<compile_context>
chip_gen: v7x
topology: tpu7x:2x2x1
jax: 0.10.0
libtpu: 0.0.40
codegen_flags: <defaults>
</compile_context>

<pallas_src>
import functools
import jax
import jax.numpy as jnp
from jax import lax
from jax.experimental import pallas as pl
from jax.experimental.pallas import tpu as pltpu

VMEM_SPEC = pl.BlockSpec(memory_space=pltpu.MemorySpace.VMEM)
NLL_BLK_V = 2048                    # vocab tile cap for the NLL kernel
VMEM_LIMIT = 64 * 1024 * 1024       # <= physical VMEM on all of v5e/v6e/v7x


def _round_up(x, m):
    return ((x + m - 1) // m) * m


def _nll_vocab_pad(vocab_size):
    """Vocab block size + padded vocab width (padded width is a multiple of the block)."""
    blk = min(NLL_BLK_V, _round_up(vocab_size, 128))
    return blk, _round_up(vocab_size, blk)


def _pick_row_block(n):
    for cand in (512, 256, 128, 64, 32, 16, 8):
        if n % cand == 0:
            return cand
    return n


# ----------------------------- Pallas kernels -----------------------------

def _bilstm_kernel(x_ref, wihf_ref, wihb_ref, whh_ref, bf_ref, bb_ref,
                   yf_ref, yb_ref, hN_ref, gxf_scr, gxb_scr, *, seq_len, batch_p):
    """Fused bidirectional LSTM layer, zero initial state.

    x:    (S*Bp, Din) bf16, time-major flattened (row = t*Bp + b), Bp multiple of 8.
    wihf/wihb: (Din, 4H) bf16, gate order [i, f, o | g]; b_f/b_b: (1,4H) f32 (b_ih+b_hh).
    whh:  (2H, 8H) bf16 block-diagonal [fwd 4H | bwd 4H].
    yf/yb:(S*Bp, H) f32 per-direction output slabs; hN: (Bp, 2H) f32 final hidden [fwd|bwd].
    """
    S, Bp = seq_len, batch_p
    H = whh_ref.shape[0] // 2
    G = 4 * H

    # Hoisted input projection per direction (one big MXU call each, not on the serial chain).
    x = x_ref[...]
    gxf_scr[...] = jnp.dot(x, wihf_ref[...], preferred_element_type=jnp.float32) + bf_ref[...]
    gxb_scr[...] = jnp.dot(x, wihb_ref[...], preferred_element_type=jnp.float32) + bb_ref[...]

    whh = whh_ref[...]

    h2 = jnp.zeros((Bp, 2 * H), jnp.float32)
    c_f = jnp.zeros((Bp, H), jnp.float32)
    c_b = jnp.zeros((Bp, H), jnp.float32)

    def cell(g, c):
        ifo = jax.nn.sigmoid(g[:, 0:3 * H])          # one wide sigmoid per direction
        gg = jnp.tanh(g[:, 3 * H:4 * H])
        i, f, o = ifo[:, 0:H], ifo[:, H:2 * H], ifo[:, 2 * H:3 * H]
        c_new = f * c + i * gg
        h_new = o * jnp.tanh(c_new)
        return h_new, c_new

    for t in range(S):                               # static unroll (S small)
        rf = t * Bp
        rb = (S - 1 - t) * Bp
        # ONE block-diagonal MXU op for both directions.
        ghh = jnp.dot(h2.astype(whh.dtype), whh, preferred_element_type=jnp.float32)
        g_f = gxf_scr[rf:rf + Bp, :] + ghh[:, 0:G]
        g_b = gxb_scr[rb:rb + Bp, :] + ghh[:, G:2 * G]
        h_f, c_f = cell(g_f, c_f)
        h_b, c_b = cell(g_b, c_b)
        yf_ref[rf:rf + Bp, :] = h_f
        yb_ref[rb:rb + Bp, :] = h_b
        h2 = jnp.concatenate([h_f, h_b], axis=1)

    hN_ref[...] = h2


def _bigru_kernel(x_ref, wihf_ref, wihb_ref, whh_ref, bihf_ref, bihb_ref,
                  bhhf_ref, bhhb_ref, h0_ref,
                  yf_ref, yb_ref, gxf_scr, gxb_scr, *, seq_len, batch_p):
    """Fused bidirectional GRU layer with given initial state.

    x: (S*Bp, Din) bf16; wihf/wihb: (Din, 3H) bf16 [r, z | n]; whh: (2H, 6H) bf16 blockdiag.
    h0: (Bp, 2H) f32 [fwd | bwd]; yf/yb: (S*Bp, H) f32.
    """
    S, Bp = seq_len, batch_p
    H = whh_ref.shape[0] // 2
    G = 3 * H

    x = x_ref[...]
    gxf_scr[...] = jnp.dot(x, wihf_ref[...], preferred_element_type=jnp.float32) + bihf_ref[...]
    gxb_scr[...] = jnp.dot(x, wihb_ref[...], preferred_element_type=jnp.float32) + bihb_ref[...]

    whh = whh_ref[...]
    bhhf = bhhf_ref[...]
    bhhb = bhhb_ref[...]

    h2 = h0_ref[...]

    def cell(gx, gh, h):
        rz = jax.nn.sigmoid(gx[:, 0:2 * H] + gh[:, 0:2 * H])   # one sigmoid for r,z
        r = rz[:, 0:H]
        z = rz[:, H:2 * H]
        n = jnp.tanh(gx[:, 2 * H:3 * H] + r * gh[:, 2 * H:3 * H])
        return (1.0 - z) * n + z * h

    for t in range(S):
        rf = t * Bp
        rb = (S - 1 - t) * Bp
        ghh = jnp.dot(h2.astype(whh.dtype), whh, preferred_element_type=jnp.float32)
        gh_f = ghh[:, 0:G] + bhhf
        gh_b = ghh[:, G:2 * G] + bhhb
        h_f = cell(gxf_scr[rf:rf + Bp, :], gh_f, h2[:, 0:H])
        h_b = cell(gxb_scr[rb:rb + Bp, :], gh_b, h2[:, H:2 * H])
        yf_ref[rf:rf + Bp, :] = h_f
        yb_ref[rb:rb + Bp, :] = h_b
        h2 = jnp.concatenate([h_f, h_b], axis=1)


def _heads_kernel(th_ref, gh_ref, wt_ref, bt_ref, wg_ref, bg_ref,
                  wz_ref, bz_ref, nz_ref, ng_ref,
                  dech_ref, pos_ref, neg_ref, rank_ref, kl_ref, *, margin):
    """Fused VAE heads: mean|logv linears for tweet + (pos|neg) groups, reparam,
    cosine scores, ranking loss, KL loss and the z2hidden decoder projection."""
    B = th_ref.shape[0]
    L = wz_ref.shape[0]
    eps = 1e-8

    tml = jnp.dot(th_ref[...], wt_ref[...], preferred_element_type=jnp.float32) + bt_ref[...]
    gml = jnp.dot(gh_ref[...], wg_ref[...], preferred_element_type=jnp.float32) + bg_ref[...]
    tmean, tlogv = tml[:, 0:L], tml[:, L:2 * L]
    gmean, glogv = gml[:, 0:L], gml[:, L:2 * L]

    z = nz_ref[...] * jnp.exp(0.5 * tlogv) + tmean        # (B, L)
    uv = ng_ref[...] * jnp.exp(0.5 * glogv) + gmean       # (2B, L)  [pos | neg]
    u = uv[0:B]
    v = uv[B:2 * B]

    def cos(a, b):
        num = jnp.sum(a * b, axis=1, keepdims=True)
        na = jnp.sqrt(jnp.sum(a * a, axis=1, keepdims=True))
        nb = jnp.sqrt(jnp.sum(b * b, axis=1, keepdims=True))
        # torch CosineSimilarity clamps each norm separately with eps
        return num / (jnp.maximum(na, eps) * jnp.maximum(nb, eps))

    pos = cos(z, u)
    neg = cos(z, v)
    pos_ref[...] = pos
    neg_ref[...] = neg

    # MarginRankingLoss(margin) with target y=1, reduction='mean'
    rank_ref[...] = jnp.reshape(jnp.mean(jnp.maximum(0.0, neg - pos + margin)), (1, 1))

    pmean = gmean[0:B]
    plogv = glogv[0:B]
    kl = 0.5 * jnp.sum(-1.0 + plogv - tlogv
                       + (jnp.exp(tlogv) + (tmean - pmean) ** 2) / jnp.exp(plogv)) / B
    kl_ref[...] = jnp.reshape(kl, (1, 1))

    # decoder initial hidden = z2hidden(z)
    dech_ref[...] = jnp.dot(z, wz_ref[...], preferred_element_type=jnp.float32) + bz_ref[...]


def _nll_kernel(hf_ref, hb_ref, wf_ref, wb_ref, b_ref, tgt_ref, part_ref,
                m_scr, s_scr, t_scr, *, blk_v):
    """Vocab-tiled log_softmax + NLLLoss(ignore_index=0) with an online LSE accumulator.

    Grid: (row_tile "parallel", vocab_block "arbitrary" reduction).
    Output: per-row-tile (8,128) slab; [*,0]=nll_sum, [*,1]=token_count (reduced in wrapper).
    Padded vocab columns carry zero weights and a -1e30 bias (exp underflows to 0).
    """
    j = pl.program_id(1)

    @pl.when(j == 0)
    def _():
        m_scr[...] = jnp.full(m_scr.shape, -jnp.inf, jnp.float32)
        s_scr[...] = jnp.zeros(s_scr.shape, jnp.float32)
        t_scr[...] = jnp.zeros(t_scr.shape, jnp.float32)

    hf = hf_ref[...].astype(jnp.bfloat16)
    hb = hb_ref[...].astype(jnp.bfloat16)
    logits = (jnp.dot(hf, wf_ref[...], preferred_element_type=jnp.float32)
              + jnp.dot(hb, wb_ref[...], preferred_element_type=jnp.float32)
              + b_ref[...])                                     # (row_blk, blk_v)

    m_prev = m_scr[...]
    m_new = jnp.maximum(m_prev, jnp.max(logits, axis=1, keepdims=True))
    s_scr[...] = (s_scr[...] * jnp.exp(m_prev - m_new)
                  + jnp.sum(jnp.exp(logits - m_new), axis=1, keepdims=True))
    m_scr[...] = m_new

    col = j * blk_v + lax.broadcasted_iota(jnp.int32, logits.shape, 1)
    onehot = (col == tgt_ref[...])
    t_scr[...] += jnp.sum(jnp.where(onehot, logits, 0.0), axis=1, keepdims=True)

    @pl.when(j == pl.num_programs(1) - 1)
    def _():
        lse = m_scr[...] + jnp.log(s_scr[...])
        logp_t = t_scr[...] - lse                               # (row_blk, 1) target log-probs
        mask = (tgt_ref[...] != 0).astype(jnp.float32)          # ignore_index = 0 (also batch pad)
        nll = -jnp.sum(logp_t * mask)
        cnt = jnp.sum(mask)
        cc = lax.broadcasted_iota(jnp.int32, part_ref.shape, 1)
        part_ref[...] = jnp.where(cc == 0, nll, jnp.where(cc == 1, cnt, 0.0))


# ----------------------------- Pallas wrappers -----------------------------

def bilstm_layer(x_tm, lp, S, Bp):
    SB = x_tm.shape[0]
    H = lp['whh'].shape[0] // 2
    kernel = functools.partial(_bilstm_kernel, seq_len=S, batch_p=Bp)
    return pl.pallas_call(
        kernel,
        out_shape=(jax.ShapeDtypeStruct((SB, H), jnp.float32),
                   jax.ShapeDtypeStruct((SB, H), jnp.float32),
                   jax.ShapeDtypeStruct((Bp, 2 * H), jnp.float32)),
        in_specs=[VMEM_SPEC] * 6,
        out_specs=(VMEM_SPEC,) * 3,
        scratch_shapes=[pltpu.VMEM((SB, 4 * H), jnp.float32),
                        pltpu.VMEM((SB, 4 * H), jnp.float32)],
        compiler_params=pltpu.CompilerParams(vmem_limit_bytes=VMEM_LIMIT),
    )(x_tm, lp['wih_f'], lp['wih_b'], lp['whh'], lp['b_f'], lp['b_b'])


def bigru_layer(x_tm, lp, h0, S, Bp):
    SB = x_tm.shape[0]
    H = lp['whh'].shape[0] // 2
    kernel = functools.partial(_bigru_kernel, seq_len=S, batch_p=Bp)
    return pl.pallas_call(
        kernel,
        out_shape=(jax.ShapeDtypeStruct((SB, H), jnp.float32),
                   jax.ShapeDtypeStruct((SB, H), jnp.float32)),
        in_specs=[VMEM_SPEC] * 9,
        out_specs=(VMEM_SPEC,) * 2,
        scratch_shapes=[pltpu.VMEM((SB, 3 * H), jnp.float32),
                        pltpu.VMEM((SB, 3 * H), jnp.float32)],
        compiler_params=pltpu.CompilerParams(vmem_limit_bytes=VMEM_LIMIT),
    )(x_tm, lp['wih_f'], lp['wih_b'], lp['whh'],
      lp['bih_f'], lp['bih_b'], lp['bhh_f'], lp['bhh_b'], h0)


def heads_call(tweet_hidden, group_hidden, params, nz, ng, margin):
    B, L = tweet_hidden.shape
    kernel = functools.partial(_heads_kernel, margin=float(margin))
    out_shape = (jax.ShapeDtypeStruct((B, L), jnp.float32),    # decoder hidden (flat)
                 jax.ShapeDtypeStruct((B, 1), jnp.float32),    # pos score
                 jax.ShapeDtypeStruct((B, 1), jnp.float32),    # neg score
                 jax.ShapeDtypeStruct((1, 1), jnp.float32),    # ranking loss
                 jax.ShapeDtypeStruct((1, 1), jnp.float32))    # kl loss
    return pl.pallas_call(
        kernel,
        out_shape=out_shape,
        in_specs=[VMEM_SPEC] * 10,
        out_specs=(VMEM_SPEC,) * 5,
    )(tweet_hidden, group_hidden, params['wt'], params['bt'], params['wg'], params['bg'],
      params['wz'], params['bz'], nz, ng)


def decoder_nll(hf, hb, wf, wb, b, tgt):
    N, H = hf.shape
    V_pad = wf.shape[1]
    blk_v = min(NLL_BLK_V, V_pad)            # consistent with _nll_vocab_pad at init
    nv = V_pad // blk_v
    row_blk = _pick_row_block(N)
    nr = N // row_blk

    w_kwargs = {}
    if nv >= 3:
        # deeper weight-stream pipelining (v5e HBM-exposed regime)
        w_kwargs = dict(pipeline_mode=pl.Buffered(3))

    kernel = functools.partial(_nll_kernel, blk_v=blk_v)
    parts = pl.pallas_call(
        kernel,
        out_shape=jax.ShapeDtypeStruct((nr * 8, 128), jnp.float32),
        grid=(nr, nv),
        in_specs=[pl.BlockSpec((row_blk, H), lambda i, j: (i, 0)),
                  pl.BlockSpec((row_blk, H), lambda i, j: (i, 0)),
                  pl.BlockSpec((H, blk_v), lambda i, j: (0, j), **w_kwargs),
                  pl.BlockSpec((H, blk_v), lambda i, j: (0, j), **w_kwargs),
                  pl.BlockSpec((1, blk_v), lambda i, j: (0, j)),
                  pl.BlockSpec((row_blk, 1), lambda i, j: (i, 0))],
        out_specs=pl.BlockSpec((8, 128), lambda i, j: (i, 0)),
        scratch_shapes=[pltpu.VMEM((row_blk, 1), jnp.float32),
                        pltpu.VMEM((row_blk, 1), jnp.float32),
                        pltpu.VMEM((row_blk, 1), jnp.float32)],
        compiler_params=pltpu.CompilerParams(
            dimension_semantics=("parallel", "arbitrary"),
            vmem_limit_bytes=VMEM_LIMIT),
    )(hf, hb, wf, wb, b, tgt)

    parts = parts.reshape(nr, 8, 128)
    nll_sum = jnp.sum(parts[:, 0, 0])
    cnt = jnp.sum(parts[:, 0, 1])
    return nll_sum / jnp.maximum(cnt, 1.0)


# ----------------------------- model glue -----------------------------

def bilstm_encoder(x_tm, layers, S, Bp):
    """x: (S*Bp, Din) bf16 time-major flattened. Returns final hidden (Bp, num_layers*2*H)
    in torch h_n.transpose(0,1).view(B,-1) ordering [l0f, l0b, l1f, l1b, ...]."""
    feats = []
    inp = x_tm
    for li, lp in enumerate(layers):
        yf, yb, h_n = bilstm_layer(inp, lp, S, Bp)
        feats.append(h_n)
        if li + 1 < len(layers):
            inp = jnp.concatenate([yf, yb], axis=1).astype(jnp.bfloat16)
    return feats[0] if len(feats) == 1 else jnp.concatenate(feats, axis=1)


def bigru_decoder(x_tm, layers, h0_flat_p, S, Bp, H):
    """x: (S*Bp, Din) bf16; h0_flat_p: (Bp, num_layers*2*H) [l0f,l0b,l1f,l1b,...].
    Returns last layer per-direction outputs (S*Bp, H) each."""
    inp = x_tm
    yf = yb = None
    for li, lp in enumerate(layers):
        h0 = h0_flat_p[:, 2 * li * H: 2 * li * H + 2 * H]   # contiguous [fwd | bwd] slice
        yf, yb = bigru_layer(inp, lp, h0, S, Bp)
        if li + 1 < len(layers):
            inp = jnp.concatenate([yf, yb], axis=1).astype(jnp.bfloat16)
    return yf, yb


def vae_forward(params, tweet, pos_group, neg_group, noise_key,
                num_layers, hidden_size, loss_margin):
    """Eval-mode forward (dropout off, wd=0 word-dropout branch).
    Returns (pos_score, neg_score, rankingloss, recoverloss, klloss)."""
    B, S = tweet.shape
    H = hidden_size
    L2H = num_layers * 2 * H
    Bp = _round_up(B, 8)          # sublane-aligned batch for the recurrent kernels
    Bg = _round_up(2 * B, 8)
    kz, kg = jax.random.split(noise_key, 2)

    emb = params['emb']

    # batch pad with PAD token (0) rows; emb row 0 is zero (padding_idx=0).
    tweet_p = jnp.pad(tweet, ((0, Bp - B), (0, 0)))
    grp_p = jnp.pad(jnp.concatenate([pos_group, neg_group], axis=0),
                    ((0, Bg - 2 * B), (0, 0)))

    # time-major flattened embeddings (row = t*Bp + b), bf16 for the MXU input projections.
    tweet_x = jnp.take(emb, jnp.transpose(tweet_p, (1, 0)).reshape(-1),
                       axis=0).astype(jnp.bfloat16)             # (S*Bp, D)
    group_x = jnp.take(emb, jnp.transpose(grp_p, (1, 0)).reshape(-1),
                       axis=0).astype(jnp.bfloat16)             # (S*Bg, D)

    # ---- encoders (one fused bidirectional launch per layer; pos+neg batched) ----
    tweet_hidden = bilstm_encoder(tweet_x, params['enc_tweet'], S, Bp)[:B]       # (B, L2H)
    group_hidden = bilstm_encoder(group_x, params['enc_group'], S, Bg)[:2 * B]   # (2B, L2H)

    nz = jax.random.normal(kz, (B, L2H), jnp.float32)
    ng = jax.random.normal(kg, (2 * B, L2H), jnp.float32)

    # ---- fused heads: mean/logv, reparam, cosine scores, rank/KL losses, z2hidden ----
    dec_h0_flat, pos_s, neg_s, rank, kl = heads_call(
        tweet_hidden, group_hidden, params, nz, ng, loss_margin)

    dec_h0_p = jnp.pad(dec_h0_flat, ((0, Bp - B), (0, 0)))      # padded rows start at 0

    # ---- decoder (wd=0: decoder input is the tweet embedding itself) ----
    yf, yb = bigru_decoder(tweet_x, params['dec_tweet'], dec_h0_p, S, Bp, H)     # (S*Bp, H) x2

    # drop last timestep (contiguous leading rows in time-major layout)
    n_rows = (S - 1) * Bp
    tgt = jnp.transpose(tweet_p[:, 1:], (1, 0)).reshape(-1, 1).astype(jnp.int32)
    recover = decoder_nll(yf[:n_rows], yb[:n_rows],
                          params['wout_f'], params['wout_b'], params['bout'], tgt)

    return pos_s[:, 0], neg_s[:, 0], rank[0, 0], recover, kl[0, 0]


# ----------------------------- parameter init -----------------------------

def init_params(key, vocab_size, word_dim, hidden_size, num_layers):
    """Weights stored pre-transposed / pre-concatenated / block-diagonalized in
    kernel-friendly layout; MXU-fed matrices in bf16, biases f32."""
    H = hidden_size
    L2H = num_layers * 2 * H
    keys = iter(jax.random.split(key, 256))
    scale = float(H) ** -0.5

    def u(shape):
        return jax.random.uniform(next(keys), shape, jnp.float32, -scale, scale)

    def blockdiag(a, b):
        h, ga = a.shape
        _, gb = b.shape
        w = jnp.zeros((2 * h, ga + gb), jnp.float32)
        w = w.at[:h, :ga].set(a)
        w = w.at[h:, ga:].set(b)
        return w

    def lstm_layers():
        layers = []
        for l in range(num_layers):
            din = word_dim if l == 0 else 2 * H
            layers.append({
                'wih_f': u((din, 4 * H)).astype(jnp.bfloat16),   # gate order [i, f, o | g]
                'wih_b': u((din, 4 * H)).astype(jnp.bfloat16),
                'whh': blockdiag(u((H, 4 * H)), u((H, 4 * H))).astype(jnp.bfloat16),
                'b_f': u((1, 4 * H)),                            # combined b_ih + b_hh
                'b_b': u((1, 4 * H)),
            })
        return layers

    def gru_layers():
        layers = []
        for l in range(num_layers):
            din = word_dim if l == 0 else 2 * H
            layers.append({
                'wih_f': u((din, 3 * H)).astype(jnp.bfloat16),   # gate order [r, z | n]
                'wih_b': u((din, 3 * H)).astype(jnp.bfloat16),
                'whh': blockdiag(u((H, 3 * H)), u((H, 3 * H))).astype(jnp.bfloat16),
                'bih_f': u((1, 3 * H)), 'bih_b': u((1, 3 * H)),
                'bhh_f': u((1, 3 * H)), 'bhh_b': u((1, 3 * H)),
            })
        return layers

    emb = jax.random.normal(next(keys), (vocab_size, word_dim), jnp.float32) * 0.1
    emb = emb.at[0].set(0.0)   # padding_idx = 0

    # decoder_out split by direction, vocab padded to a multiple of the NLL block;
    # padded columns: zero weight + -1e30 bias (never win the softmax, never match targets).
    _, v_pad = _nll_vocab_pad(vocab_size)
    wout_f = jnp.zeros((H, v_pad), jnp.float32).at[:, :vocab_size].set(
        u((H, vocab_size))).astype(jnp.bfloat16)
    wout_b = jnp.zeros((H, v_pad), jnp.float32).at[:, :vocab_size].set(
        u((H, vocab_size))).astype(jnp.bfloat16)
    bout = jnp.full((1, v_pad), -1e30, jnp.float32).at[:, :vocab_size].set(
        u((1, vocab_size)))

    params = {
        'emb': emb,
        'enc_tweet': lstm_layers(),
        'enc_group': lstm_layers(),
        'dec_tweet': gru_layers(),
        'wt': u((L2H, 2 * L2H)), 'bt': u((1, 2 * L2H)),   # [tweet_mean | tweet_logv]
        'wg': u((L2H, 2 * L2H)), 'bg': u((1, 2 * L2H)),   # [group_mean | group_logv]
        'wz': u((L2H, L2H)),     'bz': u((1, L2H)),       # z2hidden
        'wout_f': wout_f, 'wout_b': wout_b, 'bout': bout,  # decoder_out (split fwd/bwd)
    }
    return params


# ----------------------------- main -----------------------------

if __name__ == "__main__":
    B, S = 2, 8
    WORD_DIM = 32
    HIDDEN_SIZE = 32
    NUM_LAYERS = 1
    VOCAB_SIZE = 256
    LOSS_MARGIN = 0.5

    root = jax.random.PRNGKey(0)
    kp, kt, kpg, kng, kn = jax.random.split(root, 5)

    params = init_params(kp, VOCAB_SIZE, WORD_DIM, HIDDEN_SIZE, NUM_LAYERS)

    # tokens: CLS at position 0, SEP at position -1, a PAD (0) to exercise ignore_index.
    body_tok = jax.random.randint(kt, (B, S), 1, VOCAB_SIZE).astype(jnp.int32)
    tweet = body_tok.at[:, 0].set(101).at[:, -1].set(102).at[:, -2].set(0)
    pos_group = jax.random.randint(kpg, (B, S), 1, VOCAB_SIZE).astype(jnp.int32)
    pos_group = pos_group.at[:, 0].set(101).at[:, -1].set(102)
    neg_group = jax.random.randint(kng, (B, S), 1, VOCAB_SIZE).astype(jnp.int32)
    neg_group = neg_group.at[:, 0].set(101).at[:, -1].set(102)

    fwd = jax.jit(functools.partial(vae_forward, num_layers=NUM_LAYERS,
                                    hidden_size=HIDDEN_SIZE, loss_margin=LOSS_MARGIN))
    outs = fwd(params, tweet, pos_group, neg_group, kn)
    outs = jax.block_until_ready(outs)

    pos_score, neg_score, rankingloss, recoverloss, klloss = outs
    assert pos_score.shape == (B,) and neg_score.shape == (B,)
    assert all(bool(jnp.isfinite(x).all()) for x in outs)
    print("KERNEL_OK")
</pallas_src>

<mosaic_0001>
module attributes {stable_mosaic.version = 11 : i64} {
  func.func @_bilstm_kernel(%arg0: memref<64x32xbf16, #tpu.memory_space<vmem>>, %arg1: memref<32x128xbf16, #tpu.memory_space<vmem>>, %arg2: memref<32x128xbf16, #tpu.memory_space<vmem>>, %arg3: memref<64x256xbf16, #tpu.memory_space<vmem>>, %arg4: memref<1x128xf32, #tpu.memory_space<vmem>>, %arg5: memref<1x128xf32, #tpu.memory_space<vmem>>, %arg6: memref<64x32xf32, #tpu.memory_space<vmem>>, %arg7: memref<64x32xf32, #tpu.memory_space<vmem>>, %arg8: memref<8x64xf32, #tpu.memory_space<vmem>>, %arg9: memref<64x128xf32, #tpu.memory_space<vmem>>, %arg10: memref<64x128xf32, #tpu.memory_space<vmem>>) attributes {dimension_semantics = [], scalar_prefetch = 0 : i64, scratch_operands = 2 : i64, tpu.core_type = #tpu.core_type<tc>} {
    %c0 = arith.constant 0 : index
    %c0_0 = arith.constant 0 : index
    %0 = vector.load %arg0[%c0, %c0_0] : memref<64x32xbf16, #tpu.memory_space<vmem>>, vector<64x32xbf16>
    %c0_1 = arith.constant 0 : index
    %c0_2 = arith.constant 0 : index
    %1 = vector.load %arg1[%c0_1, %c0_2] : memref<32x128xbf16, #tpu.memory_space<vmem>>, vector<32x128xbf16>
    %cst = arith.constant dense<0.000000e+00> : vector<64x128xf32>
    %2 = tpu.matmul %0, %1, %cst {dimension_numbers = #tpu.dot_dimension_numbers<[1], [0], [0], [1], [0, 0, 1, 1], [], []>} : vector<64x32xbf16>, vector<32x128xbf16>, vector<64x128xf32> -> vector<64x128xf32>
    %c0_3 = arith.constant 0 : index
    %c0_4 = arith.constant 0 : index
    %3 = vector.load %arg4[%c0_3, %c0_4] : memref<1x128xf32, #tpu.memory_space<vmem>>, vector<1x128xf32>
    %4 = vector.broadcast %3 : vector<1x128xf32> to vector<64x128xf32>
    %5 = arith.addf %2, %4 : vector<64x128xf32>
    %c0_5 = arith.constant 0 : index
    %c0_6 = arith.constant 0 : index
    %6 = vector.load %arg9[%c0_5, %c0_6] : memref<64x128xf32, #tpu.memory_space<vmem>>, vector<64x128xf32>
    tpu.vector_store %arg9[%c0_5, %c0_6], %5 {strides = array<i32>} : memref<64x128xf32, #tpu.memory_space<vmem>>, vector<64x128xf32>,
    %c0_7 = arith.constant 0 : index
    %c0_8 = arith.constant 0 : index
    %7 = vector.load %arg2[%c0_7, %c0_8] : memref<32x128xbf16, #tpu.memory_space<vmem>>, vector<32x128xbf16>
    %cst_9 = arith.constant dense<0.000000e+00> : vector<64x128xf32>
    %8 = tpu.matmul %0, %7, %cst_9 {dimension_numbers = #tpu.dot_dimension_numbers<[1], [0], [0], [1], [0, 0, 1, 1], [], []>} : vector<64x32xbf16>, vector<32x128xbf16>, vector<64x128xf32> -> vector<64x128xf32>
    %c0_10 = arith.constant 0 : index
    %c0_11 = arith.constant 0 : index
    %9 = vector.load %arg5[%c0_10, %c0_11] : memref<1x128xf32, #tpu.memory_space<vmem>>, vector<1x128xf32>
    %10 = vector.broadcast %9 : vector<1x128xf32> to vector<64x128xf32>
    %11 = arith.addf %8, %10 : vector<64x128xf32>
    %c0_12 = arith.constant 0 : index
    %c0_13 = arith.constant 0 : index
    %12 = vector.load %arg10[%c0_12, %c0_13] : memref<64x128xf32, #tpu.memory_space<vmem>>, vector<64x128xf32>
    tpu.vector_store %arg10[%c0_12, %c0_13], %11 {strides = array<i32>} : memref<64x128xf32, #tpu.memory_space<vmem>>, vector<64x128xf32>,
    %c0_14 = arith.constant 0 : index
    %c0_15 = arith.constant 0 : index
    %13 = vector.load %arg3[%c0_14, %c0_15] : memref<64x256xbf16, #tpu.memory_space<vmem>>, vector<64x256xbf16>
    %cst_16 = arith.constant 0.000000e+00 : f32
    %14 = vector.broadcast %cst_16 : f32 to vector<8x64xf32>
    %cst_17 = arith.constant 0.000000e+00 : f32
    %15 = vector.broadcast %cst_17 : f32 to vector<8x32xf32>
    %cst_18 = arith.constant 0.000000e+00 : f32
    %16 = vector.broadcast %cst_18 : f32 to vector<8x32xf32>
    %17 = arith.truncf %14 : vector<8x64xf32> to vector<8x64xbf16>
    %cst_19 = arith.constant dense<0.000000e+00> : vector<8x256xf32>
    %18 = tpu.matmul %17, %13, %cst_19 {dimension_numbers = #tpu.dot_dimension_numbers<[1], [0], [0], [1], [0, 0, 1, 1], [], []>} : vector<8x64xbf16>, vector<64x256xbf16>, vector<8x256xf32> -> vector<8x256xf32>
    %c0_20 = arith.constant 0 : index
    %c0_21 = arith.constant 0 : index
    %19 = vector.load %arg9[%c0_20, %c0_21] : memref<64x128xf32, #tpu.memory_space<vmem>>, vector<8x128xf32>
    %20 = vector.extract_strided_slice %18 {offsets = [0, 0], sizes = [8, 128], strides = [1, 1]} : vector<8x256xf32> to vector<8x128xf32>
    %21 = arith.addf %19, %20 : vector<8x128xf32>
    %c56 = arith.constant 56 : index
    %c0_22 = arith.constant 0 : index
    %22 = vector.load %arg10[%c56, %c0_22] : memref<64x128xf32, #tpu.memory_space<vmem>>, vector<8x128xf32>
    %23 = vector.extract_strided_slice %18 {offsets = [0, 128], sizes = [8, 128], strides = [1, 1]} : vector<8x256xf32> to vector<8x128xf32>
    %24 = arith.addf %22, %23 : vector<8x128xf32>
    %25 = vector.extract_strided_slice %21 {offsets = [0, 0], sizes = [8, 96], strides = [1, 1]} : vector<8x128xf32> to vector<8x96xf32>
    %26 = arith.negf %25 : vector<8x96xf32>
    %27 = math.exp %26 : vector<8x96xf32>
    %cst_23 = arith.constant 1.000000e+00 : f32
    %28 = vector.broadcast %cst_23 : f32 to vector<8x96xf32>
    %29 = arith.addf %28, %27 : vector<8x96xf32>
    %30 = arith.divf %28, %29 : vector<8x96xf32>
    %31 = vector.extract_strided_slice %21 {offsets = [0, 96], sizes = [8, 32], strides = [1, 1]} : vector<8x128xf32> to vector<8x32xf32>
    %32 = math.tanh %31 : vector<8x32xf32>
    %33 = vector.extract_strided_slice %30 {offsets = [0, 0], sizes = [8, 32], strides = [1, 1]} : vector<8x96xf32> to vector<8x32xf32>
    %34 = vector.extract_strided_slice %30 {offsets = [0, 32], sizes = [8, 32], strides = [1, 1]} : vector<8x96xf32> to vector<8x32xf32>
    %35 = vector.extract_strided_slice %30 {offsets = [0, 64], sizes = [8, 32], strides = [1, 1]} : vector<8x96xf32> to vector<8x32xf32>
    %36 = arith.mulf %34, %15 : vector<8x32xf32>
    %37 = arith.mulf %33, %32 : vector<8x32xf32>
    %38 = arith.addf %36, %37 : vector<8x32xf32>
    %39 = math.tanh %38 : vector<8x32xf32>
    %40 = arith.mulf %35, %39 : vector<8x32xf32>
    %41 = vector.extract_strided_slice %24 {offsets = [0, 0], sizes = [8, 96], strides = [1, 1]} : vector<8x128xf32> to vector<8x96xf32>
    %42 = arith.negf %41 : vector<8x96xf32>
    %43 = math.exp %42 : vector<8x96xf32>
    %cst_24 = arith.constant 1.000000e+00 : f32
    %44 = vector.broadcast %cst_24 : f32 to vector<8x96xf32>
    %45 = arith.addf %44, %43 : vector<8x96xf32>
    %46 = arith.divf %44, %45 : vector<8x96xf32>
    %47 = vector.extract_strided_slice %24 {offsets = [0, 96], sizes = [8, 32], strides = [1, 1]} : vector<8x128xf32> to vector<8x32xf32>
    %48 = math.tanh %47 : vector<8x32xf32>
    %49 = vector.extract_strided_slice %46 {offsets = [0, 0], sizes = [8, 32], strides = [1, 1]} : vector<8x96xf32> to vector<8x32xf32>
    %50 = vector.extract_strided_slice %46 {offsets = [0, 32], sizes = [8, 32], strides = [1, 1]} : vector<8x96xf32> to vector<8x32xf32>
    %51 = vector.extract_strided_slice %46 {offsets = [0, 64], sizes = [8, 32], strides = [1, 1]} : vector<8x96xf32> to vector<8x32xf32>
    %52 = arith.mulf %50, %16 : vector<8x32xf32>
    %53 = arith.mulf %49, %48 : vector<8x32xf32>
    %54 = arith.addf %52, %53 : vector<8x32xf32>
    %55 = math.tanh %54 : vector<8x32xf32>
    %56 = arith.mulf %51, %55 : vector<8x32xf32>
    %c0_25 = arith.constant 0 : index
    %c0_26 = arith.constant 0 : index
    %57 = vector.load %arg6[%c0_25, %c0_26] : memref<64x32xf32, #tpu.memory_space<vmem>>, vector<8x32xf32>
    tpu.vector_store %arg6[%c0_25, %c0_26], %40 {strides = array<i32>} : memref<64x32xf32, #tpu.memory_space<vmem>>, vector<8x32xf32>,
    %c56_27 = arith.constant 56 : index
    %c0_28 = arith.constant 0 : index
    %58 = vector.load %arg7[%c56_27, %c0_28] : memref<64x32xf32, #tpu.memory_space<vmem>>, vector<8x32xf32>
    tpu.vector_store %arg7[%c56_27, %c0_28], %56 {strides = array<i32>} : memref<64x32xf32, #tpu.memory_space<vmem>>, vector<8x32xf32>,
    %59 = tpu.concatenate %40, %56 in 1 : vector<8x32xf32>, vector<8x32xf32> -> vector<8x64xf32>
    %60 = arith.truncf %59 : vector<8x64xf32> to vector<8x64xbf16>
    %cst_29 = arith.constant dense<0.000000e+00> : vector<8x256xf32>
    %61 = tpu.matmul %60, %13, %cst_29 {dimension_numbers = #tpu.dot_dimension_numbers<[1], [0], [0], [1], [0, 0, 1, 1], [], []>} : vector<8x64xbf16>, vector<64x256xbf16>, vector<8x256xf32> -> vector<8x256xf32>
    %c8 = arith.constant 8 : index
    %c0_30 = arith.constant 0 : index
    %62 = vector.load %arg9[%c8, %c0_30] : memref<64x128xf32, #tpu.memory_space<vmem>>, vector<8x128xf32>
    %63 = vector.extract_strided_slice %61 {offsets = [0, 0], sizes = [8, 128], strides = [1, 1]} : vector<8x256xf32> to vector<8x128xf32>
    %64 = arith.addf %62, %63 : vector<8x128xf32>
    %c48 = arith.constant 48 : index
    %c0_31 = arith.constant 0 : index
    %65 = vector.load %arg10[%c48, %c0_31] : memref<64x128xf32, #tpu.memory_space<vmem>>, vector<8x128xf32>
    %66 = vector.extract_strided_slice %61 {offsets = [0, 128], sizes = [8, 128], strides = [1, 1]} : vector<8x256xf32> to vector<8x128xf32>
    %67 = arith.addf %65, %66 : vector<8x128xf32>
    %68 = vector.extract_strided_slice %64 {offsets = [0, 0], sizes = [8, 96], strides = [1, 1]} : vector<8x128xf32> to vector<8x96xf32>
    %69 = arith.negf %68 : vector<8x96xf32>
    %70 = math.exp %69 : vector<8x96xf32>
    %cst_32 = arith.constant 1.000000e+00 : f32
    %71 = vector.broadcast %cst_32 : f32 to vector<8x96xf32>
    %72 = arith.addf %71, %70 : vector<8x96xf32>
    %73 = arith.divf %71, %72 : vector<8x96xf32>
    %74 = vector.extract_strided_slice %64 {offsets = [0, 96], sizes = [8, 32], strides = [1, 1]} : vector<8x128xf32> to vector<8x32xf32>
    %75 = math.tanh %74 : vector<8x32xf32>
    %76 = vector.extract_strided_slice %73 {offsets = [0, 0], sizes = [8, 32], strides = [1, 1]} : vector<8x96xf32> to vector<8x32xf32>
    %77 = vector.extract_strided_slice %73 {offsets = [0, 32], sizes = [8, 32], strides = [1, 1]} : vector<8x96xf32> to vector<8x32xf32>
    %78 = vector.extract_strided_slice %73 {offsets = [0, 64], sizes = [8, 32], strides = [1, 1]} : vector<8x96xf32> to vector<8x32xf32>
    %79 = arith.mulf %77, %38 : vector<8x32xf32>
    %80 = arith.mulf %76, %75 : vector<8x32xf32>
    %81 = arith.addf %79, %80 : vector<8x32xf32>
    %82 = math.tanh %81 : vector<8x32xf32>
    %83 = arith.mulf %78, %82 : vector<8x32xf32>
    %84 = vector.extract_strided_slice %67 {offsets = [0, 0], sizes = [8, 96], strides = [1, 1]} : vector<8x128xf32> to vector<8x96xf32>
    %85 = arith.negf %84 : vector<8x96xf32>
    %86 = math.exp %85 : vector<8x96xf32>
    %cst_33 = arith.constant 1.000000e+00 : f32
    %87 = vector.broadcast %cst_33 : f32 to vector<8x96xf32>
    %88 = arith.addf %87, %86 : vector<8x96xf32>
    %89 = arith.divf %87, %88 : vector<8x96xf32>
    %90 = vector.extract_strided_slice %67 {offsets = [0, 96], sizes = [8, 32], strides = [1, 1]} : vector<8x128xf32> to vector<8x32xf32>
    %91 = math.tanh %90 : vector<8x32xf32>
    %92 = vector.extract_strided_slice %89 {offsets = [0, 0], sizes = [8, 32], strides = [1, 1]} : vector<8x96xf32> to vector<8x32xf32>
    %93 = vector.extract_strided_slice %89 {offsets = [0, 32], sizes = [8, 32], strides = [1, 1]} : vector<8x96xf32> to vector<8x32xf32>
    %94 = vector.extract_strided_slice %89 {offsets = [0, 64], sizes = [8, 32], strides = [1, 1]} : vector<8x96xf32> to vector<8x32xf32>
    %95 = arith.mulf %93, %54 : vector<8x32xf32>
    %96 = arith.mulf %92, %91 : vector<8x32xf32>
    %97 = arith.addf %95, %96 : vector<8x32xf32>
    %98 = math.tanh %97 : vector<8x32xf32>
    %99 = arith.mulf %94, %98 : vector<8x32xf32>
    %c8_34 = arith.constant 8 : index
    %c0_35 = arith.constant 0 : index
    %100 = vector.load %arg6[%c8_34, %c0_35] : memref<64x32xf32, #tpu.memory_space<vmem>>, vector<8x32xf32>
    tpu.vector_store %arg6[%c8_34, %c0_35], %83 {strides = array<i32>} : memref<64x32xf32, #tpu.memory_space<vmem>>, vector<8x32xf32>,
    %c48_36 = arith.constant 48 : index
    %c0_37 = arith.constant 0 : index
    %101 = vector.load %arg7[%c48_36, %c0_37] : memref<64x32xf32, #tpu.memory_space<vmem>>, vector<8x32xf32>
    tpu.vector_store %arg7[%c48_36, %c0_37], %99 {strides = array<i32>} : memref<64x32xf32, #tpu.memory_space<vmem>>, vector<8x32xf32>,
    %102 = tpu.concatenate %83, %99 in 1 : vector<8x32xf32>, vector<8x32xf32> -> vector<8x64xf32>
    %103 = arith.truncf %102 : vector<8x64xf32> to vector<8x64xbf16>
    %cst_38 = arith.constant dense<0.000000e+00> : vector<8x256xf32>
    %104 = tpu.matmul %103, %13, %cst_38 {dimension_numbers = #tpu.dot_dimension_numbers<[1], [0], [0], [1], [0, 0, 1, 1], [], []>} : vector<8x64xbf16>, vector<64x256xbf16>, vector<8x256xf32> -> vector<8x256xf32>
    %c16 = arith.constant 16 : index
    %c0_39 = arith.constant 0 : index
    %105 = vector.load %arg9[%c16, %c0_39] : memref<64x128xf32, #tpu.memory_space<vmem>>, vector<8x128xf32>
    %106 = vector.extract_strided_slice %104 {offsets = [0, 0], sizes = [8, 128], strides = [1, 1]} : vector<8x256xf32> to vector<8x128xf32>
    %107 = arith.addf %105, %106 : vector<8x128xf32>
    %c40 = arith.constant 40 : index
    %c0_40 = arith.constant 0 : index
    %108 = vector.load %arg10[%c40, %c0_40] : memref<64x128xf32, #tpu.memory_space<vmem>>, vector<8x128xf32>
    %109 = vector.extract_strided_slice %104 {offsets = [0, 128], sizes = [8, 128], strides = [1, 1]} : vector<8x256xf32> to vector<8x128xf32>
    %110 = arith.addf %108, %109 : vector<8x128xf32>
    %111 = vector.extract_strided_slice %107 {offsets = [0, 0], sizes = [8, 96], strides = [1, 1]} : vector<8x128xf32> to vector<8x96xf32>
    %112 = arith.negf %111 : vector<8x96xf32>
    %113 = math.exp %112 : vector<8x96xf32>
    %cst_41 = arith.constant 1.000000e+00 : f32
    %114 = vector.broadcast %cst_41 : f32 to vector<8x96xf32>
    %115 = arith.addf %114, %113 : vector<8x96xf32>
    %116 = arith.divf %114, %115 : vector<8x96xf32>
    %117 = vector.extract_strided_slice %107 {offsets = [0, 96], sizes = [8, 32], strides = [1, 1]} : vector<8x128xf32> to vector<8x32xf32>
    %118 = math.tanh %117 : vector<8x32xf32>
    %119 = vector.extract_strided_slice %116 {offsets = [0, 0], sizes = [8, 32], strides = [1, 1]} : vector<8x96xf32> to vector<8x32xf32>
    %120 = vector.extract_strided_slice %116 {offsets = [0, 32], sizes = [8, 32], strides = [1, 1]} : vector<8x96xf32> to vector<8x32xf32>
    %121 = vector.extract_strided_slice %116 {offsets = [0, 64], sizes = [8, 32], strides = [1, 1]} : vector<8x96xf32> to vector<8x32xf32>
    %122 = arith.mulf %120, %81 : vector<8x32xf32>
    %123 = arith.mulf %119, %118 : vector<8x32xf32>
    %124 = arith.addf %122, %123 : vector<8x32xf32>
    %125 = math.tanh %124 : vector<8x32xf32>
    %126 = arith.mulf %121, %125 : vector<8x32xf32>
    %127 = vector.extract_strided_slice %110 {offsets = [0, 0], sizes = [8, 96], strides = [1, 1]} : vector<8x128xf32> to vector<8x96xf32>
    %128 = arith.negf %127 : vector<8x96xf32>
    %129 = math.exp %128 : vector<8x96xf32>
    %cst_42 = arith.constant 1.000000e+00 : f32
    %130 = vector.broadcast %cst_42 : f32 to vector<8x96xf32>
    %131 = arith.addf %130, %129 : vector<8x96xf32>
    %132 = arith.divf %130, %131 : vector<8x96xf32>
    %133 = vector.extract_strided_slice %110 {offsets = [0, 96], sizes = [8, 32], strides = [1, 1]} : vector<8x128xf32> to vector<8x32xf32>
    %134 = math.tanh %133 : vector<8x32xf32>
    %135 = vector.extract_strided_slice %132 {offsets = [0, 0], sizes = [8, 32], strides = [1, 1]} : vector<8x96xf32> to vector<8x32xf32>
    %136 = vector.extract_strided_slice %132 {offsets = [0, 32], sizes = [8, 32], strides = [1, 1]} : vector<8x96xf32> to vector<8x32xf32>
    %137 = vector.extract_strided_slice %132 {offsets = [0, 64], sizes = [8, 32], strides = [1, 1]} : vector<8x96xf32> to vector<8x32xf32>
    %138 = arith.mulf %136, %97 : vector<8x32xf32>
    %139 = arith.mulf %135, %134 : vector<8x32xf32>
    %140 = arith.addf %138, %139 : vector<8x32xf32>
    %141 = math.tanh %140 : vector<8x32xf32>
    %142 = arith.mulf %137, %141 : vector<8x32xf32>
    %c16_43 = arith.constant 16 : index
    %c0_44 = arith.constant 0 : index
    %143 = vector.load %arg6[%c16_43, %c0_44] : memref<64x32xf32, #tpu.memory_space<vmem>>, vector<8x32xf32>
    tpu.vector_store %arg6[%c16_43, %c0_44], %126 {strides = array<i32>} : memref<64x32xf32, #tpu.memory_space<vmem>>, vector<8x32xf32>,
    %c40_45 = arith.constant 40 : index
    %c0_46 = arith.constant 0 : index
    %144 = vector.load %arg7[%c40_45, %c0_46] : memref<64x32xf32, #tpu.memory_space<vmem>>, vector<8x32xf32>
    tpu.vector_store %arg7[%c40_45, %c0_46], %142 {strides = array<i32>} : memref<64x32xf32, #tpu.memory_space<vmem>>, vector<8x32xf32>,
    %145 = tpu.concatenate %126, %142 in 1 : vector<8x32xf32>, vector<8x32xf32> -> vector<8x64xf32>
    %146 = arith.truncf %145 : vector<8x64xf32> to vector<8x64xbf16>
    %cst_47 = arith.constant dense<0.000000e+00> : vector<8x256xf32>
    %147 = tpu.matmul %146, %13, %cst_47 {dimension_numbers = #tpu.dot_dimension_numbers<[1], [0], [0], [1], [0, 0, 1, 1], [], []>} : vector<8x64xbf16>, vector<64x256xbf16>, vector<8x256xf32> -> vector<8x256xf32>
    %c24 = arith.constant 24 : index
    %c0_48 = arith.constant 0 : index
    %148 = vector.load %arg9[%c24, %c0_48] : memref<64x128xf32, #tpu.memory_space<vmem>>, vector<8x128xf32>
    %149 = vector.extract_strided_slice %147 {offsets = [0, 0], sizes = [8, 128], strides = [1, 1]} : vector<8x256xf32> to vector<8x128xf32>
    %150 = arith.addf %148, %149 : vector<8x128xf32>
    %c32 = arith.constant 32 : index
    %c0_49 = arith.constant 0 : index
    %151 = vector.load %arg10[%c32, %c0_49] : memref<64x128xf32, #tpu.memory_space<vmem>>, vector<8x128xf32>
    %152 = vector.extract_strided_slice %147 {offsets = [0, 128], sizes = [8, 128], strides = [1, 1]} : vector<8x256xf32> to vector<8x128xf32>
    %153 = arith.addf %151, %152 : vector<8x128xf32>
    %154 = vector.extract_strided_slice %150 {offsets = [0, 0], sizes = [8, 96], strides = [1, 1]} : vector<8x128xf32> to vector<8x96xf32>
    %155 = arith.negf %154 : vector<8x96xf32>
    %156 = math.exp %155 : vector<8x96xf32>
    %cst_50 = arith.constant 1.000000e+00 : f32
    %157 = vector.broadcast %cst_50 : f32 to vector<8x96xf32>
    %158 = arith.addf %157, %156 : vector<8x96xf32>
    %159 = arith.divf %157, %158 : vector<8x96xf32>
    %160 = vector.extract_strided_slice %150 {offsets = [0, 96], sizes = [8, 32], strides = [1, 1]} : vector<8x128xf32> to vector<8x32xf32>
    %161 = math.tanh %160 : vector<8x32xf32>
    %162 = vector.extract_strided_slice %159 {offsets = [0, 0], sizes = [8, 32], strides = [1, 1]} : vector<8x96xf32> to vector<8x32xf32>
    %163 = vector.extract_strided_slice %159 {offsets = [0, 32], sizes = [8, 32], strides = [1, 1]} : vector<8x96xf32> to vector<8x32xf32>
    %164 = vector.extract_strided_slice %159 {offsets = [0, 64], sizes = [8, 32], strides = [1, 1]} : vector<8x96xf32> to vector<8x32xf32>
    %165 = arith.mulf %163, %124 : vector<8x32xf32>
    %166 = arith.mulf %162, %161 : vector<8x32xf32>
    %167 = arith.addf %165, %166 : vector<8x32xf32>
    %168 = math.tanh %167 : vector<8x32xf32>
    %169 = arith.mulf %164, %168 : vector<8x32xf32>
    %170 = vector.extract_strided_slice %153 {offsets = [0, 0], sizes = [8, 96], strides = [1, 1]} : vector<8x128xf32> to vector<8x96xf32>
    %171 = arith.negf %170 : vector<8x96xf32>
    %172 = math.exp %171 : vector<8x96xf32>
    %cst_51 = arith.constant 1.000000e+00 : f32
    %173 = vector.broadcast %cst_51 : f32 to vector<8x96xf32>
    %174 = arith.addf %173, %172 : vector<8x96xf32>
    %175 = arith.divf %173, %174 : vector<8x96xf32>
    %176 = vector.extract_strided_slice %153 {offsets = [0, 96], sizes = [8, 32], strides = [1, 1]} : vector<8x128xf32> to vector<8x32xf32>
    %177 = math.tanh %176 : vector<8x32xf32>
    %178 = vector.extract_strided_slice %175 {offsets = [0, 0], sizes = [8, 32], strides = [1, 1]} : vector<8x96xf32> to vector<8x32xf32>
    %179 = vector.extract_strided_slice %175 {offsets = [0, 32], sizes = [8, 32], strides = [1, 1]} : vector<8x96xf32> to vector<8x32xf32>
    %180 = vector.extract_strided_slice %175 {offsets = [0, 64], sizes = [8, 32], strides = [1, 1]} : vector<8x96xf32> to vector<8x32xf32>
    %181 = arith.mulf %179, %140 : vector<8x32xf32>
    %182 = arith.mulf %178, %177 : vector<8x32xf32>
    %183 = arith.addf %181, %182 : vector<8x32xf32>
    %184 = math.tanh %183 : vector<8x32xf32>
    %185 = arith.mulf %180, %184 : vector<8x32xf32>
    %c24_52 = arith.constant 24 : index
    %c0_53 = arith.constant 0 : index
    %186 = vector.load %arg6[%c24_52, %c0_53] : memref<64x32xf32, #tpu.memory_space<vmem>>, vector<8x32xf32>
    tpu.vector_store %arg6[%c24_52, %c0_53], %169 {strides = array<i32>} : memref<64x32xf32, #tpu.memory_space<vmem>>, vector<8x32xf32>,
    %c32_54 = arith.constant 32 : index
    %c0_55 = arith.constant 0 : index
    %187 = vector.load %arg7[%c32_54, %c0_55] : memref<64x32xf32, #tpu.memory_space<vmem>>, vector<8x32xf32>
    tpu.vector_store %arg7[%c32_54, %c0_55], %185 {strides = array<i32>} : memref<64x32xf32, #tpu.memory_space<vmem>>, vector<8x32xf32>,
    %188 = tpu.concatenate %169, %185 in 1 : vector<8x32xf32>, vector<8x32xf32> -> vector<8x64xf32>
    %189 = arith.truncf %188 : vector<8x64xf32> to vector<8x64xbf16>
    %cst_56 = arith.constant dense<0.000000e+00> : vector<8x256xf32>
    %190 = tpu.matmul %189, %13, %cst_56 {dimension_numbers = #tpu.dot_dimension_numbers<[1], [0], [0], [1], [0, 0, 1, 1], [], []>} : vector<8x64xbf16>, vector<64x256xbf16>, vector<8x256xf32> -> vector<8x256xf32>
    %c32_57 = arith.constant 32 : index
    %c0_58 = arith.constant 0 : index
    %191 = vector.load %arg9[%c32_57, %c0_58] : memref<64x128xf32, #tpu.memory_space<vmem>>, vector<8x128xf32>
    %192 = vector.extract_strided_slice %190 {offsets = [0, 0], sizes = [8, 128], strides = [1, 1]} : vector<8x256xf32> to vector<8x128xf32>
    %193 = arith.addf %191, %192 : vector<8x128xf32>
    %c24_59 = arith.constant 24 : index
    %c0_60 = arith.constant 0 : index
    %194 = vector.load %arg10[%c24_59, %c0_60] : memref<64x128xf32, #tpu.memory_space<vmem>>, vector<8x128xf32>
    %195 = vector.extract_strided_slice %190 {offsets = [0, 128], sizes = [8, 128], strides = [1, 1]} : vector<8x256xf32> to vector<8x128xf32>
    %196 = arith.addf %194, %195 : vector<8x128xf32>
    %197 = vector.extract_strided_slice %193 {offsets = [0, 0], sizes = [8, 96], strides = [1, 1]} : vector<8x128xf32> to vector<8x96xf32>
    %198 = arith.negf %197 : vector<8x96xf32>
    %199 = math.exp %198 : vector<8x96xf32>
    %cst_61 = arith.constant 1.000000e+00 : f32
    %200 = vector.broadcast %cst_61 : f32 to vector<8x96xf32>
    %201 = arith.addf %200, %199 : vector<8x96xf32>
    %202 = arith.divf %200, %201 : vector<8x96xf32>
    %203 = vector.extract_strided_slice %193 {offsets = [0, 96], sizes = [8, 32], strides = [1, 1]} : vector<8x128xf32> to vector<8x32xf32>
    %204 = math.tanh %203 : vector<8x32xf32>
    %205 = vector.extract_strided_slice %202 {offsets = [0, 0], sizes = [8, 32], strides = [1, 1]} : vector<8x96xf32> to vector<8x32xf32>
    %206 = vector.extract_strided_slice %202 {offsets = [0, 32], sizes = [8, 32], strides = [1, 1]} : vector<8x96xf32> to vector<8x32xf32>
    %207 = vector.extract_strided_slice %202 {offsets = [0, 64], sizes = [8, 32], strides = [1, 1]} : vector<8x96xf32> to vector<8x32xf32>
    %208 = arith.mulf %206, %167 : vector<8x32xf32>
    %209 = arith.mulf %205, %204 : vector<8x32xf32>
    %210 = arith.addf %208, %209 : vector<8x32xf32>
    %211 = math.tanh %210 : vector<8x32xf32>
    %212 = arith.mulf %207, %211 : vector<8x32xf32>
    %213 = vector.extract_strided_slice %196 {offsets = [0, 0], sizes = [8, 96], strides = [1, 1]} : vector<8x128xf32> to vector<8x96xf32>
    %214 = arith.negf %213 : vector<8x96xf32>
    %215 = math.exp %214 : vector<8x96xf32>
    %cst_62 = arith.constant 1.000000e+00 : f32
    %216 = vector.broadcast %cst_62 : f32 to vector<8x96xf32>
    %217 = arith.addf %216, %215 : vector<8x96xf32>
    %218 = arith.divf %216, %217 : vector<8x96xf32>
    %219 = vector.extract_strided_slice %196 {offsets = [0, 96], sizes = [8, 32], strides = [1, 1]} : vector<8x128xf32> to vector<8x32xf32>
    %220 = math.tanh %219 : vector<8x32xf32>
    %221 = vector.extract_strided_slice %218 {offsets = [0, 0], sizes = [8, 32], strides = [1, 1]} : vector<8x96xf32> to vector<8x32xf32>
    %222 = vector.extract_strided_slice %218 {offsets = [0, 32], sizes = [8, 32], strides = [1, 1]} : vector<8x96xf32> to vector<8x32xf32>
    %223 = vector.extract_strided_slice %218 {offsets = [0, 64], sizes = [8, 32], strides = [1, 1]} : vector<8x96xf32> to vector<8x32xf32>
    %224 = arith.mulf %222, %183 : vector<8x32xf32>
    %225 = arith.mulf %221, %220 : vector<8x32xf32>
    %226 = arith.addf %224, %225 : vector<8x32xf32>
    %227 = math.tanh %226 : vector<8x32xf32>
    %228 = arith.mulf %223, %227 : vector<8x32xf32>
    %c32_63 = arith.constant 32 : index
    %c0_64 = arith.constant 0 : index
    %229 = vector.load %arg6[%c32_63, %c0_64] : memref<64x32xf32, #tpu.memory_space<vmem>>, vector<8x32xf32>
    tpu.vector_store %arg6[%c32_63, %c0_64], %212 {strides = array<i32>} : memref<64x32xf32, #tpu.memory_space<vmem>>, vector<8x32xf32>,
    %c24_65 = arith.constant 24 : index
    %c0_66 = arith.constant 0 : index
    %230 = vector.load %arg7[%c24_65, %c0_66] : memref<64x32xf32, #tpu.memory_space<vmem>>, vector<8x32xf32>
    tpu.vector_store %arg7[%c24_65, %c0_66], %228 {strides = array<i32>} : memref<64x32xf32, #tpu.memory_space<vmem>>, vector<8x32xf32>,
    %231 = tpu.concatenate %212, %228 in 1 : vector<8x32xf32>, vector<8x32xf32> -> vector<8x64xf32>
    %232 = arith.truncf %231 : vector<8x64xf32> to vector<8x64xbf16>
    %cst_67 = arith.constant dense<0.000000e+00> : vector<8x256xf32>
    %233 = tpu.matmul %232, %13, %cst_67 {dimension_numbers = #tpu.dot_dimension_numbers<[1], [0], [0], [1], [0, 0, 1, 1], [], []>} : vector<8x64xbf16>, vector<64x256xbf16>, vector<8x256xf32> -> vector<8x256xf32>
    %c40_68 = arith.constant 40 : index
    %c0_69 = arith.constant 0 : index
    %234 = vector.load %arg9[%c40_68, %c0_69] : memref<64x128xf32, #tpu.memory_space<vmem>>, vector<8x128xf32>
    %235 = vector.extract_strided_slice %233 {offsets = [0, 0], sizes = [8, 128], strides = [1, 1]} : vector<8x256xf32> to vector<8x128xf32>
    %236 = arith.addf %234, %235 : vector<8x128xf32>
    %c16_70 = arith.constant 16 : index
    %c0_71 = arith.constant 0 : index
    %237 = vector.load %arg10[%c16_70, %c0_71] : memref<64x128xf32, #tpu.memory_space<vmem>>, vector<8x128xf32>
    %238 = vector.extract_strided_slice %233 {offsets = [0, 128], sizes = [8, 128], strides = [1, 1]} : vector<8x256xf32> to vector<8x128xf32>
    %239 = arith.addf %237, %238 : vector<8x128xf32>
    %240 = vector.extract_strided_slice %236 {offsets = [0, 0], sizes = [8, 96], strides = [1, 1]} : vector<8x128xf32> to vector<8x96xf32>
    %241 = arith.negf %240 : vector<8x96xf32>
    %242 = math.exp %241 : vector<8x96xf32>
    %cst_72 = arith.constant 1.000000e+00 : f32
    %243 = vector.broadcast %cst_72 : f32 to vector<8x96xf32>
    %244 = arith.addf %243, %242 : vector<8x96xf32>
    %245 = arith.divf %243, %244 : vector<8x96xf32>
    %246 = vector.extract_strided_slice %236 {offsets = [0, 96], sizes = [8, 32], strides = [1, 1]} : vector<8x128xf32> to vector<8x32xf32>
    %247 = math.tanh %246 : vector<8x32xf32>
    %248 = vector.extract_strided_slice %245 {offsets = [0, 0], sizes = [8, 32], strides = [1, 1]} : vector<8x96xf32> to vector<8x32xf32>
    %249 = vector.extract_strided_slice %245 {offsets = [0, 32], sizes = [8, 32], strides = [1, 1]} : vector<8x96xf32> to vector<8x32xf32>
    %250 = vector.extract_strided_slice %245 {offsets = [0, 64], sizes = [8, 32], strides = [1, 1]} : vector<8x96xf32> to vector<8x32xf32>
    %251 = arith.mulf %249, %210 : vector<8x32xf32>
    %252 = arith.mulf %248, %247 : vector<8x32xf32>
    %253 = arith.addf %251, %252 : vector<8x32xf32>
    %254 = math.tanh %253 : vector<8x32xf32>
    %255 = arith.mulf %250, %254 : vector<8x32xf32>
    %256 = vector.extract_strided_slice %239 {offsets = [0, 0], sizes = [8, 96], strides = [1, 1]} : vector<8x128xf32> to vector<8x96xf32>
    %257 = arith.negf %256 : vector<8x96xf32>
    %258 = math.exp %257 : vector<8x96xf32>
    %cst_73 = arith.constant 1.000000e+00 : f32
    %259 = vector.broadcast %cst_73 : f32 to vector<8x96xf32>
    %260 = arith.addf %259, %258 : vector<8x96xf32>
    %261 = arith.divf %259, %260 : vector<8x96xf32>
    %262 = vector.extract_strided_slice %239 {offsets = [0, 96], sizes = [8, 32], strides = [1, 1]} : vector<8x128xf32> to vector<8x32xf32>
    %263 = math.tanh %262 : vector<8x32xf32>
    %264 = vector.extract_strided_slice %261 {offsets = [0, 0], sizes = [8, 32], strides = [1, 1]} : vector<8x96xf32> to vector<8x32xf32>
    %265 = vector.extract_strided_slice %261 {offsets = [0, 32], sizes = [8, 32], strides = [1, 1]} : vector<8x96xf32> to vector<8x32xf32>
    %266 = vector.extract_strided_slice %261 {offsets = [0, 64], sizes = [8, 32], strides = [1, 1]} : vector<8x96xf32> to vector<8x32xf32>
    %267 = arith.mulf %265, %226 : vector<8x32xf32>
    %268 = arith.mulf %264, %263 : vector<8x32xf32>
    %269 = arith.addf %267, %268 : vector<8x32xf32>
    %270 = math.tanh %269 : vector<8x32xf32>
    %271 = arith.mulf %266, %270 : vector<8x32xf32>
    %c40_74 = arith.constant 40 : index
    %c0_75 = arith.constant 0 : index
    %272 = vector.load %arg6[%c40_74, %c0_75] : memref<64x32xf32, #tpu.memory_space<vmem>>, vector<8x32xf32>
    tpu.vector_store %arg6[%c40_74, %c0_75], %255 {strides = array<i32>} : memref<64x32xf32, #tpu.memory_space<vmem>>, vector<8x32xf32>,
    %c16_76 = arith.constant 16 : index
    %c0_77 = arith.constant 0 : index
    %273 = vector.load %arg7[%c16_76, %c0_77] : memref<64x32xf32, #tpu.memory_space<vmem>>, vector<8x32xf32>
    tpu.vector_store %arg7[%c16_76, %c0_77], %271 {strides = array<i32>} : memref<64x32xf32, #tpu.memory_space<vmem>>, vector<8x32xf32>,
    %274 = tpu.concatenate %255, %271 in 1 : vector<8x32xf32>, vector<8x32xf32> -> vector<8x64xf32>
    %275 = arith.truncf %274 : vector<8x64xf32> to vector<8x64xbf16>
    %cst_78 = arith.constant dense<0.000000e+00> : vector<8x256xf32>
    %276 = tpu.matmul %275, %13, %cst_78 {dimension_numbers = #tpu.dot_dimension_numbers<[1], [0], [0], [1], [0, 0, 1, 1], [], []>} : vector<8x64xbf16>, vector<64x256xbf16>, vector<8x256xf32> -> vector<8x256xf32>
    %c48_79 = arith.constant 48 : index
    %c0_80 = arith.constant 0 : index
    %277 = vector.load %arg9[%c48_79, %c0_80] : memref<64x128xf32, #tpu.memory_space<vmem>>, vector<8x128xf32>
    %278 = vector.extract_strided_slice %276 {offsets = [0, 0], sizes = [8, 128], strides = [1, 1]} : vector<8x256xf32> to vector<8x128xf32>
    %279 = arith.addf %277, %278 : vector<8x128xf32>
    %c8_81 = arith.constant 8 : index
    %c0_82 = arith.constant 0 : index
    %280 = vector.load %arg10[%c8_81, %c0_82] : memref<64x128xf32, #tpu.memory_space<vmem>>, vector<8x128xf32>
    %281 = vector.extract_strided_slice %276 {offsets = [0, 128], sizes = [8, 128], strides = [1, 1]} : vector<8x256xf32> to vector<8x128xf32>
    %282 = arith.addf %280, %281 : vector<8x128xf32>
    %283 = vector.extract_strided_slice %279 {offsets = [0, 0], sizes = [8, 96], strides = [1, 1]} : vector<8x128xf32> to vector<8x96xf32>
    %284 = arith.negf %283 : vector<8x96xf32>
    %285 = math.exp %284 : vector<8x96xf32>
    %cst_83 = arith.constant 1.000000e+00 : f32
    %286 = vector.broadcast %cst_83 : f32 to vector<8x96xf32>
    %287 = arith.addf %286, %285 : vector<8x96xf32>
    %288 = arith.divf %286, %287 : vector<8x96xf32>
    %289 = vector.extract_strided_slice %279 {offsets = [0, 96], sizes = [8, 32], strides = [1, 1]} : vector<8x128xf32> to vector<8x32xf32>
    %290 = math.tanh %289 : vector<8x32xf32>
    %291 = vector.extract_strided_slice %288 {offsets = [0, 0], sizes = [8, 32], strides = [1, 1]} : vector<8x96xf32> to vector<8x32xf32>
    %292 = vector.extract_strided_slice %288 {offsets = [0, 32], sizes = [8, 32], strides = [1, 1]} : vector<8x96xf32> to vector<8x32xf32>
    %293 = vector.extract_strided_slice %288 {offsets = [0, 64], sizes = [8, 32], strides = [1, 1]} : vector<8x96xf32> to vector<8x32xf32>
    %294 = arith.mulf %292, %253 : vector<8x32xf32>
    %295 = arith.mulf %291, %290 : vector<8x32xf32>
    %296 = arith.addf %294, %295 : vector<8x32xf32>
    %297 = math.tanh %296 : vector<8x32xf32>
    %298 = arith.mulf %293, %297 : vector<8x32xf32>
    %299 = vector.extract_strided_slice %282 {offsets = [0, 0], sizes = [8, 96], strides = [1, 1]} : vector<8x128xf32> to vector<8x96xf32>
    %300 = arith.negf %299 : vector<8x96xf32>
    %301 = math.exp %300 : vector<8x96xf32>
    %cst_84 = arith.constant 1.000000e+00 : f32
    %302 = vector.broadcast %cst_84 : f32 to vector<8x96xf32>
    %303 = arith.addf %302, %301 : vector<8x96xf32>
    %304 = arith.divf %302, %303 : vector<8x96xf32>
    %305 = vector.extract_strided_slice %282 {offsets = [0, 96], sizes = [8, 32], strides = [1, 1]} : vector<8x128xf32> to vector<8x32xf32>
    %306 = math.tanh %305 : vector<8x32xf32>
    %307 = vector.extract_strided_slice %304 {offsets = [0, 0], sizes = [8, 32], strides = [1, 1]} : vector<8x96xf32> to vector<8x32xf32>
    %308 = vector.extract_strided_slice %304 {offsets = [0, 32], sizes = [8, 32], strides = [1, 1]} : vector<8x96xf32> to vector<8x32xf32>
    %309 = vector.extract_strided_slice %304 {offsets = [0, 64], sizes = [8, 32], strides = [1, 1]} : vector<8x96xf32> to vector<8x32xf32>
    %310 = arith.mulf %308, %269 : vector<8x32xf32>
    %311 = arith.mulf %307, %306 : vector<8x32xf32>
    %312 = arith.addf %310, %311 : vector<8x32xf32>
    %313 = math.tanh %312 : vector<8x32xf32>
    %314 = arith.mulf %309, %313 : vector<8x32xf32>
    %c48_85 = arith.constant 48 : index
    %c0_86 = arith.constant 0 : index
    %315 = vector.load %arg6[%c48_85, %c0_86] : memref<64x32xf32, #tpu.memory_space<vmem>>, vector<8x32xf32>
    tpu.vector_store %arg6[%c48_85, %c0_86], %298 {strides = array<i32>} : memref<64x32xf32, #tpu.memory_space<vmem>>, vector<8x32xf32>,
    %c8_87 = arith.constant 8 : index
    %c0_88 = arith.constant 0 : index
    %316 = vector.load %arg7[%c8_87, %c0_88] : memref<64x32xf32, #tpu.memory_space<vmem>>, vector<8x32xf32>
    tpu.vector_store %arg7[%c8_87, %c0_88], %314 {strides = array<i32>} : memref<64x32xf32, #tpu.memory_space<vmem>>, vector<8x32xf32>,
    %317 = tpu.concatenate %298, %314 in 1 : vector<8x32xf32>, vector<8x32xf32> -> vector<8x64xf32>
    %318 = arith.truncf %317 : vector<8x64xf32> to vector<8x64xbf16>
    %cst_89 = arith.constant dense<0.000000e+00> : vector<8x256xf32>
    %319 = tpu.matmul %318, %13, %cst_89 {dimension_numbers = #tpu.dot_dimension_numbers<[1], [0], [0], [1], [0, 0, 1, 1], [], []>} : vector<8x64xbf16>, vector<64x256xbf16>, vector<8x256xf32> -> vector<8x256xf32>
    %c56_90 = arith.constant 56 : index
    %c0_91 = arith.constant 0 : index
    %320 = vector.load %arg9[%c56_90, %c0_91] : memref<64x128xf32, #tpu.memory_space<vmem>>, vector<8x128xf32>
    %321 = vector.extract_strided_slice %319 {offsets = [0, 0], sizes = [8, 128], strides = [1, 1]} : vector<8x256xf32> to vector<8x128xf32>
    %322 = arith.addf %320, %321 : vector<8x128xf32>
    %c0_92 = arith.constant 0 : index
    %c0_93 = arith.constant 0 : index
    %323 = vector.load %arg10[%c0_92, %c0_93] : memref<64x128xf32, #tpu.memory_space<vmem>>, vector<8x128xf32>
    %324 = vector.extract_strided_slice %319 {offsets = [0, 128], sizes = [8, 128], strides = [1, 1]} : vector<8x256xf32> to vector<8x128xf32>
    %325 = arith.addf %323, %324 : vector<8x128xf32>
    %326 = vector.extract_strided_slice %322 {offsets = [0, 0], sizes = [8, 96], strides = [1, 1]} : vector<8x128xf32> to vector<8x96xf32>
    %327 = arith.negf %326 : vector<8x96xf32>
    %328 = math.exp %327 : vector<8x96xf32>
    %cst_94 = arith.constant 1.000000e+00 : f32
    %329 = vector.broadcast %cst_94 : f32 to vector<8x96xf32>
    %330 = arith.addf %329, %328 : vector<8x96xf32>
    %331 = arith.divf %329, %330 : vector<8x96xf32>
    %332 = vector.extract_strided_slice %322 {offsets = [0, 96], sizes = [8, 32], strides = [1, 1]} : vector<8x128xf32> to vector<8x32xf32>
    %333 = math.tanh %332 : vector<8x32xf32>
    %334 = vector.extract_strided_slice %331 {offsets = [0, 0], sizes = [8, 32], strides = [1, 1]} : vector<8x96xf32> to vector<8x32xf32>
    %335 = vector.extract_strided_slice %331 {offsets = [0, 32], sizes = [8, 32], strides = [1, 1]} : vector<8x96xf32> to vector<8x32xf32>
    %336 = vector.extract_strided_slice %331 {offsets = [0, 64], sizes = [8, 32], strides = [1, 1]} : vector<8x96xf32> to vector<8x32xf32>
    %337 = arith.mulf %335, %296 : vector<8x32xf32>
    %338 = arith.mulf %334, %333 : vector<8x32xf32>
    %339 = arith.addf %337, %338 : vector<8x32xf32>
    %340 = math.tanh %339 : vector<8x32xf32>
    %341 = arith.mulf %336, %340 : vector<8x32xf32>
    %342 = vector.extract_strided_slice %325 {offsets = [0, 0], sizes = [8, 96], strides = [1, 1]} : vector<8x128xf32> to vector<8x96xf32>
    %343 = arith.negf %342 : vector<8x96xf32>
    %344 = math.exp %343 : vector<8x96xf32>
    %cst_95 = arith.constant 1.000000e+00 : f32
    %345 = vector.broadcast %cst_95 : f32 to vector<8x96xf32>
    %346 = arith.addf %345, %344 : vector<8x96xf32>
    %347 = arith.divf %345, %346 : vector<8x96xf32>
    %348 = vector.extract_strided_slice %325 {offsets = [0, 96], sizes = [8, 32], strides = [1, 1]} : vector<8x128xf32> to vector<8x32xf32>
    %349 = math.tanh %348 : vector<8x32xf32>
    %350 = vector.extract_strided_slice %347 {offsets = [0, 0], sizes = [8, 32], strides = [1, 1]} : vector<8x96xf32> to vector<8x32xf32>
    %351 = vector.extract_strided_slice %347 {offsets = [0, 32], sizes = [8, 32], strides = [1, 1]} : vector<8x96xf32> to vector<8x32xf32>
    %352 = vector.extract_strided_slice %347 {offsets = [0, 64], sizes = [8, 32], strides = [1, 1]} : vector<8x96xf32> to vector<8x32xf32>
    %353 = arith.mulf %351, %312 : vector<8x32xf32>
    %354 = arith.mulf %350, %349 : vector<8x32xf32>
    %355 = arith.addf %353, %354 : vector<8x32xf32>
    %356 = math.tanh %355 : vector<8x32xf32>
    %357 = arith.mulf %352, %356 : vector<8x32xf32>
    %c56_96 = arith.constant 56 : index
    %c0_97 = arith.constant 0 : index
    %358 = vector.load %arg6[%c56_96, %c0_97] : memref<64x32xf32, #tpu.memory_space<vmem>>, vector<8x32xf32>
    tpu.vector_store %arg6[%c56_96, %c0_97], %341 {strides = array<i32>} : memref<64x32xf32, #tpu.memory_space<vmem>>, vector<8x32xf32>,
    %c0_98 = arith.constant 0 : index
    %c0_99 = arith.constant 0 : index
    %359 = vector.load %arg7[%c0_98, %c0_99] : memref<64x32xf32, #tpu.memory_space<vmem>>, vector<8x32xf32>
    tpu.vector_store %arg7[%c0_98, %c0_99], %357 {strides = array<i32>} : memref<64x32xf32, #tpu.memory_space<vmem>>, vector<8x32xf32>,
    %360 = tpu.concatenate %341, %357 in 1 : vector<8x32xf32>, vector<8x32xf32> -> vector<8x64xf32>
    %c0_100 = arith.constant 0 : index
    %c0_101 = arith.constant 0 : index
    %361 = vector.load %arg8[%c0_100, %c0_101] : memref<8x64xf32, #tpu.memory_space<vmem>>, vector<8x64xf32>
    tpu.vector_store %arg8[%c0_100, %c0_101], %360 {strides = array<i32>} : memref<8x64xf32, #tpu.memory_space<vmem>>, vector<8x64xf32>,
    return
  }
}

module attributes {stable_mosaic.version = 11 : i64} {
  func.func @_heads_kernel(%arg0: memref<2x64xf32, #tpu.memory_space<vmem>>, %arg1: memref<4x64xf32, #tpu.memory_space<vmem>>, %arg2: memref<64x128xf32, #tpu.memory_space<vmem>>, %arg3: memref<1x128xf32, #tpu.memory_space<vmem>>, %arg4: memref<64x128xf32, #tpu.memory_space<vmem>>, %arg5: memref<1x128xf32, #tpu.memory_space<vmem>>, %arg6: memref<64x64xf32, #tpu.memory_space<vmem>>, %arg7: memref<1x64xf32, #tpu.memory_space<vmem>>, %arg8: memref<2x64xf32, #tpu.memory_space<vmem>>, %arg9: memref<4x64xf32, #tpu.memory_space<vmem>>, %arg10: memref<2x64xf32, #tpu.memory_space<vmem>>, %arg11: memref<2x1xf32, #tpu.memory_space<vmem>>, %arg12: memref<2x1xf32, #tpu.memory_space<vmem>>, %arg13: memref<1x1xf32, #tpu.memory_space<vmem>>, %arg14: memref<1x1xf32, #tpu.memory_space<vmem>>) attributes {dimension_semantics = [], scalar_prefetch = 0 : i64, scratch_operands = 0 : i64, tpu.core_type = #tpu.core_type<tc>} {
    %c0 = arith.constant 0 : index
    %c0_0 = arith.constant 0 : index
    %0 = vector.load %arg0[%c0, %c0_0] : memref<2x64xf32, #tpu.memory_space<vmem>>, vector<2x64xf32>
    %c0_1 = arith.constant 0 : index
    %c0_2 = arith.constant 0 : index
    %1 = vector.load %arg2[%c0_1, %c0_2] : memref<64x128xf32, #tpu.memory_space<vmem>>, vector<64x128xf32>
    %cst = arith.constant dense<0.000000e+00> : vector<2x128xf32>
    %2 = tpu.matmul %0, %1, %cst {dimension_numbers = #tpu.dot_dimension_numbers<[1], [0], [0], [1], [0, 0, 1, 1], [], []>} : vector<2x64xf32>, vector<64x128xf32>, vector<2x128xf32> -> vector<2x128xf32>
    %c0_3 = arith.constant 0 : index
    %c0_4 = arith.constant 0 : index
    %3 = vector.load %arg3[%c0_3, %c0_4] : memref<1x128xf32, #tpu.memory_space<vmem>>, vector<1x128xf32>
    %4 = vector.broadcast %3 : vector<1x128xf32> to vector<2x128xf32>
    %5 = arith.addf %2, %4 : vector<2x128xf32>
    %c0_5 = arith.constant 0 : index
    %c0_6 = arith.constant 0 : index
    %6 = vector.load %arg1[%c0_5, %c0_6] : memref<4x64xf32, #tpu.memory_space<vmem>>, vector<4x64xf32>
    %c0_7 = arith.constant 0 : index
    %c0_8 = arith.constant 0 : index
    %7 = vector.load %arg4[%c0_7, %c0_8] : memref<64x128xf32, #tpu.memory_space<vmem>>, vector<64x128xf32>
    %cst_9 = arith.constant dense<0.000000e+00> : vector<4x128xf32>
    %8 = tpu.matmul %6, %7, %cst_9 {dimension_numbers = #tpu.dot_dimension_numbers<[1], [0], [0], [1], [0, 0, 1, 1], [], []>} : vector<4x64xf32>, vector<64x128xf32>, vector<4x128xf32> -> vector<4x128xf32>
    %c0_10 = arith.constant 0 : index
    %c0_11 = arith.constant 0 : index
    %9 = vector.load %arg5[%c0_10, %c0_11] : memref<1x128xf32, #tpu.memory_space<vmem>>, vector<1x128xf32>
    %10 = vector.broadcast %9 : vector<1x128xf32> to vector<4x128xf32>
    %11 = arith.addf %8, %10 : vector<4x128xf32>
    %12 = vector.extract_strided_slice %5 {offsets = [0, 0], sizes = [2, 64], strides = [1, 1]} : vector<2x128xf32> to vector<2x64xf32>
    %13 = vector.extract_strided_slice %5 {offsets = [0, 64], sizes = [2, 64], strides = [1, 1]} : vector<2x128xf32> to vector<2x64xf32>
    %14 = vector.extract_strided_slice %11 {offsets = [0, 0], sizes = [4, 64], strides = [1, 1]} : vector<4x128xf32> to vector<4x64xf32>
    %15 = vector.extract_strided_slice %11 {offsets = [0, 64], sizes = [4, 64], strides = [1, 1]} : vector<4x128xf32> to vector<4x64xf32>
    %c0_12 = arith.constant 0 : index
    %c0_13 = arith.constant 0 : index
    %16 = vector.load %arg8[%c0_12, %c0_13] : memref<2x64xf32, #tpu.memory_space<vmem>>, vector<2x64xf32>
    %cst_14 = arith.constant 5.000000e-01 : f32
    %17 = vector.broadcast %cst_14 : f32 to vector<2x64xf32>
    %18 = arith.mulf %17, %13 : vector<2x64xf32>
    %19 = math.exp %18 : vector<2x64xf32>
    %20 = arith.mulf %16, %19 : vector<2x64xf32>
    %21 = arith.addf %20, %12 : vector<2x64xf32>
    %c0_15 = arith.constant 0 : index
    %c0_16 = arith.constant 0 : index
    %22 = vector.load %arg9[%c0_15, %c0_16] : memref<4x64xf32, #tpu.memory_space<vmem>>, vector<4x64xf32>
    %cst_17 = arith.constant 5.000000e-01 : f32
    %23 = vector.broadcast %cst_17 : f32 to vector<4x64xf32>
    %24 = arith.mulf %23, %15 : vector<4x64xf32>
    %25 = math.exp %24 : vector<4x64xf32>
    %26 = arith.mulf %22, %25 : vector<4x64xf32>
    %27 = arith.addf %26, %14 : vector<4x64xf32>
    %28 = vector.extract_strided_slice %27 {offsets = [0, 0], sizes = [2, 64], strides = [1, 1]} : vector<4x64xf32> to vector<2x64xf32>
    %29 = vector.extract_strided_slice %27 {offsets = [2, 0], sizes = [2, 64], strides = [1, 1]} : vector<4x64xf32> to vector<2x64xf32>
    %30 = arith.mulf %21, %28 : vector<2x64xf32>
    %cst_18 = arith.constant dense<0.000000e+00> : vector<2xf32>
    %31 = vector.multi_reduction <add>, %30, %cst_18 [1] : vector<2x64xf32> to vector<2xf32>
    %32 = vector.shape_cast %31 : vector<2xf32> to vector<2x1xf32>
    %33 = arith.mulf %21, %21 : vector<2x64xf32>
    %cst_19 = arith.constant dense<0.000000e+00> : vector<2xf32>
    %34 = vector.multi_reduction <add>, %33, %cst_19 [1] : vector<2x64xf32> to vector<2xf32>
    %35 = vector.shape_cast %34 : vector<2xf32> to vector<2x1xf32>
    %36 = math.sqrt %35 : vector<2x1xf32>
    %37 = arith.mulf %28, %28 : vector<2x64xf32>
    %cst_20 = arith.constant dense<0.000000e+00> : vector<2xf32>
    %38 = vector.multi_reduction <add>, %37, %cst_20 [1] : vector<2x64xf32> to vector<2xf32>
    %39 = vector.shape_cast %38 : vector<2xf32> to vector<2x1xf32>
    %40 = math.sqrt %39 : vector<2x1xf32>
    %cst_21 = arith.constant 9.99999993E-9 : f32
    %41 = vector.broadcast %cst_21 : f32 to vector<2x1xf32>
    %42 = arith.maximumf %36, %41 : vector<2x1xf32>
    %cst_22 = arith.constant 9.99999993E-9 : f32
    %43 = vector.broadcast %cst_22 : f32 to vector<2x1xf32>
    %44 = arith.maximumf %40, %43 : vector<2x1xf32>
    %45 = arith.mulf %42, %44 : vector<2x1xf32>
    %46 = arith.divf %32, %45 : vector<2x1xf32>
    %47 = arith.mulf %21, %29 : vector<2x64xf32>
    %cst_23 = arith.constant dense<0.000000e+00> : vector<2xf32>
    %48 = vector.multi_reduction <add>, %47, %cst_23 [1] : vector<2x64xf32> to vector<2xf32>
    %49 = vector.shape_cast %48 : vector<2xf32> to vector<2x1xf32>
    %50 = arith.mulf %21, %21 : vector<2x64xf32>
    %cst_24 = arith.constant dense<0.000000e+00> : vector<2xf32>
    %51 = vector.multi_reduction <add>, %50, %cst_24 [1] : vector<2x64xf32> to vector<2xf32>
    %52 = vector.shape_cast %51 : vector<2xf32> to vector<2x1xf32>
    %53 = math.sqrt %52 : vector<2x1xf32>
    %54 = arith.mulf %29, %29 : vector<2x64xf32>
    %cst_25 = arith.constant dense<0.000000e+00> : vector<2xf32>
    %55 = vector.multi_reduction <add>, %54, %cst_25 [1] : vector<2x64xf32> to vector<2xf32>
    %56 = vector.shape_cast %55 : vector<2xf32> to vector<2x1xf32>
    %57 = math.sqrt %56 : vector<2x1xf32>
    %cst_26 = arith.constant 9.99999993E-9 : f32
    %58 = vector.broadcast %cst_26 : f32 to vector<2x1xf32>
    %59 = arith.maximumf %53, %58 : vector<2x1xf32>
    %cst_27 = arith.constant 9.99999993E-9 : f32
    %60 = vector.broadcast %cst_27 : f32 to vector<2x1xf32>
    %61 = arith.maximumf %57, %60 : vector<2x1xf32>
    %62 = arith.mulf %59, %61 : vector<2x1xf32>
    %63 = arith.divf %49, %62 : vector<2x1xf32>
    %c0_28 = arith.constant 0 : index
    %c0_29 = arith.constant 0 : index
    %64 = vector.load %arg11[%c0_28, %c0_29] : memref<2x1xf32, #tpu.memory_space<vmem>>, vector<2x1xf32>
    tpu.vector_store %arg11[%c0_28, %c0_29], %46 {strides = array<i32>} : memref<2x1xf32, #tpu.memory_space<vmem>>, vector<2x1xf32>,
    %c0_30 = arith.constant 0 : index
    %c0_31 = arith.constant 0 : index
    %65 = vector.load %arg12[%c0_30, %c0_31] : memref<2x1xf32, #tpu.memory_space<vmem>>, vector<2x1xf32>
    tpu.vector_store %arg12[%c0_30, %c0_31], %63 {strides = array<i32>} : memref<2x1xf32, #tpu.memory_space<vmem>>, vector<2x1xf32>,
    %66 = arith.subf %63, %46 : vector<2x1xf32>
    %cst_32 = arith.constant 5.000000e-01 : f32
    %67 = vector.broadcast %cst_32 : f32 to vector<2x1xf32>
    %68 = arith.addf %66, %67 : vector<2x1xf32>
    %cst_33 = arith.constant 0.000000e+00 : f32
    %69 = vector.broadcast %cst_33 : f32 to vector<2x1xf32>
    %70 = arith.maximumf %69, %68 : vector<2x1xf32>
    %71 = vector.shape_cast %70 : vector<2x1xf32> to vector<1x2x1xf32>
    %cst_34 = arith.constant dense<0.000000e+00> : vector<1xf32>
    %72 = vector.multi_reduction <add>, %71, %cst_34 [1, 2] : vector<1x2x1xf32> to vector<1xf32>
    %73 = vector.shape_cast %72 : vector<1xf32> to vector<1x1x1xf32>
    %74 = vector.extract %73[0, 0, 0] : f32 from vector<1x1x1xf32>
    %cst_35 = arith.constant 2.000000e+00 : f32
    %75 = arith.divf %74, %cst_35 : f32
    %76 = vector.broadcast %75 : f32 to vector<1x1xf32>
    %c0_36 = arith.constant 0 : index
    %c0_37 = arith.constant 0 : index
    %77 = vector.load %arg13[%c0_36, %c0_37] : memref<1x1xf32, #tpu.memory_space<vmem>>, vector<1x1xf32>
    tpu.vector_store %arg13[%c0_36, %c0_37], %76 {strides = array<i32>} : memref<1x1xf32, #tpu.memory_space<vmem>>, vector<1x1xf32>,
    %78 = vector.extract_strided_slice %14 {offsets = [0, 0], sizes = [2, 64], strides = [1, 1]} : vector<4x64xf32> to vector<2x64xf32>
    %79 = vector.extract_strided_slice %15 {offsets = [0, 0], sizes = [2, 64], strides = [1, 1]} : vector<4x64xf32> to vector<2x64xf32>
    %cst_38 = arith.constant -1.000000e+00 : f32
    %80 = vector.broadcast %cst_38 : f32 to vector<2x64xf32>
    %81 = arith.addf %80, %79 : vector<2x64xf32>
    %82 = arith.subf %81, %13 : vector<2x64xf32>
    %83 = math.exp %13 : vector<2x64xf32>
    %84 = arith.subf %12, %78 : vector<2x64xf32>
    %85 = arith.mulf %84, %84 : vector<2x64xf32>
    %86 = arith.addf %83, %85 : vector<2x64xf32>
    %87 = math.exp %79 : vector<2x64xf32>
    %88 = arith.divf %86, %87 : vector<2x64xf32>
    %89 = arith.addf %82, %88 : vector<2x64xf32>
    %90 = vector.shape_cast %89 : vector<2x64xf32> to vector<1x2x64xf32>
    %cst_39 = arith.constant dense<0.000000e+00> : vector<1xf32>
    %91 = vector.multi_reduction <add>, %90, %cst_39 [1, 2] : vector<1x2x64xf32> to vector<1xf32>
    %92 = vector.shape_cast %91 : vector<1xf32> to vector<1x1x1xf32>
    %93 = vector.extract %92[0, 0, 0] : f32 from vector<1x1x1xf32>
    %cst_40 = arith.constant 5.000000e-01 : f32
    %94 = arith.mulf %cst_40, %93 : f32
    %cst_41 = arith.constant 2.000000e+00 : f32
    %95 = arith.divf %94, %cst_41 : f32
    %96 = vector.broadcast %95 : f32 to vector<1x1xf32>
    %c0_42 = arith.constant 0 : index
    %c0_43 = arith.constant 0 : index
    %97 = vector.load %arg14[%c0_42, %c0_43] : memref<1x1xf32, #tpu.memory_space<vmem>>, vector<1x1xf32>
    tpu.vector_store %arg14[%c0_42, %c0_43], %96 {strides = array<i32>} : memref<1x1xf32, #tpu.memory_space<vmem>>, vector<1x1xf32>,
    %c0_44 = arith.constant 0 : index
    %c0_45 = arith.constant 0 : index
    %98 = vector.load %arg6[%c0_44, %c0_45] : memref<64x64xf32, #tpu.memory_space<vmem>>, vector<64x64xf32>
    %cst_46 = arith.constant dense<0.000000e+00> : vector<2x64xf32>
    %99 = tpu.matmul %21, %98, %cst_46 {dimension_numbers = #tpu.dot_dimension_numbers<[1], [0], [0], [1], [0, 0, 1, 1], [], []>} : vector<2x64xf32>, vector<64x64xf32>, vector<2x64xf32> -> vector<2x64xf32>
    %c0_47 = arith.constant 0 : index
    %c0_48 = arith.constant 0 : index
    %100 = vector.load %arg7[%c0_47, %c0_48] : memref<1x64xf32, #tpu.memory_space<vmem>>, vector<1x64xf32>
    %101 = vector.broadcast %100 : vector<1x64xf32> to vector<2x64xf32>
    %102 = arith.addf %99, %101 : vector<2x64xf32>
    %c0_49 = arith.constant 0 : index
    %c0_50 = arith.constant 0 : index
    %103 = vector.load %arg10[%c0_49, %c0_50] : memref<2x64xf32, #tpu.memory_space<vmem>>, vector<2x64xf32>
    tpu.vector_store %arg10[%c0_49, %c0_50], %102 {strides = array<i32>} : memref<2x64xf32, #tpu.memory_space<vmem>>, vector<2x64xf32>,
    return
  }
}

module attributes {stable_mosaic.version = 11 : i64} {
  func.func @_bigru_kernel(%arg0: memref<64x32xbf16, #tpu.memory_space<vmem>>, %arg1: memref<32x96xbf16, #tpu.memory_space<vmem>>, %arg2: memref<32x96xbf16, #tpu.memory_space<vmem>>, %arg3: memref<64x192xbf16, #tpu.memory_space<vmem>>, %arg4: memref<1x96xf32, #tpu.memory_space<vmem>>, %arg5: memref<1x96xf32, #tpu.memory_space<vmem>>, %arg6: memref<1x96xf32, #tpu.memory_space<vmem>>, %arg7: memref<1x96xf32, #tpu.memory_space<vmem>>, %arg8: memref<8x64xf32, #tpu.memory_space<vmem>>, %arg9: memref<64x32xf32, #tpu.memory_space<vmem>>, %arg10: memref<64x32xf32, #tpu.memory_space<vmem>>, %arg11: memref<64x96xf32, #tpu.memory_space<vmem>>, %arg12: memref<64x96xf32, #tpu.memory_space<vmem>>) attributes {dimension_semantics = [], scalar_prefetch = 0 : i64, scratch_operands = 2 : i64, tpu.core_type = #tpu.core_type<tc>} {
    %c0 = arith.constant 0 : index
    %c0_0 = arith.constant 0 : index
    %0 = vector.load %arg0[%c0, %c0_0] : memref<64x32xbf16, #tpu.memory_space<vmem>>, vector<64x32xbf16>
    %c0_1 = arith.constant 0 : index
    %c0_2 = arith.constant 0 : index
    %1 = vector.load %arg1[%c0_1, %c0_2] : memref<32x96xbf16, #tpu.memory_space<vmem>>, vector<32x96xbf16>
    %cst = arith.constant dense<0.000000e+00> : vector<64x96xf32>
    %2 = tpu.matmul %0, %1, %cst {dimension_numbers = #tpu.dot_dimension_numbers<[1], [0], [0], [1], [0, 0, 1, 1], [], []>} : vector<64x32xbf16>, vector<32x96xbf16>, vector<64x96xf32> -> vector<64x96xf32>
    %c0_3 = arith.constant 0 : index
    %c0_4 = arith.constant 0 : index
    %3 = vector.load %arg4[%c0_3, %c0_4] : memref<1x96xf32, #tpu.memory_space<vmem>>, vector<1x96xf32>
    %4 = vector.broadcast %3 : vector<1x96xf32> to vector<64x96xf32>
    %5 = arith.addf %2, %4 : vector<64x96xf32>
    %c0_5 = arith.constant 0 : index
    %c0_6 = arith.constant 0 : index
    %6 = vector.load %arg11[%c0_5, %c0_6] : memref<64x96xf32, #tpu.memory_space<vmem>>, vector<64x96xf32>
    tpu.vector_store %arg11[%c0_5, %c0_6], %5 {strides = array<i32>} : memref<64x96xf32, #tpu.memory_space<vmem>>, vector<64x96xf32>,
    %c0_7 = arith.constant 0 : index
    %c0_8 = arith.constant 0 : index
    %7 = vector.load %arg2[%c0_7, %c0_8] : memref<32x96xbf16, #tpu.memory_space<vmem>>, vector<32x96xbf16>
    %cst_9 = arith.constant dense<0.000000e+00> : vector<64x96xf32>
    %8 = tpu.matmul %0, %7, %cst_9 {dimension_numbers = #tpu.dot_dimension_numbers<[1], [0], [0], [1], [0, 0, 1, 1], [], []>} : vector<64x32xbf16>, vector<32x96xbf16>, vector<64x96xf32> -> vector<64x96xf32>
    %c0_10 = arith.constant 0 : index
    %c0_11 = arith.constant 0 : index
    %9 = vector.load %arg5[%c0_10, %c0_11] : memref<1x96xf32, #tpu.memory_space<vmem>>, vector<1x96xf32>
    %10 = vector.broadcast %9 : vector<1x96xf32> to vector<64x96xf32>
    %11 = arith.addf %8, %10 : vector<64x96xf32>
    %c0_12 = arith.constant 0 : index
    %c0_13 = arith.constant 0 : index
    %12 = vector.load %arg12[%c0_12, %c0_13] : memref<64x96xf32, #tpu.memory_space<vmem>>, vector<64x96xf32>
    tpu.vector_store %arg12[%c0_12, %c0_13], %11 {strides = array<i32>} : memref<64x96xf32, #tpu.memory_space<vmem>>, vector<64x96xf32>,
    %c0_14 = arith.constant 0 : index
    %c0_15 = arith.constant 0 : index
    %13 = vector.load %arg3[%c0_14, %c0_15] : memref<64x192xbf16, #tpu.memory_space<vmem>>, vector<64x192xbf16>
    %c0_16 = arith.constant 0 : index
    %c0_17 = arith.constant 0 : index
    %14 = vector.load %arg6[%c0_16, %c0_17] : memref<1x96xf32, #tpu.memory_space<vmem>>, vector<1x96xf32>
    %c0_18 = arith.constant 0 : index
    %c0_19 = arith.constant 0 : index
    %15 = vector.load %arg7[%c0_18, %c0_19] : memref<1x96xf32, #tpu.memory_space<vmem>>, vector<1x96xf32>
    %c0_20 = arith.constant 0 : index
    %c0_21 = arith.constant 0 : index
    %16 = vector.load %arg8[%c0_20, %c0_21] : memref<8x64xf32, #tpu.memory_space<vmem>>, vector<8x64xf32>
    %17 = arith.truncf %16 : vector<8x64xf32> to vector<8x64xbf16>
    %cst_22 = arith.constant dense<0.000000e+00> : vector<8x192xf32>
    %18 = tpu.matmul %17, %13, %cst_22 {dimension_numbers = #tpu.dot_dimension_numbers<[1], [0], [0], [1], [0, 0, 1, 1], [], []>} : vector<8x64xbf16>, vector<64x192xbf16>, vector<8x192xf32> -> vector<8x192xf32>
    %19 = vector.extract_strided_slice %18 {offsets = [0, 0], sizes = [8, 96], strides = [1, 1]} : vector<8x192xf32> to vector<8x96xf32>
    %20 = vector.broadcast %14 : vector<1x96xf32> to vector<8x96xf32>
    %21 = arith.addf %19, %20 : vector<8x96xf32>
    %22 = vector.extract_strided_slice %18 {offsets = [0, 96], sizes = [8, 96], strides = [1, 1]} : vector<8x192xf32> to vector<8x96xf32>
    %23 = vector.broadcast %15 : vector<1x96xf32> to vector<8x96xf32>
    %24 = arith.addf %22, %23 : vector<8x96xf32>
    %c0_23 = arith.constant 0 : index
    %c0_24 = arith.constant 0 : index
    %25 = vector.load %arg11[%c0_23, %c0_24] : memref<64x96xf32, #tpu.memory_space<vmem>>, vector<8x96xf32>
    %26 = vector.extract_strided_slice %16 {offsets = [0, 0], sizes = [8, 32], strides = [1, 1]} : vector<8x64xf32> to vector<8x32xf32>
    %27 = vector.extract_strided_slice %25 {offsets = [0, 0], sizes = [8, 64], strides = [1, 1]} : vector<8x96xf32> to vector<8x64xf32>
    %28 = vector.extract_strided_slice %21 {offsets = [0, 0], sizes = [8, 64], strides = [1, 1]} : vector<8x96xf32> to vector<8x64xf32>
    %29 = arith.addf %27, %28 : vector<8x64xf32>
    %30 = arith.negf %29 : vector<8x64xf32>
    %31 = math.exp %30 : vector<8x64xf32>
    %cst_25 = arith.constant 1.000000e+00 : f32
    %32 = vector.broadcast %cst_25 : f32 to vector<8x64xf32>
    %33 = arith.addf %32, %31 : vector<8x64xf32>
    %34 = arith.divf %32, %33 : vector<8x64xf32>
    %35 = vector.extract_strided_slice %34 {offsets = [0, 0], sizes = [8, 32], strides = [1, 1]} : vector<8x64xf32> to vector<8x32xf32>
    %36 = vector.extract_strided_slice %34 {offsets = [0, 32], sizes = [8, 32], strides = [1, 1]} : vector<8x64xf32> to vector<8x32xf32>
    %37 = vector.extract_strided_slice %25 {offsets = [0, 64], sizes = [8, 32], strides = [1, 1]} : vector<8x96xf32> to vector<8x32xf32>
    %38 = vector.extract_strided_slice %21 {offsets = [0, 64], sizes = [8, 32], strides = [1, 1]} : vector<8x96xf32> to vector<8x32xf32>
    %39 = arith.mulf %35, %38 : vector<8x32xf32>
    %40 = arith.addf %37, %39 : vector<8x32xf32>
    %41 = math.tanh %40 : vector<8x32xf32>
    %cst_26 = arith.constant 1.000000e+00 : f32
    %42 = vector.broadcast %cst_26 : f32 to vector<8x32xf32>
    %43 = arith.subf %42, %36 : vector<8x32xf32>
    %44 = arith.mulf %43, %41 : vector<8x32xf32>
    %45 = arith.mulf %36, %26 : vector<8x32xf32>
    %46 = arith.addf %44, %45 : vector<8x32xf32>
    %c56 = arith.constant 56 : index
    %c0_27 = arith.constant 0 : index
    %47 = vector.load %arg12[%c56, %c0_27] : memref<64x96xf32, #tpu.memory_space<vmem>>, vector<8x96xf32>
    %48 = vector.extract_strided_slice %16 {offsets = [0, 32], sizes = [8, 32], strides = [1, 1]} : vector<8x64xf32> to vector<8x32xf32>
    %49 = vector.extract_strided_slice %47 {offsets = [0, 0], sizes = [8, 64], strides = [1, 1]} : vector<8x96xf32> to vector<8x64xf32>
    %50 = vector.extract_strided_slice %24 {offsets = [0, 0], sizes = [8, 64], strides = [1, 1]} : vector<8x96xf32> to vector<8x64xf32>
    %51 = arith.addf %49, %50 : vector<8x64xf32>
    %52 = arith.negf %51 : vector<8x64xf32>
    %53 = math.exp %52 : vector<8x64xf32>
    %cst_28 = arith.constant 1.000000e+00 : f32
    %54 = vector.broadcast %cst_28 : f32 to vector<8x64xf32>
    %55 = arith.addf %54, %53 : vector<8x64xf32>
    %56 = arith.divf %54, %55 : vector<8x64xf32>
    %57 = vector.extract_strided_slice %56 {offsets = [0, 0], sizes = [8, 32], strides = [1, 1]} : vector<8x64xf32> to vector<8x32xf32>
    %58 = vector.extract_strided_slice %56 {offsets = [0, 32], sizes = [8, 32], strides = [1, 1]} : vector<8x64xf32> to vector<8x32xf32>
    %59 = vector.extract_strided_slice %47 {offsets = [0, 64], sizes = [8, 32], strides = [1, 1]} : vector<8x96xf32> to vector<8x32xf32>
    %60 = vector.extract_strided_slice %24 {offsets = [0, 64], sizes = [8, 32], strides = [1, 1]} : vector<8x96xf32> to vector<8x32xf32>
    %61 = arith.mulf %57, %60 : vector<8x32xf32>
    %62 = arith.addf %59, %61 : vector<8x32xf32>
    %63 = math.tanh %62 : vector<8x32xf32>
    %cst_29 = arith.constant 1.000000e+00 : f32
    %64 = vector.broadcast %cst_29 : f32 to vector<8x32xf32>
    %65 = arith.subf %64, %58 : vector<8x32xf32>
    %66 = arith.mulf %65, %63 : vector<8x32xf32>
    %67 = arith.mulf %58, %48 : vector<8x32xf32>
    %68 = arith.addf %66, %67 : vector<8x32xf32>
    %c0_30 = arith.constant 0 : index
    %c0_31 = arith.constant 0 : index
    %69 = vector.load %arg9[%c0_30, %c0_31] : memref<64x32xf32, #tpu.memory_space<vmem>>, vector<8x32xf32>
    tpu.vector_store %arg9[%c0_30, %c0_31], %46 {strides = array<i32>} : memref<64x32xf32, #tpu.memory_space<vmem>>, vector<8x32xf32>,
    %c56_32 = arith.constant 56 : index
    %c0_33 = arith.constant 0 : index
    %70 = vector.load %arg10[%c56_32, %c0_33] : memref<64x32xf32, #tpu.memory_space<vmem>>, vector<8x32xf32>
    tpu.vector_store %arg10[%c56_32, %c0_33], %68 {strides = array<i32>} : memref<64x32xf32, #tpu.memory_space<vmem>>, vector<8x32xf32>,
    %71 = tpu.concatenate %46, %68 in 1 : vector<8x32xf32>, vector<8x32xf32> -> vector<8x64xf32>
    %72 = arith.truncf %71 : vector<8x64xf32> to vector<8x64xbf16>
    %cst_34 = arith.constant dense<0.000000e+00> : vector<8x192xf32>
    %73 = tpu.matmul %72, %13, %cst_34 {dimension_numbers = #tpu.dot_dimension_numbers<[1], [0], [0], [1], [0, 0, 1, 1], [], []>} : vector<8x64xbf16>, vector<64x192xbf16>, vector<8x192xf32> -> vector<8x192xf32>
    %74 = vector.extract_strided_slice %73 {offsets = [0, 0], sizes = [8, 96], strides = [1, 1]} : vector<8x192xf32> to vector<8x96xf32>
    %75 = vector.broadcast %14 : vector<1x96xf32> to vector<8x96xf32>
    %76 = arith.addf %74, %75 : vector<8x96xf32>
    %77 = vector.extract_strided_slice %73 {offsets = [0, 96], sizes = [8, 96], strides = [1, 1]} : vector<8x192xf32> to vector<8x96xf32>
    %78 = vector.broadcast %15 : vector<1x96xf32> to vector<8x96xf32>
    %79 = arith.addf %77, %78 : vector<8x96xf32>
    %c8 = arith.constant 8 : index
    %c0_35 = arith.constant 0 : index
    %80 = vector.load %arg11[%c8, %c0_35] : memref<64x96xf32, #tpu.memory_space<vmem>>, vector<8x96xf32>
    %81 = vector.extract_strided_slice %71 {offsets = [0, 0], sizes = [8, 32], strides = [1, 1]} : vector<8x64xf32> to vector<8x32xf32>
    %82 = vector.extract_strided_slice %80 {offsets = [0, 0], sizes = [8, 64], strides = [1, 1]} : vector<8x96xf32> to vector<8x64xf32>
    %83 = vector.extract_strided_slice %76 {offsets = [0, 0], sizes = [8, 64], strides = [1, 1]} : vector<8x96xf32> to vector<8x64xf32>
    %84 = arith.addf %82, %83 : vector<8x64xf32>
    %85 = arith.negf %84 : vector<8x64xf32>
    %86 = math.exp %85 : vector<8x64xf32>
    %cst_36 = arith.constant 1.000000e+00 : f32
    %87 = vector.broadcast %cst_36 : f32 to vector<8x64xf32>
    %88 = arith.addf %87, %86 : vector<8x64xf32>
    %89 = arith.divf %87, %88 : vector<8x64xf32>
    %90 = vector.extract_strided_slice %89 {offsets = [0, 0], sizes = [8, 32], strides = [1, 1]} : vector<8x64xf32> to vector<8x32xf32>
    %91 = vector.extract_strided_slice %89 {offsets = [0, 32], sizes = [8, 32], strides = [1, 1]} : vector<8x64xf32> to vector<8x32xf32>
    %92 = vector.extract_strided_slice %80 {offsets = [0, 64], sizes = [8, 32], strides = [1, 1]} : vector<8x96xf32> to vector<8x32xf32>
    %93 = vector.extract_strided_slice %76 {offsets = [0, 64], sizes = [8, 32], strides = [1, 1]} : vector<8x96xf32> to vector<8x32xf32>
    %94 = arith.mulf %90, %93 : vector<8x32xf32>
    %95 = arith.addf %92, %94 : vector<8x32xf32>
    %96 = math.tanh %95 : vector<8x32xf32>
    %cst_37 = arith.constant 1.000000e+00 : f32
    %97 = vector.broadcast %cst_37 : f32 to vector<8x32xf32>
    %98 = arith.subf %97, %91 : vector<8x32xf32>
    %99 = arith.mulf %98, %96 : vector<8x32xf32>
    %100 = arith.mulf %91, %81 : vector<8x32xf32>
    %101 = arith.addf %99, %100 : vector<8x32xf32>
    %c48 = arith.constant 48 : index
    %c0_38 = arith.constant 0 : index
    %102 = vector.load %arg12[%c48, %c0_38] : memref<64x96xf32, #tpu.memory_space<vmem>>, vector<8x96xf32>
    %103 = vector.extract_strided_slice %71 {offsets = [0, 32], sizes = [8, 32], strides = [1, 1]} : vector<8x64xf32> to vector<8x32xf32>
    %104 = vector.extract_strided_slice %102 {offsets = [0, 0], sizes = [8, 64], strides = [1, 1]} : vector<8x96xf32> to vector<8x64xf32>
    %105 = vector.extract_strided_slice %79 {offsets = [0, 0], sizes = [8, 64], strides = [1, 1]} : vector<8x96xf32> to vector<8x64xf32>
    %106 = arith.addf %104, %105 : vector<8x64xf32>
    %107 = arith.negf %106 : vector<8x64xf32>
    %108 = math.exp %107 : vector<8x64xf32>
    %cst_39 = arith.constant 1.000000e+00 : f32
    %109 = vector.broadcast %cst_39 : f32 to vector<8x64xf32>
    %110 = arith.addf %109, %108 : vector<8x64xf32>
    %111 = arith.divf %109, %110 : vector<8x64xf32>
    %112 = vector.extract_strided_slice %111 {offsets = [0, 0], sizes = [8, 32], strides = [1, 1]} : vector<8x64xf32> to vector<8x32xf32>
    %113 = vector.extract_strided_slice %111 {offsets = [0, 32], sizes = [8, 32], strides = [1, 1]} : vector<8x64xf32> to vector<8x32xf32>
    %114 = vector.extract_strided_slice %102 {offsets = [0, 64], sizes = [8, 32], strides = [1, 1]} : vector<8x96xf32> to vector<8x32xf32>
    %115 = vector.extract_strided_slice %79 {offsets = [0, 64], sizes = [8, 32], strides = [1, 1]} : vector<8x96xf32> to vector<8x32xf32>
    %116 = arith.mulf %112, %115 : vector<8x32xf32>
    %117 = arith.addf %114, %116 : vector<8x32xf32>
    %118 = math.tanh %117 : vector<8x32xf32>
    %cst_40 = arith.constant 1.000000e+00 : f32
    %119 = vector.broadcast %cst_40 : f32 to vector<8x32xf32>
    %120 = arith.subf %119, %113 : vector<8x32xf32>
    %121 = arith.mulf %120, %118 : vector<8x32xf32>
    %122 = arith.mulf %113, %103 : vector<8x32xf32>
    %123 = arith.addf %121, %122 : vector<8x32xf32>
    %c8_41 = arith.constant 8 : index
    %c0_42 = arith.constant 0 : index
    %124 = vector.load %arg9[%c8_41, %c0_42] : memref<64x32xf32, #tpu.memory_space<vmem>>, vector<8x32xf32>
    tpu.vector_store %arg9[%c8_41, %c0_42], %101 {strides = array<i32>} : memref<64x32xf32, #tpu.memory_space<vmem>>, vector<8x32xf32>,
    %c48_43 = arith.constant 48 : index
    %c0_44 = arith.constant 0 : index
    %125 = vector.load %arg10[%c48_43, %c0_44] : memref<64x32xf32, #tpu.memory_space<vmem>>, vector<8x32xf32>
    tpu.vector_store %arg10[%c48_43, %c0_44], %123 {strides = array<i32>} : memref<64x32xf32, #tpu.memory_space<vmem>>, vector<8x32xf32>,
    %126 = tpu.concatenate %101, %123 in 1 : vector<8x32xf32>, vector<8x32xf32> -> vector<8x64xf32>
    %127 = arith.truncf %126 : vector<8x64xf32> to vector<8x64xbf16>
    %cst_45 = arith.constant dense<0.000000e+00> : vector<8x192xf32>
    %128 = tpu.matmul %127, %13, %cst_45 {dimension_numbers = #tpu.dot_dimension_numbers<[1], [0], [0], [1], [0, 0, 1, 1], [], []>} : vector<8x64xbf16>, vector<64x192xbf16>, vector<8x192xf32> -> vector<8x192xf32>
    %129 = vector.extract_strided_slice %128 {offsets = [0, 0], sizes = [8, 96], strides = [1, 1]} : vector<8x192xf32> to vector<8x96xf32>
    %130 = vector.broadcast %14 : vector<1x96xf32> to vector<8x96xf32>
    %131 = arith.addf %129, %130 : vector<8x96xf32>
    %132 = vector.extract_strided_slice %128 {offsets = [0, 96], sizes = [8, 96], strides = [1, 1]} : vector<8x192xf32> to vector<8x96xf32>
    %133 = vector.broadcast %15 : vector<1x96xf32> to vector<8x96xf32>
    %134 = arith.addf %132, %133 : vector<8x96xf32>
    %c16 = arith.constant 16 : index
    %c0_46 = arith.constant 0 : index
    %135 = vector.load %arg11[%c16, %c0_46] : memref<64x96xf32, #tpu.memory_space<vmem>>, vector<8x96xf32>
    %136 = vector.extract_strided_slice %126 {offsets = [0, 0], sizes = [8, 32], strides = [1, 1]} : vector<8x64xf32> to vector<8x32xf32>
    %137 = vector.extract_strided_slice %135 {offsets = [0, 0], sizes = [8, 64], strides = [1, 1]} : vector<8x96xf32> to vector<8x64xf32>
    %138 = vector.extract_strided_slice %131 {offsets = [0, 0], sizes = [8, 64], strides = [1, 1]} : vector<8x96xf32> to vector<8x64xf32>
    %139 = arith.addf %137, %138 : vector<8x64xf32>
    %140 = arith.negf %139 : vector<8x64xf32>
    %141 = math.exp %140 : vector<8x64xf32>
    %cst_47 = arith.constant 1.000000e+00 : f32
    %142 = vector.broadcast %cst_47 : f32 to vector<8x64xf32>
    %143 = arith.addf %142, %141 : vector<8x64xf32>
    %144 = arith.divf %142, %143 : vector<8x64xf32>
    %145 = vector.extract_strided_slice %144 {offsets = [0, 0], sizes = [8, 32], strides = [1, 1]} : vector<8x64xf32> to vector<8x32xf32>
    %146 = vector.extract_strided_slice %144 {offsets = [0, 32], sizes = [8, 32], strides = [1, 1]} : vector<8x64xf32> to vector<8x32xf32>
    %147 = vector.extract_strided_slice %135 {offsets = [0, 64], sizes = [8, 32], strides = [1, 1]} : vector<8x96xf32> to vector<8x32xf32>
    %148 = vector.extract_strided_slice %131 {offsets = [0, 64], sizes = [8, 32], strides = [1, 1]} : vector<8x96xf32> to vector<8x32xf32>
    %149 = arith.mulf %145, %148 : vector<8x32xf32>
    %150 = arith.addf %147, %149 : vector<8x32xf32>
    %151 = math.tanh %150 : vector<8x32xf32>
    %cst_48 = arith.constant 1.000000e+00 : f32
    %152 = vector.broadcast %cst_48 : f32 to vector<8x32xf32>
    %153 = arith.subf %152, %146 : vector<8x32xf32>
    %154 = arith.mulf %153, %151 : vector<8x32xf32>
    %155 = arith.mulf %146, %136 : vector<8x32xf32>
    %156 = arith.addf %154, %155 : vector<8x32xf32>
    %c40 = arith.constant 40 : index
    %c0_49 = arith.constant 0 : index
    %157 = vector.load %arg12[%c40, %c0_49] : memref<64x96xf32, #tpu.memory_space<vmem>>, vector<8x96xf32>
    %158 = vector.extract_strided_slice %126 {offsets = [0, 32], sizes = [8, 32], strides = [1, 1]} : vector<8x64xf32> to vector<8x32xf32>
    %159 = vector.extract_strided_slice %157 {offsets = [0, 0], sizes = [8, 64], strides = [1, 1]} : vector<8x96xf32> to vector<8x64xf32>
    %160 = vector.extract_strided_slice %134 {offsets = [0, 0], sizes = [8, 64], strides = [1, 1]} : vector<8x96xf32> to vector<8x64xf32>
    %161 = arith.addf %159, %160 : vector<8x64xf32>
    %162 = arith.negf %161 : vector<8x64xf32>
    %163 = math.exp %162 : vector<8x64xf32>
    %cst_50 = arith.constant 1.000000e+00 : f32
    %164 = vector.broadcast %cst_50 : f32 to vector<8x64xf32>
    %165 = arith.addf %164, %163 : vector<8x64xf32>
    %166 = arith.divf %164, %165 : vector<8x64xf32>
    %167 = vector.extract_strided_slice %166 {offsets = [0, 0], sizes = [8, 32], strides = [1, 1]} : vector<8x64xf32> to vector<8x32xf32>
    %168 = vector.extract_strided_slice %166 {offsets = [0, 32], sizes = [8, 32], strides = [1, 1]} : vector<8x64xf32> to vector<8x32xf32>
    %169 = vector.extract_strided_slice %157 {offsets = [0, 64], sizes = [8, 32], strides = [1, 1]} : vector<8x96xf32> to vector<8x32xf32>
    %170 = vector.extract_strided_slice %134 {offsets = [0, 64], sizes = [8, 32], strides = [1, 1]} : vector<8x96xf32> to vector<8x32xf32>
    %171 = arith.mulf %167, %170 : vector<8x32xf32>
    %172 = arith.addf %169, %171 : vector<8x32xf32>
    %173 = math.tanh %172 : vector<8x32xf32>
    %cst_51 = arith.constant 1.000000e+00 : f32
    %174 = vector.broadcast %cst_51 : f32 to vector<8x32xf32>
    %175 = arith.subf %174, %168 : vector<8x32xf32>
    %176 = arith.mulf %175, %173 : vector<8x32xf32>
    %177 = arith.mulf %168, %158 : vector<8x32xf32>
    %178 = arith.addf %176, %177 : vector<8x32xf32>
    %c16_52 = arith.constant 16 : index
    %c0_53 = arith.constant 0 : index
    %179 = vector.load %arg9[%c16_52, %c0_53] : memref<64x32xf32, #tpu.memory_space<vmem>>, vector<8x32xf32>
    tpu.vector_store %arg9[%c16_52, %c0_53], %156 {strides = array<i32>} : memref<64x32xf32, #tpu.memory_space<vmem>>, vector<8x32xf32>,
    %c40_54 = arith.constant 40 : index
    %c0_55 = arith.constant 0 : index
    %180 = vector.load %arg10[%c40_54, %c0_55] : memref<64x32xf32, #tpu.memory_space<vmem>>, vector<8x32xf32>
    tpu.vector_store %arg10[%c40_54, %c0_55], %178 {strides = array<i32>} : memref<64x32xf32, #tpu.memory_space<vmem>>, vector<8x32xf32>,
    %181 = tpu.concatenate %156, %178 in 1 : vector<8x32xf32>, vector<8x32xf32> -> vector<8x64xf32>
    %182 = arith.truncf %181 : vector<8x64xf32> to vector<8x64xbf16>
    %cst_56 = arith.constant dense<0.000000e+00> : vector<8x192xf32>
    %183 = tpu.matmul %182, %13, %cst_56 {dimension_numbers = #tpu.dot_dimension_numbers<[1], [0], [0], [1], [0, 0, 1, 1], [], []>} : vector<8x64xbf16>, vector<64x192xbf16>, vector<8x192xf32> -> vector<8x192xf32>
    %184 = vector.extract_strided_slice %183 {offsets = [0, 0], sizes = [8, 96], strides = [1, 1]} : vector<8x192xf32> to vector<8x96xf32>
    %185 = vector.broadcast %14 : vector<1x96xf32> to vector<8x96xf32>
    %186 = arith.addf %184, %185 : vector<8x96xf32>
    %187 = vector.extract_strided_slice %183 {offsets = [0, 96], sizes = [8, 96], strides = [1, 1]} : vector<8x192xf32> to vector<8x96xf32>
    %188 = vector.broadcast %15 : vector<1x96xf32> to vector<8x96xf32>
    %189 = arith.addf %187, %188 : vector<8x96xf32>
    %c24 = arith.constant 24 : index
    %c0_57 = arith.constant 0 : index
    %190 = vector.load %arg11[%c24, %c0_57] : memref<64x96xf32, #tpu.memory_space<vmem>>, vector<8x96xf32>
    %191 = vector.extract_strided_slice %181 {offsets = [0, 0], sizes = [8, 32], strides = [1, 1]} : vector<8x64xf32> to vector<8x32xf32>
    %192 = vector.extract_strided_slice %190 {offsets = [0, 0], sizes = [8, 64], strides = [1, 1]} : vector<8x96xf32> to vector<8x64xf32>
    %193 = vector.extract_strided_slice %186 {offsets = [0, 0], sizes = [8, 64], strides = [1, 1]} : vector<8x96xf32> to vector<8x64xf32>
    %194 = arith.addf %192, %193 : vector<8x64xf32>
    %195 = arith.negf %194 : vector<8x64xf32>
    %196 = math.exp %195 : vector<8x64xf32>
    %cst_58 = arith.constant 1.000000e+00 : f32
    %197 = vector.broadcast %cst_58 : f32 to vector<8x64xf32>
    %198 = arith.addf %197, %196 : vector<8x64xf32>
    %199 = arith.divf %197, %198 : vector<8x64xf32>
    %200 = vector.extract_strided_slice %199 {offsets = [0, 0], sizes = [8, 32], strides = [1, 1]} : vector<8x64xf32> to vector<8x32xf32>
    %201 = vector.extract_strided_slice %199 {offsets = [0, 32], sizes = [8, 32], strides = [1, 1]} : vector<8x64xf32> to vector<8x32xf32>
    %202 = vector.extract_strided_slice %190 {offsets = [0, 64], sizes = [8, 32], strides = [1, 1]} : vector<8x96xf32> to vector<8x32xf32>
    %203 = vector.extract_strided_slice %186 {offsets = [0, 64], sizes = [8, 32], strides = [1, 1]} : vector<8x96xf32> to vector<8x32xf32>
    %204 = arith.mulf %200, %203 : vector<8x32xf32>
    %205 = arith.addf %202, %204 : vector<8x32xf32>
    %206 = math.tanh %205 : vector<8x32xf32>
    %cst_59 = arith.constant 1.000000e+00 : f32
    %207 = vector.broadcast %cst_59 : f32 to vector<8x32xf32>
    %208 = arith.subf %207, %201 : vector<8x32xf32>
    %209 = arith.mulf %208, %206 : vector<8x32xf32>
    %210 = arith.mulf %201, %191 : vector<8x32xf32>
    %211 = arith.addf %209, %210 : vector<8x32xf32>
    %c32 = arith.constant 32 : index
    %c0_60 = arith.constant 0 : index
    %212 = vector.load %arg12[%c32, %c0_60] : memref<64x96xf32, #tpu.memory_space<vmem>>, vector<8x96xf32>
    %213 = vector.extract_strided_slice %181 {offsets = [0, 32], sizes = [8, 32], strides = [1, 1]} : vector<8x64xf32> to vector<8x32xf32>
    %214 = vector.extract_strided_slice %212 {offsets = [0, 0], sizes = [8, 64], strides = [1, 1]} : vector<8x96xf32> to vector<8x64xf32>
    %215 = vector.extract_strided_slice %189 {offsets = [0, 0], sizes = [8, 64], strides = [1, 1]} : vector<8x96xf32> to vector<8x64xf32>
    %216 = arith.addf %214, %215 : vector<8x64xf32>
    %217 = arith.negf %216 : vector<8x64xf32>
    %218 = math.exp %217 : vector<8x64xf32>
    %cst_61 = arith.constant 1.000000e+00 : f32
    %219 = vector.broadcast %cst_61 : f32 to vector<8x64xf32>
    %220 = arith.addf %219, %218 : vector<8x64xf32>
    %221 = arith.divf %219, %220 : vector<8x64xf32>
    %222 = vector.extract_strided_slice %221 {offsets = [0, 0], sizes = [8, 32], strides = [1, 1]} : vector<8x64xf32> to vector<8x32xf32>
    %223 = vector.extract_strided_slice %221 {offsets = [0, 32], sizes = [8, 32], strides = [1, 1]} : vector<8x64xf32> to vector<8x32xf32>
    %224 = vector.extract_strided_slice %212 {offsets = [0, 64], sizes = [8, 32], strides = [1, 1]} : vector<8x96xf32> to vector<8x32xf32>
    %225 = vector.extract_strided_slice %189 {offsets = [0, 64], sizes = [8, 32], strides = [1, 1]} : vector<8x96xf32> to vector<8x32xf32>
    %226 = arith.mulf %222, %225 : vector<8x32xf32>
    %227 = arith.addf %224, %226 : vector<8x32xf32>
    %228 = math.tanh %227 : vector<8x32xf32>
    %cst_62 = arith.constant 1.000000e+00 : f32
    %229 = vector.broadcast %cst_62 : f32 to vector<8x32xf32>
    %230 = arith.subf %229, %223 : vector<8x32xf32>
    %231 = arith.mulf %230, %228 : vector<8x32xf32>
    %232 = arith.mulf %223, %213 : vector<8x32xf32>
    %233 = arith.addf %231, %232 : vector<8x32xf32>
    %c24_63 = arith.constant 24 : index
    %c0_64 = arith.constant 0 : index
    %234 = vector.load %arg9[%c24_63, %c0_64] : memref<64x32xf32, #tpu.memory_space<vmem>>, vector<8x32xf32>
    tpu.vector_store %arg9[%c24_63, %c0_64], %211 {strides = array<i32>} : memref<64x32xf32, #tpu.memory_space<vmem>>, vector<8x32xf32>,
    %c32_65 = arith.constant 32 : index
    %c0_66 = arith.constant 0 : index
    %235 = vector.load %arg10[%c32_65, %c0_66] : memref<64x32xf32, #tpu.memory_space<vmem>>, vector<8x32xf32>
    tpu.vector_store %arg10[%c32_65, %c0_66], %233 {strides = array<i32>} : memref<64x32xf32, #tpu.memory_space<vmem>>, vector<8x32xf32>,
    %236 = tpu.concatenate %211, %233 in 1 : vector<8x32xf32>, vector<8x32xf32> -> vector<8x64xf32>
    %237 = arith.truncf %236 : vector<8x64xf32> to vector<8x64xbf16>
    %cst_67 = arith.constant dense<0.000000e+00> : vector<8x192xf32>
    %238 = tpu.matmul %237, %13, %cst_67 {dimension_numbers = #tpu.dot_dimension_numbers<[1], [0], [0], [1], [0, 0, 1, 1], [], []>} : vector<8x64xbf16>, vector<64x192xbf16>, vector<8x192xf32> -> vector<8x192xf32>
    %239 = vector.extract_strided_slice %238 {offsets = [0, 0], sizes = [8, 96], strides = [1, 1]} : vector<8x192xf32> to vector<8x96xf32>
    %240 = vector.broadcast %14 : vector<1x96xf32> to vector<8x96xf32>
    %241 = arith.addf %239, %240 : vector<8x96xf32>
    %242 = vector.extract_strided_slice %238 {offsets = [0, 96], sizes = [8, 96], strides = [1, 1]} : vector<8x192xf32> to vector<8x96xf32>
    %243 = vector.broadcast %15 : vector<1x96xf32> to vector<8x96xf32>
    %244 = arith.addf %242, %243 : vector<8x96xf32>
    %c32_68 = arith.constant 32 : index
    %c0_69 = arith.constant 0 : index
    %245 = vector.load %arg11[%c32_68, %c0_69] : memref<64x96xf32, #tpu.memory_space<vmem>>, vector<8x96xf32>
    %246 = vector.extract_strided_slice %236 {offsets = [0, 0], sizes = [8, 32], strides = [1, 1]} : vector<8x64xf32> to vector<8x32xf32>
    %247 = vector.extract_strided_slice %245 {offsets = [0, 0], sizes = [8, 64], strides = [1, 1]} : vector<8x96xf32> to vector<8x64xf32>
    %248 = vector.extract_strided_slice %241 {offsets = [0, 0], sizes = [8, 64], strides = [1, 1]} : vector<8x96xf32> to vector<8x64xf32>
    %249 = arith.addf %247, %248 : vector<8x64xf32>
    %250 = arith.negf %249 : vector<8x64xf32>
    %251 = math.exp %250 : vector<8x64xf32>
    %cst_70 = arith.constant 1.000000e+00 : f32
    %252 = vector.broadcast %cst_70 : f32 to vector<8x64xf32>
    %253 = arith.addf %252, %251 : vector<8x64xf32>
    %254 = arith.divf %252, %253 : vector<8x64xf32>
    %255 = vector.extract_strided_slice %254 {offsets = [0, 0], sizes = [8, 32], strides = [1, 1]} : vector<8x64xf32> to vector<8x32xf32>
    %256 = vector.extract_strided_slice %254 {offsets = [0, 32], sizes = [8, 32], strides = [1, 1]} : vector<8x64xf32> to vector<8x32xf32>
    %257 = vector.extract_strided_slice %245 {offsets = [0, 64], sizes = [8, 32], strides = [1, 1]} : vector<8x96xf32> to vector<8x32xf32>
    %258 = vector.extract_strided_slice %241 {offsets = [0, 64], sizes = [8, 32], strides = [1, 1]} : vector<8x96xf32> to vector<8x32xf32>
    %259 = arith.mulf %255, %258 : vector<8x32xf32>
    %260 = arith.addf %257, %259 : vector<8x32xf32>
    %261 = math.tanh %260 : vector<8x32xf32>
    %cst_71 = arith.constant 1.000000e+00 : f32
    %262 = vector.broadcast %cst_71 : f32 to vector<8x32xf32>
    %263 = arith.subf %262, %256 : vector<8x32xf32>
    %264 = arith.mulf %263, %261 : vector<8x32xf32>
    %265 = arith.mulf %256, %246 : vector<8x32xf32>
    %266 = arith.addf %264, %265 : vector<8x32xf32>
    %c24_72 = arith.constant 24 : index
    %c0_73 = arith.constant 0 : index
    %267 = vector.load %arg12[%c24_72, %c0_73] : memref<64x96xf32, #tpu.memory_space<vmem>>, vector<8x96xf32>
    %268 = vector.extract_strided_slice %236 {offsets = [0, 32], sizes = [8, 32], strides = [1, 1]} : vector<8x64xf32> to vector<8x32xf32>
    %269 = vector.extract_strided_slice %267 {offsets = [0, 0], sizes = [8, 64], strides = [1, 1]} : vector<8x96xf32> to vector<8x64xf32>
    %270 = vector.extract_strided_slice %244 {offsets = [0, 0], sizes = [8, 64], strides = [1, 1]} : vector<8x96xf32> to vector<8x64xf32>
    %271 = arith.addf %269, %270 : vector<8x64xf32>
    %272 = arith.negf %271 : vector<8x64xf32>
    %273 = math.exp %272 : vector<8x64xf32>
    %cst_74 = arith.constant 1.000000e+00 : f32
    %274 = vector.broadcast %cst_74 : f32 to vector<8x64xf32>
    %275 = arith.addf %274, %273 : vector<8x64xf32>
    %276 = arith.divf %274, %275 : vector<8x64xf32>
    %277 = vector.extract_strided_slice %276 {offsets = [0, 0], sizes = [8, 32], strides = [1, 1]} : vector<8x64xf32> to vector<8x32xf32>
    %278 = vector.extract_strided_slice %276 {offsets = [0, 32], sizes = [8, 32], strides = [1, 1]} : vector<8x64xf32> to vector<8x32xf32>
    %279 = vector.extract_strided_slice %267 {offsets = [0, 64], sizes = [8, 32], strides = [1, 1]} : vector<8x96xf32> to vector<8x32xf32>
    %280 = vector.extract_strided_slice %244 {offsets = [0, 64], sizes = [8, 32], strides = [1, 1]} : vector<8x96xf32> to vector<8x32xf32>
    %281 = arith.mulf %277, %280 : vector<8x32xf32>
    %282 = arith.addf %279, %281 : vector<8x32xf32>
    %283 = math.tanh %282 : vector<8x32xf32>
    %cst_75 = arith.constant 1.000000e+00 : f32
    %284 = vector.broadcast %cst_75 : f32 to vector<8x32xf32>
    %285 = arith.subf %284, %278 : vector<8x32xf32>
    %286 = arith.mulf %285, %283 : vector<8x32xf32>
    %287 = arith.mulf %278, %268 : vector<8x32xf32>
    %288 = arith.addf %286, %287 : vector<8x32xf32>
    %c32_76 = arith.constant 32 : index
    %c0_77 = arith.constant 0 : index
    %289 = vector.load %arg9[%c32_76, %c0_77] : memref<64x32xf32, #tpu.memory_space<vmem>>, vector<8x32xf32>
    tpu.vector_store %arg9[%c32_76, %c0_77], %266 {strides = array<i32>} : memref<64x32xf32, #tpu.memory_space<vmem>>, vector<8x32xf32>,
    %c24_78 = arith.constant 24 : index
    %c0_79 = arith.constant 0 : index
    %290 = vector.load %arg10[%c24_78, %c0_79] : memref<64x32xf32, #tpu.memory_space<vmem>>, vector<8x32xf32>
    tpu.vector_store %arg10[%c24_78, %c0_79], %288 {strides = array<i32>} : memref<64x32xf32, #tpu.memory_space<vmem>>, vector<8x32xf32>,
    %291 = tpu.concatenate %266, %288 in 1 : vector<8x32xf32>, vector<8x32xf32> -> vector<8x64xf32>
    %292 = arith.truncf %291 : vector<8x64xf32> to vector<8x64xbf16>
    %cst_80 = arith.constant dense<0.000000e+00> : vector<8x192xf32>
    %293 = tpu.matmul %292, %13, %cst_80 {dimension_numbers = #tpu.dot_dimension_numbers<[1], [0], [0], [1], [0, 0, 1, 1], [], []>} : vector<8x64xbf16>, vector<64x192xbf16>, vector<8x192xf32> -> vector<8x192xf32>
    %294 = vector.extract_strided_slice %293 {offsets = [0, 0], sizes = [8, 96], strides = [1, 1]} : vector<8x192xf32> to vector<8x96xf32>
    %295 = vector.broadcast %14 : vector<1x96xf32> to vector<8x96xf32>
    %296 = arith.addf %294, %295 : vector<8x96xf32>
    %297 = vector.extract_strided_slice %293 {offsets = [0, 96], sizes = [8, 96], strides = [1, 1]} : vector<8x192xf32> to vector<8x96xf32>
    %298 = vector.broadcast %15 : vector<1x96xf32> to vector<8x96xf32>
    %299 = arith.addf %297, %298 : vector<8x96xf32>
    %c40_81 = arith.constant 40 : index
    %c0_82 = arith.constant 0 : index
    %300 = vector.load %arg11[%c40_81, %c0_82] : memref<64x96xf32, #tpu.memory_space<vmem>>, vector<8x96xf32>
    %301 = vector.extract_strided_slice %291 {offsets = [0, 0], sizes = [8, 32], strides = [1, 1]} : vector<8x64xf32> to vector<8x32xf32>
    %302 = vector.extract_strided_slice %300 {offsets = [0, 0], sizes = [8, 64], strides = [1, 1]} : vector<8x96xf32> to vector<8x64xf32>
    %303 = vector.extract_strided_slice %296 {offsets = [0, 0], sizes = [8, 64], strides = [1, 1]} : vector<8x96xf32> to vector<8x64xf32>
    %304 = arith.addf %302, %303 : vector<8x64xf32>
    %305 = arith.negf %304 : vector<8x64xf32>
    %306 = math.exp %305 : vector<8x64xf32>
    %cst_83 = arith.constant 1.000000e+00 : f32
    %307 = vector.broadcast %cst_83 : f32 to vector<8x64xf32>
    %308 = arith.addf %307, %306 : vector<8x64xf32>
    %309 = arith.divf %307, %308 : vector<8x64xf32>
    %310 = vector.extract_strided_slice %309 {offsets = [0, 0], sizes = [8, 32], strides = [1, 1]} : vector<8x64xf32> to vector<8x32xf32>
    %311 = vector.extract_strided_slice %309 {offsets = [0, 32], sizes = [8, 32], strides = [1, 1]} : vector<8x64xf32> to vector<8x32xf32>
    %312 = vector.extract_strided_slice %300 {offsets = [0, 64], sizes = [8, 32], strides = [1, 1]} : vector<8x96xf32> to vector<8x32xf32>
    %313 = vector.extract_strided_slice %296 {offsets = [0, 64], sizes = [8, 32], strides = [1, 1]} : vector<8x96xf32> to vector<8x32xf32>
    %314 = arith.mulf %310, %313 : vector<8x32xf32>
    %315 = arith.addf %312, %314 : vector<8x32xf32>
    %316 = math.tanh %315 : vector<8x32xf32>
    %cst_84 = arith.constant 1.000000e+00 : f32
    %317 = vector.broadcast %cst_84 : f32 to vector<8x32xf32>
    %318 = arith.subf %317, %311 : vector<8x32xf32>
    %319 = arith.mulf %318, %316 : vector<8x32xf32>
    %320 = arith.mulf %311, %301 : vector<8x32xf32>
    %321 = arith.addf %319, %320 : vector<8x32xf32>
    %c16_85 = arith.constant 16 : index
    %c0_86 = arith.constant 0 : index
    %322 = vector.load %arg12[%c16_85, %c0_86] : memref<64x96xf32, #tpu.memory_space<vmem>>, vector<8x96xf32>
    %323 = vector.extract_strided_slice %291 {offsets = [0, 32], sizes = [8, 32], strides = [1, 1]} : vector<8x64xf32> to vector<8x32xf32>
    %324 = vector.extract_strided_slice %322 {offsets = [0, 0], sizes = [8, 64], strides = [1, 1]} : vector<8x96xf32> to vector<8x64xf32>
    %325 = vector.extract_strided_slice %299 {offsets = [0, 0], sizes = [8, 64], strides = [1, 1]} : vector<8x96xf32> to vector<8x64xf32>
    %326 = arith.addf %324, %325 : vector<8x64xf32>
    %327 = arith.negf %326 : vector<8x64xf32>
    %328 = math.exp %327 : vector<8x64xf32>
    %cst_87 = arith.constant 1.000000e+00 : f32
    %329 = vector.broadcast %cst_87 : f32 to vector<8x64xf32>
    %330 = arith.addf %329, %328 : vector<8x64xf32>
    %331 = arith.divf %329, %330 : vector<8x64xf32>
    %332 = vector.extract_strided_slice %331 {offsets = [0, 0], sizes = [8, 32], strides = [1, 1]} : vector<8x64xf32> to vector<8x32xf32>
    %333 = vector.extract_strided_slice %331 {offsets = [0, 32], sizes = [8, 32], strides = [1, 1]} : vector<8x64xf32> to vector<8x32xf32>
    %334 = vector.extract_strided_slice %322 {offsets = [0, 64], sizes = [8, 32], strides = [1, 1]} : vector<8x96xf32> to vector<8x32xf32>
    %335 = vector.extract_strided_slice %299 {offsets = [0, 64], sizes = [8, 32], strides = [1, 1]} : vector<8x96xf32> to vector<8x32xf32>
    %336 = arith.mulf %332, %335 : vector<8x32xf32>
    %337 = arith.addf %334, %336 : vector<8x32xf32>
    %338 = math.tanh %337 : vector<8x32xf32>
    %cst_88 = arith.constant 1.000000e+00 : f32
    %339 = vector.broadcast %cst_88 : f32 to vector<8x32xf32>
    %340 = arith.subf %339, %333 : vector<8x32xf32>
    %341 = arith.mulf %340, %338 : vector<8x32xf32>
    %342 = arith.mulf %333, %323 : vector<8x32xf32>
    %343 = arith.addf %341, %342 : vector<8x32xf32>
    %c40_89 = arith.constant 40 : index
    %c0_90 = arith.constant 0 : index
    %344 = vector.load %arg9[%c40_89, %c0_90] : memref<64x32xf32, #tpu.memory_space<vmem>>, vector<8x32xf32>
    tpu.vector_store %arg9[%c40_89, %c0_90], %321 {strides = array<i32>} : memref<64x32xf32, #tpu.memory_space<vmem>>, vector<8x32xf32>,
    %c16_91 = arith.constant 16 : index
    %c0_92 = arith.constant 0 : index
    %345 = vector.load %arg10[%c16_91, %c0_92] : memref<64x32xf32, #tpu.memory_space<vmem>>, vector<8x32xf32>
    tpu.vector_store %arg10[%c16_91, %c0_92], %343 {strides = array<i32>} : memref<64x32xf32, #tpu.memory_space<vmem>>, vector<8x32xf32>,
    %346 = tpu.concatenate %321, %343 in 1 : vector<8x32xf32>, vector<8x32xf32> -> vector<8x64xf32>
    %347 = arith.truncf %346 : vector<8x64xf32> to vector<8x64xbf16>
    %cst_93 = arith.constant dense<0.000000e+00> : vector<8x192xf32>
    %348 = tpu.matmul %347, %13, %cst_93 {dimension_numbers = #tpu.dot_dimension_numbers<[1], [0], [0], [1], [0, 0, 1, 1], [], []>} : vector<8x64xbf16>, vector<64x192xbf16>, vector<8x192xf32> -> vector<8x192xf32>
    %349 = vector.extract_strided_slice %348 {offsets = [0, 0], sizes = [8, 96], strides = [1, 1]} : vector<8x192xf32> to vector<8x96xf32>
    %350 = vector.broadcast %14 : vector<1x96xf32> to vector<8x96xf32>
    %351 = arith.addf %349, %350 : vector<8x96xf32>
    %352 = vector.extract_strided_slice %348 {offsets = [0, 96], sizes = [8, 96], strides = [1, 1]} : vector<8x192xf32> to vector<8x96xf32>
    %353 = vector.broadcast %15 : vector<1x96xf32> to vector<8x96xf32>
    %354 = arith.addf %352, %353 : vector<8x96xf32>
    %c48_94 = arith.constant 48 : index
    %c0_95 = arith.constant 0 : index
    %355 = vector.load %arg11[%c48_94, %c0_95] : memref<64x96xf32, #tpu.memory_space<vmem>>, vector<8x96xf32>
    %356 = vector.extract_strided_slice %346 {offsets = [0, 0], sizes = [8, 32], strides = [1, 1]} : vector<8x64xf32> to vector<8x32xf32>
    %357 = vector.extract_strided_slice %355 {offsets = [0, 0], sizes = [8, 64], strides = [1, 1]} : vector<8x96xf32> to vector<8x64xf32>
    %358 = vector.extract_strided_slice %351 {offsets = [0, 0], sizes = [8, 64], strides = [1, 1]} : vector<8x96xf32> to vector<8x64xf32>
    %359 = arith.addf %357, %358 : vector<8x64xf32>
    %360 = arith.negf %359 : vector<8x64xf32>
    %361 = math.exp %360 : vector<8x64xf32>
    %cst_96 = arith.constant 1.000000e+00 : f32
    %362 = vector.broadcast %cst_96 : f32 to vector<8x64xf32>
    %363 = arith.addf %362, %361 : vector<8x64xf32>
    %364 = arith.divf %362, %363 : vector<8x64xf32>
    %365 = vector.extract_strided_slice %364 {offsets = [0, 0], sizes = [8, 32], strides = [1, 1]} : vector<8x64xf32> to vector<8x32xf32>
    %366 = vector.extract_strided_slice %364 {offsets = [0, 32], sizes = [8, 32], strides = [1, 1]} : vector<8x64xf32> to vector<8x32xf32>
    %367 = vector.extract_strided_slice %355 {offsets = [0, 64], sizes = [8, 32], strides = [1, 1]} : vector<8x96xf32> to vector<8x32xf32>
    %368 = vector.extract_strided_slice %351 {offsets = [0, 64], sizes = [8, 32], strides = [1, 1]} : vector<8x96xf32> to vector<8x32xf32>
    %369 = arith.mulf %365, %368 : vector<8x32xf32>
    %370 = arith.addf %367, %369 : vector<8x32xf32>
    %371 = math.tanh %370 : vector<8x32xf32>
    %cst_97 = arith.constant 1.000000e+00 : f32
    %372 = vector.broadcast %cst_97 : f32 to vector<8x32xf32>
    %373 = arith.subf %372, %366 : vector<8x32xf32>
    %374 = arith.mulf %373, %371 : vector<8x32xf32>
    %375 = arith.mulf %366, %356 : vector<8x32xf32>
    %376 = arith.addf %374, %375 : vector<8x32xf32>
    %c8_98 = arith.constant 8 : index
    %c0_99 = arith.constant 0 : index
    %377 = vector.load %arg12[%c8_98, %c0_99] : memref<64x96xf32, #tpu.memory_space<vmem>>, vector<8x96xf32>
    %378 = vector.extract_strided_slice %346 {offsets = [0, 32], sizes = [8, 32], strides = [1, 1]} : vector<8x64xf32> to vector<8x32xf32>
    %379 = vector.extract_strided_slice %377 {offsets = [0, 0], sizes = [8, 64], strides = [1, 1]} : vector<8x96xf32> to vector<8x64xf32>
    %380 = vector.extract_strided_slice %354 {offsets = [0, 0], sizes = [8, 64], strides = [1, 1]} : vector<8x96xf32> to vector<8x64xf32>
    %381 = arith.addf %379, %380 : vector<8x64xf32>
    %382 = arith.negf %381 : vector<8x64xf32>
    %383 = math.exp %382 : vector<8x64xf32>
    %cst_100 = arith.constant 1.000000e+00 : f32
    %384 = vector.broadcast %cst_100 : f32 to vector<8x64xf32>
    %385 = arith.addf %384, %383 : vector<8x64xf32>
    %386 = arith.divf %384, %385 : vector<8x64xf32>
    %387 = vector.extract_strided_slice %386 {offsets = [0, 0], sizes = [8, 32], strides = [1, 1]} : vector<8x64xf32> to vector<8x32xf32>
    %388 = vector.extract_strided_slice %386 {offsets = [0, 32], sizes = [8, 32], strides = [1, 1]} : vector<8x64xf32> to vector<8x32xf32>
    %389 = vector.extract_strided_slice %377 {offsets = [0, 64], sizes = [8, 32], strides = [1, 1]} : vector<8x96xf32> to vector<8x32xf32>
    %390 = vector.extract_strided_slice %354 {offsets = [0, 64], sizes = [8, 32], strides = [1, 1]} : vector<8x96xf32> to vector<8x32xf32>
    %391 = arith.mulf %387, %390 : vector<8x32xf32>
    %392 = arith.addf %389, %391 : vector<8x32xf32>
    %393 = math.tanh %392 : vector<8x32xf32>
    %cst_101 = arith.constant 1.000000e+00 : f32
    %394 = vector.broadcast %cst_101 : f32 to vector<8x32xf32>
    %395 = arith.subf %394, %388 : vector<8x32xf32>
    %396 = arith.mulf %395, %393 : vector<8x32xf32>
    %397 = arith.mulf %388, %378 : vector<8x32xf32>
    %398 = arith.addf %396, %397 : vector<8x32xf32>
    %c48_102 = arith.constant 48 : index
    %c0_103 = arith.constant 0 : index
    %399 = vector.load %arg9[%c48_102, %c0_103] : memref<64x32xf32, #tpu.memory_space<vmem>>, vector<8x32xf32>
    tpu.vector_store %arg9[%c48_102, %c0_103], %376 {strides = array<i32>} : memref<64x32xf32, #tpu.memory_space<vmem>>, vector<8x32xf32>,
    %c8_104 = arith.constant 8 : index
    %c0_105 = arith.constant 0 : index
    %400 = vector.load %arg10[%c8_104, %c0_105] : memref<64x32xf32, #tpu.memory_space<vmem>>, vector<8x32xf32>
    tpu.vector_store %arg10[%c8_104, %c0_105], %398 {strides = array<i32>} : memref<64x32xf32, #tpu.memory_space<vmem>>, vector<8x32xf32>,
    %401 = tpu.concatenate %376, %398 in 1 : vector<8x32xf32>, vector<8x32xf32> -> vector<8x64xf32>
    %402 = arith.truncf %401 : vector<8x64xf32> to vector<8x64xbf16>
    %cst_106 = arith.constant dense<0.000000e+00> : vector<8x192xf32>
    %403 = tpu.matmul %402, %13, %cst_106 {dimension_numbers = #tpu.dot_dimension_numbers<[1], [0], [0], [1], [0, 0, 1, 1], [], []>} : vector<8x64xbf16>, vector<64x192xbf16>, vector<8x192xf32> -> vector<8x192xf32>
    %404 = vector.extract_strided_slice %403 {offsets = [0, 0], sizes = [8, 96], strides = [1, 1]} : vector<8x192xf32> to vector<8x96xf32>
    %405 = vector.broadcast %14 : vector<1x96xf32> to vector<8x96xf32>
    %406 = arith.addf %404, %405 : vector<8x96xf32>
    %407 = vector.extract_strided_slice %403 {offsets = [0, 96], sizes = [8, 96], strides = [1, 1]} : vector<8x192xf32> to vector<8x96xf32>
    %408 = vector.broadcast %15 : vector<1x96xf32> to vector<8x96xf32>
    %409 = arith.addf %407, %408 : vector<8x96xf32>
    %c56_107 = arith.constant 56 : index
    %c0_108 = arith.constant 0 : index
    %410 = vector.load %arg11[%c56_107, %c0_108] : memref<64x96xf32, #tpu.memory_space<vmem>>, vector<8x96xf32>
    %411 = vector.extract_strided_slice %401 {offsets = [0, 0], sizes = [8, 32], strides = [1, 1]} : vector<8x64xf32> to vector<8x32xf32>
    %412 = vector.extract_strided_slice %410 {offsets = [0, 0], sizes = [8, 64], strides = [1, 1]} : vector<8x96xf32> to vector<8x64xf32>
    %413 = vector.extract_strided_slice %406 {offsets = [0, 0], sizes = [8, 64], strides = [1, 1]} : vector<8x96xf32> to vector<8x64xf32>
    %414 = arith.addf %412, %413 : vector<8x64xf32>
    %415 = arith.negf %414 : vector<8x64xf32>
    %416 = math.exp %415 : vector<8x64xf32>
    %cst_109 = arith.constant 1.000000e+00 : f32
    %417 = vector.broadcast %cst_109 : f32 to vector<8x64xf32>
    %418 = arith.addf %417, %416 : vector<8x64xf32>
    %419 = arith.divf %417, %418 : vector<8x64xf32>
    %420 = vector.extract_strided_slice %419 {offsets = [0, 0], sizes = [8, 32], strides = [1, 1]} : vector<8x64xf32> to vector<8x32xf32>
    %421 = vector.extract_strided_slice %419 {offsets = [0, 32], sizes = [8, 32], strides = [1, 1]} : vector<8x64xf32> to vector<8x32xf32>
    %422 = vector.extract_strided_slice %410 {offsets = [0, 64], sizes = [8, 32], strides = [1, 1]} : vector<8x96xf32> to vector<8x32xf32>
    %423 = vector.extract_strided_slice %406 {offsets = [0, 64], sizes = [8, 32], strides = [1, 1]} : vector<8x96xf32> to vector<8x32xf32>
    %424 = arith.mulf %420, %423 : vector<8x32xf32>
    %425 = arith.addf %422, %424 : vector<8x32xf32>
    %426 = math.tanh %425 : vector<8x32xf32>
    %cst_110 = arith.constant 1.000000e+00 : f32
    %427 = vector.broadcast %cst_110 : f32 to vector<8x32xf32>
    %428 = arith.subf %427, %421 : vector<8x32xf32>
    %429 = arith.mulf %428, %426 : vector<8x32xf32>
    %430 = arith.mulf %421, %411 : vector<8x32xf32>
    %431 = arith.addf %429, %430 : vector<8x32xf32>
    %c0_111 = arith.constant 0 : index
    %c0_112 = arith.constant 0 : index
    %432 = vector.load %arg12[%c0_111, %c0_112] : memref<64x96xf32, #tpu.memory_space<vmem>>, vector<8x96xf32>
    %433 = vector.extract_strided_slice %401 {offsets = [0, 32], sizes = [8, 32], strides = [1, 1]} : vector<8x64xf32> to vector<8x32xf32>
    %434 = vector.extract_strided_slice %432 {offsets = [0, 0], sizes = [8, 64], strides = [1, 1]} : vector<8x96xf32> to vector<8x64xf32>
    %435 = vector.extract_strided_slice %409 {offsets = [0, 0], sizes = [8, 64], strides = [1, 1]} : vector<8x96xf32> to vector<8x64xf32>
    %436 = arith.addf %434, %435 : vector<8x64xf32>
    %437 = arith.negf %436 : vector<8x64xf32>
    %438 = math.exp %437 : vector<8x64xf32>
    %cst_113 = arith.constant 1.000000e+00 : f32
    %439 = vector.broadcast %cst_113 : f32 to vector<8x64xf32>
    %440 = arith.addf %439, %438 : vector<8x64xf32>
    %441 = arith.divf %439, %440 : vector<8x64xf32>
    %442 = vector.extract_strided_slice %441 {offsets = [0, 0], sizes = [8, 32], strides = [1, 1]} : vector<8x64xf32> to vector<8x32xf32>
    %443 = vector.extract_strided_slice %441 {offsets = [0, 32], sizes = [8, 32], strides = [1, 1]} : vector<8x64xf32> to vector<8x32xf32>
    %444 = vector.extract_strided_slice %432 {offsets = [0, 64], sizes = [8, 32], strides = [1, 1]} : vector<8x96xf32> to vector<8x32xf32>
    %445 = vector.extract_strided_slice %409 {offsets = [0, 64], sizes = [8, 32], strides = [1, 1]} : vector<8x96xf32> to vector<8x32xf32>
    %446 = arith.mulf %442, %445 : vector<8x32xf32>
    %447 = arith.addf %444, %446 : vector<8x32xf32>
    %448 = math.tanh %447 : vector<8x32xf32>
    %cst_114 = arith.constant 1.000000e+00 : f32
    %449 = vector.broadcast %cst_114 : f32 to vector<8x32xf32>
    %450 = arith.subf %449, %443 : vector<8x32xf32>
    %451 = arith.mulf %450, %448 : vector<8x32xf32>
    %452 = arith.mulf %443, %433 : vector<8x32xf32>
    %453 = arith.addf %451, %452 : vector<8x32xf32>
    %c56_115 = arith.constant 56 : index
    %c0_116 = arith.constant 0 : index
    %454 = vector.load %arg9[%c56_115, %c0_116] : memref<64x32xf32, #tpu.memory_space<vmem>>, vector<8x32xf32>
    tpu.vector_store %arg9[%c56_115, %c0_116], %431 {strides = array<i32>} : memref<64x32xf32, #tpu.memory_space<vmem>>, vector<8x32xf32>,
    %c0_117 = arith.constant 0 : index
    %c0_118 = arith.constant 0 : index
    %455 = vector.load %arg10[%c0_117, %c0_118] : memref<64x32xf32, #tpu.memory_space<vmem>>, vector<8x32xf32>
    tpu.vector_store %arg10[%c0_117, %c0_118], %453 {strides = array<i32>} : memref<64x32xf32, #tpu.memory_space<vmem>>, vector<8x32xf32>,
    return
  }
}

module attributes {stable_mosaic.version = 11 : i64} {
  func.func @_nll_kernel(%arg0: i32, %arg1: i32, %arg2: memref<8x32xf32, #tpu.memory_space<vmem>>, %arg3: memref<8x32xf32, #tpu.memory_space<vmem>>, %arg4: memref<32x256xbf16, #tpu.memory_space<vmem>>, %arg5: memref<32x256xbf16, #tpu.memory_space<vmem>>, %arg6: memref<1x256xf32, #tpu.memory_space<vmem>>, %arg7: memref<8x1xi32, #tpu.memory_space<vmem>>, %arg8: memref<8x128xf32, #tpu.memory_space<vmem>>, %arg9: memref<8x1xf32, #tpu.memory_space<vmem>>, %arg10: memref<8x1xf32, #tpu.memory_space<vmem>>, %arg11: memref<8x1xf32, #tpu.memory_space<vmem>>) attributes {dimension_semantics = [#tpu.dimension_semantics<parallel>, #tpu.dimension_semantics<arbitrary>], iteration_bounds = array<i64: 7, 1>, scalar_prefetch = 0 : i64, scratch_operands = 3 : i64, tpu.core_type = #tpu.core_type<tc>, window_params = [{transform_indices = @transform_0, window_bounds = array<i64: 8, 32>}, {transform_indices = @transform_1, window_bounds = array<i64: 8, 32>}, {transform_indices = @transform_2, window_bounds = array<i64: 32, 256>}, {transform_indices = @transform_3, window_bounds = array<i64: 32, 256>}, {transform_indices = @transform_4, window_bounds = array<i64: 1, 256>}, {transform_indices = @transform_5, window_bounds = array<i64: 8, 1>}, {transform_indices = @transform_6, window_bounds = array<i64: 8, 128>}]} {
    %c0_i32 = arith.constant 0 : i32
    %0 = arith.cmpi eq, %arg1, %c0_i32 : i32
    %1 = arith.extui %0 : i1 to i32
    %c0_i32_0 = arith.constant 0 : i32
    %2 = arith.cmpi ne, %1, %c0_i32_0 : i32
    scf.if %2 {
      %cst_31 = arith.constant 0xFF800000 : f32
      %48 = vector.broadcast %cst_31 : f32 to vector<8x1xf32>
      %c0_32 = arith.constant 0 : index
      %c0_33 = arith.constant 0 : index
      %49 = vector.load %arg9[%c0_32, %c0_33] : memref<8x1xf32, #tpu.memory_space<vmem>>, vector<8x1xf32>
      tpu.vector_store %arg9[%c0_32, %c0_33], %48 {strides = array<i32>} : memref<8x1xf32, #tpu.memory_space<vmem>>, vector<8x1xf32>,
      %cst_34 = arith.constant 0.000000e+00 : f32
      %50 = vector.broadcast %cst_34 : f32 to vector<8x1xf32>
      %c0_35 = arith.constant 0 : index
      %c0_36 = arith.constant 0 : index
      %51 = vector.load %arg10[%c0_35, %c0_36] : memref<8x1xf32, #tpu.memory_space<vmem>>, vector<8x1xf32>
      tpu.vector_store %arg10[%c0_35, %c0_36], %50 {strides = array<i32>} : memref<8x1xf32, #tpu.memory_space<vmem>>, vector<8x1xf32>,
      %cst_37 = arith.constant 0.000000e+00 : f32
      %52 = vector.broadcast %cst_37 : f32 to vector<8x1xf32>
      %c0_38 = arith.constant 0 : index
      %c0_39 = arith.constant 0 : index
      %53 = vector.load %arg11[%c0_38, %c0_39] : memref<8x1xf32, #tpu.memory_space<vmem>>, vector<8x1xf32>
      tpu.vector_store %arg11[%c0_38, %c0_39], %52 {strides = array<i32>} : memref<8x1xf32, #tpu.memory_space<vmem>>, vector<8x1xf32>,
    } else {
    }
    %c0 = arith.constant 0 : index
    %c0_1 = arith.constant 0 : index
    %3 = vector.load %arg2[%c0, %c0_1] : memref<8x32xf32, #tpu.memory_space<vmem>>, vector<8x32xf32>
    %4 = arith.truncf %3 : vector<8x32xf32> to vector<8x32xbf16>
    %c0_2 = arith.constant 0 : index
    %c0_3 = arith.constant 0 : index
    %5 = vector.load %arg3[%c0_2, %c0_3] : memref<8x32xf32, #tpu.memory_space<vmem>>, vector<8x32xf32>
    %6 = arith.truncf %5 : vector<8x32xf32> to vector<8x32xbf16>
    %c0_4 = arith.constant 0 : index
    %c0_5 = arith.constant 0 : index
    %7 = vector.load %arg4[%c0_4, %c0_5] : memref<32x256xbf16, #tpu.memory_space<vmem>>, vector<32x256xbf16>
    %cst = arith.constant dense<0.000000e+00> : vector<8x256xf32>
    %8 = tpu.matmul %4, %7, %cst {dimension_numbers = #tpu.dot_dimension_numbers<[1], [0], [0], [1], [0, 0, 1, 1], [], []>} : vector<8x32xbf16>, vector<32x256xbf16>, vector<8x256xf32> -> vector<8x256xf32>
    %c0_6 = arith.constant 0 : index
    %c0_7 = arith.constant 0 : index
    %9 = vector.load %arg5[%c0_6, %c0_7] : memref<32x256xbf16, #tpu.memory_space<vmem>>, vector<32x256xbf16>
    %cst_8 = arith.constant dense<0.000000e+00> : vector<8x256xf32>
    %10 = tpu.matmul %6, %9, %cst_8 {dimension_numbers = #tpu.dot_dimension_numbers<[1], [0], [0], [1], [0, 0, 1, 1], [], []>} : vector<8x32xbf16>, vector<32x256xbf16>, vector<8x256xf32> -> vector<8x256xf32>
    %11 = arith.addf %8, %10 : vector<8x256xf32>
    %c0_9 = arith.constant 0 : index
    %c0_10 = arith.constant 0 : index
    %12 = vector.load %arg6[%c0_9, %c0_10] : memref<1x256xf32, #tpu.memory_space<vmem>>, vector<1x256xf32>
    %13 = vector.broadcast %12 : vector<1x256xf32> to vector<8x256xf32>
    %14 = arith.addf %11, %13 : vector<8x256xf32>
    %c0_11 = arith.constant 0 : index
    %c0_12 = arith.constant 0 : index
    %15 = vector.load %arg9[%c0_11, %c0_12] : memref<8x1xf32, #tpu.memory_space<vmem>>, vector<8x1xf32>
    %cst_13 = arith.constant dense<0xFF800000> : vector<8xf32>
    %16 = vector.multi_reduction <maximumf>, %14, %cst_13 [1] : vector<8x256xf32> to vector<8xf32>
    %17 = vector.shape_cast %16 : vector<8xf32> to vector<8x1xf32>
    %18 = arith.maximumf %15, %17 : vector<8x1xf32>
    %c0_14 = arith.constant 0 : index
    %c0_15 = arith.constant 0 : index
    %19 = vector.load %arg10[%c0_14, %c0_15] : memref<8x1xf32, #tpu.memory_space<vmem>>, vector<8x1xf32>
    %20 = arith.subf %15, %18 : vector<8x1xf32>
    %21 = math.exp %20 : vector<8x1xf32>
    %22 = arith.mulf %19, %21 : vector<8x1xf32>
    %23 = vector.broadcast %18 : vector<8x1xf32> to vector<8x256xf32>
    %24 = arith.subf %14, %23 : vector<8x256xf32>
    %25 = math.exp %24 : vector<8x256xf32>
    %cst_16 = arith.constant dense<0.000000e+00> : vector<8xf32>
    %26 = vector.multi_reduction <add>, %25, %cst_16 [1] : vector<8x256xf32> to vector<8xf32>
    %27 = vector.shape_cast %26 : vector<8xf32> to vector<8x1xf32>
    %28 = arith.addf %22, %27 : vector<8x1xf32>
    %c0_17 = arith.constant 0 : index
    %c0_18 = arith.constant 0 : index
    %29 = vector.load %arg10[%c0_17, %c0_18] : memref<8x1xf32, #tpu.memory_space<vmem>>, vector<8x1xf32>
    tpu.vector_store %arg10[%c0_17, %c0_18], %28 {strides = array<i32>} : memref<8x1xf32, #tpu.memory_space<vmem>>, vector<8x1xf32>,
    %c0_19 = arith.constant 0 : index
    %c0_20 = arith.constant 0 : index
    %30 = vector.load %arg9[%c0_19, %c0_20] : memref<8x1xf32, #tpu.memory_space<vmem>>, vector<8x1xf32>
    tpu.vector_store %arg9[%c0_19, %c0_20], %18 {strides = array<i32>} : memref<8x1xf32, #tpu.memory_space<vmem>>, vector<8x1xf32>,
    %c256_i32 = arith.constant 256 : i32
    %31 = arith.muli %arg1, %c256_i32 : i32
    %32 = tpu.iota {dimensions = array<i32: 1>} : vector<8x256xi32>
    %33 = vector.broadcast %31 : i32 to vector<8x256xi32>
    %34 = arith.addi %33, %32 : vector<8x256xi32>
    %c0_21 = arith.constant 0 : index
    %c0_22 = arith.constant 0 : index
    %35 = vector.load %arg7[%c0_21, %c0_22] : memref<8x1xi32, #tpu.memory_space<vmem>>, vector<8x1xi32>
    %36 = vector.broadcast %35 : vector<8x1xi32> to vector<8x256xi32>
    %37 = arith.cmpi eq, %34, %36 : vector<8x256xi32>
    %c0_23 = arith.constant 0 : index
    %c0_24 = arith.constant 0 : index
    %38 = vector.load %arg11[%c0_23, %c0_24] : memref<8x1xf32, #tpu.memory_space<vmem>>, vector<8x1xf32>
    %cst_25 = arith.constant 0.000000e+00 : f32
    %39 = vector.broadcast %cst_25 : f32 to vector<8x256xf32>
    %40 = arith.select %37, %14, %39 : vector<8x256xi1>, vector<8x256xf32>
    %cst_26 = arith.constant dense<0.000000e+00> : vector<8xf32>
    %41 = vector.multi_reduction <add>, %40, %cst_26 [1] : vector<8x256xf32> to vector<8xf32>
    %42 = vector.shape_cast %41 : vector<8xf32> to vector<8x1xf32>
    %43 = arith.addf %38, %42 : vector<8x1xf32>
    %c0_27 = arith.constant 0 : index
    %c0_28 = arith.constant 0 : index
    %44 = vector.load %arg11[%c0_27, %c0_28] : memref<8x1xf32, #tpu.memory_space<vmem>>, vector<8x1xf32>
    tpu.vector_store %arg11[%c0_27, %c0_28], %43 {strides = array<i32>} : memref<8x1xf32, #tpu.memory_space<vmem>>, vector<8x1xf32>,
    %c0_i32_29 = arith.constant 0 : i32
    %45 = arith.cmpi eq, %arg1, %c0_i32_29 : i32
    %46 = arith.extui %45 : i1 to i32
    %c0_i32_30 = arith.constant 0 : i32
    %47 = arith.cmpi ne, %46, %c0_i32_30 : i32
    scf.if %47 {
      %c0_31 = arith.constant 0 : index
      %c0_32 = arith.constant 0 : index
      %48 = vector.load %arg9[%c0_31, %c0_32] : memref<8x1xf32, #tpu.memory_space<vmem>>, vector<8x1xf32>
      %c0_33 = arith.constant 0 : index
      %c0_34 = arith.constant 0 : index
      %49 = vector.load %arg10[%c0_33, %c0_34] : memref<8x1xf32, #tpu.memory_space<vmem>>, vector<8x1xf32>
      %50 = math.log %49 : vector<8x1xf32>
      %51 = arith.addf %48, %50 : vector<8x1xf32>
      %c0_35 = arith.constant 0 : index
      %c0_36 = arith.constant 0 : index
      %52 = vector.load %arg11[%c0_35, %c0_36] : memref<8x1xf32, #tpu.memory_space<vmem>>, vector<8x1xf32>
      %53 = arith.subf %52, %51 : vector<8x1xf32>
      %c0_37 = arith.constant 0 : index
      %c0_38 = arith.constant 0 : index
      %54 = vector.load %arg7[%c0_37, %c0_38] : memref<8x1xi32, #tpu.memory_space<vmem>>, vector<8x1xi32>
      %c0_i32_39 = arith.constant 0 : i32
      %55 = vector.broadcast %c0_i32_39 : i32 to vector<8x1xi32>
      %56 = arith.cmpi ne, %54, %55 : vector<8x1xi32>
      %57 = arith.extui %56 : vector<8x1xi1> to vector<8x1xi32>
      %58 = arith.sitofp %57 : vector<8x1xi32> to vector<8x1xf32>
      %59 = arith.mulf %53, %58 : vector<8x1xf32>
      %60 = vector.shape_cast %59 : vector<8x1xf32> to vector<1x8x1xf32>
      %cst_40 = arith.constant dense<0.000000e+00> : vector<1xf32>
      %61 = vector.multi_reduction <add>, %60, %cst_40 [1, 2] : vector<1x8x1xf32> to vector<1xf32>
      %62 = vector.shape_cast %61 : vector<1xf32> to vector<1x1x1xf32>
      %63 = vector.extract %62[0, 0, 0] : f32 from vector<1x1x1xf32>
      %cst_41 = arith.constant 0.000000e+00 : f32
      %64 = arith.subf %cst_41, %63 : f32
      %65 = vector.shape_cast %58 : vector<8x1xf32> to vector<1x8x1xf32>
      %cst_42 = arith.constant dense<0.000000e+00> : vector<1xf32>
      %66 = vector.multi_reduction <add>, %65, %cst_42 [1, 2] : vector<1x8x1xf32> to vector<1xf32>
      %67 = vector.shape_cast %66 : vector<1xf32> to vector<1x1x1xf32>
      %68 = vector.extract %67[0, 0, 0] : f32 from vector<1x1x1xf32>
      %69 = tpu.iota {dimensions = array<i32: 1>} : vector<8x128xi32>
      %c0_i32_43 = arith.constant 0 : i32
      %70 = vector.broadcast %c0_i32_43 : i32 to vector<8x128xi32>
      %71 = arith.cmpi eq, %69, %70 : vector<8x128xi32>
      %c1_i32 = arith.constant 1 : i32
      %72 = vector.broadcast %c1_i32 : i32 to vector<8x128xi32>
      %73 = arith.cmpi eq, %69, %72 : vector<8x128xi32>
      %cst_44 = arith.constant 0.000000e+00 : f32
      %74 = vector.broadcast %68 : f32 to vector<8x128xf32>
      %75 = vector.broadcast %cst_44 : f32 to vector<8x128xf32>
      %76 = arith.select %73, %74, %75 : vector<8x128xi1>, vector<8x128xf32>
      %77 = vector.broadcast %64 : f32 to vector<8x128xf32>
      %78 = arith.select %71, %77, %76 : vector<8x128xi1>, vector<8x128xf32>
      %c0_45 = arith.constant 0 : index
      %c0_46 = arith.constant 0 : index
      %79 = vector.load %arg8[%c0_45, %c0_46] : memref<8x128xf32, #tpu.memory_space<vmem>>, vector<8x128xf32>
      tpu.vector_store %arg8[%c0_45, %c0_46], %78 {strides = array<i32>} : memref<8x128xf32, #tpu.memory_space<vmem>>, vector<8x128xf32>,
    } else {
    }
    return
  }
  func.func @transform_0(%arg0: i32, %arg1: i32) -> (i32, i32) {
    %c0_i32 = arith.constant 0 : i32
    %c0_i32_0 = arith.constant 0 : i32
    return %arg0, %c0_i32 : i32, i32
  }
  func.func @transform_1(%arg0: i32, %arg1: i32) -> (i32, i32) {
    %c0_i32 = arith.constant 0 : i32
    %c0_i32_0 = arith.constant 0 : i32
    return %arg0, %c0_i32 : i32, i32
  }
  func.func @transform_2(%arg0: i32, %arg1: i32) -> (i32, i32) {
    %c0_i32 = arith.constant 0 : i32
    %c0_i32_0 = arith.constant 0 : i32
    return %c0_i32, %arg1 : i32, i32
  }
  func.func @transform_3(%arg0: i32, %arg1: i32) -> (i32, i32) {
    %c0_i32 = arith.constant 0 : i32
    %c0_i32_0 = arith.constant 0 : i32
    return %c0_i32, %arg1 : i32, i32
  }
  func.func @transform_4(%arg0: i32, %arg1: i32) -> (i32, i32) {
    %c0_i32 = arith.constant 0 : i32
    %c0_i32_0 = arith.constant 0 : i32
    return %c0_i32, %arg1 : i32, i32
  }
  func.func @transform_5(%arg0: i32, %arg1: i32) -> (i32, i32) {
    %c0_i32 = arith.constant 0 : i32
    %c0_i32_0 = arith.constant 0 : i32
    return %arg0, %c0_i32 : i32, i32
  }
  func.func @transform_6(%arg0: i32, %arg1: i32) -> (i32, i32) {
    %c0_i32 = arith.constant 0 : i32
    %c0_i32_0 = arith.constant 0 : i32
    return %arg0, %c0_i32 : i32, i32
  }
}

</mosaic_0001>

<llo_original>
// kernel: vae_forward.7
$region0: #{vae_forward.7}
  #allocation0 [shape = 'u32[]', space=smem, size = 0x4, offset = 0x4, fixed_abs, tag = 'smem constant byte address 0x4 - core index']
  #allocation1 [shape = 'u32[144,128]{1,0:T(1,128)}', space=vmem, size = 0x12000, scoped, tag = 'internal scratch']
  %s0 = inlined_call_operand.vmem [shape: f32[2,64], index: 0, kind: input, shape index: {}]
  %s1 = inlined_call_operand.hbm [shape: f32[4,64], index: 1, kind: input, shape index: {}]
  %s2 = inlined_call_operand.hbm [shape: f32[64,128], index: 2, kind: input, shape index: {}]
  %s3 = inlined_call_operand.vmem [shape: f32[1,128], index: 3, kind: input, shape index: {}]
  %s4 = inlined_call_operand.hbm [shape: f32[64,128], index: 4, kind: input, shape index: {}]
  %s5 = inlined_call_operand.hbm [shape: f32[1,128], index: 5, kind: input, shape index: {}]
  %s6 = inlined_call_operand.hbm [shape: f32[64,64], index: 6, kind: input, shape index: {}]
  %s7 = inlined_call_operand.hbm [shape: f32[1,64], index: 7, kind: input, shape index: {}]
  %s8 = inlined_call_operand.vmem [shape: f32[2,64], index: 8, kind: input, shape index: {}]
  %s9 = inlined_call_operand.vmem [shape: f32[4,64], index: 9, kind: input, shape index: {}]
  %s10 = inlined_call_operand.vmem [shape: f32[2,64], index: 10, kind: output, shape index: {0}]
  %s11 = inlined_call_operand.vmem [shape: f32[2,1], index: 11, kind: output, shape index: {1}]
  %s12 = inlined_call_operand.vmem [shape: f32[2,1], index: 12, kind: output, shape index: {2}]
  %s13 = inlined_call_operand.hbm [shape: f32[1,1], index: 13, kind: output, shape index: {3}]
  %s14 = inlined_call_operand.hbm [shape: f32[1,1], index: 14, kind: output, shape index: {4}]
  %15 = xla_tuple %s10, %s11, %s12, %s13, %s14
  %s16 = sld [smem:[#allocation0]]
  $region106: #{vae_forward.7} parent=0
    _
  %s18 = ssub.s32 1, %s16
  %s19 = scalar_select 0, %s18, %s16
  $region1: #{vae_forward.7} parent=0
    #allocation2 [shape = 'u8[2048]{0}', space=vmem, size = 0x800, scoped, tag = 'input window, operand 1, single buffered']
    #allocation3 [shape = 's32[1]{0}', space=sflag, size = 0x4, scoped, tag = 'scoped memory for vae_forward.7']
    #allocation4 [shape = 's32[1]{0}', space=sflag, size = 0x4, scoped, tag = 'scoped memory for vae_forward.7']
    #allocation5 [shape = 'u8[32768]{0}', space=vmem, size = 0x8000, scoped, tag = 'input window, operand 2, single buffered']
    #allocation6 [shape = 's32[1]{0}', space=sflag, size = 0x4, scoped, tag = 'scoped memory for vae_forward.7']
    #allocation7 [shape = 'u8[32768]{0}', space=vmem, size = 0x8000, scoped, tag = 'input window, operand 4, single buffered']
    #allocation8 [shape = 'u8[512]{0}', space=vmem, size = 0x400, scoped, tag = 'input window, operand 5, single buffered']
    #allocation9 [shape = 's32[1]{0}', space=sflag, size = 0x4, scoped, tag = 'scoped memory for vae_forward.7']
    #allocation10 [shape = 'u8[32768]{0}', space=vmem, size = 0x8000, scoped, tag = 'input window, operand 6, single buffered']
    #allocation11 [shape = 'u8[512]{0}', space=vmem, size = 0x400, scoped, tag = 'input window, operand 7, single buffered']
    #allocation12 [shape = 's32[1]{0}', space=sflag, size = 0x4, scoped, tag = 'scoped memory for vae_forward.7']
    #allocation13 [shape = 'u8[512]{0}', space=vmem, size = 0x400, scoped, tag = 'output window, operand 3, single buffered']
    #allocation14 [shape = 'u8[512]{0}', space=vmem, size = 0x400, scoped, tag = 'output window, operand 4, single buffered']
    #allocation15 [shape = 's32[1]{0}', space=sflag, size = 0x4, scoped, tag = 'scoped memory for vae_forward.7']
    %20 = vsyncpa [#allocation3], 0
    %21 = vsyncpa [#allocation6], 0
    %22 = vsyncpa [#allocation9], 0
    %23 = vsyncpa [#allocation12], 0
    %24 = vsyncpa [#allocation4], 0
    %25 = vsyncpa [#allocation15], 0
    // Predicated region
    $region2: #{vae_forward.7} parent=1 // pred_check
      _
    $region3: #{vae_forward.7} parent=1 // pred_check_branch
      %27 = sbr.rel (0) target = $region5
    $region4: #{vae_forward.7} parent=1 // pred_region
      _
    $region5: #{vae_forward.7} parent=1 // pred_fallthru
      _
    // Predicated region
    $region6: #{vae_forward.7} parent=1 // pred_check
      _
    $region7: #{vae_forward.7} parent=1 // pred_check_branch
      %29 = sbr.rel (0) target = $region9
    $region8: #{vae_forward.7} parent=1 // pred_region
      %s31 = ssub.s32 64, 64
      %32 = vsyncadd [#allocation3], %s31
      %s34 = sshll.u32 [#allocation2], 4
      %s35 = int_to_ptr.vmem [resolvable:$true] %s34
      %37 = dma.hbm_to_vmem [thread:$0]  %s1, 64, %s35, [#allocation3]
    $region9: #{vae_forward.7} parent=1 // pred_fallthru
      _
    // Predicated region
    $region10: #{vae_forward.7} parent=1 // pred_check
      _
    $region11: #{vae_forward.7} parent=1 // pred_check_branch
      %39 = sbr.rel (0) target = $region13
    $region12: #{vae_forward.7} parent=1 // pred_region
      %s41 = ssub.s32 1024, 1024
      %42 = vsyncadd [#allocation6], %s41
      %s43 = sshll.u32 [#allocation5], 4
      %s44 = int_to_ptr.vmem [resolvable:$true] %s43
      %49 = dma.hbm_to_vmem [thread:$0]  %s2, 1024, %s44, [#allocation6], 128, 128, 8
    $region13: #{vae_forward.7} parent=1 // pred_fallthru
      _
    // Predicated region
    $region14: #{vae_forward.7} parent=1 // pred_check
      _
    $region15: #{vae_forward.7} parent=1 // pred_check_branch
      %51 = sbr.rel (0) target = $region17
    $region16: #{vae_forward.7} parent=1 // pred_region
      _
    $region17: #{vae_forward.7} parent=1 // pred_fallthru
      _
    // Predicated region
    $region18: #{vae_forward.7} parent=1 // pred_check
      _
    $region19: #{vae_forward.7} parent=1 // pred_check_branch
      %53 = sbr.rel (0) target = $region21
    $region20: #{vae_forward.7} parent=1 // pred_region
      %s55 = ssub.s32 1024, 1024
      %56 = vsyncadd [#allocation6], %s55
      %s57 = sshll.u32 [#allocation7], 4
      %s58 = int_to_ptr.vmem [resolvable:$true] %s57
      %63 = dma.hbm_to_vmem [thread:$0]  %s4, 1024, %s58, [#allocation6], 128, 128, 8
    $region21: #{vae_forward.7} parent=1 // pred_fallthru
      _
    // Predicated region
    $region22: #{vae_forward.7} parent=1 // pred_check
      _
    $region23: #{vae_forward.7} parent=1 // pred_check_branch
      %65 = sbr.rel (0) target = $region25
    $region24: #{vae_forward.7} parent=1 // pred_region
      %s67 = ssub.s32 16, 16
      %68 = vsyncadd [#allocation9], %s67
      %s70 = sshll.u32 [#allocation8], 4
      %s71 = int_to_ptr.vmem [resolvable:$true] %s70
      %73 = dma.hbm_to_vmem [thread:$0]  %s5, 16, %s71, [#allocation9]
    $region25: #{vae_forward.7} parent=1 // pred_fallthru
      _
    // Predicated region
    $region26: #{vae_forward.7} parent=1 // pred_check
      _
    $region27: #{vae_forward.7} parent=1 // pred_check_branch
      %75 = sbr.rel (0) target = $region29
    $region28: #{vae_forward.7} parent=1 // pred_region
      %s77 = ssub.s32 1024, 1024
      %78 = vsyncadd [#allocation9], %s77
      %s79 = sshll.u32 [#allocation10], 4
      %s80 = int_to_ptr.vmem [resolvable:$true] %s79
      %85 = dma.hbm_to_vmem [thread:$0]  %s6, 1024, %s80, [#allocation9], 128, 128, 8
    $region29: #{vae_forward.7} parent=1 // pred_fallthru
      _
    // Predicated region
    $region30: #{vae_forward.7} parent=1 // pred_check
      _
    $region31: #{vae_forward.7} parent=1 // pred_check_branch
      %87 = sbr.rel (0) target = $region33
    $region32: #{vae_forward.7} parent=1 // pred_region
      %s89 = ssub.s32 16, 16
      %90 = vsyncadd [#allocation12], %s89
      %s92 = sshll.u32 [#allocation11], 4
      %s93 = int_to_ptr.vmem [resolvable:$true] %s92
      %95 = dma.hbm_to_vmem [thread:$0]  %s7, 16, %s93, [#allocation12]
    $region33: #{vae_forward.7} parent=1 // pred_fallthru
      _
    // Predicated region
    $region34: #{vae_forward.7} parent=1 // pred_check
      _
    $region35: #{vae_forward.7} parent=1 // pred_check_branch
      %97 = sbr.rel (0) target = $region37
    $region36: #{vae_forward.7} parent=1 // pred_region
      _
    $region37: #{vae_forward.7} parent=1 // pred_fallthru
      _
    // Predicated region
    $region38: #{vae_forward.7} parent=1 // pred_check
      _
    $region39: #{vae_forward.7} parent=1 // pred_check_branch
      %99 = sbr.rel (0) target = $region41
    $region40: #{vae_forward.7} parent=1 // pred_region
      _
    $region41: #{vae_forward.7} parent=1 // pred_fallthru
      _
    // Predicated region
    $region42: #{vae_forward.7} parent=1 // pred_check
      _
    $region43: #{vae_forward.7} parent=1 // pred_check_branch
      %101 = sbr.rel (0) target = $region45
    $region44: #{vae_forward.7} parent=1 // pred_region
      %102 = dma.done [#allocation3], 64
    $region45: #{vae_forward.7} parent=1 // pred_fallthru
      _
    // Predicated region
    $region46: #{vae_forward.7} parent=1 // pred_check
      _
    $region47: #{vae_forward.7} parent=1 // pred_check_branch
      %104 = sbr.rel (0) target = $region49
    $region48: #{vae_forward.7} parent=1 // pred_region
      %105 = dma.done [#allocation6], 1024
    $region49: #{vae_forward.7} parent=1 // pred_fallthru
      _
    // Predicated region
    $region50: #{vae_forward.7} parent=1 // pred_check
      _
    $region51: #{vae_forward.7} parent=1 // pred_check_branch
      %107 = sbr.rel (0) target = $region53
    $region52: #{vae_forward.7} parent=1 // pred_region
      %108 = dma.done [#allocation6], 1024
    $region53: #{vae_forward.7} parent=1 // pred_fallthru
      _
    // Predicated region
    $region54: #{vae_forward.7} parent=1 // pred_check
      _
    $region55: #{vae_forward.7} parent=1 // pred_check_branch
      %110 = sbr.rel (0) target = $region57
    $region56: #{vae_forward.7} parent=1 // pred_region
      %111 = dma.done [#allocation9], 16
    $region57: #{vae_forward.7} parent=1 // pred_fallthru
      _
    // Predicated region
    $region58: #{vae_forward.7} parent=1 // pred_check
      _
    $region59: #{vae_forward.7} parent=1 // pred_check_branch
      %113 = sbr.rel (0) target = $region61
    $region60: #{vae_forward.7} parent=1 // pred_region
      %114 = dma.done [#allocation9], 1024
    $region61: #{vae_forward.7} parent=1 // pred_fallthru
      _
    // Predicated region
    $region62: #{vae_forward.7} parent=1 // pred_check
      _
    $region63: #{vae_forward.7} parent=1 // pred_check_branch
      %116 = sbr.rel (0) target = $region65
    $region64: #{vae_forward.7} parent=1 // pred_region
      %117 = dma.done [#allocation12], 16
    $region65: #{vae_forward.7} parent=1 // pred_fallthru
      _
    %v118 = vld [vmem:[%s0] sm:$0x3]
    %v119 = vld [vmem:[#allocation5] sm:$0xff]
    %v120 = vld [vmem:[#allocation5 + $0x8] sm:$0xff]
    %v121 = vld [vmem:[#allocation5 + $0x10] sm:$0xff]
    %v122 = vld [vmem:[#allocation5 + $0x18] sm:$0xff]
    %v123 = vld [vmem:[#allocation5 + $0x20] sm:$0xff]
    %v124 = vld [vmem:[#allocation5 + $0x28] sm:$0xff]
    %v125 = vld [vmem:[#allocation5 + $0x30] sm:$0xff]
    %v126 = vld [vmem:[#allocation5 + $0x38] sm:$0xff]
    %v127 = vld [vmem:[%s3] sm:$0x1]
    %v129 = vlaneseq
    %v130 = vshrl.u32 %v129, 7
    %v131 = vsub.s32 0, %v130
    %v132 = vrot.slane %v127, %v131
    %vm134 = vcmask 523264
    %v136 = vsel %vm134, %v118, 0
    %138 = vmatprep.subr.mxu0 0.0
    %139 = vmatpush1.msra.mxu0 %v119
    %140 = vmatprep.subr.mxu0 0.0
    %141 = vmatpush1.msra.mxu0 %v120
    %142 = vmatprep.subr.mxu0 0.0
    %143 = vmatpush1.msra.mxu0 %v121
    %144 = vmatprep.subr.mxu0 0.0
    %145 = vmatpush1.msra.mxu0 %v122
    %146 = vmatprep.subr.mxu0 0.0
    %147 = vmatpush1.msra.mxu0 %v123
    %148 = vmatprep.subr.mxu0 0.0
    %149 = vmatpush1.msra.mxu0 %v124
    %150 = vmatprep.subr.mxu0 0.0
    %151 = vmatpush1.msra.mxu0 %v125
    %152 = vmatprep.subr.mxu0 0.0
    %153 = vmatpush1.msra.mxu0 %v126
    %154 = vmatprep.subr.mxu0 0.0
    %155 = vmatpush1.msra.mxu0 0.0
    %156 = vmatprep.subr.mxu0 0.0
    %157 = vmatpush1.msra.mxu0 0.0
    %158 = vmatprep.subr.mxu0 0.0
    %159 = vmatpush1.msra.mxu0 0.0
    %160 = vmatprep.subr.mxu0 0.0
    %161 = vmatpush1.msra.mxu0 0.0
    %162 = vmatprep.subr.mxu0 0.0
    %163 = vmatpush1.msra.mxu0 0.0
    %164 = vmatprep.subr.mxu0 0.0
    %165 = vmatpush1.msra.mxu0 0.0
    %166 = vmatprep.subr.mxu0 0.0
    %167 = vmatpush1.msra.mxu0 0.0
    %168 = vmatprep.subr.mxu0 0.0
    %169 = vmatpush1.msra.mxu0 0.0
    %170 = vmatprep.subr.mxu0 0.0
    %171 = vmatpush1.msra.mxu0 0.0
    %172 = vmatprep.subr.mxu0 0.0
    %173 = vmatpush1.msra.mxu0 0.0
    %174 = vmatprep.subr.mxu0 0.0
    %175 = vmatpush1.msra.mxu0 0.0
    %176 = vmatprep.subr.mxu0 0.0
    %177 = vmatpush1.msra.mxu0 0.0
    %178 = vmatprep.subr.mxu0 0.0
    %179 = vmatpush1.msra.mxu0 0.0
    %180 = vmatprep.subr.mxu0 0.0
    %181 = vmatpush1.msra.mxu0 0.0
    %182 = vmatprep.subr.mxu0 0.0
    %183 = vmatpush1.msra.mxu0 0.0
    %184 = vmatprep.subr.mxu0 0.0
    %185 = vmatpush1.msra.mxu0 0.0
    %186 = vmatprep.subr.mxu0 0.0
    %187 = vmatpush1.msra.mxu0 0.0
    %188 = vmatprep.subr.mxu0 0.0
    %189 = vmatpush1.msra.mxu0 0.0
    %190 = vmatprep.subr.mxu0 0.0
    %191 = vmatpush1.msra.mxu0 0.0
    %192 = vmatprep.subr.mxu0 0.0
    %193 = vmatpush1.msra.mxu0 0.0
    %194 = vmatprep.subr.mxu0 0.0
    %195 = vmatpush1.msra.mxu0 0.0
    %196 = vmatprep.subr.mxu0 0.0
    %197 = vmatpush1.msra.mxu0 0.0
    %198 = vmatprep.subr.mxu0 0.0
    %199 = vmatpush1.msra.mxu0 0.0
    %200 = vmatprep.subr.mxu0 0.0
    %201 = vmatpush1.msra.mxu0 0.0
    %202 = vmatprep.mubr.f32.mxu0 0.0
    %203 = vmatmul.mubr.f32.gmra.mrb[0].mxu0 %v136
    %v204 = vpop.f32.mrb[0].mxu0
    %v205 = vadd.f32 %v132, %v204
    %v206 = vpop.f32.mrb[0].mxu0
    %207 = vdwg.mxu0
    %v208 = vld [vmem:[#allocation2] sm:$0xf]
    %v209 = vld [vmem:[#allocation7] sm:$0xff]
    %v210 = vld [vmem:[#allocation7 + $0x8] sm:$0xff]
    %v211 = vld [vmem:[#allocation7 + $0x10] sm:$0xff]
    %v212 = vld [vmem:[#allocation7 + $0x18] sm:$0xff]
    %v213 = vld [vmem:[#allocation7 + $0x20] sm:$0xff]
    %v214 = vld [vmem:[#allocation7 + $0x28] sm:$0xff]
    %v215 = vld [vmem:[#allocation7 + $0x30] sm:$0xff]
    %v216 = vld [vmem:[#allocation7 + $0x38] sm:$0xff]
    %v217 = vld [vmem:[#allocation8] sm:$0x1]
    %v219 = vlaneseq
    %v220 = vshrl.u32 %v219, 7
    %v221 = vsub.s32 0, %v220
    %v222 = vrot.slane %v217, %v221
    %v225 = vsel %vm134, %v208, 0
    %227 = vmatprep.subr.mxu0 0.0
    %228 = vmatpush1.msra.mxu0 %v209
    %229 = vmatprep.subr.mxu0 0.0
    %230 = vmatpush1.msra.mxu0 %v210
    %231 = vmatprep.subr.mxu0 0.0
    %232 = vmatpush1.msra.mxu0 %v211
    %233 = vmatprep.subr.mxu0 0.0
    %234 = vmatpush1.msra.mxu0 %v212
    %235 = vmatprep.subr.mxu0 0.0
    %236 = vmatpush1.msra.mxu0 %v213
    %237 = vmatprep.subr.mxu0 0.0
    %238 = vmatpush1.msra.mxu0 %v214
    %239 = vmatprep.subr.mxu0 0.0
    %240 = vmatpush1.msra.mxu0 %v215
    %241 = vmatprep.subr.mxu0 0.0
    %242 = vmatpush1.msra.mxu0 %v216
    %243 = vmatprep.subr.mxu0 0.0
    %244 = vmatpush1.msra.mxu0 0.0
    %245 = vmatprep.subr.mxu0 0.0
    %246 = vmatpush1.msra.mxu0 0.0
    %247 = vmatprep.subr.mxu0 0.0
    %248 = vmatpush1.msra.mxu0 0.0
    %249 = vmatprep.subr.mxu0 0.0
    %250 = vmatpush1.msra.mxu0 0.0
    %251 = vmatprep.subr.mxu0 0.0
    %252 = vmatpush1.msra.mxu0 0.0
    %253 = vmatprep.subr.mxu0 0.0
    %254 = vmatpush1.msra.mxu0 0.0
    %255 = vmatprep.subr.mxu0 0.0
    %256 = vmatpush1.msra.mxu0 0.0
    %257 = vmatprep.subr.mxu0 0.0
    %258 = vmatpush1.msra.mxu0 0.0
    %259 = vmatprep.subr.mxu0 0.0
    %260 = vmatpush1.msra.mxu0 0.0
    %261 = vmatprep.subr.mxu0 0.0
    %262 = vmatpush1.msra.mxu0 0.0
    %263 = vmatprep.subr.mxu0 0.0
    %264 = vmatpush1.msra.mxu0 0.0
    %265 = vmatprep.subr.mxu0 0.0
    %266 = vmatpush1.msra.mxu0 0.0
    %267 = vmatprep.subr.mxu0 0.0
    %268 = vmatpush1.msra.mxu0 0.0
    %269 = vmatprep.subr.mxu0 0.0
    %270 = vmatpush1.msra.mxu0 0.0
    %271 = vmatprep.subr.mxu0 0.0
    %272 = vmatpush1.msra.mxu0 0.0
    %273 = vmatprep.subr.mxu0 0.0
    %274 = vmatpush1.msra.mxu0 0.0
    %275 = vmatprep.subr.mxu0 0.0
    %276 = vmatpush1.msra.mxu0 0.0
    %277 = vmatprep.subr.mxu0 0.0
    %278 = vmatpush1.msra.mxu0 0.0
    %279 = vmatprep.subr.mxu0 0.0
    %280 = vmatpush1.msra.mxu0 0.0
    %281 = vmatprep.subr.mxu0 0.0
    %282 = vmatpush1.msra.mxu0 0.0
    %283 = vmatprep.subr.mxu0 0.0
    %284 = vmatpush1.msra.mxu0 0.0
    %285 = vmatprep.subr.mxu0 0.0
    %286 = vmatpush1.msra.mxu0 0.0
    %287 = vmatprep.subr.mxu0 0.0
    %288 = vmatpush1.msra.mxu0 0.0
    %289 = vmatprep.subr.mxu0 0.0
    %290 = vmatpush1.msra.mxu0 0.0
    %291 = vmatprep.mubr.f32.mxu0 0.0
    %292 = vmatmul.mubr.f32.gmra.mrb[0].mxu0 %v225
    %v293 = vpop.f32.mrb[0].mxu0
    %v294 = vadd.f32 %v222, %v293
    %v295 = vpop.f32.mrb[0].mxu0
    %296 = vdwg.mxu0
    %v297 = vld [vmem:[%s8] sm:$0x3]
    %v298 = vmul.f32 %v205, 0.5
    %v299 = vmul.f32 %v298, 1.442695
    %v300 = vpow.pop %v299
    %302 = vrot.lane.b32.xlu0 %v300, 64
    %v303 = vpop.permute.xlu0 %302
    %v305 = vmul.f32 %v297, %v303
    %v306 = vadd.f32 %v305, %v205
    %v307 = vld [vmem:[%s9] sm:$0xf]
    %v308 = vmul.f32 %v294, 0.5
    %v309 = vmul.f32 %v308, 1.442695
    %v310 = vpow.pop %v309
    %312 = vrot.lane.b32.xlu0 %v310, 64
    %v313 = vpop.permute.xlu0 %312
    %v315 = vmul.f32 %v307, %v313
    %v316 = vadd.f32 %v315, %v294
    %v317 = vmul.f32 %v306, %v316
    %vm318 = vcmask 517120
    %v319 = vsel %vm318, %v317, 0.0
    %320 = vadd.xlane.f32.xlu0 %v319
    %v321 = vpop.xlane.xlu0 %320
    %v322 = vmul.f32 %v306, %v306
    %v323 = vsel %vm318, %v322, 0.0
    %324 = vadd.xlane.f32.xlu0 %v323
    %v325 = vpop.xlane.xlu0 %324
    %v326 = vrsqrt.pop %v325
    %v327 = vmul.f32 %v325, %v326
    %vm328 = vcmp.eq.f32.partialorder %v325, inf
    %v329 = vsel %vm328, %v325, %v327
    %vm330 = vcmp.eq.f32.partialorder %v325, 0.0
    %v331 = vand.u32 %v325, 2147483648
    %v332 = vsel %vm330, %v331, %v329
    %v333 = vmul.f32 %v316, %v316
    %v334 = vsel %vm318, %v333, 0.0
    %335 = vadd.xlane.f32.xlu0 %v334
    %v336 = vpop.xlane.xlu0 %335
    %v337 = vrsqrt.pop %v336
    %v338 = vmul.f32 %v336, %v337
    %vm339 = vcmp.eq.f32.partialorder %v336, inf
    %v340 = vsel %vm339, %v336, %v338
    %vm341 = vcmp.eq.f32.partialorder %v336, 0.0
    %v342 = vand.u32 %v336, 2147483648
    %v343 = vsel %vm341, %v342, %v340
    %v344 = vmax.f32 %v332, 1e-08
    %v345 = vmax.f32 %v343, 1e-08
    %v346 = vmul.f32 %v344, %v345
    %v347 = vrcp.pop %v346
    %v348 = vmul.f32 %v321, %v347
    %v350 = vrot.slane %v316, 2
    %v352 = vmul.f32 %v306, %v350
    %v353 = vsel %vm318, %v352, 0.0
    %354 = vadd.xlane.f32.xlu0 %v353
    %v355 = vpop.xlane.xlu0 %354
    %vm356 = vcmask 519170
    %v357 = vsel %vm356, %v333, 0.0
    %358 = vadd.xlane.f32.xlu0 %v357
    %v359 = vpop.xlane.xlu0 %358
    %v360 = vrsqrt.pop %v359
    %v361 = vmul.f32 %v359, %v360
    %vm362 = vcmp.eq.f32.partialorder %v359, inf
    %v363 = vsel %vm362, %v359, %v361
    %vm364 = vcmp.eq.f32.partialorder %v359, 0.0
    %v365 = vand.u32 %v359, 2147483648
    %v366 = vsel %vm364, %v365, %v363
    %v367 = vmax.f32 %v366, 1e-08
    %v369 = vrot.slane %v367, 2
    %v371 = vmul.f32 %v344, %v369
    %v372 = vrcp.pop %v371
    %v373 = vmul.f32 %v355, %v372
    %vm374 = vcmask 1024
    %375 = vst.msk [vmem:[%s11] sm:$0x3] %vm374, %v348
    %376 = vst.msk [vmem:[%s12] sm:$0x3] %vm374, %v373
    %v377 = vsub.f32 %v373, %v348
    %v378 = vadd.f32 %v377, 0.5
    %v379 = vmax.f32 %v378, 0.0
    %v380 = vsel %vm374, %v379, 0.0
    %381 = vadd.xlane.f32.xlu0 %v380
    %v382 = vpop.xlane.xlu0 %381
    %v383 = vrot.slane %v382, 4
    %v384 = vadd.f32 %v382, %v383
    %v385 = vrot.slane %v384, 2
    %v386 = vadd.f32 %v384, %v385
    %v387 = vrot.slane %v386, 1
    %v388 = vadd.f32 %v386, %v387
    %s389 = vtos %v388
    %v390 = vrcp.pop 2.0
    %s391 = vtos %v390
    %s392 = smul.f32 %s389, %s391
    %v393 = vstv %s392
    %vm394 = vcmask 0
    %395 = vst.msk [vmem:[#allocation13] sm:$0x1] %vm394, %v393
    %v396 = vadd.f32 %v294, -1.0
    %v397 = vsub.f32 %v396, %v205
    %v398 = vmul.f32 %v205, 1.442695
    %v399 = vpow.pop %v398
    %v400 = vsub.f32 %v205, %v294
    %v401 = vmul.f32 %v400, %v400
    %403 = vrot.lane.b32.xlu0 %v401, 64
    %v404 = vpop.permute.xlu0 %403
    %v406 = vadd.f32 %v399, %v404
    %v407 = vmul.f32 %v294, 1.442695
    %v408 = vpow.pop %v407
    %v409 = vrcp.pop %v408
    %v410 = vmul.f32 %v406, %v409
    %v411 = vadd.f32 %v397, %v410
    %413 = vrot.lane.b32.xlu0 %v411, 64
    %v414 = vpop.permute.xlu0 %413
    %v416 = vsel %vm318, %v414, 0.0
    %417 = vadd.xlane.f32.xlu0 %v416
    %v418 = vpop.xlane.xlu0 %417
    %v419 = vrot.slane %v418, 4
    %v420 = vadd.f32 %v418, %v419
    %v421 = vrot.slane %v420, 2
    %v422 = vadd.f32 %v420, %v421
    %v423 = vrot.slane %v422, 1
    %v424 = vadd.f32 %v422, %v423
    %s425 = vtos %v424
    %s426 = smul.f32 %s425, 0.5
    %v427 = vrcp.pop 2.0
    %s428 = vtos %v427
    %s429 = smul.f32 %s426, %s428
    %v430 = vstv %s429
    %431 = vst.msk [vmem:[#allocation14] sm:$0x1] %vm394, %v430
    %v432 = vld [vmem:[#allocation10] sm:$0xff]
    %v433 = vld [vmem:[#allocation10 + $0x8] sm:$0xff]
    %v434 = vld [vmem:[#allocation10 + $0x10] sm:$0xff]
    %v435 = vld [vmem:[#allocation10 + $0x18] sm:$0xff]
    %v436 = vld [vmem:[#allocation10 + $0x20] sm:$0xff]
    %v437 = vld [vmem:[#allocation10 + $0x28] sm:$0xff]
    %v438 = vld [vmem:[#allocation10 + $0x30] sm:$0xff]
    %v439 = vld [vmem:[#allocation10 + $0x38] sm:$0xff]
    %v440 = vld [vmem:[#allocation11] sm:$0x1]
    %v442 = vlaneseq
    %v443 = vshrl.u32 %v442, 7
    %v444 = vsub.s32 0, %v443
    %v445 = vrot.slane %v440, %v444
    %v448 = vsel %vm134, %v306, 0
    %450 = vmatprep.subr.mxu0 0.0
    %451 = vmatpush1.msra.mxu0 %v432
    %452 = vmatprep.subr.mxu0 0.0
    %453 = vmatpush1.msra.mxu0 %v433
    %454 = vmatprep.subr.mxu0 0.0
    %455 = vmatpush1.msra.mxu0 %v434
    %456 = vmatprep.subr.mxu0 0.0
    %457 = vmatpush1.msra.mxu0 %v435
    %458 = vmatprep.subr.mxu0 0.0
    %459 = vmatpush1.msra.mxu0 %v436
    %460 = vmatprep.subr.mxu0 0.0
    %461 = vmatpush1.msra.mxu0 %v437
    %462 = vmatprep.subr.mxu0 0.0
    %463 = vmatpush1.msra.mxu0 %v438
    %464 = vmatprep.subr.mxu0 0.0
    %465 = vmatpush1.msra.mxu0 %v439
    %466 = vmatprep.subr.mxu0 0.0
    %467 = vmatpush1.msra.mxu0 0.0
    %468 = vmatprep.subr.mxu0 0.0
    %469 = vmatpush1.msra.mxu0 0.0
    %470 = vmatprep.subr.mxu0 0.0
    %471 = vmatpush1.msra.mxu0 0.0
    %472 = vmatprep.subr.mxu0 0.0
    %473 = vmatpush1.msra.mxu0 0.0
    %474 = vmatprep.subr.mxu0 0.0
    %475 = vmatpush1.msra.mxu0 0.0
    %476 = vmatprep.subr.mxu0 0.0
    %477 = vmatpush1.msra.mxu0 0.0
    %478 = vmatprep.subr.mxu0 0.0
    %479 = vmatpush1.msra.mxu0 0.0
    %480 = vmatprep.subr.mxu0 0.0
    %481 = vmatpush1.msra.mxu0 0.0
    %482 = vmatprep.subr.mxu0 0.0
    %483 = vmatpush1.msra.mxu0 0.0
    %484 = vmatprep.subr.mxu0 0.0
    %485 = vmatpush1.msra.mxu0 0.0
    %486 = vmatprep.subr.mxu0 0.0
    %487 = vmatpush1.msra.mxu0 0.0
    %488 = vmatprep.subr.mxu0 0.0
    %489 = vmatpush1.msra.mxu0 0.0
    %490 = vmatprep.subr.mxu0 0.0
    %491 = vmatpush1.msra.mxu0 0.0
    %492 = vmatprep.subr.mxu0 0.0
    %493 = vmatpush1.msra.mxu0 0.0
    %494 = vmatprep.subr.mxu0 0.0
    %495 = vmatpush1.msra.mxu0 0.0
    %496 = vmatprep.subr.mxu0 0.0
    %497 = vmatpush1.msra.mxu0 0.0
    %498 = vmatprep.subr.mxu0 0.0
    %499 = vmatpush1.msra.mxu0 0.0
    %500 = vmatprep.subr.mxu0 0.0
    %501 = vmatpush1.msra.mxu0 0.0
    %502 = vmatprep.subr.mxu0 0.0
    %503 = vmatpush1.msra.mxu0 0.0
    %504 = vmatprep.subr.mxu0 0.0
    %505 = vmatpush1.msra.mxu0 0.0
    %506 = vmatprep.subr.mxu0 0.0
    %507 = vmatpush1.msra.mxu0 0.0
    %508 = vmatprep.subr.mxu0 0.0
    %509 = vmatpush1.msra.mxu0 0.0
    %510 = vmatprep.subr.mxu0 0.0
    %511 = vmatpush1.msra.mxu0 0.0
    %512 = vmatprep.subr.mxu0 0.0
    %513 = vmatpush1.msra.mxu0 0.0
    %514 = vmatprep.mubr.f32.mxu0 0.0
    %515 = vmatmul.mubr.f32.gmra.mrb[0].mxu0 %v448
    %v516 = vpop.f32.mrb[0].mxu0
    %v517 = vadd.f32 %v445, %v516
    %v518 = vpop.f32.mrb[0].mxu0
    %519 = vdwg.mxu0
    %520 = vst.msk [vmem:[%s10] sm:$0x3] %vm318, %v517
    // Predicated region
    $region66: #{vae_forward.7} parent=1 // pred_check
      _
    $region67: #{vae_forward.7} parent=1 // pred_check_branch
      %522 = sbr.rel (0) target = $region69
    $region68: #{vae_forward.7} parent=1 // pred_region
      _
    $region69: #{vae_forward.7} parent=1 // pred_fallthru
      _
    // Predicated region
    $region70: #{vae_forward.7} parent=1 // pred_check
      _
    $region71: #{vae_forward.7} parent=1 // pred_check_branch
      %524 = sbr.rel (0) target = $region73
    $region72: #{vae_forward.7} parent=1 // pred_region
      _
    $region73: #{vae_forward.7} parent=1 // pred_fallthru
      _
    // Predicated region
    $region74: #{vae_forward.7} parent=1 // pred_check
      _
    $region75: #{vae_forward.7} parent=1 // pred_check_branch
      %526 = sbr.rel (0) target = $region77
    $region76: #{vae_forward.7} parent=1 // pred_region
      _
    $region77: #{vae_forward.7} parent=1 // pred_fallthru
      _
    // Predicated region
    $region78: #{vae_forward.7} parent=1 // pred_check
      _
    $region79: #{vae_forward.7} parent=1 // pred_check_branch
      %528 = sbr.rel (0) target = $region81
    $region80: #{vae_forward.7} parent=1 // pred_region
      %s530 = ssub.s32 16, 16
      %531 = vsyncadd [#allocation4], %s530
      %s533 = sshll.u32 [#allocation13], 4
      %s534 = int_to_ptr.vmem [resolvable:$true] %s533
      %536 = dma.vmem_to_hbm [thread:$0]  %s534, 16, %s13, [#allocation4]
    $region81: #{vae_forward.7} parent=1 // pred_fallthru
      _
    // Predicated region
    $region82: #{vae_forward.7} parent=1 // pred_check
      _
    $region83: #{vae_forward.7} parent=1 // pred_check_branch
      %538 = sbr.rel (0) target = $region85
    $region84: #{vae_forward.7} parent=1 // pred_region
      %s540 = ssub.s32 16, 16
      %541 = vsyncadd [#allocation15], %s540
      %s543 = sshll.u32 [#allocation14], 4
      %s544 = int_to_ptr.vmem [resolvable:$true] %s543
      %546 = dma.vmem_to_hbm [thread:$0]  %s544, 16, %s14, [#allocation15]
    $region85: #{vae_forward.7} parent=1 // pred_fallthru
      _
    // Predicated region
    $region86: #{vae_forward.7} parent=1 // pred_check
      _
    $region87: #{vae_forward.7} parent=1 // pred_check_branch
      %548 = sbr.rel (0) target = $region89
    $region88: #{vae_forward.7} parent=1 // pred_region
      _
    $region89: #{vae_forward.7} parent=1 // pred_fallthru
      _
    // Predicated region
    $region90: #{vae_forward.7} parent=1 // pred_check
      _
    $region91: #{vae_forward.7} parent=1 // pred_check_branch
      %550 = sbr.rel (0) target = $region93
    $region92: #{vae_forward.7} parent=1 // pred_region
      _
    $region93: #{vae_forward.7} parent=1 // pred_fallthru
      _
    // Predicated region
    $region94: #{vae_forward.7} parent=1 // pred_check
      _
    $region95: #{vae_forward.7} parent=1 // pred_check_branch
      %552 = sbr.rel (0) target = $region97
    $region96: #{vae_forward.7} parent=1 // pred_region
      _
    $region97: #{vae_forward.7} parent=1 // pred_fallthru
      _
    // Predicated region
    $region98: #{vae_forward.7} parent=1 // pred_check
      _
    $region99: #{vae_forward.7} parent=1 // pred_check_branch
      %554 = sbr.rel (0) target = $region101
    $region100: #{vae_forward.7} parent=1 // pred_region
      %555 = dma.done [#allocation4], 16
    $region101: #{vae_forward.7} parent=1 // pred_fallthru
      _
    // Predicated region
    $region102: #{vae_forward.7} parent=1 // pred_check
      _
    $region103: #{vae_forward.7} parent=1 // pred_check_branch
      %557 = sbr.rel (0) target = $region105
    $region104: #{vae_forward.7} parent=1 // pred_region
      %558 = dma.done [#allocation15], 16
    $region105: #{vae_forward.7} parent=1 // pred_fallthru
      _
    %559 = vsyncpa [#allocation3], 1
    %560 = vsyncpa [#allocation6], 1
    %561 = vsyncpa [#allocation9], 1
    %562 = vsyncpa [#allocation12], 1
    %563 = vsyncpa [#allocation4], 1
    %564 = vsyncpa [#allocation15], 1

// kernel: vae_forward.6
$region0: #{vae_forward.6}
  #allocation0 [shape = 'u32[]', space=smem, size = 0x4, offset = 0x4, fixed_abs, tag = 'smem constant byte address 0x4 - core index']
  #allocation1 [shape = 'u32[144,128]{1,0:T(1,128)}', space=vmem, size = 0x12000, scoped, tag = 'internal scratch']
  #allocation2 [shape = 'f32[64,128]{1,0:T(8,128)}', space=vmem, size = 0x8000, scoped, tag = 'scratch operand']
  #allocation3 [shape = 'f32[64,128]{1,0:T(8,128)}', space=vmem, size = 0x8000, scoped, tag = 'scratch operand']
  %s0 = inlined_call_operand.hbm [shape: bf16[64,32], index: 0, kind: input, shape index: {}]
  %s1 = inlined_call_operand.hbm [shape: bf16[32,128], index: 1, kind: input, shape index: {}]
  %s2 = inlined_call_operand.hbm [shape: bf16[32,128], index: 2, kind: input, shape index: {}]
  %s3 = inlined_call_operand.hbm [shape: bf16[64,256], index: 3, kind: input, shape index: {}]
  %s4 = inlined_call_operand.hbm [shape: f32[1,128], index: 4, kind: input, shape index: {}]
  %s5 = inlined_call_operand.hbm [shape: f32[1,128], index: 5, kind: input, shape index: {}]
  %s6 = inlined_call_operand.hbm [shape: f32[64,32], index: 6, kind: output, shape index: {0}]
  %s7 = inlined_call_operand.hbm [shape: f32[64,32], index: 7, kind: output, shape index: {1}]
  %s8 = inlined_call_operand.hbm [shape: f32[8,64], index: 8, kind: output, shape index: {2}]
  %9 = xla_tuple %s6, %s7, %s8
  %s10 = sld [smem:[#allocation0]]
  $region74: #{vae_forward.6} parent=0
    _
  %s12 = ssub.s32 1, %s10
  %s13 = scalar_select 0, %s12, %s10
  $region1: #{vae_forward.6} parent=0
    #allocation4 [shape = 'u8[16384]{0}', space=vmem, size = 0x4000, scoped, tag = 'input window, operand 0, single buffered']
    #allocation5 [shape = 's32[1]{0}', space=sflag, size = 0x4, scoped, tag = 'scoped memory for vae_forward.6']
    #allocation6 [shape = 's32[1]{0}', space=sflag, size = 0x4, scoped, tag = 'scoped memory for vae_forward.6']
    #allocation7 [shape = 'u8[8192]{0}', space=vmem, size = 0x2000, scoped, tag = 'input window, operand 1, single buffered']
    #allocation8 [shape = 's32[1]{0}', space=sflag, size = 0x4, scoped, tag = 'scoped memory for vae_forward.6']
    #allocation9 [shape = 'u8[8192]{0}', space=vmem, size = 0x2000, scoped, tag = 'input window, operand 2, single buffered']
    #allocation10 [shape = 'u8[32768]{0}', space=vmem, size = 0x8000, scoped, tag = 'input window, operand 3, single buffered']
    #allocation11 [shape = 's32[1]{0}', space=sflag, size = 0x4, scoped, tag = 'scoped memory for vae_forward.6']
    #allocation12 [shape = 'u8[512]{0}', space=vmem, size = 0x400, scoped, tag = 'input window, operand 4, single buffered']
    #allocation13 [shape = 'u8[512]{0}', space=vmem, size = 0x400, scoped, tag = 'input window, operand 5, single buffered']
    #allocation14 [shape = 's32[1]{0}', space=sflag, size = 0x4, scoped, tag = 'scoped memory for vae_forward.6']
    #allocation15 [shape = 'u8[32768]{0}', space=vmem, size = 0x8000, scoped, tag = 'output window, operand 0, single buffered']
    #allocation16 [shape = 'u8[32768]{0}', space=vmem, size = 0x8000, scoped, tag = 'output window, operand 1, single buffered']
    #allocation17 [shape = 's32[1]{0}', space=sflag, size = 0x4, scoped, tag = 'scoped memory for vae_forward.6']
    #allocation18 [shape = 'u8[4096]{0}', space=vmem, size = 0x1000, scoped, tag = 'output window, operand 2, single buffered']
    %14 = vsyncpa [#allocation5], 0
    %15 = vsyncpa [#allocation8], 0
    %16 = vsyncpa [#allocation11], 0
    %17 = vsyncpa [#allocation14], 0
    %18 = vsyncpa [#allocation6], 0
    %19 = vsyncpa [#allocation17], 0
    // Predicated region
    $region2: #{vae_forward.6} parent=1 // pred_check
      _
    $region3: #{vae_forward.6} parent=1 // pred_check_branch
      %21 = sbr.rel (0) target = $region5
    $region4: #{vae_forward.6} parent=1 // pred_region
      %s23 = ssub.s32 512, 512
      %24 = vsyncadd [#allocation5], %s23
      %s25 = sshll.u32 [#allocation4], 4
      %s26 = int_to_ptr.vmem [resolvable:$true] %s25
      %31 = dma.hbm_to_vmem [thread:$0]  %s0, 512, %s26, [#allocation5], 64, 64, 4
    $region5: #{vae_forward.6} parent=1 // pred_fallthru
      _
    // Predicated region
    $region6: #{vae_forward.6} parent=1 // pred_check
      _
    $region7: #{vae_forward.6} parent=1 // pred_check_branch
      %33 = sbr.rel (0) target = $region9
    $region8: #{vae_forward.6} parent=1 // pred_region
      %s35 = ssub.s32 256, 256
      %36 = vsyncadd [#allocation8], %s35
      %s37 = sshll.u32 [#allocation7], 4
      %s38 = int_to_ptr.vmem [resolvable:$true] %s37
      %43 = dma.hbm_to_vmem [thread:$0]  %s1, 256, %s38, [#allocation8], 64, 64, 4
    $region9: #{vae_forward.6} parent=1 // pred_fallthru
      _
    // Predicated region
    $region10: #{vae_forward.6} parent=1 // pred_check
      _
    $region11: #{vae_forward.6} parent=1 // pred_check_branch
      %45 = sbr.rel (0) target = $region13
    $region12: #{vae_forward.6} parent=1 // pred_region
      %s47 = ssub.s32 256, 256
      %48 = vsyncadd [#allocation8], %s47
      %s49 = sshll.u32 [#allocation9], 4
      %s50 = int_to_ptr.vmem [resolvable:$true] %s49
      %55 = dma.hbm_to_vmem [thread:$0]  %s2, 256, %s50, [#allocation8], 64, 64, 4
    $region13: #{vae_forward.6} parent=1 // pred_fallthru
      _
    // Predicated region
    $region14: #{vae_forward.6} parent=1 // pred_check
      _
    $region15: #{vae_forward.6} parent=1 // pred_check_branch
      %57 = sbr.rel (0) target = $region17
    $region16: #{vae_forward.6} parent=1 // pred_region
      %s59 = ssub.s32 1024, 1024
      %60 = vsyncadd [#allocation11], %s59
      %s61 = sshll.u32 [#allocation10], 4
      %s62 = int_to_ptr.vmem [resolvable:$true] %s61
      %67 = dma.hbm_to_vmem [thread:$0]  %s3, 1024, %s62, [#allocation11], 128, 128, 8
    $region17: #{vae_forward.6} parent=1 // pred_fallthru
      _
    // Predicated region
    $region18: #{vae_forward.6} parent=1 // pred_check
      _
    $region19: #{vae_forward.6} parent=1 // pred_check_branch
      %69 = sbr.rel (0) target = $region21
    $region20: #{vae_forward.6} parent=1 // pred_region
      %s71 = ssub.s32 16, 16
      %72 = vsyncadd [#allocation11], %s71
      %s74 = sshll.u32 [#allocation12], 4
      %s75 = int_to_ptr.vmem [resolvable:$true] %s74
      %77 = dma.hbm_to_vmem [thread:$0]  %s4, 16, %s75, [#allocation11]
    $region21: #{vae_forward.6} parent=1 // pred_fallthru
      _
    // Predicated region
    $region22: #{vae_forward.6} parent=1 // pred_check
      _
    $region23: #{vae_forward.6} parent=1 // pred_check_branch
      %79 = sbr.rel (0) target = $region25
    $region24: #{vae_forward.6} parent=1 // pred_region
      %s81 = ssub.s32 16, 16
      %82 = vsyncadd [#allocation14], %s81
      %s84 = sshll.u32 [#allocation13], 4
      %s85 = int_to_ptr.vmem [resolvable:$true] %s84
      %87 = dma.hbm_to_vmem [thread:$0]  %s5, 16, %s85, [#allocation14]
    $region25: #{vae_forward.6} parent=1 // pred_fallthru
      _
    // Predicated region
    $region26: #{vae_forward.6} parent=1 // pred_check
      _
    $region27: #{vae_forward.6} parent=1 // pred_check_branch
      %89 = sbr.rel (0) target = $region29
    $region28: #{vae_forward.6} parent=1 // pred_region
      %90 = dma.done [#allocation5], 512
    $region29: #{vae_forward.6} parent=1 // pred_fallthru
      _
    // Predicated region
    $region30: #{vae_forward.6} parent=1 // pred_check
      _
    $region31: #{vae_forward.6} parent=1 // pred_check_branch
      %92 = sbr.rel (0) target = $region33
    $region32: #{vae_forward.6} parent=1 // pred_region
      %93 = dma.done [#allocation8], 256
    $region33: #{vae_forward.6} parent=1 // pred_fallthru
      _
    // Predicated region
    $region34: #{vae_forward.6} parent=1 // pred_check
      _
    $region35: #{vae_forward.6} parent=1 // pred_check_branch
      %95 = sbr.rel (0) target = $region37
    $region36: #{vae_forward.6} parent=1 // pred_region
      %96 = dma.done [#allocation8], 256
    $region37: #{vae_forward.6} parent=1 // pred_fallthru
      _
    // Predicated region
    $region38: #{vae_forward.6} parent=1 // pred_check
      _
    $region39: #{vae_forward.6} parent=1 // pred_check_branch
      %98 = sbr.rel (0) target = $region41
    $region40: #{vae_forward.6} parent=1 // pred_region
      %99 = dma.done [#allocation11], 1024
    $region41: #{vae_forward.6} parent=1 // pred_fallthru
      _
    // Predicated region
    $region42: #{vae_forward.6} parent=1 // pred_check
      _
    $region43: #{vae_forward.6} parent=1 // pred_check_branch
      %101 = sbr.rel (0) target = $region45
    $region44: #{vae_forward.6} parent=1 // pred_region
      %102 = dma.done [#allocation11], 16
    $region45: #{vae_forward.6} parent=1 // pred_fallthru
      _
    // Predicated region
    $region46: #{vae_forward.6} parent=1 // pred_check
      _
    $region47: #{vae_forward.6} parent=1 // pred_check_branch
      %104 = sbr.rel (0) target = $region49
    $region48: #{vae_forward.6} parent=1 // pred_region
      %105 = dma.done [#allocation14], 16
    $region49: #{vae_forward.6} parent=1 // pred_fallthru
      _
    %v107 = vld [vmem:[#allocation4] sm:$0xf]
    %v108 = vld [vmem:[#allocation4 + $0x4] sm:$0xf]
    %v109 = vld [vmem:[#allocation4 + $0x8] sm:$0xf]
    %v110 = vld [vmem:[#allocation4 + $0xc] sm:$0xf]
    %v111 = vld [vmem:[#allocation4 + $0x10] sm:$0xf]
    %v112 = vld [vmem:[#allocation4 + $0x14] sm:$0xf]
    %v113 = vld [vmem:[#allocation4 + $0x18] sm:$0xf]
    %v114 = vld [vmem:[#allocation4 + $0x1c] sm:$0xf]
    %v115 = vld [vmem:[#allocation7] sm:$0xf]
    %v116 = vld [vmem:[#allocation7 + $0x4] sm:$0xf]
    %v117 = vld [vmem:[#allocation7 + $0x8] sm:$0xf]
    %v118 = vld [vmem:[#allocation7 + $0xc] sm:$0xf]
    %v119 = vld [vmem:[#allocation12] sm:$0x1]
    %v121 = vlaneseq
    %v122 = vshrl.u32 %v121, 7
    %v123 = vsub.s32 0, %v122
    %v124 = vrot.slane %v119, %v123
    %v134 = vunpack.c.l.b16 %v107
    %v135 = vunpack.c.l.b16 %v108
    %v136 = vunpack.c.l.b16 %v109
    %v137 = vunpack.c.l.b16 %v110
    %v138 = vunpack.c.l.b16 %v111
    %v139 = vunpack.c.l.b16 %v112
    %v140 = vunpack.c.l.b16 %v113
    %v141 = vunpack.c.l.b16 %v114
    %v142 = vpack.c.b16 %v135, %v134
    %v143 = vpack.c.b16 %v137, %v136
    %v144 = vpack.c.b16 %v139, %v138
    %v145 = vpack.c.b16 %v141, %v140
    %v150 = vunpack.c.l.b16 %v115
    %v151 = vunpack.c.l.b16 %v116
    %v152 = vunpack.c.l.b16 %v117
    %v153 = vunpack.c.l.b16 %v118
    %v154 = vpack.c.b16 %v151, %v150
    %v155 = vpack.c.b16 %v153, %v152
    %vm158 = vcmask 261120
    %v160 = vsel %vm158, %v142, 0
    %v163 = vsel %vm158, %v143, 0
    %v166 = vsel %vm158, %v144, 0
    %v169 = vsel %vm158, %v145, 0
    %171 = vmatprep.subr.bf16.mxu0 0
    %172 = vmatpush1.bf16.msra.mxu0 %v154
    %173 = vmatprep.subr.bf16.mxu0 0
    %174 = vmatpush1.bf16.msra.mxu0 %v155
    %175 = vmatprep.subr.bf16.mxu0 0
    %176 = vmatpush1.bf16.msra.mxu0 0
    %177 = vmatprep.subr.bf16.mxu0 0
    %178 = vmatpush1.bf16.msra.mxu0 0
    %179 = vmatprep.subr.bf16.mxu0 0
    %180 = vmatpush1.bf16.msra.mxu0 0
    %181 = vmatprep.subr.bf16.mxu0 0
    %182 = vmatpush1.bf16.msra.mxu0 0
    %183 = vmatprep.subr.bf16.mxu0 0
    %184 = vmatpush1.bf16.msra.mxu0 0
    %185 = vmatprep.subr.bf16.mxu0 0
    %186 = vmatpush1.bf16.msra.mxu0 0
    %187 = vmatprep.subr.bf16.mxu0 0
    %188 = vmatpush1.bf16.msra.mxu0 0
    %189 = vmatprep.subr.bf16.mxu0 0
    %190 = vmatpush1.bf16.msra.mxu0 0
    %191 = vmatprep.subr.bf16.mxu0 0
    %192 = vmatpush1.bf16.msra.mxu0 0
    %193 = vmatprep.subr.bf16.mxu0 0
    %194 = vmatpush1.bf16.msra.mxu0 0
    %195 = vmatprep.subr.bf16.mxu0 0
    %196 = vmatpush1.bf16.msra.mxu0 0
    %197 = vmatprep.subr.bf16.mxu0 0
    %198 = vmatpush1.bf16.msra.mxu0 0
    %199 = vmatprep.subr.bf16.mxu0 0
    %200 = vmatpush1.bf16.msra.mxu0 0
    %201 = vmatprep.subr.bf16.mxu0 0
    %202 = vmatpush1.bf16.msra.mxu0 0
    %203 = vmatprep.mubr.bf16.mxu0 0
    %204 = vmatmul.mubr.bf16.gmra.mrb[0].mxu0 %v160
    %v205 = vpop.f32.mrb[0].mxu0
    %v206 = vadd.f32 %v124, %v205
    %v207 = vpop.f32.mrb[0].mxu0
    %v208 = vpop.f32.mrb[0].mxu0
    %v209 = vadd.f32 %v124, %v208
    %v210 = vpop.f32.mrb[0].mxu0
    %211 = vmatprep.mubr.bf16.mxu0 0
    %212 = vmatmul.mubr.bf16.gmra.mrb[0].mxu0 %v163
    %v213 = vpop.f32.mrb[0].mxu0
    %v214 = vadd.f32 %v124, %v213
    %v215 = vpop.f32.mrb[0].mxu0
    %v216 = vpop.f32.mrb[0].mxu0
    %v217 = vadd.f32 %v124, %v216
    %v218 = vpop.f32.mrb[0].mxu0
    %219 = vmatprep.mubr.bf16.mxu0 0
    %220 = vmatmul.mubr.bf16.gmra.mrb[0].mxu0 %v166
    %v221 = vpop.f32.mrb[0].mxu0
    %v222 = vadd.f32 %v124, %v221
    %v223 = vpop.f32.mrb[0].mxu0
    %v224 = vpop.f32.mrb[0].mxu0
    %v225 = vadd.f32 %v124, %v224
    %v226 = vpop.f32.mrb[0].mxu0
    %227 = vmatprep.mubr.bf16.mxu0 0
    %228 = vmatmul.mubr.bf16.gmra.mrb[0].mxu0 %v169
    %v229 = vpop.f32.mrb[0].mxu0
    %v230 = vadd.f32 %v124, %v229
    %v231 = vpop.f32.mrb[0].mxu0
    %v232 = vpop.f32.mrb[0].mxu0
    %v233 = vadd.f32 %v124, %v232
    %v234 = vpop.f32.mrb[0].mxu0
    %235 = vdwg.mxu0
    %236 = vst [vmem:[#allocation2] sm:$0xff] %v206
    %237 = vst [vmem:[#allocation2 + $0x8] sm:$0xff] %v209
    %238 = vst [vmem:[#allocation2 + $0x10] sm:$0xff] %v214
    %239 = vst [vmem:[#allocation2 + $0x18] sm:$0xff] %v217
    %240 = vst [vmem:[#allocation2 + $0x20] sm:$0xff] %v222
    %241 = vst [vmem:[#allocation2 + $0x28] sm:$0xff] %v225
    %242 = vst [vmem:[#allocation2 + $0x30] sm:$0xff] %v230
    %243 = vst [vmem:[#allocation2 + $0x38] sm:$0xff] %v233
    %v244 = vld [vmem:[#allocation9] sm:$0xf]
    %v245 = vld [vmem:[#allocation9 + $0x4] sm:$0xf]
    %v246 = vld [vmem:[#allocation9 + $0x8] sm:$0xf]
    %v247 = vld [vmem:[#allocation9 + $0xc] sm:$0xf]
    %v248 = vld [vmem:[#allocation13] sm:$0x1]
    %v250 = vlaneseq
    %v251 = vshrl.u32 %v250, 7
    %v252 = vsub.s32 0, %v251
    %v253 = vrot.slane %v248, %v252
    %v259 = vunpack.c.l.b16 %v244
    %v260 = vunpack.c.l.b16 %v245
    %v261 = vunpack.c.l.b16 %v246
    %v262 = vunpack.c.l.b16 %v247
    %v263 = vpack.c.b16 %v260, %v259
    %v264 = vpack.c.b16 %v262, %v261
    %267 = vmatprep.subr.bf16.mxu0 0
    %268 = vmatpush1.bf16.msra.mxu0 %v263
    %269 = vmatprep.subr.bf16.mxu0 0
    %270 = vmatpush1.bf16.msra.mxu0 %v264
    %271 = vmatprep.subr.bf16.mxu0 0
    %272 = vmatpush1.bf16.msra.mxu0 0
    %273 = vmatprep.subr.bf16.mxu0 0
    %274 = vmatpush1.bf16.msra.mxu0 0
    %275 = vmatprep.subr.bf16.mxu0 0
    %276 = vmatpush1.bf16.msra.mxu0 0
    %277 = vmatprep.subr.bf16.mxu0 0
    %278 = vmatpush1.bf16.msra.mxu0 0
    %279 = vmatprep.subr.bf16.mxu0 0
    %280 = vmatpush1.bf16.msra.mxu0 0
    %281 = vmatprep.subr.bf16.mxu0 0
    %282 = vmatpush1.bf16.msra.mxu0 0
    %283 = vmatprep.subr.bf16.mxu0 0
    %284 = vmatpush1.bf16.msra.mxu0 0
    %285 = vmatprep.subr.bf16.mxu0 0
    %286 = vmatpush1.bf16.msra.mxu0 0
    %287 = vmatprep.subr.bf16.mxu0 0
    %288 = vmatpush1.bf16.msra.mxu0 0
    %289 = vmatprep.subr.bf16.mxu0 0
    %290 = vmatpush1.bf16.msra.mxu0 0
    %291 = vmatprep.subr.bf16.mxu0 0
    %292 = vmatpush1.bf16.msra.mxu0 0
    %293 = vmatprep.subr.bf16.mxu0 0
    %294 = vmatpush1.bf16.msra.mxu0 0
    %295 = vmatprep.subr.bf16.mxu0 0
    %296 = vmatpush1.bf16.msra.mxu0 0
    %297 = vmatprep.subr.bf16.mxu0 0
    %298 = vmatpush1.bf16.msra.mxu0 0
    %299 = vmatprep.mubr.bf16.mxu0 0
    %300 = vmatmul.mubr.bf16.gmra.mrb[0].mxu0 %v160
    %v301 = vpop.f32.mrb[0].mxu0
    %v302 = vadd.f32 %v253, %v301
    %v303 = vpop.f32.mrb[0].mxu0
    %v304 = vpop.f32.mrb[0].mxu0
    %v305 = vadd.f32 %v253, %v304
    %v306 = vpop.f32.mrb[0].mxu0
    %307 = vmatprep.mubr.bf16.mxu0 0
    %308 = vmatmul.mubr.bf16.gmra.mrb[0].mxu0 %v163
    %v309 = vpop.f32.mrb[0].mxu0
    %v310 = vadd.f32 %v253, %v309
    %v311 = vpop.f32.mrb[0].mxu0
    %v312 = vpop.f32.mrb[0].mxu0
    %v313 = vadd.f32 %v253, %v312
    %v314 = vpop.f32.mrb[0].mxu0
    %315 = vmatprep.mubr.bf16.mxu0 0
    %316 = vmatmul.mubr.bf16.gmra.mrb[0].mxu0 %v166
    %v317 = vpop.f32.mrb[0].mxu0
    %v318 = vadd.f32 %v253, %v317
    %v319 = vpop.f32.mrb[0].mxu0
    %v320 = vpop.f32.mrb[0].mxu0
    %v321 = vadd.f32 %v253, %v320
    %v322 = vpop.f32.mrb[0].mxu0
    %323 = vmatprep.mubr.bf16.mxu0 0
    %324 = vmatmul.mubr.bf16.gmra.mrb[0].mxu0 %v169
    %v325 = vpop.f32.mrb[0].mxu0
    %v326 = vadd.f32 %v253, %v325
    %v327 = vpop.f32.mrb[0].mxu0
    %v328 = vpop.f32.mrb[0].mxu0
    %v329 = vadd.f32 %v253, %v328
    %v330 = vpop.f32.mrb[0].mxu0
    %331 = vdwg.mxu0
    %332 = vst [vmem:[#allocation3] sm:$0xff] %v302
    %333 = vst [vmem:[#allocation3 + $0x8] sm:$0xff] %v305
    %334 = vst [vmem:[#allocation3 + $0x10] sm:$0xff] %v310
    %335 = vst [vmem:[#allocation3 + $0x18] sm:$0xff] %v313
    %336 = vst [vmem:[#allocation3 + $0x20] sm:$0xff] %v318
    %337 = vst [vmem:[#allocation3 + $0x28] sm:$0xff] %v321
    %338 = vst [vmem:[#allocation3 + $0x30] sm:$0xff] %v326
    %339 = vst [vmem:[#allocation3 + $0x38] sm:$0xff] %v329
    %v340 = vld [vmem:[#allocation10] sm:$0xff]
    %v341 = vld [vmem:[#allocation10 + $0x8] sm:$0xff]
    %v342 = vld [vmem:[#allocation10 + $0x10] sm:$0xff]
    %v343 = vld [vmem:[#allocation10 + $0x18] sm:$0xff]
    %v344 = vld [vmem:[#allocation10 + $0x20] sm:$0xff]
    %v345 = vld [vmem:[#allocation10 + $0x28] sm:$0xff]
    %v346 = vld [vmem:[#allocation10 + $0x30] sm:$0xff]
    %v347 = vld [vmem:[#allocation10 + $0x38] sm:$0xff]
    %v356 = vunpack.c.l.b16 %v340
    %v357 = vunpack.c.h.b16 %v340
    %v358 = vunpack.c.l.b16 %v341
    %v359 = vunpack.c.h.b16 %v341
    %v360 = vunpack.c.l.b16 %v342
    %v361 = vunpack.c.h.b16 %v342
    %v362 = vunpack.c.l.b16 %v343
    %v363 = vunpack.c.h.b16 %v343
    %v364 = vunpack.c.l.b16 %v344
    %v365 = vunpack.c.h.b16 %v344
    %v366 = vunpack.c.l.b16 %v345
    %v367 = vunpack.c.h.b16 %v345
    %v368 = vunpack.c.l.b16 %v346
    %v369 = vunpack.c.h.b16 %v346
    %v370 = vunpack.c.l.b16 %v347
    %v371 = vunpack.c.h.b16 %v347
    %v372 = vpack.c.b16 %v358, %v356
    %v373 = vpack.c.b16 %v359, %v357
    %v374 = vpack.c.b16 %v362, %v360
    %v375 = vpack.c.b16 %v363, %v361
    %v376 = vpack.c.b16 %v366, %v364
    %v377 = vpack.c.b16 %v367, %v365
    %v378 = vpack.c.b16 %v370, %v368
    %v379 = vpack.c.b16 %v371, %v369
    %vm388 = vcmask 523264
    %v390 = vsel %vm388, 0, 0
    %392 = vmatprep.subr.bf16.mxu0 %v373
    %393 = vmatpush1.bf16.msra.mxu0 %v372
    %394 = vmatprep.subr.bf16.mxu0 %v375
    %395 = vmatpush1.bf16.msra.mxu0 %v374
    %396 = vmatprep.subr.bf16.mxu0 %v377
    %397 = vmatpush1.bf16.msra.mxu0 %v376
    %398 = vmatprep.subr.bf16.mxu0 %v379
    %399 = vmatpush1.bf16.msra.mxu0 %v378
    %400 = vmatprep.subr.bf16.mxu0 0
    %401 = vmatpush1.bf16.msra.mxu0 0
    %402 = vmatprep.subr.bf16.mxu0 0
    %403 = vmatpush1.bf16.msra.mxu0 0
    %404 = vmatprep.subr.bf16.mxu0 0
    %405 = vmatpush1.bf16.msra.mxu0 0
    %406 = vmatprep.subr.bf16.mxu0 0
    %407 = vmatpush1.bf16.msra.mxu0 0
    %408 = vmatprep.subr.bf16.mxu0 0
    %409 = vmatpush1.bf16.msra.mxu0 0
    %410 = vmatprep.subr.bf16.mxu0 0
    %411 = vmatpush1.bf16.msra.mxu0 0
    %412 = vmatprep.subr.bf16.mxu0 0
    %413 = vmatpush1.bf16.msra.mxu0 0
    %414 = vmatprep.subr.bf16.mxu0 0
    %415 = vmatpush1.bf16.msra.mxu0 0
    %416 = vmatprep.subr.bf16.mxu0 0
    %417 = vmatpush1.bf16.msra.mxu0 0
    %418 = vmatprep.subr.bf16.mxu0 0
    %419 = vmatpush1.bf16.msra.mxu0 0
    %420 = vmatprep.subr.bf16.mxu0 0
    %421 = vmatpush1.bf16.msra.mxu0 0
    %422 = vmatprep.subr.bf16.mxu0 0
    %423 = vmatpush1.bf16.msra.mxu0 0
    %424 = vmatprep.mubr.bf16.mxu0 0
    %425 = vmatmul.mubr.bf16.gmra.mrb[0].mxu0 %v390
    %v426 = vpop.f32.mrb[0].mxu0
    %v427 = vadd.f32 0.0, %v426
    %v428 = vpop.f32.mrb[0].mxu0
    %v429 = vadd.f32 0.0, %v428
    %v430 = vpop.f32.mrb[0].mxu0
    %v431 = vpop.f32.mrb[0].mxu0
    %432 = vdwg.mxu0
    %v433 = vld [vmem:[#allocation2] sm:$0xff]
    %v434 = vadd.f32 %v433, %v427
    %v435 = vld [vmem:[#allocation3 + $0x38] sm:$0xff]
    %v436 = vadd.f32 %v435, %v429
    %v437 = vxor.u32 %v434, 2147483648
    %v438 = vmul.f32 %v437, 1.442695
    %v439 = vpow.pop %v438
    %v440 = vadd.f32 %v439, 1.0
    %v441 = vrcp.pop %v440
    %v442 = vmul.f32 1.0, %v441
    %v443 = vtanh.pop %v434
    %v444 = vmul.f32 %v442, 0.0
    %446 = vrot.lane.b32.xlu0 %v443, 32
    %v447 = vpop.permute.xlu0 %446
    %v449 = vmul.f32 %v442, %v447
    %451 = vrot.lane.b32.xlu0 %v449, 32
    %v452 = vpop.permute.xlu0 %451
    %v454 = vadd.f32 %v444, %v452
    %v455 = vtanh.pop %v454
    %457 = vrot.lane.b32.xlu0 %v455, 32
    %v458 = vpop.permute.xlu0 %457
    %v460 = vmul.f32 %v442, %v458
    %v461 = vxor.u32 %v436, 2147483648
    %v462 = vmul.f32 %v461, 1.442695
    %v463 = vpow.pop %v462
    %v464 = vadd.f32 %v463, 1.0
    %v465 = vrcp.pop %v464
    %v466 = vmul.f32 1.0, %v465
    %v467 = vtanh.pop %v436
    %v468 = vmul.f32 %v466, 0.0
    %470 = vrot.lane.b32.xlu0 %v467, 32
    %v471 = vpop.permute.xlu0 %470
    %v473 = vmul.f32 %v466, %v471
    %475 = vrot.lane.b32.xlu0 %v473, 32
    %v476 = vpop.permute.xlu0 %475
    %v478 = vadd.f32 %v468, %v476
    %v479 = vtanh.pop %v478
    %481 = vrot.lane.b32.xlu0 %v479, 32
    %v482 = vpop.permute.xlu0 %481
    %v484 = vmul.f32 %v466, %v482
    %486 = vrot.lane.b32.xlu0 %v460, 64
    %v487 = vpop.permute.xlu0 %486
    %489 = vst.msk [vmem:[#allocation15] sm:$0xff] %vm158, %v487
    %491 = vrot.lane.b32.xlu0 %v484, 64
    %v492 = vpop.permute.xlu0 %491
    %494 = vst.msk [vmem:[#allocation16 + $0x38] sm:$0xff] %vm158, %v492
    %495 = vrot.lane.b32.xlu0 %v484, 96
    %v496 = vpop.permute.xlu0 %495
    %v498 = vsel %vm158, %v487, %v496
    %v499 = vpack.c.bf16 %v498, %v498
    %v501 = vsel %vm388, %v499, 0
    %503 = vmatprep.subr.bf16.mxu0 %v373
    %504 = vmatpush1.bf16.msra.mxu0 %v372
    %505 = vmatprep.subr.bf16.mxu0 %v375
    %506 = vmatpush1.bf16.msra.mxu0 %v374
    %507 = vmatprep.subr.bf16.mxu0 %v377
    %508 = vmatpush1.bf16.msra.mxu0 %v376
    %509 = vmatprep.subr.bf16.mxu0 %v379
    %510 = vmatpush1.bf16.msra.mxu0 %v378
    %511 = vmatprep.subr.bf16.mxu0 0
    %512 = vmatpush1.bf16.msra.mxu0 0
    %513 = vmatprep.subr.bf16.mxu0 0
    %514 = vmatpush1.bf16.msra.mxu0 0
    %515 = vmatprep.subr.bf16.mxu0 0
    %516 = vmatpush1.bf16.msra.mxu0 0
    %517 = vmatprep.subr.bf16.mxu0 0
    %518 = vmatpush1.bf16.msra.mxu0 0
    %519 = vmatprep.subr.bf16.mxu0 0
    %520 = vmatpush1.bf16.msra.mxu0 0
    %521 = vmatprep.subr.bf16.mxu0 0
    %522 = vmatpush1.bf16.msra.mxu0 0
    %523 = vmatprep.subr.bf16.mxu0 0
    %524 = vmatpush1.bf16.msra.mxu0 0
    %525 = vmatprep.subr.bf16.mxu0 0
    %526 = vmatpush1.bf16.msra.mxu0 0
    %527 = vmatprep.subr.bf16.mxu0 0
    %528 = vmatpush1.bf16.msra.mxu0 0
    %529 = vmatprep.subr.bf16.mxu0 0
    %530 = vmatpush1.bf16.msra.mxu0 0
    %531 = vmatprep.subr.bf16.mxu0 0
    %532 = vmatpush1.bf16.msra.mxu0 0
    %533 = vmatprep.subr.bf16.mxu0 0
    %534 = vmatpush1.bf16.msra.mxu0 0
    %535 = vmatprep.mubr.bf16.mxu0 0
    %536 = vmatmul.mubr.bf16.gmra.mrb[0].mxu0 %v501
    %v537 = vpop.f32.mrb[0].mxu0
    %v538 = vadd.f32 0.0, %v537
    %v539 = vpop.f32.mrb[0].mxu0
    %v540 = vadd.f32 0.0, %v539
    %v541 = vpop.f32.mrb[0].mxu0
    %v542 = vpop.f32.mrb[0].mxu0
    %543 = vdwg.mxu0
    %v544 = vld [vmem:[#allocation2 + $0x8] sm:$0xff]
    %v545 = vadd.f32 %v544, %v538
    %v546 = vld [vmem:[#allocation3 + $0x30] sm:$0xff]
    %v547 = vadd.f32 %v546, %v540
    %v548 = vxor.u32 %v545, 2147483648
    %v549 = vmul.f32 %v548, 1.442695
    %v550 = vpow.pop %v549
    %v551 = vadd.f32 %v550, 1.0
    %v552 = vrcp.pop %v551
    %v553 = vmul.f32 1.0, %v552
    %v554 = vtanh.pop %v545
    %v555 = vmul.f32 %v553, %v454
    %557 = vrot.lane.b32.xlu0 %v554, 32
    %v558 = vpop.permute.xlu0 %557
    %v560 = vmul.f32 %v553, %v558
    %562 = vrot.lane.b32.xlu0 %v560, 32
    %v563 = vpop.permute.xlu0 %562
    %v565 = vadd.f32 %v555, %v563
    %v566 = vtanh.pop %v565
    %568 = vrot.lane.b32.xlu0 %v566, 32
    %v569 = vpop.permute.xlu0 %568
    %v571 = vmul.f32 %v553, %v569
    %v572 = vxor.u32 %v547, 2147483648
    %v573 = vmul.f32 %v572, 1.442695
    %v574 = vpow.pop %v573
    %v575 = vadd.f32 %v574, 1.0
    %v576 = vrcp.pop %v575
    %v577 = vmul.f32 1.0, %v576
    %v578 = vtanh.pop %v547
    %v579 = vmul.f32 %v577, %v478
    %581 = vrot.lane.b32.xlu0 %v578, 32
    %v582 = vpop.permute.xlu0 %581
    %v584 = vmul.f32 %v577, %v582
    %586 = vrot.lane.b32.xlu0 %v584, 32
    %v587 = vpop.permute.xlu0 %586
    %v589 = vadd.f32 %v579, %v587
    %v590 = vtanh.pop %v589
    %592 = vrot.lane.b32.xlu0 %v590, 32
    %v593 = vpop.permute.xlu0 %592
    %v595 = vmul.f32 %v577, %v593
    %597 = vrot.lane.b32.xlu0 %v571, 64
    %v598 = vpop.permute.xlu0 %597
    %600 = vst.msk [vmem:[#allocation15 + $0x8] sm:$0xff] %vm158, %v598
    %602 = vrot.lane.b32.xlu0 %v595, 64
    %v603 = vpop.permute.xlu0 %602
    %605 = vst.msk [vmem:[#allocation16 + $0x30] sm:$0xff] %vm158, %v603
    %606 = vrot.lane.b32.xlu0 %v595, 96
    %v607 = vpop.permute.xlu0 %606
    %v609 = vsel %vm158, %v598, %v607
    %v610 = vpack.c.bf16 %v609, %v609
    %v612 = vsel %vm388, %v610, 0
    %614 = vmatprep.subr.bf16.mxu0 %v373
    %615 = vmatpush1.bf16.msra.mxu0 %v372
    %616 = vmatprep.subr.bf16.mxu0 %v375
    %617 = vmatpush1.bf16.msra.mxu0 %v374
    %618 = vmatprep.subr.bf16.mxu0 %v377
    %619 = vmatpush1.bf16.msra.mxu0 %v376
    %620 = vmatprep.subr.bf16.mxu0 %v379
    %621 = vmatpush1.bf16.msra.mxu0 %v378
    %622 = vmatprep.subr.bf16.mxu0 0
    %623 = vmatpush1.bf16.msra.mxu0 0
    %624 = vmatprep.subr.bf16.mxu0 0
    %625 = vmatpush1.bf16.msra.mxu0 0
    %626 = vmatprep.subr.bf16.mxu0 0
    %627 = vmatpush1.bf16.msra.mxu0 0
    %628 = vmatprep.subr.bf16.mxu0 0
    %629 = vmatpush1.bf16.msra.mxu0 0
    %630 = vmatprep.subr.bf16.mxu0 0
    %631 = vmatpush1.bf16.msra.mxu0 0
    %632 = vmatprep.subr.bf16.mxu0 0
    %633 = vmatpush1.bf16.msra.mxu0 0
    %634 = vmatprep.subr.bf16.mxu0 0
    %635 = vmatpush1.bf16.msra.mxu0 0
    %636 = vmatprep.subr.bf16.mxu0 0
    %637 = vmatpush1.bf16.msra.mxu0 0
    %638 = vmatprep.subr.bf16.mxu0 0
    %639 = vmatpush1.bf16.msra.mxu0 0
    %640 = vmatprep.subr.bf16.mxu0 0
    %641 = vmatpush1.bf16.msra.mxu0 0
    %642 = vmatprep.subr.bf16.mxu0 0
    %643 = vmatpush1.bf16.msra.mxu0 0
    %644 = vmatprep.subr.bf16.mxu0 0
    %645 = vmatpush1.bf16.msra.mxu0 0
    %646 = vmatprep.mubr.bf16.mxu0 0
    %647 = vmatmul.mubr.bf16.gmra.mrb[0].mxu0 %v612
    %v648 = vpop.f32.mrb[0].mxu0
    %v649 = vadd.f32 0.0, %v648
    %v650 = vpop.f32.mrb[0].mxu0
    %v651 = vadd.f32 0.0, %v650
    %v652 = vpop.f32.mrb[0].mxu0
    %v653 = vpop.f32.mrb[0].mxu0
    %654 = vdwg.mxu0
    %v655 = vld [vmem:[#allocation2 + $0x10] sm:$0xff]
    %v656 = vadd.f32 %v655, %v649
    %v657 = vld [vmem:[#allocation3 + $0x28] sm:$0xff]
    %v658 = vadd.f32 %v657, %v651
    %v659 = vxor.u32 %v656, 2147483648
    %v660 = vmul.f32 %v659, 1.442695
    %v661 = vpow.pop %v660
    %v662 = vadd.f32 %v661, 1.0
    %v663 = vrcp.pop %v662
    %v664 = vmul.f32 1.0, %v663
    %v665 = vtanh.pop %v656
    %v666 = vmul.f32 %v664, %v565
    %668 = vrot.lane.b32.xlu0 %v665, 32
    %v669 = vpop.permute.xlu0 %668
    %v671 = vmul.f32 %v664, %v669
    %673 = vrot.lane.b32.xlu0 %v671, 32
    %v674 = vpop.permute.xlu0 %673
    %v676 = vadd.f32 %v666, %v674
    %v677 = vtanh.pop %v676
    %679 = vrot.lane.b32.xlu0 %v677, 32
    %v680 = vpop.permute.xlu0 %679
    %v682 = vmul.f32 %v664, %v680
    %v683 = vxor.u32 %v658, 2147483648
    %v684 = vmul.f32 %v683, 1.442695
    %v685 = vpow.pop %v684
    %v686 = vadd.f32 %v685, 1.0
    %v687 = vrcp.pop %v686
    %v688 = vmul.f32 1.0, %v687
    %v689 = vtanh.pop %v658
    %v690 = vmul.f32 %v688, %v589
    %692 = vrot.lane.b32.xlu0 %v689, 32
    %v693 = vpop.permute.xlu0 %692
    %v695 = vmul.f32 %v688, %v693
    %697 = vrot.lane.b32.xlu0 %v695, 32
    %v698 = vpop.permute.xlu0 %697
    %v700 = vadd.f32 %v690, %v698
    %v701 = vtanh.pop %v700
    %703 = vrot.lane.b32.xlu0 %v701, 32
    %v704 = vpop.permute.xlu0 %703
    %v706 = vmul.f32 %v688, %v704
    %708 = vrot.lane.b32.xlu0 %v682, 64
    %v709 = vpop.permute.xlu0 %708
    %711 = vst.msk [vmem:[#allocation15 + $0x10] sm:$0xff] %vm158, %v709
    %713 = vrot.lane.b32.xlu0 %v706, 64
    %v714 = vpop.permute.xlu0 %713
    %716 = vst.msk [vmem:[#allocation16 + $0x28] sm:$0xff] %vm158, %v714
    %717 = vrot.lane.b32.xlu0 %v706, 96
    %v718 = vpop.permute.xlu0 %717
    %v720 = vsel %vm158, %v709, %v718
    %v721 = vpack.c.bf16 %v720, %v720
    %v723 = vsel %vm388, %v721, 0
    %725 = vmatprep.subr.bf16.mxu0 %v373
    %726 = vmatpush1.bf16.msra.mxu0 %v372
    %727 = vmatprep.subr.bf16.mxu0 %v375
    %728 = vmatpush1.bf16.msra.mxu0 %v374
    %729 = vmatprep.subr.bf16.mxu0 %v377
    %730 = vmatpush1.bf16.msra.mxu0 %v376
    %731 = vmatprep.subr.bf16.mxu0 %v379
    %732 = vmatpush1.bf16.msra.mxu0 %v378
    %733 = vmatprep.subr.bf16.mxu0 0
    %734 = vmatpush1.bf16.msra.mxu0 0
    %735 = vmatprep.subr.bf16.mxu0 0
    %736 = vmatpush1.bf16.msra.mxu0 0
    %737 = vmatprep.subr.bf16.mxu0 0
    %738 = vmatpush1.bf16.msra.mxu0 0
    %739 = vmatprep.subr.bf16.mxu0 0
    %740 = vmatpush1.bf16.msra.mxu0 0
    %741 = vmatprep.subr.bf16.mxu0 0
    %742 = vmatpush1.bf16.msra.mxu0 0
    %743 = vmatprep.subr.bf16.mxu0 0
    %744 = vmatpush1.bf16.msra.mxu0 0
    %745 = vmatprep.subr.bf16.mxu0 0
    %746 = vmatpush1.bf16.msra.mxu0 0
    %747 = vmatprep.subr.bf16.mxu0 0
    %748 = vmatpush1.bf16.msra.mxu0 0
    %749 = vmatprep.subr.bf16.mxu0 0
    %750 = vmatpush1.bf16.msra.mxu0 0
    %751 = vmatprep.subr.bf16.mxu0 0
    %752 = vmatpush1.bf16.msra.mxu0 0
    %753 = vmatprep.subr.bf16.mxu0 0
    %754 = vmatpush1.bf16.msra.mxu0 0
    %755 = vmatprep.subr.bf16.mxu0 0
    %756 = vmatpush1.bf16.msra.mxu0 0
    %757 = vmatprep.mubr.bf16.mxu0 0
    %758 = vmatmul.mubr.bf16.gmra.mrb[0].mxu0 %v723
    %v759 = vpop.f32.mrb[0].mxu0
    %v760 = vadd.f32 0.0, %v759
    %v761 = vpop.f32.mrb[0].mxu0
    %v762 = vadd.f32 0.0, %v761
    %v763 = vpop.f32.mrb[0].mxu0
    %v764 = vpop.f32.mrb[0].mxu0
    %765 = vdwg.mxu0
    %v766 = vld [vmem:[#allocation2 + $0x18] sm:$0xff]
    %v767 = vadd.f32 %v766, %v760
    %v768 = vld [vmem:[#allocation3 + $0x20] sm:$0xff]
    %v769 = vadd.f32 %v768, %v762
    %v770 = vxor.u32 %v767, 2147483648
    %v771 = vmul.f32 %v770, 1.442695
    %v772 = vpow.pop %v771
    %v773 = vadd.f32 %v772, 1.0
    %v774 = vrcp.pop %v773
    %v775 = vmul.f32 1.0, %v774
    %v776 = vtanh.pop %v767
    %v777 = vmul.f32 %v775, %v676
    %779 = vrot.lane.b32.xlu0 %v776, 32
    %v780 = vpop.permute.xlu0 %779
    %v782 = vmul.f32 %v775, %v780
    %784 = vrot.lane.b32.xlu0 %v782, 32
    %v785 = vpop.permute.xlu0 %784
    %v787 = vadd.f32 %v777, %v785
    %v788 = vtanh.pop %v787
    %790 = vrot.lane.b32.xlu0 %v788, 32
    %v791 = vpop.permute.xlu0 %790
    %v793 = vmul.f32 %v775, %v791
    %v794 = vxor.u32 %v769, 2147483648
    %v795 = vmul.f32 %v794, 1.442695
    %v796 = vpow.pop %v795
    %v797 = vadd.f32 %v796, 1.0
    %v798 = vrcp.pop %v797
    %v799 = vmul.f32 1.0, %v798
    %v800 = vtanh.pop %v769
    %v801 = vmul.f32 %v799, %v700
    %803 = vrot.lane.b32.xlu0 %v800, 32
    %v804 = vpop.permute.xlu0 %803
    %v806 = vmul.f32 %v799, %v804
    %808 = vrot.lane.b32.xlu0 %v806, 32
    %v809 = vpop.permute.xlu0 %808
    %v811 = vadd.f32 %v801, %v809
    %v812 = vtanh.pop %v811
    %814 = vrot.lane.b32.xlu0 %v812, 32
    %v815 = vpop.permute.xlu0 %814
    %v817 = vmul.f32 %v799, %v815
    %819 = vrot.lane.b32.xlu0 %v793, 64
    %v820 = vpop.permute.xlu0 %819
    %822 = vst.msk [vmem:[#allocation15 + $0x18] sm:$0xff] %vm158, %v820
    %824 = vrot.lane.b32.xlu0 %v817, 64
    %v825 = vpop.permute.xlu0 %824
    %827 = vst.msk [vmem:[#allocation16 + $0x20] sm:$0xff] %vm158, %v825
    %828 = vrot.lane.b32.xlu0 %v817, 96
    %v829 = vpop.permute.xlu0 %828
    %v831 = vsel %vm158, %v820, %v829
    %v832 = vpack.c.bf16 %v831, %v831
    %v834 = vsel %vm388, %v832, 0
    %836 = vmatprep.subr.bf16.mxu0 %v373
    %837 = vmatpush1.bf16.msra.mxu0 %v372
    %838 = vmatprep.subr.bf16.mxu0 %v375
    %839 = vmatpush1.bf16.msra.mxu0 %v374
    %840 = vmatprep.subr.bf16.mxu0 %v377
    %841 = vmatpush1.bf16.msra.mxu0 %v376
    %842 = vmatprep.subr.bf16.mxu0 %v379
    %843 = vmatpush1.bf16.msra.mxu0 %v378
    %844 = vmatprep.subr.bf16.mxu0 0
    %845 = vmatpush1.bf16.msra.mxu0 0
    %846 = vmatprep.subr.bf16.mxu0 0
    %847 = vmatpush1.bf16.msra.mxu0 0
    %848 = vmatprep.subr.bf16.mxu0 0
    %849 = vmatpush1.bf16.msra.mxu0 0
    %850 = vmatprep.subr.bf16.mxu0 0
    %851 = vmatpush1.bf16.msra.mxu0 0
    %852 = vmatprep.subr.bf16.mxu0 0
    %853 = vmatpush1.bf16.msra.mxu0 0
    %854 = vmatprep.subr.bf16.mxu0 0
    %855 = vmatpush1.bf16.msra.mxu0 0
    %856 = vmatprep.subr.bf16.mxu0 0
    %857 = vmatpush1.bf16.msra.mxu0 0
    %858 = vmatprep.subr.bf16.mxu0 0
    %859 = vmatpush1.bf16.msra.mxu0 0
    %860 = vmatprep.subr.bf16.mxu0 0
    %861 = vmatpush1.bf16.msra.mxu0 0
    %862 = vmatprep.subr.bf16.mxu0 0
    %863 = vmatpush1.bf16.msra.mxu0 0
    %864 = vmatprep.subr.bf16.mxu0 0
    %865 = vmatpush1.bf16.msra.mxu0 0
    %866 = vmatprep.subr.bf16.mxu0 0
    %867 = vmatpush1.bf16.msra.mxu0 0
    %868 = vmatprep.mubr.bf16.mxu0 0
    %869 = vmatmul.mubr.bf16.gmra.mrb[0].mxu0 %v834
    %v870 = vpop.f32.mrb[0].mxu0
    %v871 = vadd.f32 0.0, %v870
    %v872 = vpop.f32.mrb[0].mxu0
    %v873 = vadd.f32 0.0, %v872
    %v874 = vpop.f32.mrb[0].mxu0
    %v875 = vpop.f32.mrb[0].mxu0
    %876 = vdwg.mxu0
    %v877 = vld [vmem:[#allocation2 + $0x20] sm:$0xff]
    %v878 = vadd.f32 %v877, %v871
    %v879 = vld [vmem:[#allocation3 + $0x18] sm:$0xff]
    %v880 = vadd.f32 %v879, %v873
    %v881 = vxor.u32 %v878, 2147483648
    %v882 = vmul.f32 %v881, 1.442695
    %v883 = vpow.pop %v882
    %v884 = vadd.f32 %v883, 1.0
    %v885 = vrcp.pop %v884
    %v886 = vmul.f32 1.0, %v885
    %v887 = vtanh.pop %v878
    %v888 = vmul.f32 %v886, %v787
    %890 = vrot.lane.b32.xlu0 %v887, 32
    %v891 = vpop.permute.xlu0 %890
    %v893 = vmul.f32 %v886, %v891
    %895 = vrot.lane.b32.xlu0 %v893, 32
    %v896 = vpop.permute.xlu0 %895
    %v898 = vadd.f32 %v888, %v896
    %v899 = vtanh.pop %v898
    %901 = vrot.lane.b32.xlu0 %v899, 32
    %v902 = vpop.permute.xlu0 %901
    %v904 = vmul.f32 %v886, %v902
    %v905 = vxor.u32 %v880, 2147483648
    %v906 = vmul.f32 %v905, 1.442695
    %v907 = vpow.pop %v906
    %v908 = vadd.f32 %v907, 1.0
    %v909 = vrcp.pop %v908
    %v910 = vmul.f32 1.0, %v909
    %v911 = vtanh.pop %v880
    %v912 = vmul.f32 %v910, %v811
    %914 = vrot.lane.b32.xlu0 %v911, 32
    %v915 = vpop.permute.xlu0 %914
    %v917 = vmul.f32 %v910, %v915
    %919 = vrot.lane.b32.xlu0 %v917, 32
    %v920 = vpop.permute.xlu0 %919
    %v922 = vadd.f32 %v912, %v920
    %v923 = vtanh.pop %v922
    %925 = vrot.lane.b32.xlu0 %v923, 32
    %v926 = vpop.permute.xlu0 %925
    %v928 = vmul.f32 %v910, %v926
    %930 = vrot.lane.b32.xlu0 %v904, 64
    %v931 = vpop.permute.xlu0 %930
    %933 = vst.msk [vmem:[#allocation15 + $0x20] sm:$0xff] %vm158, %v931
    %935 = vrot.lane.b32.xlu0 %v928, 64
    %v936 = vpop.permute.xlu0 %935
    %938 = vst.msk [vmem:[#allocation16 + $0x18] sm:$0xff] %vm158, %v936
    %939 = vrot.lane.b32.xlu0 %v928, 96
    %v940 = vpop.permute.xlu0 %939
    %v942 = vsel %vm158, %v931, %v940
    %v943 = vpack.c.bf16 %v942, %v942
    %v945 = vsel %vm388, %v943, 0
    %947 = vmatprep.subr.bf16.mxu0 %v373
    %948 = vmatpush1.bf16.msra.mxu0 %v372
    %949 = vmatprep.subr.bf16.mxu0 %v375
    %950 = vmatpush1.bf16.msra.mxu0 %v374
    %951 = vmatprep.subr.bf16.mxu0 %v377
    %952 = vmatpush1.bf16.msra.mxu0 %v376
    %953 = vmatprep.subr.bf16.mxu0 %v379
    %954 = vmatpush1.bf16.msra.mxu0 %v378
    %955 = vmatprep.subr.bf16.mxu0 0
    %956 = vmatpush1.bf16.msra.mxu0 0
    %957 = vmatprep.subr.bf16.mxu0 0
    %958 = vmatpush1.bf16.msra.mxu0 0
    %959 = vmatprep.subr.bf16.mxu0 0
    %960 = vmatpush1.bf16.msra.mxu0 0
    %961 = vmatprep.subr.bf16.mxu0 0
    %962 = vmatpush1.bf16.msra.mxu0 0
    %963 = vmatprep.subr.bf16.mxu0 0
    %964 = vmatpush1.bf16.msra.mxu0 0
    %965 = vmatprep.subr.bf16.mxu0 0
    %966 = vmatpush1.bf16.msra.mxu0 0
    %967 = vmatprep.subr.bf16.mxu0 0
    %968 = vmatpush1.bf16.msra.mxu0 0
    %969 = vmatprep.subr.bf16.mxu0 0
    %970 = vmatpush1.bf16.msra.mxu0 0
    %971 = vmatprep.subr.bf16.mxu0 0
    %972 = vmatpush1.bf16.msra.mxu0 0
    %973 = vmatprep.subr.bf16.mxu0 0
    %974 = vmatpush1.bf16.msra.mxu0 0
    %975 = vmatprep.subr.bf16.mxu0 0
    %976 = vmatpush1.bf16.msra.mxu0 0
    %977 = vmatprep.subr.bf16.mxu0 0
    %978 = vmatpush1.bf16.msra.mxu0 0
    %979 = vmatprep.mubr.bf16.mxu0 0
    %980 = vmatmul.mubr.bf16.gmra.mrb[0].mxu0 %v945
    %v981 = vpop.f32.mrb[0].mxu0
    %v982 = vadd.f32 0.0, %v981
    %v983 = vpop.f32.mrb[0].mxu0
    %v984 = vadd.f32 0.0, %v983
    %v985 = vpop.f32.mrb[0].mxu0
    %v986 = vpop.f32.mrb[0].mxu0
    %987 = vdwg.mxu0
    %v988 = vld [vmem:[#allocation2 + $0x28] sm:$0xff]
    %v989 = vadd.f32 %v988, %v982
    %v990 = vld [vmem:[#allocation3 + $0x10] sm:$0xff]
    %v991 = vadd.f32 %v990, %v984
    %v992 = vxor.u32 %v989, 2147483648
    %v993 = vmul.f32 %v992, 1.442695
    %v994 = vpow.pop %v993
    %v995 = vadd.f32 %v994, 1.0
    %v996 = vrcp.pop %v995
    %v997 = vmul.f32 1.0, %v996
    %v998 = vtanh.pop %v989
    %v999 = vmul.f32 %v997, %v898
    %1001 = vrot.lane.b32.xlu0 %v998, 32
    %v1002 = vpop.permute.xlu0 %1001
    %v1004 = vmul.f32 %v997, %v1002
    %1006 = vrot.lane.b32.xlu0 %v1004, 32
    %v1007 = vpop.permute.xlu0 %1006
    %v1009 = vadd.f32 %v999, %v1007
    %v1010 = vtanh.pop %v1009
    %1012 = vrot.lane.b32.xlu0 %v1010, 32
    %v1013 = vpop.permute.xlu0 %1012
    %v1015 = vmul.f32 %v997, %v1013
    %v1016 = vxor.u32 %v991, 2147483648
    %v1017 = vmul.f32 %v1016, 1.442695
    %v1018 = vpow.pop %v1017
    %v1019 = vadd.f32 %v1018, 1.0
    %v1020 = vrcp.pop %v1019
    %v1021 = vmul.f32 1.0, %v1020
    %v1022 = vtanh.pop %v991
    %v1023 = vmul.f32 %v1021, %v922
    %1025 = vrot.lane.b32.xlu0 %v1022, 32
    %v1026 = vpop.permute.xlu0 %1025
    %v1028 = vmul.f32 %v1021, %v1026
    %1030 = vrot.lane.b32.xlu0 %v1028, 32
    %v1031 = vpop.permute.xlu0 %1030
    %v1033 = vadd.f32 %v1023, %v1031
    %v1034 = vtanh.pop %v1033
    %1036 = vrot.lane.b32.xlu0 %v1034, 32
    %v1037 = vpop.permute.xlu0 %1036
    %v1039 = vmul.f32 %v1021, %v1037
    %1041 = vrot.lane.b32.xlu0 %v1015, 64
    %v1042 = vpop.permute.xlu0 %1041
    %1044 = vst.msk [vmem:[#allocation15 + $0x28] sm:$0xff] %vm158, %v1042
    %1046 = vrot.lane.b32.xlu0 %v1039, 64
    %v1047 = vpop.permute.xlu0 %1046
    %1049 = vst.msk [vmem:[#allocation16 + $0x10] sm:$0xff] %vm158, %v1047
    %1050 = vrot.lane.b32.xlu0 %v1039, 96
    %v1051 = vpop.permute.xlu0 %1050
    %v1053 = vsel %vm158, %v1042, %v1051
    %v1054 = vpack.c.bf16 %v1053, %v1053
    %v1056 = vsel %vm388, %v1054, 0
    %1058 = vmatprep.subr.bf16.mxu0 %v373
    %1059 = vmatpush1.bf16.msra.mxu0 %v372
    %1060 = vmatprep.subr.bf16.mxu0 %v375
    %1061 = vmatpush1.bf16.msra.mxu0 %v374
    %1062 = vmatprep.subr.bf16.mxu0 %v377
    %1063 = vmatpush1.bf16.msra.mxu0 %v376
    %1064 = vmatprep.subr.bf16.mxu0 %v379
    %1065 = vmatpush1.bf16.msra.mxu0 %v378
    %1066 = vmatprep.subr.bf16.mxu0 0
    %1067 = vmatpush1.bf16.msra.mxu0 0
    %1068 = vmatprep.subr.bf16.mxu0 0
    %1069 = vmatpush1.bf16.msra.mxu0 0
    %1070 = vmatprep.subr.bf16.mxu0 0
    %1071 = vmatpush1.bf16.msra.mxu0 0
    %1072 = vmatprep.subr.bf16.mxu0 0
    %1073 = vmatpush1.bf16.msra.mxu0 0
    %1074 = vmatprep.subr.bf16.mxu0 0
    %1075 = vmatpush1.bf16.msra.mxu0 0
    %1076 = vmatprep.subr.bf16.mxu0 0
    %1077 = vmatpush1.bf16.msra.mxu0 0
    %1078 = vmatprep.subr.bf16.mxu0 0
    %1079 = vmatpush1.bf16.msra.mxu0 0
    %1080 = vmatprep.subr.bf16.mxu0 0
    %1081 = vmatpush1.bf16.msra.mxu0 0
    %1082 = vmatprep.subr.bf16.mxu0 0
    %1083 = vmatpush1.bf16.msra.mxu0 0
    %1084 = vmatprep.subr.bf16.mxu0 0
    %1085 = vmatpush1.bf16.msra.mxu0 0
    %1086 = vmatprep.subr.bf16.mxu0 0
    %1087 = vmatpush1.bf16.msra.mxu0 0
    %1088 = vmatprep.subr.bf16.mxu0 0
    %1089 = vmatpush1.bf16.msra.mxu0 0
    %1090 = vmatprep.mubr.bf16.mxu0 0
    %1091 = vmatmul.mubr.bf16.gmra.mrb[0].mxu0 %v1056
    %v1092 = vpop.f32.mrb[0].mxu0
    %v1093 = vadd.f32 0.0, %v1092
    %v1094 = vpop.f32.mrb[0].mxu0
    %v1095 = vadd.f32 0.0, %v1094
    %v1096 = vpop.f32.mrb[0].mxu0
    %v1097 = vpop.f32.mrb[0].mxu0
    %1098 = vdwg.mxu0
    %v1099 = vld [vmem:[#allocation2 + $0x30] sm:$0xff]
    %v1100 = vadd.f32 %v1099, %v1093
    %v1101 = vld [vmem:[#allocation3 + $0x8] sm:$0xff]
    %v1102 = vadd.f32 %v1101, %v1095
    %v1103 = vxor.u32 %v1100, 2147483648
    %v1104 = vmul.f32 %v1103, 1.442695
    %v1105 = vpow.pop %v1104
    %v1106 = vadd.f32 %v1105, 1.0
    %v1107 = vrcp.pop %v1106
    %v1108 = vmul.f32 1.0, %v1107
    %v1109 = vtanh.pop %v1100
    %v1110 = vmul.f32 %v1108, %v1009
    %1112 = vrot.lane.b32.xlu0 %v1109, 32
    %v1113 = vpop.permute.xlu0 %1112
    %v1115 = vmul.f32 %v1108, %v1113
    %1117 = vrot.lane.b32.xlu0 %v1115, 32
    %v1118 = vpop.permute.xlu0 %1117
    %v1120 = vadd.f32 %v1110, %v1118
    %v1121 = vtanh.pop %v1120
    %1123 = vrot.lane.b32.xlu0 %v1121, 32
    %v1124 = vpop.permute.xlu0 %1123
    %v1126 = vmul.f32 %v1108, %v1124
    %v1127 = vxor.u32 %v1102, 2147483648
    %v1128 = vmul.f32 %v1127, 1.442695
    %v1129 = vpow.pop %v1128
    %v1130 = vadd.f32 %v1129, 1.0
    %v1131 = vrcp.pop %v1130
    %v1132 = vmul.f32 1.0, %v1131
    %v1133 = vtanh.pop %v1102
    %v1134 = vmul.f32 %v1132, %v1033
    %1136 = vrot.lane.b32.xlu0 %v1133, 32
    %v1137 = vpop.permute.xlu0 %1136
    %v1139 = vmul.f32 %v1132, %v1137
    %1141 = vrot.lane.b32.xlu0 %v1139, 32
    %v1142 = vpop.permute.xlu0 %1141
    %v1144 = vadd.f32 %v1134, %v1142
    %v1145 = vtanh.pop %v1144
    %1147 = vrot.lane.b32.xlu0 %v1145, 32
    %v1148 = vpop.permute.xlu0 %1147
    %v1150 = vmul.f32 %v1132, %v1148
    %1152 = vrot.lane.b32.xlu0 %v1126, 64
    %v1153 = vpop.permute.xlu0 %1152
    %1155 = vst.msk [vmem:[#allocation15 + $0x30] sm:$0xff] %vm158, %v1153
    %1157 = vrot.lane.b32.xlu0 %v1150, 64
    %v1158 = vpop.permute.xlu0 %1157
    %1160 = vst.msk [vmem:[#allocation16 + $0x8] sm:$0xff] %vm158, %v1158
    %1161 = vrot.lane.b32.xlu0 %v1150, 96
    %v1162 = vpop.permute.xlu0 %1161
    %v1164 = vsel %vm158, %v1153, %v1162
    %v1165 = vpack.c.bf16 %v1164, %v1164
    %v1167 = vsel %vm388, %v1165, 0
    %1169 = vmatprep.subr.bf16.mxu0 %v373
    %1170 = vmatpush1.bf16.msra.mxu0 %v372
    %1171 = vmatprep.subr.bf16.mxu0 %v375
    %1172 = vmatpush1.bf16.msra.mxu0 %v374
    %1173 = vmatprep.subr.bf16.mxu0 %v377
    %1174 = vmatpush1.bf16.msra.mxu0 %v376
    %1175 = vmatprep.subr.bf16.mxu0 %v379
    %1176 = vmatpush1.bf16.msra.mxu0 %v378
    %1177 = vmatprep.subr.bf16.mxu0 0
    %1178 = vmatpush1.bf16.msra.mxu0 0
    %1179 = vmatprep.subr.bf16.mxu0 0
    %1180 = vmatpush1.bf16.msra.mxu0 0
    %1181 = vmatprep.subr.bf16.mxu0 0
    %1182 = vmatpush1.bf16.msra.mxu0 0
    %1183 = vmatprep.subr.bf16.mxu0 0
    %1184 = vmatpush1.bf16.msra.mxu0 0
    %1185 = vmatprep.subr.bf16.mxu0 0
    %1186 = vmatpush1.bf16.msra.mxu0 0
    %1187 = vmatprep.subr.bf16.mxu0 0
    %1188 = vmatpush1.bf16.msra.mxu0 0
    %1189 = vmatprep.subr.bf16.mxu0 0
    %1190 = vmatpush1.bf16.msra.mxu0 0
    %1191 = vmatprep.subr.bf16.mxu0 0
    %1192 = vmatpush1.bf16.msra.mxu0 0
    %1193 = vmatprep.subr.bf16.mxu0 0
    %1194 = vmatpush1.bf16.msra.mxu0 0
    %1195 = vmatprep.subr.bf16.mxu0 0
    %1196 = vmatpush1.bf16.msra.mxu0 0
    %1197 = vmatprep.subr.bf16.mxu0 0
    %1198 = vmatpush1.bf16.msra.mxu0 0
    %1199 = vmatprep.subr.bf16.mxu0 0
    %1200 = vmatpush1.bf16.msra.mxu0 0
    %1201 = vmatprep.mubr.bf16.mxu0 0
    %1202 = vmatmul.mubr.bf16.gmra.mrb[0].mxu0 %v1167
    %v1203 = vpop.f32.mrb[0].mxu0
    %v1204 = vadd.f32 0.0, %v1203
    %v1205 = vpop.f32.mrb[0].mxu0
    %v1206 = vadd.f32 0.0, %v1205
    %v1207 = vpop.f32.mrb[0].mxu0
    %v1208 = vpop.f32.mrb[0].mxu0
    %1209 = vdwg.mxu0
    %v1210 = vld [vmem:[#allocation2 + $0x38] sm:$0xff]
    %v1211 = vadd.f32 %v1210, %v1204
    %v1212 = vld [vmem:[#allocation3] sm:$0xff]
    %v1213 = vadd.f32 %v1212, %v1206
    %v1214 = vxor.u32 %v1211, 2147483648
    %v1215 = vmul.f32 %v1214, 1.442695
    %v1216 = vpow.pop %v1215
    %v1217 = vadd.f32 %v1216, 1.0
    %v1218 = vrcp.pop %v1217
    %v1219 = vmul.f32 1.0, %v1218
    %v1220 = vtanh.pop %v1211
    %v1221 = vmul.f32 %v1219, %v1120
    %1223 = vrot.lane.b32.xlu0 %v1220, 32
    %v1224 = vpop.permute.xlu0 %1223
    %v1226 = vmul.f32 %v1219, %v1224
    %1228 = vrot.lane.b32.xlu0 %v1226, 32
    %v1229 = vpop.permute.xlu0 %1228
    %v1231 = vadd.f32 %v1221, %v1229
    %v1232 = vtanh.pop %v1231
    %1234 = vrot.lane.b32.xlu0 %v1232, 32
    %v1235 = vpop.permute.xlu0 %1234
    %v1237 = vmul.f32 %v1219, %v1235
    %v1238 = vxor.u32 %v1213, 2147483648
    %v1239 = vmul.f32 %v1238, 1.442695
    %v1240 = vpow.pop %v1239
    %v1241 = vadd.f32 %v1240, 1.0
    %v1242 = vrcp.pop %v1241
    %v1243 = vmul.f32 1.0, %v1242
    %v1244 = vtanh.pop %v1213
    %v1245 = vmul.f32 %v1243, %v1144
    %1247 = vrot.lane.b32.xlu0 %v1244, 32
    %v1248 = vpop.permute.xlu0 %1247
    %v1250 = vmul.f32 %v1243, %v1248
    %1252 = vrot.lane.b32.xlu0 %v1250, 32
    %v1253 = vpop.permute.xlu0 %1252
    %v1255 = vadd.f32 %v1245, %v1253
    %v1256 = vtanh.pop %v1255
    %1258 = vrot.lane.b32.xlu0 %v1256, 32
    %v1259 = vpop.permute.xlu0 %1258
    %v1261 = vmul.f32 %v1243, %v1259
    %1263 = vrot.lane.b32.xlu0 %v1237, 64
    %v1264 = vpop.permute.xlu0 %1263
    %1266 = vst.msk [vmem:[#allocation15 + $0x38] sm:$0xff] %vm158, %v1264
    %1268 = vrot.lane.b32.xlu0 %v1261, 64
    %v1269 = vpop.permute.xlu0 %1268
    %1271 = vst.msk [vmem:[#allocation16] sm:$0xff] %vm158, %v1269
    %1272 = vrot.lane.b32.xlu0 %v1261, 96
    %v1273 = vpop.permute.xlu0 %1272
    %v1275 = vsel %vm158, %v1264, %v1273
    %1276 = vst.msk [vmem:[#allocation18] sm:$0xff] %vm388, %v1275
    // Predicated region
    $region50: #{vae_forward.6} parent=1 // pred_check
      _
    $region51: #{vae_forward.6} parent=1 // pred_check_branch
      %1278 = sbr.rel (0) target = $region53
    $region52: #{vae_forward.6} parent=1 // pred_region
      %s1280 = ssub.s32 1024, 1024
      %1281 = vsyncadd [#allocation6], %s1280
      %s1282 = sshll.u32 [#allocation15], 4
      %s1283 = int_to_ptr.vmem [resolvable:$true] %s1282
      %1288 = dma.vmem_to_hbm [thread:$0]  %s1283, 1024, %s6, [#allocation6], 128, 128, 8
    $region53: #{vae_forward.6} parent=1 // pred_fallthru
      _
    // Predicated region
    $region54: #{vae_forward.6} parent=1 // pred_check
      _
    $region55: #{vae_forward.6} parent=1 // pred_check_branch
      %1290 = sbr.rel (0) target = $region57
    $region56: #{vae_forward.6} parent=1 // pred_region
      %s1292 = ssub.s32 1024, 1024
      %1293 = vsyncadd [#allocation17], %s1292
      %s1294 = sshll.u32 [#allocation16], 4
      %s1295 = int_to_ptr.vmem [resolvable:$true] %s1294
      %1300 = dma.vmem_to_hbm [thread:$0]  %s1295, 1024, %s7, [#allocation17], 128, 128, 8
    $region57: #{vae_forward.6} parent=1 // pred_fallthru
      _
    // Predicated region
    $region58: #{vae_forward.6} parent=1 // pred_check
      _
    $region59: #{vae_forward.6} parent=1 // pred_check_branch
      %1302 = sbr.rel (0) target = $region61
    $region60: #{vae_forward.6} parent=1 // pred_region
      %s1304 = ssub.s32 128, 128
      %1305 = vsyncadd [#allocation17], %s1304
      %s1307 = sshll.u32 [#allocation18], 4
      %s1308 = int_to_ptr.vmem [resolvable:$true] %s1307
      %1310 = dma.vmem_to_hbm [thread:$0]  %s1308, 128, %s8, [#allocation17]
    $region61: #{vae_forward.6} parent=1 // pred_fallthru
      _
    // Predicated region
    $region62: #{vae_forward.6} parent=1 // pred_check
      _
    $region63: #{vae_forward.6} parent=1 // pred_check_branch
      %1312 = sbr.rel (0) target = $region65
    $region64: #{vae_forward.6} parent=1 // pred_region
      %1313 = dma.done [#allocation6], 1024
    $region65: #{vae_forward.6} parent=1 // pred_fallthru
      _
    // Predicated region
    $region66: #{vae_forward.6} parent=1 // pred_check
      _
    $region67: #{vae_forward.6} parent=1 // pred_check_branch
      %1315 = sbr.rel (0) target = $region69
    $region68: #{vae_forward.6} parent=1 // pred_region
      %1316 = dma.done [#allocation17], 1024
    $region69: #{vae_forward.6} parent=1 // pred_fallthru
      _
    // Predicated region
    $region70: #{vae_forward.6} parent=1 // pred_check
      _
    $region71: #{vae_forward.6} parent=1 // pred_check_branch
      %1318 = sbr.rel (0) target = $region73
    $region72: #{vae_forward.6} parent=1 // pred_region
      %1319 = dma.done [#allocation17], 128
    $region73: #{vae_forward.6} parent=1 // pred_fallthru
      _
    %1320 = vsyncpa [#allocation5], 1
    %1321 = vsyncpa [#allocation8], 1
    %1322 = vsyncpa [#allocation11], 1
    %1323 = vsyncpa [#allocation14], 1
    %1324 = vsyncpa [#allocation6], 1
    %1325 = vsyncpa [#allocation17], 1

// kernel: vae_forward.9
$region0: #{vae_forward.9}
  #allocation0 [shape = 'u32[]', space=smem, size = 0x4, offset = 0x4, fixed_abs, tag = 'smem constant byte address 0x4 - core index']
  #allocation1 [shape = 'u32[144,128]{1,0:T(1,128)}', space=vmem, size = 0x12000, scoped, tag = 'internal scratch']
  #allocation2 [shape = 'f32[8,1]{1,0:T(8,128)}', space=vmem, size = 0x1000, scoped, tag = 'scratch operand']
  #allocation3 [shape = 'f32[8,1]{1,0:T(8,128)}', space=vmem, size = 0x1000, scoped, tag = 'scratch operand']
  #allocation4 [shape = 'f32[8,1]{1,0:T(8,128)}', space=vmem, size = 0x1000, scoped, tag = 'scratch operand']
  %s0 = inlined_call_operand.hbm [shape: f32[56,32], index: 0, kind: input, shape index: {}]
  %s1 = inlined_call_operand.hbm [shape: f32[56,32], index: 1, kind: input, shape index: {}]
  %s2 = inlined_call_operand.hbm [shape: bf16[32,256], index: 2, kind: input, shape index: {}]
  %s3 = inlined_call_operand.hbm [shape: bf16[32,256], index: 3, kind: input, shape index: {}]
  %s4 = inlined_call_operand.hbm [shape: f32[1,256], index: 4, kind: input, shape index: {}]
  %s5 = inlined_call_operand.hbm [shape: s32[56,1], index: 5, kind: input, shape index: {}]
  %s6 = inlined_call_operand.hbm [shape: f32[56,128], index: 6, kind: output, shape index: {}]
  %s7 = sld [smem:[#allocation0]]
  $region89: #{vae_forward.9} parent=0
    _
  %s9 = ssub.s32 1, %s7
  %s10 = scalar_select 0, %s9, %s7
  $region1: #{vae_forward.9} parent=0
    #allocation5 [shape = 'u8[8192]{0}', space=vmem, size = 0x2000, scoped, tag = 'input window, operand 0']
    #allocation6 [shape = 's32[2]{0}', space=sflag, size = 0x8, scoped, tag = 'scoped memory for vae_forward.9']
    #allocation7 [shape = 's32[2]{0}', space=sflag, size = 0x8, scoped, tag = 'scoped memory for vae_forward.9']
    #allocation8 [shape = 'u8[8192]{0}', space=vmem, size = 0x2000, scoped, tag = 'input window, operand 1']
    #allocation9 [shape = 's32[2]{0}', space=sflag, size = 0x8, scoped, tag = 'scoped memory for vae_forward.9']
    #allocation10 [shape = 'u8[16384]{0}', space=vmem, size = 0x4000, scoped, tag = 'input window, operand 2, single buffered']
    #allocation11 [shape = 'u8[16384]{0}', space=vmem, size = 0x4000, scoped, tag = 'input window, operand 3, single buffered']
    #allocation12 [shape = 's32[1]{0}', space=sflag, size = 0x4, scoped, tag = 'scoped memory for vae_forward.9']
    #allocation13 [shape = 'u8[1024]{0}', space=vmem, size = 0x400, scoped, tag = 'input window, operand 4, single buffered']
    #allocation14 [shape = 'u8[8192]{0}', space=vmem, size = 0x2000, scoped, tag = 'input window, operand 5']
    #allocation15 [shape = 's32[2]{0}', space=sflag, size = 0x8, scoped, tag = 'scoped memory for vae_forward.9']
    #allocation16 [shape = 'u8[8192]{0}', space=vmem, size = 0x2000, scoped, tag = 'output window, operand 0']
    %11 = vsyncpa [#allocation6], 0
    %s12 = scalar_lea.sflag [#allocation6], 1
    %13 = vsyncpa %s12, 0
    %14 = vsyncpa [#allocation9], 0
    %s15 = scalar_lea.sflag [#allocation9], 1
    %16 = vsyncpa %s15, 0
    %17 = vsyncpa [#allocation12], 0
    %18 = vsyncpa [#allocation15], 0
    %s19 = scalar_lea.sflag [#allocation15], 1
    %20 = vsyncpa %s19, 0
    %21 = vsyncpa [#allocation7], 0
    %s22 = scalar_lea.sflag [#allocation7], 1
    %23 = vsyncpa %s22, 0
    loop: start=0, step=1, limit=9
    $region2: #{vae_forward.9} parent=1 // loop_pre_header
      _
    $region3: #{vae_forward.9} parent=1 // loop_header
      %s25 = sphi 0, %s29
      %p26 = scmp.ge.s32.totalorder %s25, 9
      %s32 = sphi 0, %s44
      %s33 = sphi 0, %s40
      %s34 = sphi 0, %s32
      %s35 = sphi 0, %s33
      %s36 = sphi 0, %s34
      %s37 = sphi 0, %s35
      %s47 = sphi 0, %s49
      %s50 = sphi 0, %s47
      %s51 = sphi 0, %s50
      %s67 = sphi 0, %s51
      %s73 = sphi 0, %s75
      %s76 = sphi 0, %s73
      %s77 = sphi 0, %s76
      %s93 = sphi 0, %s77
      %s99 = sphi 0, %s101
      %s102 = sphi 0, %s99
      %s103 = sphi 0, %s102
      %s119 = sphi 0, %s103
      %s125 = sphi 0, %s127
      %s128 = sphi 0, %s125
      %s129 = sphi 0, %s128
      %s145 = sphi 0, %s129
      %s151 = sphi 0, %s153
      %s154 = sphi 0, %s151
      %s155 = sphi 0, %s154
      %s171 = sphi 0, %s155
      %s177 = sphi 0, %s179
      %s180 = sphi 0, %s177
      %s181 = sphi 0, %s180
      %s197 = sphi 0, %s181
      %s203 = sphi 0, %s205
      %s206 = sphi 0, %s203
      %s207 = sphi 0, %s206
      %s223 = sphi 0, %s207
    $region4: #{vae_forward.9} parent=1 // loop_header_branch
      %28 = sbr.rel (%p26) target = $region8
    $region5: #{vae_forward.9} parent=1 // loop_body
      %s30 = ssub.s32 %s25, 1
      %s31 = ssub.s32 %s25, 2
      %s38 = sadd.s32 1, %s33
      %p39 = scmp.ge.s32.totalorder %s38, 1
      %s40 = scalar_select %p39, 0, %s38
      %s41 = sadd.s32 1, %s32
      %s42 = scalar_select %p39, %s41, %s32
      %p43 = scmp.ge.s32.totalorder %s42, 7
      %s44 = scalar_select %p43, 0, %s42
      %s45 = ssub.s32 %s32, %s44
      %p46 = scmp.eq.s32.totalorder %s45, 0
      %s48 = sadd.s32 %s47, 1
      %s49 = scalar_select %p46, %s47, %s48
      %p52 = pneg %p46
      %p53 = scmp.eq.s32.totalorder %s25, 6
      %p54 = por %p52, %p53
      %p55 = scmp.ne.s32.totalorder %s47, %s50
      %p56 = scmp.eq.s32.totalorder %s25, 0
      %p57 = por %p55, %p56
      %p58 = scmp.ne.s32.totalorder %s47, %s50
      %p59 = scmp.eq.s32.totalorder %s30, 6
      %p60 = por %p58, %p59
      %p61 = scmp.ne.s32.totalorder %s50, %s51
      %p62 = scmp.eq.s32.totalorder %s30, 0
      %p63 = por %p61, %p62
      %p64 = scmp.ne.s32.totalorder %s50, %s51
      %p65 = scmp.eq.s32.totalorder %s31, 6
      %p66 = por %p64, %p65
      %p68 = scmp.ne.s32.totalorder %s51, %s67
      %p69 = scmp.eq.s32.totalorder %s31, 0
      %p70 = por %p68, %p69
      %s71 = ssub.s32 %s32, %s44
      %p72 = scmp.eq.s32.totalorder %s71, 0
      %s74 = sadd.s32 %s73, 1
      %s75 = scalar_select %p72, %s73, %s74
      %p78 = pneg %p72
      %p79 = scmp.eq.s32.totalorder %s25, 6
      %p80 = por %p78, %p79
      %p81 = scmp.ne.s32.totalorder %s73, %s76
      %p82 = scmp.eq.s32.totalorder %s25, 0
      %p83 = por %p81, %p82
      %p84 = scmp.ne.s32.totalorder %s73, %s76
      %p85 = scmp.eq.s32.totalorder %s30, 6
      %p86 = por %p84, %p85
      %p87 = scmp.ne.s32.totalorder %s76, %s77
      %p88 = scmp.eq.s32.totalorder %s30, 0
      %p89 = por %p87, %p88
      %p90 = scmp.ne.s32.totalorder %s76, %s77
      %p91 = scmp.eq.s32.totalorder %s31, 6
      %p92 = por %p90, %p91
      %p94 = scmp.ne.s32.totalorder %s77, %s93
      %p95 = scmp.eq.s32.totalorder %s31, 0
      %p96 = por %p94, %p95
      %s97 = ssub.s32 %s33, %s40
      %p98 = scmp.eq.s32.totalorder %s97, 0
      %s100 = sadd.s32 %s99, 1
      %s101 = scalar_select %p98, %s99, %s100
      %p104 = pneg %p98
      %p105 = scmp.eq.s32.totalorder %s25, 6
      %p106 = por %p104, %p105
      %p107 = scmp.ne.s32.totalorder %s99, %s102
      %p108 = scmp.eq.s32.totalorder %s25, 0
      %p109 = por %p107, %p108
      %p110 = scmp.ne.s32.totalorder %s99, %s102
      %p111 = scmp.eq.s32.totalorder %s30, 6
      %p112 = por %p110, %p111
      %p113 = scmp.ne.s32.totalorder %s102, %s103
      %p114 = scmp.eq.s32.totalorder %s30, 0
      %p115 = por %p113, %p114
      %p116 = scmp.ne.s32.totalorder %s102, %s103
      %p117 = scmp.eq.s32.totalorder %s31, 6
      %p118 = por %p116, %p117
      %p120 = scmp.ne.s32.totalorder %s103, %s119
      %p121 = scmp.eq.s32.totalorder %s31, 0
      %p122 = por %p120, %p121
      %s123 = ssub.s32 %s33, %s40
      %p124 = scmp.eq.s32.totalorder %s123, 0
      %s126 = sadd.s32 %s125, 1
      %s127 = scalar_select %p124, %s125, %s126
      %p130 = pneg %p124
      %p131 = scmp.eq.s32.totalorder %s25, 6
      %p132 = por %p130, %p131
      %p133 = scmp.ne.s32.totalorder %s125, %s128
      %p134 = scmp.eq.s32.totalorder %s25, 0
      %p135 = por %p133, %p134
      %p136 = scmp.ne.s32.totalorder %s125, %s128
      %p137 = scmp.eq.s32.totalorder %s30, 6
      %p138 = por %p136, %p137
      %p139 = scmp.ne.s32.totalorder %s128, %s129
      %p140 = scmp.eq.s32.totalorder %s30, 0
      %p141 = por %p139, %p140
      %p142 = scmp.ne.s32.totalorder %s128, %s129
      %p143 = scmp.eq.s32.totalorder %s31, 6
      %p144 = por %p142, %p143
      %p146 = scmp.ne.s32.totalorder %s129, %s145
      %p147 = scmp.eq.s32.totalorder %s31, 0
      %p148 = por %p146, %p147
      %s149 = ssub.s32 %s33, %s40
      %p150 = scmp.eq.s32.totalorder %s149, 0
      %s152 = sadd.s32 %s151, 1
      %s153 = scalar_select %p150, %s151, %s152
      %p156 = pneg %p150
      %p157 = scmp.eq.s32.totalorder %s25, 6
      %p158 = por %p156, %p157
      %p159 = scmp.ne.s32.totalorder %s151, %s154
      %p160 = scmp.eq.s32.totalorder %s25, 0
      %p161 = por %p159, %p160
      %p162 = scmp.ne.s32.totalorder %s151, %s154
      %p163 = scmp.eq.s32.totalorder %s30, 6
      %p164 = por %p162, %p163
      %p165 = scmp.ne.s32.totalorder %s154, %s155
      %p166 = scmp.eq.s32.totalorder %s30, 0
      %p167 = por %p165, %p166
      %p168 = scmp.ne.s32.totalorder %s154, %s155
      %p169 = scmp.eq.s32.totalorder %s31, 6
      %p170 = por %p168, %p169
      %p172 = scmp.ne.s32.totalorder %s155, %s171
      %p173 = scmp.eq.s32.totalorder %s31, 0
      %p174 = por %p172, %p173
      %s175 = ssub.s32 %s32, %s44
      %p176 = scmp.eq.s32.totalorder %s175, 0
      %s178 = sadd.s32 %s177, 1
      %s179 = scalar_select %p176, %s177, %s178
      %p182 = pneg %p176
      %p183 = scmp.eq.s32.totalorder %s25, 6
      %p184 = por %p182, %p183
      %p185 = scmp.ne.s32.totalorder %s177, %s180
      %p186 = scmp.eq.s32.totalorder %s25, 0
      %p187 = por %p185, %p186
      %p188 = scmp.ne.s32.totalorder %s177, %s180
      %p189 = scmp.eq.s32.totalorder %s30, 6
      %p190 = por %p188, %p189
      %p191 = scmp.ne.s32.totalorder %s180, %s181
      %p192 = scmp.eq.s32.totalorder %s30, 0
      %p193 = por %p191, %p192
      %p194 = scmp.ne.s32.totalorder %s180, %s181
      %p195 = scmp.eq.s32.totalorder %s31, 6
      %p196 = por %p194, %p195
      %p198 = scmp.ne.s32.totalorder %s181, %s197
      %p199 = scmp.eq.s32.totalorder %s31, 0
      %p200 = por %p198, %p199
      %s201 = ssub.s32 %s32, %s44
      %p202 = scmp.eq.s32.totalorder %s201, 0
      %s204 = sadd.s32 %s203, 1
      %s205 = scalar_select %p202, %s203, %s204
      %p208 = pneg %p202
      %p209 = scmp.eq.s32.totalorder %s25, 6
      %p210 = por %p208, %p209
      %p211 = scmp.ne.s32.totalorder %s203, %s206
      %p212 = scmp.eq.s32.totalorder %s25, 0
      %p213 = por %p211, %p212
      %p214 = scmp.ne.s32.totalorder %s203, %s206
      %p215 = scmp.eq.s32.totalorder %s30, 6
      %p216 = por %p214, %p215
      %p217 = scmp.ne.s32.totalorder %s206, %s207
      %p218 = scmp.eq.s32.totalorder %s30, 0
      %p219 = por %p217, %p218
      %p220 = scmp.ne.s32.totalorder %s206, %s207
      %p221 = scmp.eq.s32.totalorder %s31, 6
      %p222 = por %p220, %p221
      %p224 = scmp.ne.s32.totalorder %s207, %s223
      %p225 = scmp.eq.s32.totalorder %s31, 0
      %p226 = por %p224, %p225
      %p227 = scmp.le.s32.totalorder 1, %s25
      %p228 = scmp.lt.s32.totalorder %s25, 8
      %p229 = pnand %p227, %p228
      %p230 = pneg %p229
      // Predicated region
      $region9: #{vae_forward.9} parent=5 // pred_check
        _
      $region10: #{vae_forward.9} parent=5 // pred_check_branch
        %232 = sbr.rel (%p229) target = $region12
      $region11: #{vae_forward.9} parent=5 // pred_region
        %s233 = ssub.s32 %s25, 1
        // Predicated region
        $region13: #{vae_forward.9} parent=11 // pred_check
          %p234 = pneg %p115
        $region14: #{vae_forward.9} parent=11 // pred_check_branch
          %236 = sbr.rel (%p234) target = $region16
        $region15: #{vae_forward.9} parent=11 // pred_region
          %s237 = smul.u32 2, %s35
          %s239 = ssub.s32 512, 512
          %240 = vsyncadd [#allocation9], %s239
          %s241 = smul.addr %s237, 64
          %s242 = scalar_lea.hbm %s2, %s241
          %s243 = sshll.u32 [#allocation10], 4
          %s244 = int_to_ptr.vmem [resolvable:$true] %s243
          %249 = dma.hbm_to_vmem [thread:$0]  %s242, 512, %s244, [#allocation9], 128, 128, 8
        $region16: #{vae_forward.9} parent=11 // pred_fallthru
          _
        // Predicated region
        $region17: #{vae_forward.9} parent=11 // pred_check
          %p250 = pneg %p141
        $region18: #{vae_forward.9} parent=11 // pred_check_branch
          %252 = sbr.rel (%p250) target = $region20
        $region19: #{vae_forward.9} parent=11 // pred_region
          %s253 = smul.u32 2, %s35
          %s255 = ssub.s32 512, 512
          %256 = vsyncadd [#allocation12], %s255
          %s257 = smul.addr %s253, 64
          %s258 = scalar_lea.hbm %s3, %s257
          %s259 = sshll.u32 [#allocation11], 4
          %s260 = int_to_ptr.vmem [resolvable:$true] %s259
          %265 = dma.hbm_to_vmem [thread:$0]  %s258, 512, %s260, [#allocation12], 128, 128, 8
        $region20: #{vae_forward.9} parent=11 // pred_fallthru
          _
        // Predicated region
        $region21: #{vae_forward.9} parent=11 // pred_check
          %p266 = pneg %p167
        $region22: #{vae_forward.9} parent=11 // pred_check_branch
          %268 = sbr.rel (%p266) target = $region24
        $region23: #{vae_forward.9} parent=11 // pred_region
          %s269 = smul.u32 2, %s35
          %s271 = ssub.s32 32, 32
          %272 = vsyncadd [#allocation12], %s271
          %s273 = smul.addr %s269, 16
          %s274 = scalar_lea.hbm %s4, %s273
          %s276 = sshll.u32 [#allocation13], 4
          %s277 = int_to_ptr.vmem [resolvable:$true] %s276
          %279 = dma.hbm_to_vmem [thread:$0]  %s274, 32, %s277, [#allocation12]
        $region24: #{vae_forward.9} parent=11 // pred_fallthru
          _
      $region12: #{vae_forward.9} parent=5 // pred_fallthru
        _
      %p280 = scmp.lt.s32.totalorder %s25, 7
      // Predicated region
      $region25: #{vae_forward.9} parent=5 // pred_check
        %p281 = pneg %p280
      $region26: #{vae_forward.9} parent=5 // pred_check_branch
        %283 = sbr.rel (%p281) target = $region28
      $region27: #{vae_forward.9} parent=5 // pred_region
        // Predicated region
        $region29: #{vae_forward.9} parent=27 // pred_check
          %p284 = pneg %p57
        $region30: #{vae_forward.9} parent=27 // pred_check_branch
          %286 = sbr.rel (%p284) target = $region32
        $region31: #{vae_forward.9} parent=27 // pred_region
          %s287 = sand.u32 %s47, 1
          %s288 = scalar_lea.sflag [#allocation6], %s287
          %s289 = sand.u32 %s47, 1
          %s290 = smul.addr %s289, 8
          %s291 = scalar_lea.vmem [#allocation5], %s290
          %s293 = ssub.s32 128, 128
          %294 = vsyncadd %s288, %s293
          %s295 = smul.addr %s32, 128
          %s296 = scalar_lea.hbm %s0, %s295
          %s298 = sshll.u32 %s291, 4
          %s299 = int_to_ptr.vmem [resolvable:$true] %s298
          %301 = dma.hbm_to_vmem [thread:$0]  %s296, 128, %s299, %s288
        $region32: #{vae_forward.9} parent=27 // pred_fallthru
          _
        // Predicated region
        $region33: #{vae_forward.9} parent=27 // pred_check
          %p302 = pneg %p83
        $region34: #{vae_forward.9} parent=27 // pred_check_branch
          %304 = sbr.rel (%p302) target = $region36
        $region35: #{vae_forward.9} parent=27 // pred_region
          %s305 = sand.u32 %s25, 1
          %s306 = scalar_lea.sflag [#allocation9], %s305
          %s307 = sand.u32 %s73, 1
          %s308 = smul.addr %s307, 8
          %s309 = scalar_lea.vmem [#allocation8], %s308
          %s311 = ssub.s32 128, 128
          %312 = vsyncadd %s306, %s311
          %s313 = smul.addr %s32, 128
          %s314 = scalar_lea.hbm %s1, %s313
          %s316 = sshll.u32 %s309, 4
          %s317 = int_to_ptr.vmem [resolvable:$true] %s316
          %319 = dma.hbm_to_vmem [thread:$0]  %s314, 128, %s317, %s306
        $region36: #{vae_forward.9} parent=27 // pred_fallthru
          _
        // Predicated region
        $region37: #{vae_forward.9} parent=27 // pred_check
          %p320 = pneg %p187
        $region38: #{vae_forward.9} parent=27 // pred_check_branch
          %322 = sbr.rel (%p320) target = $region40
        $region39: #{vae_forward.9} parent=27 // pred_region
          %s323 = sand.u32 %s177, 1
          %s324 = scalar_lea.sflag [#allocation15], %s323
          %s325 = sand.u32 %s177, 1
          %s326 = smul.addr %s325, 8
          %s327 = scalar_lea.vmem [#allocation14], %s326
          %s329 = ssub.s32 128, 128
          %330 = vsyncadd %s324, %s329
          %s331 = smul.addr %s32, 128
          %s332 = scalar_lea.hbm %s5, %s331
          %s334 = sshll.u32 %s327, 4
          %s335 = int_to_ptr.vmem [resolvable:$true] %s334
          %337 = dma.hbm_to_vmem [thread:$0]  %s332, 128, %s335, %s324
        $region40: #{vae_forward.9} parent=27 // pred_fallthru
          _
      $region28: #{vae_forward.9} parent=5 // pred_fallthru
        _
      %p338 = scmp.le.s32.totalorder 1, %s25
      %p339 = scmp.lt.s32.totalorder %s25, 8
      %p340 = pnand %p338, %p339
      %p341 = pneg %p340
      // Predicated region
      $region41: #{vae_forward.9} parent=5 // pred_check
        _
      $region42: #{vae_forward.9} parent=5 // pred_check_branch
        %343 = sbr.rel (%p340) target = $region44
      $region43: #{vae_forward.9} parent=5 // pred_region
        %s344 = ssub.s32 %s25, 1
        %s345 = sand.u32 %s50, 1
        %s346 = scalar_lea.sflag [#allocation6], %s345
        %s347 = sand.u32 %s50, 1
        %s348 = smul.addr %s347, 8
        %s349 = scalar_lea.vmem [#allocation5], %s348
        // Predicated region
        $region45: #{vae_forward.9} parent=43 // pred_check
          %p350 = pneg %p63
        $region46: #{vae_forward.9} parent=43 // pred_check_branch
          %352 = sbr.rel (%p350) target = $region48
        $region47: #{vae_forward.9} parent=43 // pred_region
          %353 = dma.done %s346, 128
        $region48: #{vae_forward.9} parent=43 // pred_fallthru
          _
        %s354 = sand.u32 %s30, 1
        %s355 = scalar_lea.sflag [#allocation9], %s354
        %s356 = sand.u32 %s76, 1
        %s357 = smul.addr %s356, 8
        %s358 = scalar_lea.vmem [#allocation8], %s357
        // Predicated region
        $region49: #{vae_forward.9} parent=43 // pred_check
          %p359 = pneg %p89
        $region50: #{vae_forward.9} parent=43 // pred_check_branch
          %361 = sbr.rel (%p359) target = $region52
        $region51: #{vae_forward.9} parent=43 // pred_region
          %362 = dma.done %s355, 128
        $region52: #{vae_forward.9} parent=43 // pred_fallthru
          _
        // Predicated region
        $region53: #{vae_forward.9} parent=43 // pred_check
          %p363 = pneg %p115
        $region54: #{vae_forward.9} parent=43 // pred_check_branch
          %365 = sbr.rel (%p363) target = $region56
        $region55: #{vae_forward.9} parent=43 // pred_region
          %366 = dma.done [#allocation9], 512
        $region56: #{vae_forward.9} parent=43 // pred_fallthru
          _
        // Predicated region
        $region57: #{vae_forward.9} parent=43 // pred_check
          %p367 = pneg %p141
        $region58: #{vae_forward.9} parent=43 // pred_check_branch
          %369 = sbr.rel (%p367) target = $region60
        $region59: #{vae_forward.9} parent=43 // pred_region
          %370 = dma.done [#allocation12], 512
        $region60: #{vae_forward.9} parent=43 // pred_fallthru
          _
        // Predicated region
        $region61: #{vae_forward.9} parent=43 // pred_check
          %p371 = pneg %p167
        $region62: #{vae_forward.9} parent=43 // pred_check_branch
          %373 = sbr.rel (%p371) target = $region64
        $region63: #{vae_forward.9} parent=43 // pred_region
          %374 = dma.done [#allocation12], 32
        $region64: #{vae_forward.9} parent=43 // pred_fallthru
          _
        %s375 = sand.u32 %s180, 1
        %s376 = scalar_lea.sflag [#allocation15], %s375
        %s377 = sand.u32 %s180, 1
        %s378 = smul.addr %s377, 8
        %s379 = scalar_lea.vmem [#allocation14], %s378
        // Predicated region
        $region65: #{vae_forward.9} parent=43 // pred_check
          %p380 = pneg %p193
        $region66: #{vae_forward.9} parent=43 // pred_check_branch
          %382 = sbr.rel (%p380) target = $region68
        $region67: #{vae_forward.9} parent=43 // pred_region
          %383 = dma.done %s376, 128
        $region68: #{vae_forward.9} parent=43 // pred_fallthru
          _
        %s384 = sand.u32 %s50, 1
        %s385 = scalar_lea.sflag [#allocation6], %s384
        %s386 = sand.u32 %s50, 1
        %s387 = smul.addr %s386, 8
        %s388 = scalar_lea.vmem [#allocation5], %s387
        %p389 = pneg %p63
        %p390 = pneg %p60
        %s391 = sand.u32 %s30, 1
        %s392 = scalar_lea.sflag [#allocation9], %s391
        %s393 = sand.u32 %s76, 1
        %s394 = smul.addr %s393, 8
        %s395 = scalar_lea.vmem [#allocation8], %s394
        %p396 = pneg %p89
        %p397 = pneg %p86
        %p398 = pneg %p115
        %p399 = pneg %p112
        %p400 = pneg %p141
        %p401 = pneg %p138
        %p402 = pneg %p167
        %p403 = pneg %p164
        %s404 = sand.u32 %s180, 1
        %s405 = scalar_lea.sflag [#allocation15], %s404
        %s406 = sand.u32 %s180, 1
        %s407 = smul.addr %s406, 8
        %s408 = scalar_lea.vmem [#allocation14], %s407
        %p409 = pneg %p193
        %p410 = pneg %p190
        %p411 = pneg %p219
        %p412 = pneg %p216
        %s413 = sand.u32 %s206, 1
        %s414 = scalar_lea.sflag [#allocation7], %s413
        %s415 = sand.u32 %s206, 1
        %s416 = smul.addr %s415, 8
        %s417 = scalar_lea.vmem [#allocation16], %s416
        %s418 = smul.u32 2, %s35
        %s419 = smul.u32 2, %s35
        %s420 = smul.u32 2, %s35
        %p422 = scmp.eq.s32.totalorder %s35, 0
        // Predicated region
        $region69: #{vae_forward.9} parent=43 // pred_check
          %p423 = pneg %p422
        $region70: #{vae_forward.9} parent=43 // pred_check_branch
          %425 = sbr.rel (%p423) target = $region72
        $region71: #{vae_forward.9} parent=43 // pred_region
          %vm426 = vcmask 7168
          %427 = vst.msk [vmem:[#allocation2] sm:$0xff] %vm426, -inf
          %428 = vst.msk [vmem:[#allocation3] sm:$0xff] %vm426, 0.0
          %429 = vst.msk [vmem:[#allocation4] sm:$0xff] %vm426, 0.0
        $region72: #{vae_forward.9} parent=43 // pred_fallthru
          _
        %v430 = vld [vmem:[%s349] sm:$0xff]
        %v431 = vpack.c.bf16 %v430, %v430
        %v432 = vld [vmem:[%s358] sm:$0xff]
        %v433 = vpack.c.bf16 %v432, %v432
        %v434 = vld [vmem:[#allocation10] sm:$0xff]
        %v435 = vld [vmem:[#allocation10 + $0x8] sm:$0xff]
        %v436 = vld [vmem:[#allocation10 + $0x10] sm:$0xff]
        %v437 = vld [vmem:[#allocation10 + $0x18] sm:$0xff]
        %v438 = vld [vmem:[#allocation11] sm:$0xff]
        %v439 = vld [vmem:[#allocation11 + $0x8] sm:$0xff]
        %v440 = vld [vmem:[#allocation11 + $0x10] sm:$0xff]
        %v441 = vld [vmem:[#allocation11 + $0x18] sm:$0xff]
        %v446 = vunpack.c.l.b16 %v438
        %v447 = vunpack.c.h.b16 %v438
        %v448 = vunpack.c.l.b16 %v439
        %v449 = vunpack.c.h.b16 %v439
        %v450 = vunpack.c.l.b16 %v440
        %v451 = vunpack.c.h.b16 %v440
        %v452 = vunpack.c.l.b16 %v441
        %v453 = vunpack.c.h.b16 %v441
        %v454 = vpack.c.b16 %v448, %v446
        %v455 = vpack.c.b16 %v449, %v447
        %v456 = vpack.c.b16 %v452, %v450
        %v457 = vpack.c.b16 %v453, %v451
        %vm462 = vcmask 261120
        %v464 = vsel %vm462, %v433, 0
        %466 = vmatprep.subr.bf16.mxu0 %v455
        %467 = vmatpush1.bf16.msra.mxu0 %v454
        %468 = vmatprep.subr.bf16.mxu0 %v457
        %469 = vmatpush1.bf16.msra.mxu0 %v456
        %470 = vmatprep.subr.bf16.mxu0 0
        %471 = vmatpush1.bf16.msra.mxu0 0
        %472 = vmatprep.subr.bf16.mxu0 0
        %473 = vmatpush1.bf16.msra.mxu0 0
        %474 = vmatprep.subr.bf16.mxu0 0
        %475 = vmatpush1.bf16.msra.mxu0 0
        %476 = vmatprep.subr.bf16.mxu0 0
        %477 = vmatpush1.bf16.msra.mxu0 0
        %478 = vmatprep.subr.bf16.mxu0 0
        %479 = vmatpush1.bf16.msra.mxu0 0
        %480 = vmatprep.subr.bf16.mxu0 0
        %481 = vmatpush1.bf16.msra.mxu0 0
        %482 = vmatprep.subr.bf16.mxu0 0
        %483 = vmatpush1.bf16.msra.mxu0 0
        %484 = vmatprep.subr.bf16.mxu0 0
        %485 = vmatpush1.bf16.msra.mxu0 0
        %486 = vmatprep.subr.bf16.mxu0 0
        %487 = vmatpush1.bf16.msra.mxu0 0
        %488 = vmatprep.subr.bf16.mxu0 0
        %489 = vmatpush1.bf16.msra.mxu0 0
        %490 = vmatprep.subr.bf16.mxu0 0
        %491 = vmatpush1.bf16.msra.mxu0 0
        %492 = vmatprep.subr.bf16.mxu0 0
        %493 = vmatpush1.bf16.msra.mxu0 0
        %494 = vmatprep.subr.bf16.mxu0 0
        %495 = vmatpush1.bf16.msra.mxu0 0
        %496 = vmatprep.subr.bf16.mxu0 0
        %497 = vmatpush1.bf16.msra.mxu0 0
        %498 = vmatprep.mubr.bf16.mxu0 0
        %499 = vmatmul.mubr.bf16.gmra.mrb[0].mxu0 %v464
        %v500 = vpop.f32.mrb[0].mxu0
        %v501 = vadd.f32 0.0, %v500
        %v502 = vpop.f32.mrb[0].mxu0
        %v503 = vadd.f32 0.0, %v502
        %v504 = vpop.f32.mrb[0].mxu0
        %v505 = vpop.f32.mrb[0].mxu0
        %506 = vdwg.mxu0
        %v511 = vunpack.c.l.b16 %v434
        %v512 = vunpack.c.h.b16 %v434
        %v513 = vunpack.c.l.b16 %v435
        %v514 = vunpack.c.h.b16 %v435
        %v515 = vunpack.c.l.b16 %v436
        %v516 = vunpack.c.h.b16 %v436
        %v517 = vunpack.c.l.b16 %v437
        %v518 = vunpack.c.h.b16 %v437
        %v519 = vpack.c.b16 %v513, %v511
        %v520 = vpack.c.b16 %v514, %v512
        %v521 = vpack.c.b16 %v517, %v515
        %v522 = vpack.c.b16 %v518, %v516
        %v528 = vsel %vm462, %v431, 0
        %530 = vmatprep.subr.bf16.mxu0 %v520
        %531 = vmatpush1.bf16.msra.mxu0 %v519
        %532 = vmatprep.subr.bf16.mxu0 %v522
        %533 = vmatpush1.bf16.msra.mxu0 %v521
        %534 = vmatprep.subr.bf16.mxu0 0
        %535 = vmatpush1.bf16.msra.mxu0 0
        %536 = vmatprep.subr.bf16.mxu0 0
        %537 = vmatpush1.bf16.msra.mxu0 0
        %538 = vmatprep.subr.bf16.mxu0 0
        %539 = vmatpush1.bf16.msra.mxu0 0
        %540 = vmatprep.subr.bf16.mxu0 0
        %541 = vmatpush1.bf16.msra.mxu0 0
        %542 = vmatprep.subr.bf16.mxu0 0
        %543 = vmatpush1.bf16.msra.mxu0 0
        %544 = vmatprep.subr.bf16.mxu0 0
        %545 = vmatpush1.bf16.msra.mxu0 0
        %546 = vmatprep.subr.bf16.mxu0 0
        %547 = vmatpush1.bf16.msra.mxu0 0
        %548 = vmatprep.subr.bf16.mxu0 0
        %549 = vmatpush1.bf16.msra.mxu0 0
        %550 = vmatprep.subr.bf16.mxu0 0
        %551 = vmatpush1.bf16.msra.mxu0 0
        %552 = vmatprep.subr.bf16.mxu0 0
        %553 = vmatpush1.bf16.msra.mxu0 0
        %554 = vmatprep.subr.bf16.mxu0 0
        %555 = vmatpush1.bf16.msra.mxu0 0
        %556 = vmatprep.subr.bf16.mxu0 0
        %557 = vmatpush1.bf16.msra.mxu0 0
        %558 = vmatprep.subr.bf16.mxu0 0
        %559 = vmatpush1.bf16.msra.mxu0 0
        %560 = vmatprep.subr.bf16.mxu0 0
        %561 = vmatpush1.bf16.msra.mxu0 0
        %562 = vmatprep.mubr.bf16.mxu0 0
        %563 = vmatmul.mubr.bf16.gmra.mrb[0].mxu0 %v528
        %v564 = vpop.f32.mrb[0].mxu0
        %v565 = vadd.f32 %v501, %v564
        %v566 = vpop.f32.mrb[0].mxu0
        %v567 = vadd.f32 %v503, %v566
        %v568 = vpop.f32.mrb[0].mxu0
        %v569 = vpop.f32.mrb[0].mxu0
        %570 = vdwg.mxu0
        %v571 = vld [vmem:[#allocation13] sm:$0x3]
        %v573 = vlaneseq
        %v574 = vshrl.u32 %v573, 7
        %v575 = vsub.s32 0, %v574
        %v576 = vrot.slane %v571, %v575
        %v577 = vlaneseq
        %v578 = vshrl.u32 %v577, 7
        %v579 = vsub.s32 1, %v578
        %v580 = vrot.slane %v571, %v579
        %v583 = vadd.f32 %v565, %v576
        %v584 = vadd.f32 %v567, %v580
        %v585 = vld [vmem:[#allocation2] sm:$0xff]
        %v586 = vmax.f32 %v583, %v584
        %587 = vmax.xlane.f32.xlu0 %v586
        %v588 = vpop.xlane.xlu0 %587
        %v589 = vmax.f32 %v585, %v588
        %v590 = vld [vmem:[#allocation3] sm:$0xff]
        %v591 = vsub.f32 %v585, %v589
        %v592 = vmul.f32 %v591, 1.442695
        %v593 = vpow.pop %v592
        %v594 = vmul.f32 %v590, %v593
        %596 = vset.pattern.permute.xlu0 0
        %597 = vperm.xlu0 %596, %v589
        %v598 = vpop.permute.xlu0 %597
        %v600 = vsub.f32 %v583, %v598
        %v601 = vsub.f32 %v584, %v598
        %v602 = vmul.f32 %v600, 1.442695
        %v603 = vpow.pop %v602
        %v604 = vmul.f32 %v601, 1.442695
        %v605 = vpow.pop %v604
        %v606 = vadd.f32 %v603, %v605
        %607 = vadd.xlane.f32.xlu0 %v606
        %v608 = vpop.xlane.xlu0 %607
        %v609 = vadd.f32 %v594, %v608
        %vm610 = vcmask 7168
        %611 = vst.msk [vmem:[#allocation3] sm:$0xff] %vm610, %v609
        %612 = vst.msk [vmem:[#allocation2] sm:$0xff] %vm610, %v589
        %s613 = smul.u32 %s35, 256
        %v614 = vlaneseq
        %v615 = vand.u32 %v614, 127
        %v616 = vadd.s32 %v615, 128
        %v617 = vstv %s613
        %v618 = vadd.s32 %v617, %v615
        %v619 = vadd.s32 %v617, %v616
        %v620 = vld [vmem:[%s379] sm:$0xff]
        %621 = vset.pattern.permute.xlu0 0
        %622 = vperm.xlu0 %621, %v620
        %v623 = vpop.permute.xlu0 %622
        %vm624 = vcmp.eq.s32.totalorder %v618, %v623
        %vm625 = vcmp.eq.s32.totalorder %v619, %v623
        %v626 = vld [vmem:[#allocation4] sm:$0xff]
        %v627 = vsel %vm624, %v583, 0.0
        %v628 = vsel %vm625, %v584, 0.0
        %v629 = vadd.f32 %v627, %v628
        %630 = vadd.xlane.f32.xlu0 %v629
        %v631 = vpop.xlane.xlu0 %630
        %v632 = vadd.f32 %v626, %v631
        %633 = vst.msk [vmem:[#allocation4] sm:$0xff] %vm610, %v632
        // Predicated region
        $region73: #{vae_forward.9} parent=43 // pred_check
          %p634 = pneg %p422
        $region74: #{vae_forward.9} parent=43 // pred_check_branch
          %636 = sbr.rel (%p634) target = $region76
        $region75: #{vae_forward.9} parent=43 // pred_region
          %v637 = vld [vmem:[#allocation2] sm:$0xff]
          %v638 = vld [vmem:[#allocation3] sm:$0xff]
          %v639 = vlog2.pop %v638
          %v640 = vmul.f32 %v639, 0.6931472
          %v641 = vadd.f32 %v637, %v640
          %v642 = vld [vmem:[#allocation4] sm:$0xff]
          %v643 = vsub.f32 %v642, %v641
          %v644 = vld [vmem:[%s379] sm:$0xff]
          %vm645 = vcmp.ne.s32.totalorder %v644, 0
          %v646 = vsel %vm645, 1, 0
          %v647 = vcvt.s32.f32 %v646
          %v648 = vmul.f32 %v643, %v647
          %v649 = vsel %vm610, %v648, 0.0
          %650 = vadd.xlane.f32.xlu0 %v649
          %v651 = vpop.xlane.xlu0 %650
          %v652 = vrot.slane %v651, 4
          %v653 = vadd.f32 %v651, %v652
          %v654 = vrot.slane %v653, 2
          %v655 = vadd.f32 %v653, %v654
          %v656 = vrot.slane %v655, 1
          %v657 = vadd.f32 %v655, %v656
          %s658 = vtos %v657
          %s659 = ssub.f32 0.0, %s658
          %v660 = vsel %vm610, %v647, 0.0
          %661 = vadd.xlane.f32.xlu0 %v660
          %v662 = vpop.xlane.xlu0 %661
          %v663 = vrot.slane %v662, 4
          %v664 = vadd.f32 %v662, %v663
          %v665 = vrot.slane %v664, 2
          %v666 = vadd.f32 %v664, %v665
          %v667 = vrot.slane %v666, 1
          %v668 = vadd.f32 %v666, %v667
          %s669 = vtos %v668
          %vm670 = vcmp.eq.s32.totalorder %v615, 0
          %vm671 = vcmp.eq.s32.totalorder %v615, 1
          %v672 = vstv %s669
          %v673 = vsel %vm671, %v672, 0.0
          %v674 = vstv %s659
          %v675 = vsel %vm670, %v674, %v673
          %676 = vst [vmem:[%s417] sm:$0xff] %v675
        $region76: #{vae_forward.9} parent=43 // pred_fallthru
          _
        %s677 = sand.u32 %s206, 1
        %s678 = scalar_lea.sflag [#allocation7], %s677
        %s679 = sand.u32 %s206, 1
        %s680 = smul.addr %s679, 8
        %s681 = scalar_lea.vmem [#allocation16], %s680
        // Predicated region
        $region77: #{vae_forward.9} parent=43 // pred_check
          %p682 = pneg %p216
        $region78: #{vae_forward.9} parent=43 // pred_check_branch
          %684 = sbr.rel (%p682) target = $region80
        $region79: #{vae_forward.9} parent=43 // pred_region
          %s686 = ssub.s32 128, 128
          %687 = vsyncadd %s678, %s686
          %s688 = smul.addr %s34, 128
          %s689 = scalar_lea.hbm %s6, %s688
          %s691 = sshll.u32 %s681, 4
          %s692 = int_to_ptr.vmem [resolvable:$true] %s691
          %694 = dma.vmem_to_hbm [thread:$0]  %s692, 128, %s689, %s678
        $region80: #{vae_forward.9} parent=43 // pred_fallthru
          _
      $region44: #{vae_forward.9} parent=5 // pred_fallthru
        _
      %p695 = scmp.le.s32.totalorder 2, %s25
      // Predicated region
      $region81: #{vae_forward.9} parent=5 // pred_check
        %p696 = pneg %p695
      $region82: #{vae_forward.9} parent=5 // pred_check_branch
        %698 = sbr.rel (%p696) target = $region84
      $region83: #{vae_forward.9} parent=5 // pred_region
        %s699 = ssub.s32 %s25, 2
        // Predicated region
        $region85: #{vae_forward.9} parent=83 // pred_check
          %p700 = pneg %p222
        $region86: #{vae_forward.9} parent=83 // pred_check_branch
          %702 = sbr.rel (%p700) target = $region88
        $region87: #{vae_forward.9} parent=83 // pred_region
          %s703 = sand.u32 %s207, 1
          %s704 = scalar_lea.sflag [#allocation7], %s703
          %s705 = sand.u32 %s207, 1
          %s706 = smul.addr %s705, 8
          %s707 = scalar_lea.vmem [#allocation16], %s706
          %708 = dma.done %s704, 128
        $region88: #{vae_forward.9} parent=83 // pred_fallthru
          _
      $region84: #{vae_forward.9} parent=5 // pred_fallthru
        _
    $region6: #{vae_forward.9} parent=1 // loop_footer
      %s29 = sadd.s32 1, %s25
    $region7: #{vae_forward.9} parent=1 // loop_footer_branch
      %24 = sbr.rel target = $region3
    $region8: #{vae_forward.9} parent=1 // loop_exit
      _
    %709 = vsyncpa [#allocation6], 1
    %s710 = scalar_lea.sflag [#allocation6], 1
    %711 = vsyncpa %s710, 1
    %712 = vsyncpa [#allocation9], 1
    %s713 = scalar_lea.sflag [#allocation9], 1
    %714 = vsyncpa %s713, 1
    %715 = vsyncpa [#allocation12], 1
    %716 = vsyncpa [#allocation15], 1
    %s717 = scalar_lea.sflag [#allocation15], 1
    %718 = vsyncpa %s717, 1
    %719 = vsyncpa [#allocation7], 1
    %s720 = scalar_lea.sflag [#allocation7], 1
    %721 = vsyncpa %s720, 1

// kernel: vae_forward.8
$region0: #{vae_forward.8}
  #allocation0 [shape = 'u32[]', space=smem, size = 0x4, offset = 0x4, fixed_abs, tag = 'smem constant byte address 0x4 - core index']
  #allocation1 [shape = 'u32[144,128]{1,0:T(1,128)}', space=vmem, size = 0x12000, scoped, tag = 'internal scratch']
  #allocation2 [shape = 'f32[64,96]{1,0:T(8,128)}', space=vmem, size = 0x8000, scoped, tag = 'scratch operand']
  #allocation3 [shape = 'f32[64,96]{1,0:T(8,128)}', space=vmem, size = 0x8000, scoped, tag = 'scratch operand']
  %s0 = inlined_call_operand.hbm [shape: bf16[64,32], index: 0, kind: input, shape index: {}]
  %s1 = inlined_call_operand.hbm [shape: bf16[32,96], index: 1, kind: input, shape index: {}]
  %s2 = inlined_call_operand.hbm [shape: bf16[32,96], index: 2, kind: input, shape index: {}]
  %s3 = inlined_call_operand.hbm [shape: bf16[64,192], index: 3, kind: input, shape index: {}]
  %s4 = inlined_call_operand.hbm [shape: f32[1,96], index: 4, kind: input, shape index: {}]
  %s5 = inlined_call_operand.hbm [shape: f32[1,96], index: 5, kind: input, shape index: {}]
  %s6 = inlined_call_operand.hbm [shape: f32[1,96], index: 6, kind: input, shape index: {}]
  %s7 = inlined_call_operand.hbm [shape: f32[1,96], index: 7, kind: input, shape index: {}]
  %s8 = inlined_call_operand.hbm [shape: f32[8,64], index: 8, kind: input, shape index: {}]
  %s9 = inlined_call_operand.hbm [shape: f32[64,32], index: 9, kind: output, shape index: {0}]
  %s10 = inlined_call_operand.hbm [shape: f32[64,32], index: 10, kind: output, shape index: {1}]
  %11 = xla_tuple %s9, %s10
  %s12 = sld [smem:[#allocation0]]
  $region90: #{vae_forward.8} parent=0
    _
  %s14 = ssub.s32 1, %s12
  %s15 = scalar_select 0, %s14, %s12
  $region1: #{vae_forward.8} parent=0
    #allocation4 [shape = 'u8[16384]{0}', space=vmem, size = 0x4000, scoped, tag = 'input window, operand 0, single buffered']
    #allocation5 [shape = 's32[1]{0}', space=sflag, size = 0x4, scoped, tag = 'scoped memory for vae_forward.8']
    #allocation6 [shape = 's32[1]{0}', space=sflag, size = 0x4, scoped, tag = 'scoped memory for vae_forward.8']
    #allocation7 [shape = 'u8[8192]{0}', space=vmem, size = 0x2000, scoped, tag = 'input window, operand 1, single buffered']
    #allocation8 [shape = 's32[1]{0}', space=sflag, size = 0x4, scoped, tag = 'scoped memory for vae_forward.8']
    #allocation9 [shape = 'u8[8192]{0}', space=vmem, size = 0x2000, scoped, tag = 'input window, operand 2, single buffered']
    #allocation10 [shape = 'u8[32768]{0}', space=vmem, size = 0x8000, scoped, tag = 'input window, operand 3, single buffered']
    #allocation11 [shape = 's32[1]{0}', space=sflag, size = 0x4, scoped, tag = 'scoped memory for vae_forward.8']
    #allocation12 [shape = 'u8[512]{0}', space=vmem, size = 0x400, scoped, tag = 'input window, operand 4, single buffered']
    #allocation13 [shape = 'u8[512]{0}', space=vmem, size = 0x400, scoped, tag = 'input window, operand 5, single buffered']
    #allocation14 [shape = 's32[1]{0}', space=sflag, size = 0x4, scoped, tag = 'scoped memory for vae_forward.8']
    #allocation15 [shape = 'u8[512]{0}', space=vmem, size = 0x400, scoped, tag = 'input window, operand 6, single buffered']
    #allocation16 [shape = 'u8[512]{0}', space=vmem, size = 0x400, scoped, tag = 'input window, operand 7, single buffered']
    #allocation17 [shape = 's32[1]{0}', space=sflag, size = 0x4, scoped, tag = 'scoped memory for vae_forward.8']
    #allocation18 [shape = 'u8[4096]{0}', space=vmem, size = 0x1000, scoped, tag = 'input window, operand 8, single buffered']
    #allocation19 [shape = 'u8[32768]{0}', space=vmem, size = 0x8000, scoped, tag = 'output window, operand 0, single buffered']
    #allocation20 [shape = 'u8[32768]{0}', space=vmem, size = 0x8000, scoped, tag = 'output window, operand 1, single buffered']
    #allocation21 [shape = 's32[1]{0}', space=sflag, size = 0x4, scoped, tag = 'scoped memory for vae_forward.8']
    %16 = vsyncpa [#allocation5], 0
    %17 = vsyncpa [#allocation8], 0
    %18 = vsyncpa [#allocation11], 0
    %19 = vsyncpa [#allocation14], 0
    %20 = vsyncpa [#allocation17], 0
    %21 = vsyncpa [#allocation6], 0
    %22 = vsyncpa [#allocation21], 0
    // Predicated region
    $region2: #{vae_forward.8} parent=1 // pred_check
      _
    $region3: #{vae_forward.8} parent=1 // pred_check_branch
      %24 = sbr.rel (0) target = $region5
    $region4: #{vae_forward.8} parent=1 // pred_region
      %s26 = ssub.s32 512, 512
      %27 = vsyncadd [#allocation5], %s26
      %s28 = sshll.u32 [#allocation4], 4
      %s29 = int_to_ptr.vmem [resolvable:$true] %s28
      %34 = dma.hbm_to_vmem [thread:$0]  %s0, 512, %s29, [#allocation5], 64, 64, 4
    $region5: #{vae_forward.8} parent=1 // pred_fallthru
      _
    // Predicated region
    $region6: #{vae_forward.8} parent=1 // pred_check
      _
    $region7: #{vae_forward.8} parent=1 // pred_check_branch
      %36 = sbr.rel (0) target = $region9
    $region8: #{vae_forward.8} parent=1 // pred_region
      %s38 = ssub.s32 256, 256
      %39 = vsyncadd [#allocation8], %s38
      %s40 = sshll.u32 [#allocation7], 4
      %s41 = int_to_ptr.vmem [resolvable:$true] %s40
      %46 = dma.hbm_to_vmem [thread:$0]  %s1, 256, %s41, [#allocation8], 64, 64, 4
    $region9: #{vae_forward.8} parent=1 // pred_fallthru
      _
    // Predicated region
    $region10: #{vae_forward.8} parent=1 // pred_check
      _
    $region11: #{vae_forward.8} parent=1 // pred_check_branch
      %48 = sbr.rel (0) target = $region13
    $region12: #{vae_forward.8} parent=1 // pred_region
      %s50 = ssub.s32 256, 256
      %51 = vsyncadd [#allocation8], %s50
      %s52 = sshll.u32 [#allocation9], 4
      %s53 = int_to_ptr.vmem [resolvable:$true] %s52
      %58 = dma.hbm_to_vmem [thread:$0]  %s2, 256, %s53, [#allocation8], 64, 64, 4
    $region13: #{vae_forward.8} parent=1 // pred_fallthru
      _
    // Predicated region
    $region14: #{vae_forward.8} parent=1 // pred_check
      _
    $region15: #{vae_forward.8} parent=1 // pred_check_branch
      %60 = sbr.rel (0) target = $region17
    $region16: #{vae_forward.8} parent=1 // pred_region
      %s62 = ssub.s32 1024, 1024
      %63 = vsyncadd [#allocation11], %s62
      %s64 = sshll.u32 [#allocation10], 4
      %s65 = int_to_ptr.vmem [resolvable:$true] %s64
      %70 = dma.hbm_to_vmem [thread:$0]  %s3, 1024, %s65, [#allocation11], 128, 128, 8
    $region17: #{vae_forward.8} parent=1 // pred_fallthru
      _
    // Predicated region
    $region18: #{vae_forward.8} parent=1 // pred_check
      _
    $region19: #{vae_forward.8} parent=1 // pred_check_branch
      %72 = sbr.rel (0) target = $region21
    $region20: #{vae_forward.8} parent=1 // pred_region
      %s74 = ssub.s32 16, 16
      %75 = vsyncadd [#allocation11], %s74
      %s77 = sshll.u32 [#allocation12], 4
      %s78 = int_to_ptr.vmem [resolvable:$true] %s77
      %80 = dma.hbm_to_vmem [thread:$0]  %s4, 16, %s78, [#allocation11]
    $region21: #{vae_forward.8} parent=1 // pred_fallthru
      _
    // Predicated region
    $region22: #{vae_forward.8} parent=1 // pred_check
      _
    $region23: #{vae_forward.8} parent=1 // pred_check_branch
      %82 = sbr.rel (0) target = $region25
    $region24: #{vae_forward.8} parent=1 // pred_region
      %s84 = ssub.s32 16, 16
      %85 = vsyncadd [#allocation14], %s84
      %s87 = sshll.u32 [#allocation13], 4
      %s88 = int_to_ptr.vmem [resolvable:$true] %s87
      %90 = dma.hbm_to_vmem [thread:$0]  %s5, 16, %s88, [#allocation14]
    $region25: #{vae_forward.8} parent=1 // pred_fallthru
      _
    // Predicated region
    $region26: #{vae_forward.8} parent=1 // pred_check
      _
    $region27: #{vae_forward.8} parent=1 // pred_check_branch
      %92 = sbr.rel (0) target = $region29
    $region28: #{vae_forward.8} parent=1 // pred_region
      %s94 = ssub.s32 16, 16
      %95 = vsyncadd [#allocation14], %s94
      %s97 = sshll.u32 [#allocation15], 4
      %s98 = int_to_ptr.vmem [resolvable:$true] %s97
      %100 = dma.hbm_to_vmem [thread:$0]  %s6, 16, %s98, [#allocation14]
    $region29: #{vae_forward.8} parent=1 // pred_fallthru
      _
    // Predicated region
    $region30: #{vae_forward.8} parent=1 // pred_check
      _
    $region31: #{vae_forward.8} parent=1 // pred_check_branch
      %102 = sbr.rel (0) target = $region33
    $region32: #{vae_forward.8} parent=1 // pred_region
      %s104 = ssub.s32 16, 16
      %105 = vsyncadd [#allocation17], %s104
      %s107 = sshll.u32 [#allocation16], 4
      %s108 = int_to_ptr.vmem [resolvable:$true] %s107
      %110 = dma.hbm_to_vmem [thread:$0]  %s7, 16, %s108, [#allocation17]
    $region33: #{vae_forward.8} parent=1 // pred_fallthru
      _
    // Predicated region
    $region34: #{vae_forward.8} parent=1 // pred_check
      _
    $region35: #{vae_forward.8} parent=1 // pred_check_branch
      %112 = sbr.rel (0) target = $region37
    $region36: #{vae_forward.8} parent=1 // pred_region
      %s114 = ssub.s32 128, 128
      %115 = vsyncadd [#allocation17], %s114
      %s117 = sshll.u32 [#allocation18], 4
      %s118 = int_to_ptr.vmem [resolvable:$true] %s117
      %120 = dma.hbm_to_vmem [thread:$0]  %s8, 128, %s118, [#allocation17]
    $region37: #{vae_forward.8} parent=1 // pred_fallthru
      _
    // Predicated region
    $region38: #{vae_forward.8} parent=1 // pred_check
      _
    $region39: #{vae_forward.8} parent=1 // pred_check_branch
      %122 = sbr.rel (0) target = $region41
    $region40: #{vae_forward.8} parent=1 // pred_region
      %123 = dma.done [#allocation5], 512
    $region41: #{vae_forward.8} parent=1 // pred_fallthru
      _
    // Predicated region
    $region42: #{vae_forward.8} parent=1 // pred_check
      _
    $region43: #{vae_forward.8} parent=1 // pred_check_branch
      %125 = sbr.rel (0) target = $region45
    $region44: #{vae_forward.8} parent=1 // pred_region
      %126 = dma.done [#allocation8], 256
    $region45: #{vae_forward.8} parent=1 // pred_fallthru
      _
    // Predicated region
    $region46: #{vae_forward.8} parent=1 // pred_check
      _
    $region47: #{vae_forward.8} parent=1 // pred_check_branch
      %128 = sbr.rel (0) target = $region49
    $region48: #{vae_forward.8} parent=1 // pred_region
      %129 = dma.done [#allocation8], 256
    $region49: #{vae_forward.8} parent=1 // pred_fallthru
      _
    // Predicated region
    $region50: #{vae_forward.8} parent=1 // pred_check
      _
    $region51: #{vae_forward.8} parent=1 // pred_check_branch
      %131 = sbr.rel (0) target = $region53
    $region52: #{vae_forward.8} parent=1 // pred_region
      %132 = dma.done [#allocation11], 1024
    $region53: #{vae_forward.8} parent=1 // pred_fallthru
      _
    // Predicated region
    $region54: #{vae_forward.8} parent=1 // pred_check
      _
    $region55: #{vae_forward.8} parent=1 // pred_check_branch
      %134 = sbr.rel (0) target = $region57
    $region56: #{vae_forward.8} parent=1 // pred_region
      %135 = dma.done [#allocation11], 16
    $region57: #{vae_forward.8} parent=1 // pred_fallthru
      _
    // Predicated region
    $region58: #{vae_forward.8} parent=1 // pred_check
      _
    $region59: #{vae_forward.8} parent=1 // pred_check_branch
      %137 = sbr.rel (0) target = $region61
    $region60: #{vae_forward.8} parent=1 // pred_region
      %138 = dma.done [#allocation14], 16
    $region61: #{vae_forward.8} parent=1 // pred_fallthru
      _
    // Predicated region
    $region62: #{vae_forward.8} parent=1 // pred_check
      _
    $region63: #{vae_forward.8} parent=1 // pred_check_branch
      %140 = sbr.rel (0) target = $region65
    $region64: #{vae_forward.8} parent=1 // pred_region
      %141 = dma.done [#allocation14], 16
    $region65: #{vae_forward.8} parent=1 // pred_fallthru
      _
    // Predicated region
    $region66: #{vae_forward.8} parent=1 // pred_check
      _
    $region67: #{vae_forward.8} parent=1 // pred_check_branch
      %143 = sbr.rel (0) target = $region69
    $region68: #{vae_forward.8} parent=1 // pred_region
      %144 = dma.done [#allocation17], 16
    $region69: #{vae_forward.8} parent=1 // pred_fallthru
      _
    // Predicated region
    $region70: #{vae_forward.8} parent=1 // pred_check
      _
    $region71: #{vae_forward.8} parent=1 // pred_check_branch
      %146 = sbr.rel (0) target = $region73
    $region72: #{vae_forward.8} parent=1 // pred_region
      %147 = dma.done [#allocation17], 128
    $region73: #{vae_forward.8} parent=1 // pred_fallthru
      _
    %v149 = vld [vmem:[#allocation4] sm:$0xf]
    %v150 = vld [vmem:[#allocation4 + $0x4] sm:$0xf]
    %v151 = vld [vmem:[#allocation4 + $0x8] sm:$0xf]
    %v152 = vld [vmem:[#allocation4 + $0xc] sm:$0xf]
    %v153 = vld [vmem:[#allocation4 + $0x10] sm:$0xf]
    %v154 = vld [vmem:[#allocation4 + $0x14] sm:$0xf]
    %v155 = vld [vmem:[#allocation4 + $0x18] sm:$0xf]
    %v156 = vld [vmem:[#allocation4 + $0x1c] sm:$0xf]
    %v157 = vld [vmem:[#allocation7] sm:$0xf]
    %v158 = vld [vmem:[#allocation7 + $0x4] sm:$0xf]
    %v159 = vld [vmem:[#allocation7 + $0x8] sm:$0xf]
    %v160 = vld [vmem:[#allocation7 + $0xc] sm:$0xf]
    %v161 = vld [vmem:[#allocation12] sm:$0x1]
    %v163 = vlaneseq
    %v164 = vshrl.u32 %v163, 7
    %v165 = vsub.s32 0, %v164
    %v166 = vrot.slane %v161, %v165
    %v176 = vunpack.c.l.b16 %v149
    %v177 = vunpack.c.l.b16 %v150
    %v178 = vunpack.c.l.b16 %v151
    %v179 = vunpack.c.l.b16 %v152
    %v180 = vunpack.c.l.b16 %v153
    %v181 = vunpack.c.l.b16 %v154
    %v182 = vunpack.c.l.b16 %v155
    %v183 = vunpack.c.l.b16 %v156
    %v184 = vpack.c.b16 %v177, %v176
    %v185 = vpack.c.b16 %v179, %v178
    %v186 = vpack.c.b16 %v181, %v180
    %v187 = vpack.c.b16 %v183, %v182
    %v192 = vunpack.c.l.b16 %v157
    %v193 = vunpack.c.l.b16 %v158
    %v194 = vunpack.c.l.b16 %v159
    %v195 = vunpack.c.l.b16 %v160
    %v196 = vpack.c.b16 %v193, %v192
    %v197 = vpack.c.b16 %v195, %v194
    %vm200 = vcmask 261120
    %v202 = vsel %vm200, %v184, 0
    %v205 = vsel %vm200, %v185, 0
    %v208 = vsel %vm200, %v186, 0
    %v211 = vsel %vm200, %v187, 0
    %213 = vmatprep.subr.bf16.mxu0 0
    %214 = vmatpush1.bf16.msra.mxu0 %v196
    %215 = vmatprep.subr.bf16.mxu0 0
    %216 = vmatpush1.bf16.msra.mxu0 %v197
    %217 = vmatprep.subr.bf16.mxu0 0
    %218 = vmatpush1.bf16.msra.mxu0 0
    %219 = vmatprep.subr.bf16.mxu0 0
    %220 = vmatpush1.bf16.msra.mxu0 0
    %221 = vmatprep.subr.bf16.mxu0 0
    %222 = vmatpush1.bf16.msra.mxu0 0
    %223 = vmatprep.subr.bf16.mxu0 0
    %224 = vmatpush1.bf16.msra.mxu0 0
    %225 = vmatprep.subr.bf16.mxu0 0
    %226 = vmatpush1.bf16.msra.mxu0 0
    %227 = vmatprep.subr.bf16.mxu0 0
    %228 = vmatpush1.bf16.msra.mxu0 0
    %229 = vmatprep.subr.bf16.mxu0 0
    %230 = vmatpush1.bf16.msra.mxu0 0
    %231 = vmatprep.subr.bf16.mxu0 0
    %232 = vmatpush1.bf16.msra.mxu0 0
    %233 = vmatprep.subr.bf16.mxu0 0
    %234 = vmatpush1.bf16.msra.mxu0 0
    %235 = vmatprep.subr.bf16.mxu0 0
    %236 = vmatpush1.bf16.msra.mxu0 0
    %237 = vmatprep.subr.bf16.mxu0 0
    %238 = vmatpush1.bf16.msra.mxu0 0
    %239 = vmatprep.subr.bf16.mxu0 0
    %240 = vmatpush1.bf16.msra.mxu0 0
    %241 = vmatprep.subr.bf16.mxu0 0
    %242 = vmatpush1.bf16.msra.mxu0 0
    %243 = vmatprep.subr.bf16.mxu0 0
    %244 = vmatpush1.bf16.msra.mxu0 0
    %245 = vmatprep.mubr.bf16.mxu0 0
    %246 = vmatmul.mubr.bf16.gmra.mrb[0].mxu0 %v202
    %v247 = vpop.f32.mrb[0].mxu0
    %v248 = vadd.f32 %v166, %v247
    %v249 = vpop.f32.mrb[0].mxu0
    %v250 = vpop.f32.mrb[0].mxu0
    %v251 = vadd.f32 %v166, %v250
    %v252 = vpop.f32.mrb[0].mxu0
    %253 = vmatprep.mubr.bf16.mxu0 0
    %254 = vmatmul.mubr.bf16.gmra.mrb[0].mxu0 %v205
    %v255 = vpop.f32.mrb[0].mxu0
    %v256 = vadd.f32 %v166, %v255
    %v257 = vpop.f32.mrb[0].mxu0
    %v258 = vpop.f32.mrb[0].mxu0
    %v259 = vadd.f32 %v166, %v258
    %v260 = vpop.f32.mrb[0].mxu0
    %261 = vmatprep.mubr.bf16.mxu0 0
    %262 = vmatmul.mubr.bf16.gmra.mrb[0].mxu0 %v208
    %v263 = vpop.f32.mrb[0].mxu0
    %v264 = vadd.f32 %v166, %v263
    %v265 = vpop.f32.mrb[0].mxu0
    %v266 = vpop.f32.mrb[0].mxu0
    %v267 = vadd.f32 %v166, %v266
    %v268 = vpop.f32.mrb[0].mxu0
    %269 = vmatprep.mubr.bf16.mxu0 0
    %270 = vmatmul.mubr.bf16.gmra.mrb[0].mxu0 %v211
    %v271 = vpop.f32.mrb[0].mxu0
    %v272 = vadd.f32 %v166, %v271
    %v273 = vpop.f32.mrb[0].mxu0
    %v274 = vpop.f32.mrb[0].mxu0
    %v275 = vadd.f32 %v166, %v274
    %v276 = vpop.f32.mrb[0].mxu0
    %277 = vdwg.mxu0
    %vm278 = vcmask 785408
    %279 = vst.msk [vmem:[#allocation2] sm:$0xff] %vm278, %v248
    %280 = vst.msk [vmem:[#allocation2 + $0x8] sm:$0xff] %vm278, %v251
    %281 = vst.msk [vmem:[#allocation2 + $0x10] sm:$0xff] %vm278, %v256
    %282 = vst.msk [vmem:[#allocation2 + $0x18] sm:$0xff] %vm278, %v259
    %283 = vst.msk [vmem:[#allocation2 + $0x20] sm:$0xff] %vm278, %v264
    %284 = vst.msk [vmem:[#allocation2 + $0x28] sm:$0xff] %vm278, %v267
    %285 = vst.msk [vmem:[#allocation2 + $0x30] sm:$0xff] %vm278, %v272
    %286 = vst.msk [vmem:[#allocation2 + $0x38] sm:$0xff] %vm278, %v275
    %v287 = vld [vmem:[#allocation9] sm:$0xf]
    %v288 = vld [vmem:[#allocation9 + $0x4] sm:$0xf]
    %v289 = vld [vmem:[#allocation9 + $0x8] sm:$0xf]
    %v290 = vld [vmem:[#allocation9 + $0xc] sm:$0xf]
    %v291 = vld [vmem:[#allocation13] sm:$0x1]
    %v293 = vlaneseq
    %v294 = vshrl.u32 %v293, 7
    %v295 = vsub.s32 0, %v294
    %v296 = vrot.slane %v291, %v295
    %v302 = vunpack.c.l.b16 %v287
    %v303 = vunpack.c.l.b16 %v288
    %v304 = vunpack.c.l.b16 %v289
    %v305 = vunpack.c.l.b16 %v290
    %v306 = vpack.c.b16 %v303, %v302
    %v307 = vpack.c.b16 %v305, %v304
    %310 = vmatprep.subr.bf16.mxu0 0
    %311 = vmatpush1.bf16.msra.mxu0 %v306
    %312 = vmatprep.subr.bf16.mxu0 0
    %313 = vmatpush1.bf16.msra.mxu0 %v307
    %314 = vmatprep.subr.bf16.mxu0 0
    %315 = vmatpush1.bf16.msra.mxu0 0
    %316 = vmatprep.subr.bf16.mxu0 0
    %317 = vmatpush1.bf16.msra.mxu0 0
    %318 = vmatprep.subr.bf16.mxu0 0
    %319 = vmatpush1.bf16.msra.mxu0 0
    %320 = vmatprep.subr.bf16.mxu0 0
    %321 = vmatpush1.bf16.msra.mxu0 0
    %322 = vmatprep.subr.bf16.mxu0 0
    %323 = vmatpush1.bf16.msra.mxu0 0
    %324 = vmatprep.subr.bf16.mxu0 0
    %325 = vmatpush1.bf16.msra.mxu0 0
    %326 = vmatprep.subr.bf16.mxu0 0
    %327 = vmatpush1.bf16.msra.mxu0 0
    %328 = vmatprep.subr.bf16.mxu0 0
    %329 = vmatpush1.bf16.msra.mxu0 0
    %330 = vmatprep.subr.bf16.mxu0 0
    %331 = vmatpush1.bf16.msra.mxu0 0
    %332 = vmatprep.subr.bf16.mxu0 0
    %333 = vmatpush1.bf16.msra.mxu0 0
    %334 = vmatprep.subr.bf16.mxu0 0
    %335 = vmatpush1.bf16.msra.mxu0 0
    %336 = vmatprep.subr.bf16.mxu0 0
    %337 = vmatpush1.bf16.msra.mxu0 0
    %338 = vmatprep.subr.bf16.mxu0 0
    %339 = vmatpush1.bf16.msra.mxu0 0
    %340 = vmatprep.subr.bf16.mxu0 0
    %341 = vmatpush1.bf16.msra.mxu0 0
    %342 = vmatprep.mubr.bf16.mxu0 0
    %343 = vmatmul.mubr.bf16.gmra.mrb[0].mxu0 %v202
    %v344 = vpop.f32.mrb[0].mxu0
    %v345 = vadd.f32 %v296, %v344
    %v346 = vpop.f32.mrb[0].mxu0
    %v347 = vpop.f32.mrb[0].mxu0
    %v348 = vadd.f32 %v296, %v347
    %v349 = vpop.f32.mrb[0].mxu0
    %350 = vmatprep.mubr.bf16.mxu0 0
    %351 = vmatmul.mubr.bf16.gmra.mrb[0].mxu0 %v205
    %v352 = vpop.f32.mrb[0].mxu0
    %v353 = vadd.f32 %v296, %v352
    %v354 = vpop.f32.mrb[0].mxu0
    %v355 = vpop.f32.mrb[0].mxu0
    %v356 = vadd.f32 %v296, %v355
    %v357 = vpop.f32.mrb[0].mxu0
    %358 = vmatprep.mubr.bf16.mxu0 0
    %359 = vmatmul.mubr.bf16.gmra.mrb[0].mxu0 %v208
    %v360 = vpop.f32.mrb[0].mxu0
    %v361 = vadd.f32 %v296, %v360
    %v362 = vpop.f32.mrb[0].mxu0
    %v363 = vpop.f32.mrb[0].mxu0
    %v364 = vadd.f32 %v296, %v363
    %v365 = vpop.f32.mrb[0].mxu0
    %366 = vmatprep.mubr.bf16.mxu0 0
    %367 = vmatmul.mubr.bf16.gmra.mrb[0].mxu0 %v211
    %v368 = vpop.f32.mrb[0].mxu0
    %v369 = vadd.f32 %v296, %v368
    %v370 = vpop.f32.mrb[0].mxu0
    %v371 = vpop.f32.mrb[0].mxu0
    %v372 = vadd.f32 %v296, %v371
    %v373 = vpop.f32.mrb[0].mxu0
    %374 = vdwg.mxu0
    %375 = vst.msk [vmem:[#allocation3] sm:$0xff] %vm278, %v345
    %376 = vst.msk [vmem:[#allocation3 + $0x8] sm:$0xff] %vm278, %v348
    %377 = vst.msk [vmem:[#allocation3 + $0x10] sm:$0xff] %vm278, %v353
    %378 = vst.msk [vmem:[#allocation3 + $0x18] sm:$0xff] %vm278, %v356
    %379 = vst.msk [vmem:[#allocation3 + $0x20] sm:$0xff] %vm278, %v361
    %380 = vst.msk [vmem:[#allocation3 + $0x28] sm:$0xff] %vm278, %v364
    %381 = vst.msk [vmem:[#allocation3 + $0x30] sm:$0xff] %vm278, %v369
    %382 = vst.msk [vmem:[#allocation3 + $0x38] sm:$0xff] %vm278, %v372
    %v383 = vld [vmem:[#allocation10] sm:$0xff]
    %v384 = vld [vmem:[#allocation10 + $0x8] sm:$0xff]
    %v385 = vld [vmem:[#allocation10 + $0x10] sm:$0xff]
    %v386 = vld [vmem:[#allocation10 + $0x18] sm:$0xff]
    %v387 = vld [vmem:[#allocation10 + $0x20] sm:$0xff]
    %v388 = vld [vmem:[#allocation10 + $0x28] sm:$0xff]
    %v389 = vld [vmem:[#allocation10 + $0x30] sm:$0xff]
    %v390 = vld [vmem:[#allocation10 + $0x38] sm:$0xff]
    %v391 = vld [vmem:[#allocation15] sm:$0x1]
    %v392 = vld [vmem:[#allocation16] sm:$0x1]
    %v393 = vld [vmem:[#allocation18] sm:$0xff]
    %v394 = vpack.c.bf16 %v393, %v393
    %v403 = vunpack.c.l.b16 %v383
    %v404 = vunpack.c.h.b16 %v383
    %v405 = vunpack.c.l.b16 %v384
    %v406 = vunpack.c.h.b16 %v384
    %v407 = vunpack.c.l.b16 %v385
    %v408 = vunpack.c.h.b16 %v385
    %v409 = vunpack.c.l.b16 %v386
    %v410 = vunpack.c.h.b16 %v386
    %v411 = vunpack.c.l.b16 %v387
    %v412 = vunpack.c.h.b16 %v387
    %v413 = vunpack.c.l.b16 %v388
    %v414 = vunpack.c.h.b16 %v388
    %v415 = vunpack.c.l.b16 %v389
    %v416 = vunpack.c.h.b16 %v389
    %v417 = vunpack.c.l.b16 %v390
    %v418 = vunpack.c.h.b16 %v390
    %v419 = vpack.c.b16 %v405, %v403
    %v420 = vpack.c.b16 %v406, %v404
    %v421 = vpack.c.b16 %v409, %v407
    %v422 = vpack.c.b16 %v410, %v408
    %v423 = vpack.c.b16 %v413, %v411
    %v424 = vpack.c.b16 %v414, %v412
    %v425 = vpack.c.b16 %v417, %v415
    %v426 = vpack.c.b16 %v418, %v416
    %vm435 = vcmask 523264
    %v437 = vsel %vm435, %v394, 0
    %439 = vmatprep.subr.bf16.mxu0 %v420
    %440 = vmatpush1.bf16.msra.mxu0 %v419
    %441 = vmatprep.subr.bf16.mxu0 %v422
    %442 = vmatpush1.bf16.msra.mxu0 %v421
    %443 = vmatprep.subr.bf16.mxu0 %v424
    %444 = vmatpush1.bf16.msra.mxu0 %v423
    %445 = vmatprep.subr.bf16.mxu0 %v426
    %446 = vmatpush1.bf16.msra.mxu0 %v425
    %447 = vmatprep.subr.bf16.mxu0 0
    %448 = vmatpush1.bf16.msra.mxu0 0
    %449 = vmatprep.subr.bf16.mxu0 0
    %450 = vmatpush1.bf16.msra.mxu0 0
    %451 = vmatprep.subr.bf16.mxu0 0
    %452 = vmatpush1.bf16.msra.mxu0 0
    %453 = vmatprep.subr.bf16.mxu0 0
    %454 = vmatpush1.bf16.msra.mxu0 0
    %455 = vmatprep.subr.bf16.mxu0 0
    %456 = vmatpush1.bf16.msra.mxu0 0
    %457 = vmatprep.subr.bf16.mxu0 0
    %458 = vmatpush1.bf16.msra.mxu0 0
    %459 = vmatprep.subr.bf16.mxu0 0
    %460 = vmatpush1.bf16.msra.mxu0 0
    %461 = vmatprep.subr.bf16.mxu0 0
    %462 = vmatpush1.bf16.msra.mxu0 0
    %463 = vmatprep.subr.bf16.mxu0 0
    %464 = vmatpush1.bf16.msra.mxu0 0
    %465 = vmatprep.subr.bf16.mxu0 0
    %466 = vmatpush1.bf16.msra.mxu0 0
    %467 = vmatprep.subr.bf16.mxu0 0
    %468 = vmatpush1.bf16.msra.mxu0 0
    %469 = vmatprep.subr.bf16.mxu0 0
    %470 = vmatpush1.bf16.msra.mxu0 0
    %471 = vmatprep.mubr.bf16.mxu0 0
    %472 = vmatmul.mubr.bf16.gmra.mrb[0].mxu0 %v437
    %v473 = vpop.f32.mrb[0].mxu0
    %v474 = vadd.f32 0.0, %v473
    %v475 = vpop.f32.mrb[0].mxu0
    %v476 = vadd.f32 0.0, %v475
    %v477 = vpop.f32.mrb[0].mxu0
    %v478 = vpop.f32.mrb[0].mxu0
    %479 = vdwg.mxu0
    %v481 = vlaneseq
    %v482 = vshrl.u32 %v481, 7
    %v483 = vsub.s32 0, %v482
    %v484 = vrot.slane %v391, %v483
    %v486 = vadd.f32 %v474, %v484
    %v488 = vlaneseq
    %v489 = vshrl.u32 %v488, 7
    %v490 = vsub.s32 0, %v489
    %v491 = vrot.slane %v392, %v490
    %492 = vrot.lane.b32.xlu0 %v491, 96
    %v493 = vpop.permute.xlu0 %492
    %v495 = vadd.f32 %v474, %v493
    %v496 = vadd.f32 %v476, %v493
    %v497 = vld [vmem:[#allocation2] sm:$0xff]
    %v498 = vadd.f32 %v497, %v486
    %v499 = vxor.u32 %v498, 2147483648
    %v500 = vmul.f32 %v499, 1.442695
    %v501 = vpow.pop %v500
    %v502 = vadd.f32 %v501, 1.0
    %v503 = vrcp.pop %v502
    %v504 = vmul.f32 1.0, %v503
    %506 = vrot.lane.b32.xlu0 %v486, 64
    %v507 = vpop.permute.xlu0 %506
    %v509 = vmul.f32 %v504, %v507
    %511 = vrot.lane.b32.xlu0 %v509, 64
    %v512 = vpop.permute.xlu0 %511
    %v514 = vadd.f32 %v497, %v512
    %v515 = vtanh.pop %v514
    %v516 = vsub.f32 1.0, %v504
    %518 = vrot.lane.b32.xlu0 %v515, 96
    %v519 = vpop.permute.xlu0 %518
    %v521 = vmul.f32 %v516, %v519
    %523 = vrot.lane.b32.xlu0 %v393, 32
    %v524 = vpop.permute.xlu0 %523
    %v526 = vmul.f32 %v504, %v524
    %v527 = vadd.f32 %v521, %v526
    %v528 = vld [vmem:[#allocation3 + $0x38] sm:$0xff]
    %531 = vrot.lane.b32.xlu0 %v495, 32
    %v532 = vpop.permute.xlu0 %531
    %533 = vrot.lane.b32.xlu0 %v496, 32
    %v534 = vpop.permute.xlu0 %533
    %v535 = vsel %vm200, %v532, %v534
    %v537 = vadd.f32 %v528, %v535
    %v538 = vxor.u32 %v537, 2147483648
    %v539 = vmul.f32 %v538, 1.442695
    %v540 = vpow.pop %v539
    %v541 = vadd.f32 %v540, 1.0
    %v542 = vrcp.pop %v541
    %v543 = vmul.f32 1.0, %v542
    %544 = vrot.lane.b32.xlu0 %v496, 96
    %v545 = vpop.permute.xlu0 %544
    %v547 = vmul.f32 %v543, %v545
    %549 = vrot.lane.b32.xlu0 %v547, 64
    %v550 = vpop.permute.xlu0 %549
    %v552 = vadd.f32 %v528, %v550
    %v553 = vtanh.pop %v552
    %v554 = vsub.f32 1.0, %v543
    %556 = vrot.lane.b32.xlu0 %v553, 96
    %v557 = vpop.permute.xlu0 %556
    %v559 = vmul.f32 %v554, %v557
    %v560 = vmul.f32 %v543, %v393
    %v561 = vadd.f32 %v559, %v560
    %563 = vrot.lane.b32.xlu0 %v527, 96
    %v564 = vpop.permute.xlu0 %563
    %566 = vst.msk [vmem:[#allocation19] sm:$0xff] %vm200, %v564
    %568 = vrot.lane.b32.xlu0 %v561, 96
    %v569 = vpop.permute.xlu0 %568
    %571 = vst.msk [vmem:[#allocation20 + $0x38] sm:$0xff] %vm200, %v569
    %v572 = vsel %vm200, %v564, %v561
    %v573 = vpack.c.bf16 %v572, %v572
    %v575 = vsel %vm435, %v573, 0
    %577 = vmatprep.subr.bf16.mxu0 %v420
    %578 = vmatpush1.bf16.msra.mxu0 %v419
    %579 = vmatprep.subr.bf16.mxu0 %v422
    %580 = vmatpush1.bf16.msra.mxu0 %v421
    %581 = vmatprep.subr.bf16.mxu0 %v424
    %582 = vmatpush1.bf16.msra.mxu0 %v423
    %583 = vmatprep.subr.bf16.mxu0 %v426
    %584 = vmatpush1.bf16.msra.mxu0 %v425
    %585 = vmatprep.subr.bf16.mxu0 0
    %586 = vmatpush1.bf16.msra.mxu0 0
    %587 = vmatprep.subr.bf16.mxu0 0
    %588 = vmatpush1.bf16.msra.mxu0 0
    %589 = vmatprep.subr.bf16.mxu0 0
    %590 = vmatpush1.bf16.msra.mxu0 0
    %591 = vmatprep.subr.bf16.mxu0 0
    %592 = vmatpush1.bf16.msra.mxu0 0
    %593 = vmatprep.subr.bf16.mxu0 0
    %594 = vmatpush1.bf16.msra.mxu0 0
    %595 = vmatprep.subr.bf16.mxu0 0
    %596 = vmatpush1.bf16.msra.mxu0 0
    %597 = vmatprep.subr.bf16.mxu0 0
    %598 = vmatpush1.bf16.msra.mxu0 0
    %599 = vmatprep.subr.bf16.mxu0 0
    %600 = vmatpush1.bf16.msra.mxu0 0
    %601 = vmatprep.subr.bf16.mxu0 0
    %602 = vmatpush1.bf16.msra.mxu0 0
    %603 = vmatprep.subr.bf16.mxu0 0
    %604 = vmatpush1.bf16.msra.mxu0 0
    %605 = vmatprep.subr.bf16.mxu0 0
    %606 = vmatpush1.bf16.msra.mxu0 0
    %607 = vmatprep.subr.bf16.mxu0 0
    %608 = vmatpush1.bf16.msra.mxu0 0
    %609 = vmatprep.mubr.bf16.mxu0 0
    %610 = vmatmul.mubr.bf16.gmra.mrb[0].mxu0 %v575
    %v611 = vpop.f32.mrb[0].mxu0
    %v612 = vadd.f32 0.0, %v611
    %v613 = vpop.f32.mrb[0].mxu0
    %v614 = vadd.f32 0.0, %v613
    %v615 = vpop.f32.mrb[0].mxu0
    %v616 = vpop.f32.mrb[0].mxu0
    %617 = vdwg.mxu0
    %v618 = vadd.f32 %v612, %v484
    %v619 = vadd.f32 %v612, %v493
    %v620 = vadd.f32 %v614, %v493
    %v621 = vld [vmem:[#allocation2 + $0x8] sm:$0xff]
    %v622 = vadd.f32 %v621, %v618
    %v623 = vxor.u32 %v622, 2147483648
    %v624 = vmul.f32 %v623, 1.442695
    %v625 = vpow.pop %v624
    %v626 = vadd.f32 %v625, 1.0
    %v627 = vrcp.pop %v626
    %v628 = vmul.f32 1.0, %v627
    %630 = vrot.lane.b32.xlu0 %v618, 64
    %v631 = vpop.permute.xlu0 %630
    %v633 = vmul.f32 %v628, %v631
    %635 = vrot.lane.b32.xlu0 %v633, 64
    %v636 = vpop.permute.xlu0 %635
    %v638 = vadd.f32 %v621, %v636
    %v639 = vtanh.pop %v638
    %v640 = vsub.f32 1.0, %v628
    %642 = vrot.lane.b32.xlu0 %v639, 96
    %v643 = vpop.permute.xlu0 %642
    %v645 = vmul.f32 %v640, %v643
    %647 = vrot.lane.b32.xlu0 %v572, 32
    %v648 = vpop.permute.xlu0 %647
    %v650 = vmul.f32 %v628, %v648
    %v651 = vadd.f32 %v645, %v650
    %v652 = vld [vmem:[#allocation3 + $0x30] sm:$0xff]
    %655 = vrot.lane.b32.xlu0 %v619, 32
    %v656 = vpop.permute.xlu0 %655
    %657 = vrot.lane.b32.xlu0 %v620, 32
    %v658 = vpop.permute.xlu0 %657
    %v659 = vsel %vm200, %v656, %v658
    %v661 = vadd.f32 %v652, %v659
    %v662 = vxor.u32 %v661, 2147483648
    %v663 = vmul.f32 %v662, 1.442695
    %v664 = vpow.pop %v663
    %v665 = vadd.f32 %v664, 1.0
    %v666 = vrcp.pop %v665
    %v667 = vmul.f32 1.0, %v666
    %668 = vrot.lane.b32.xlu0 %v620, 96
    %v669 = vpop.permute.xlu0 %668
    %v671 = vmul.f32 %v667, %v669
    %673 = vrot.lane.b32.xlu0 %v671, 64
    %v674 = vpop.permute.xlu0 %673
    %v676 = vadd.f32 %v652, %v674
    %v677 = vtanh.pop %v676
    %v678 = vsub.f32 1.0, %v667
    %680 = vrot.lane.b32.xlu0 %v677, 96
    %v681 = vpop.permute.xlu0 %680
    %v683 = vmul.f32 %v678, %v681
    %v684 = vmul.f32 %v667, %v572
    %v685 = vadd.f32 %v683, %v684
    %687 = vrot.lane.b32.xlu0 %v651, 96
    %v688 = vpop.permute.xlu0 %687
    %690 = vst.msk [vmem:[#allocation19 + $0x8] sm:$0xff] %vm200, %v688
    %692 = vrot.lane.b32.xlu0 %v685, 96
    %v693 = vpop.permute.xlu0 %692
    %695 = vst.msk [vmem:[#allocation20 + $0x30] sm:$0xff] %vm200, %v693
    %v696 = vsel %vm200, %v688, %v685
    %v697 = vpack.c.bf16 %v696, %v696
    %v699 = vsel %vm435, %v697, 0
    %701 = vmatprep.subr.bf16.mxu0 %v420
    %702 = vmatpush1.bf16.msra.mxu0 %v419
    %703 = vmatprep.subr.bf16.mxu0 %v422
    %704 = vmatpush1.bf16.msra.mxu0 %v421
    %705 = vmatprep.subr.bf16.mxu0 %v424
    %706 = vmatpush1.bf16.msra.mxu0 %v423
    %707 = vmatprep.subr.bf16.mxu0 %v426
    %708 = vmatpush1.bf16.msra.mxu0 %v425
    %709 = vmatprep.subr.bf16.mxu0 0
    %710 = vmatpush1.bf16.msra.mxu0 0
    %711 = vmatprep.subr.bf16.mxu0 0
    %712 = vmatpush1.bf16.msra.mxu0 0
    %713 = vmatprep.subr.bf16.mxu0 0
    %714 = vmatpush1.bf16.msra.mxu0 0
    %715 = vmatprep.subr.bf16.mxu0 0
    %716 = vmatpush1.bf16.msra.mxu0 0
    %717 = vmatprep.subr.bf16.mxu0 0
    %718 = vmatpush1.bf16.msra.mxu0 0
    %719 = vmatprep.subr.bf16.mxu0 0
    %720 = vmatpush1.bf16.msra.mxu0 0
    %721 = vmatprep.subr.bf16.mxu0 0
    %722 = vmatpush1.bf16.msra.mxu0 0
    %723 = vmatprep.subr.bf16.mxu0 0
    %724 = vmatpush1.bf16.msra.mxu0 0
    %725 = vmatprep.subr.bf16.mxu0 0
    %726 = vmatpush1.bf16.msra.mxu0 0
    %727 = vmatprep.subr.bf16.mxu0 0
    %728 = vmatpush1.bf16.msra.mxu0 0
    %729 = vmatprep.subr.bf16.mxu0 0
    %730 = vmatpush1.bf16.msra.mxu0 0
    %731 = vmatprep.subr.bf16.mxu0 0
    %732 = vmatpush1.bf16.msra.mxu0 0
    %733 = vmatprep.mubr.bf16.mxu0 0
    %734 = vmatmul.mubr.bf16.gmra.mrb[0].mxu0 %v699
    %v735 = vpop.f32.mrb[0].mxu0
    %v736 = vadd.f32 0.0, %v735
    %v737 = vpop.f32.mrb[0].mxu0
    %v738 = vadd.f32 0.0, %v737
    %v739 = vpop.f32.mrb[0].mxu0
    %v740 = vpop.f32.mrb[0].mxu0
    %741 = vdwg.mxu0
    %v742 = vadd.f32 %v736, %v484
    %v743 = vadd.f32 %v736, %v493
    %v744 = vadd.f32 %v738, %v493
    %v745 = vld [vmem:[#allocation2 + $0x10] sm:$0xff]
    %v746 = vadd.f32 %v745, %v742
    %v747 = vxor.u32 %v746, 2147483648
    %v748 = vmul.f32 %v747, 1.442695
    %v749 = vpow.pop %v748
    %v750 = vadd.f32 %v749, 1.0
    %v751 = vrcp.pop %v750
    %v752 = vmul.f32 1.0, %v751
    %754 = vrot.lane.b32.xlu0 %v742, 64
    %v755 = vpop.permute.xlu0 %754
    %v757 = vmul.f32 %v752, %v755
    %759 = vrot.lane.b32.xlu0 %v757, 64
    %v760 = vpop.permute.xlu0 %759
    %v762 = vadd.f32 %v745, %v760
    %v763 = vtanh.pop %v762
    %v764 = vsub.f32 1.0, %v752
    %766 = vrot.lane.b32.xlu0 %v763, 96
    %v767 = vpop.permute.xlu0 %766
    %v769 = vmul.f32 %v764, %v767
    %771 = vrot.lane.b32.xlu0 %v696, 32
    %v772 = vpop.permute.xlu0 %771
    %v774 = vmul.f32 %v752, %v772
    %v775 = vadd.f32 %v769, %v774
    %v776 = vld [vmem:[#allocation3 + $0x28] sm:$0xff]
    %779 = vrot.lane.b32.xlu0 %v743, 32
    %v780 = vpop.permute.xlu0 %779
    %781 = vrot.lane.b32.xlu0 %v744, 32
    %v782 = vpop.permute.xlu0 %781
    %v783 = vsel %vm200, %v780, %v782
    %v785 = vadd.f32 %v776, %v783
    %v786 = vxor.u32 %v785, 2147483648
    %v787 = vmul.f32 %v786, 1.442695
    %v788 = vpow.pop %v787
    %v789 = vadd.f32 %v788, 1.0
    %v790 = vrcp.pop %v789
    %v791 = vmul.f32 1.0, %v790
    %792 = vrot.lane.b32.xlu0 %v744, 96
    %v793 = vpop.permute.xlu0 %792
    %v795 = vmul.f32 %v791, %v793
    %797 = vrot.lane.b32.xlu0 %v795, 64
    %v798 = vpop.permute.xlu0 %797
    %v800 = vadd.f32 %v776, %v798
    %v801 = vtanh.pop %v800
    %v802 = vsub.f32 1.0, %v791
    %804 = vrot.lane.b32.xlu0 %v801, 96
    %v805 = vpop.permute.xlu0 %804
    %v807 = vmul.f32 %v802, %v805
    %v808 = vmul.f32 %v791, %v696
    %v809 = vadd.f32 %v807, %v808
    %811 = vrot.lane.b32.xlu0 %v775, 96
    %v812 = vpop.permute.xlu0 %811
    %814 = vst.msk [vmem:[#allocation19 + $0x10] sm:$0xff] %vm200, %v812
    %816 = vrot.lane.b32.xlu0 %v809, 96
    %v817 = vpop.permute.xlu0 %816
    %819 = vst.msk [vmem:[#allocation20 + $0x28] sm:$0xff] %vm200, %v817
    %v820 = vsel %vm200, %v812, %v809
    %v821 = vpack.c.bf16 %v820, %v820
    %v823 = vsel %vm435, %v821, 0
    %825 = vmatprep.subr.bf16.mxu0 %v420
    %826 = vmatpush1.bf16.msra.mxu0 %v419
    %827 = vmatprep.subr.bf16.mxu0 %v422
    %828 = vmatpush1.bf16.msra.mxu0 %v421
    %829 = vmatprep.subr.bf16.mxu0 %v424
    %830 = vmatpush1.bf16.msra.mxu0 %v423
    %831 = vmatprep.subr.bf16.mxu0 %v426
    %832 = vmatpush1.bf16.msra.mxu0 %v425
    %833 = vmatprep.subr.bf16.mxu0 0
    %834 = vmatpush1.bf16.msra.mxu0 0
    %835 = vmatprep.subr.bf16.mxu0 0
    %836 = vmatpush1.bf16.msra.mxu0 0
    %837 = vmatprep.subr.bf16.mxu0 0
    %838 = vmatpush1.bf16.msra.mxu0 0
    %839 = vmatprep.subr.bf16.mxu0 0
    %840 = vmatpush1.bf16.msra.mxu0 0
    %841 = vmatprep.subr.bf16.mxu0 0
    %842 = vmatpush1.bf16.msra.mxu0 0
    %843 = vmatprep.subr.bf16.mxu0 0
    %844 = vmatpush1.bf16.msra.mxu0 0
    %845 = vmatprep.subr.bf16.mxu0 0
    %846 = vmatpush1.bf16.msra.mxu0 0
    %847 = vmatprep.subr.bf16.mxu0 0
    %848 = vmatpush1.bf16.msra.mxu0 0
    %849 = vmatprep.subr.bf16.mxu0 0
    %850 = vmatpush1.bf16.msra.mxu0 0
    %851 = vmatprep.subr.bf16.mxu0 0
    %852 = vmatpush1.bf16.msra.mxu0 0
    %853 = vmatprep.subr.bf16.mxu0 0
    %854 = vmatpush1.bf16.msra.mxu0 0
    %855 = vmatprep.subr.bf16.mxu0 0
    %856 = vmatpush1.bf16.msra.mxu0 0
    %857 = vmatprep.mubr.bf16.mxu0 0
    %858 = vmatmul.mubr.bf16.gmra.mrb[0].mxu0 %v823
    %v859 = vpop.f32.mrb[0].mxu0
    %v860 = vadd.f32 0.0, %v859
    %v861 = vpop.f32.mrb[0].mxu0
    %v862 = vadd.f32 0.0, %v861
    %v863 = vpop.f32.mrb[0].mxu0
    %v864 = vpop.f32.mrb[0].mxu0
    %865 = vdwg.mxu0
    %v866 = vadd.f32 %v860, %v484
    %v867 = vadd.f32 %v860, %v493
    %v868 = vadd.f32 %v862, %v493
    %v869 = vld [vmem:[#allocation2 + $0x18] sm:$0xff]
    %v870 = vadd.f32 %v869, %v866
    %v871 = vxor.u32 %v870, 2147483648
    %v872 = vmul.f32 %v871, 1.442695
    %v873 = vpow.pop %v872
    %v874 = vadd.f32 %v873, 1.0
    %v875 = vrcp.pop %v874
    %v876 = vmul.f32 1.0, %v875
    %878 = vrot.lane.b32.xlu0 %v866, 64
    %v879 = vpop.permute.xlu0 %878
    %v881 = vmul.f32 %v876, %v879
    %883 = vrot.lane.b32.xlu0 %v881, 64
    %v884 = vpop.permute.xlu0 %883
    %v886 = vadd.f32 %v869, %v884
    %v887 = vtanh.pop %v886
    %v888 = vsub.f32 1.0, %v876
    %890 = vrot.lane.b32.xlu0 %v887, 96
    %v891 = vpop.permute.xlu0 %890
    %v893 = vmul.f32 %v888, %v891
    %895 = vrot.lane.b32.xlu0 %v820, 32
    %v896 = vpop.permute.xlu0 %895
    %v898 = vmul.f32 %v876, %v896
    %v899 = vadd.f32 %v893, %v898
    %v900 = vld [vmem:[#allocation3 + $0x20] sm:$0xff]
    %903 = vrot.lane.b32.xlu0 %v867, 32
    %v904 = vpop.permute.xlu0 %903
    %905 = vrot.lane.b32.xlu0 %v868, 32
    %v906 = vpop.permute.xlu0 %905
    %v907 = vsel %vm200, %v904, %v906
    %v909 = vadd.f32 %v900, %v907
    %v910 = vxor.u32 %v909, 2147483648
    %v911 = vmul.f32 %v910, 1.442695
    %v912 = vpow.pop %v911
    %v913 = vadd.f32 %v912, 1.0
    %v914 = vrcp.pop %v913
    %v915 = vmul.f32 1.0, %v914
    %916 = vrot.lane.b32.xlu0 %v868, 96
    %v917 = vpop.permute.xlu0 %916
    %v919 = vmul.f32 %v915, %v917
    %921 = vrot.lane.b32.xlu0 %v919, 64
    %v922 = vpop.permute.xlu0 %921
    %v924 = vadd.f32 %v900, %v922
    %v925 = vtanh.pop %v924
    %v926 = vsub.f32 1.0, %v915
    %928 = vrot.lane.b32.xlu0 %v925, 96
    %v929 = vpop.permute.xlu0 %928
    %v931 = vmul.f32 %v926, %v929
    %v932 = vmul.f32 %v915, %v820
    %v933 = vadd.f32 %v931, %v932
    %935 = vrot.lane.b32.xlu0 %v899, 96
    %v936 = vpop.permute.xlu0 %935
    %938 = vst.msk [vmem:[#allocation19 + $0x18] sm:$0xff] %vm200, %v936
    %940 = vrot.lane.b32.xlu0 %v933, 96
    %v941 = vpop.permute.xlu0 %940
    %943 = vst.msk [vmem:[#allocation20 + $0x20] sm:$0xff] %vm200, %v941
    %v944 = vsel %vm200, %v936, %v933
    %v945 = vpack.c.bf16 %v944, %v944
    %v947 = vsel %vm435, %v945, 0
    %949 = vmatprep.subr.bf16.mxu0 %v420
    %950 = vmatpush1.bf16.msra.mxu0 %v419
    %951 = vmatprep.subr.bf16.mxu0 %v422
    %952 = vmatpush1.bf16.msra.mxu0 %v421
    %953 = vmatprep.subr.bf16.mxu0 %v424
    %954 = vmatpush1.bf16.msra.mxu0 %v423
    %955 = vmatprep.subr.bf16.mxu0 %v426
    %956 = vmatpush1.bf16.msra.mxu0 %v425
    %957 = vmatprep.subr.bf16.mxu0 0
    %958 = vmatpush1.bf16.msra.mxu0 0
    %959 = vmatprep.subr.bf16.mxu0 0
    %960 = vmatpush1.bf16.msra.mxu0 0
    %961 = vmatprep.subr.bf16.mxu0 0
    %962 = vmatpush1.bf16.msra.mxu0 0
    %963 = vmatprep.subr.bf16.mxu0 0
    %964 = vmatpush1.bf16.msra.mxu0 0
    %965 = vmatprep.subr.bf16.mxu0 0
    %966 = vmatpush1.bf16.msra.mxu0 0
    %967 = vmatprep.subr.bf16.mxu0 0
    %968 = vmatpush1.bf16.msra.mxu0 0
    %969 = vmatprep.subr.bf16.mxu0 0
    %970 = vmatpush1.bf16.msra.mxu0 0
    %971 = vmatprep.subr.bf16.mxu0 0
    %972 = vmatpush1.bf16.msra.mxu0 0
    %973 = vmatprep.subr.bf16.mxu0 0
    %974 = vmatpush1.bf16.msra.mxu0 0
    %975 = vmatprep.subr.bf16.mxu0 0
    %976 = vmatpush1.bf16.msra.mxu0 0
    %977 = vmatprep.subr.bf16.mxu0 0
    %978 = vmatpush1.bf16.msra.mxu0 0
    %979 = vmatprep.subr.bf16.mxu0 0
    %980 = vmatpush1.bf16.msra.mxu0 0
    %981 = vmatprep.mubr.bf16.mxu0 0
    %982 = vmatmul.mubr.bf16.gmra.mrb[0].mxu0 %v947
    %v983 = vpop.f32.mrb[0].mxu0
    %v984 = vadd.f32 0.0, %v983
    %v985 = vpop.f32.mrb[0].mxu0
    %v986 = vadd.f32 0.0, %v985
    %v987 = vpop.f32.mrb[0].mxu0
    %v988 = vpop.f32.mrb[0].mxu0
    %989 = vdwg.mxu0
    %v990 = vadd.f32 %v984, %v484
    %v991 = vadd.f32 %v984, %v493
    %v992 = vadd.f32 %v986, %v493
    %v993 = vld [vmem:[#allocation2 + $0x20] sm:$0xff]
    %v994 = vadd.f32 %v993, %v990
    %v995 = vxor.u32 %v994, 2147483648
    %v996 = vmul.f32 %v995, 1.442695
    %v997 = vpow.pop %v996
    %v998 = vadd.f32 %v997, 1.0
    %v999 = vrcp.pop %v998
    %v1000 = vmul.f32 1.0, %v999
    %1002 = vrot.lane.b32.xlu0 %v990, 64
    %v1003 = vpop.permute.xlu0 %1002
    %v1005 = vmul.f32 %v1000, %v1003
    %1007 = vrot.lane.b32.xlu0 %v1005, 64
    %v1008 = vpop.permute.xlu0 %1007
    %v1010 = vadd.f32 %v993, %v1008
    %v1011 = vtanh.pop %v1010
    %v1012 = vsub.f32 1.0, %v1000
    %1014 = vrot.lane.b32.xlu0 %v1011, 96
    %v1015 = vpop.permute.xlu0 %1014
    %v1017 = vmul.f32 %v1012, %v1015
    %1019 = vrot.lane.b32.xlu0 %v944, 32
    %v1020 = vpop.permute.xlu0 %1019
    %v1022 = vmul.f32 %v1000, %v1020
    %v1023 = vadd.f32 %v1017, %v1022
    %v1024 = vld [vmem:[#allocation3 + $0x18] sm:$0xff]
    %1027 = vrot.lane.b32.xlu0 %v991, 32
    %v1028 = vpop.permute.xlu0 %1027
    %1029 = vrot.lane.b32.xlu0 %v992, 32
    %v1030 = vpop.permute.xlu0 %1029
    %v1031 = vsel %vm200, %v1028, %v1030
    %v1033 = vadd.f32 %v1024, %v1031
    %v1034 = vxor.u32 %v1033, 2147483648
    %v1035 = vmul.f32 %v1034, 1.442695
    %v1036 = vpow.pop %v1035
    %v1037 = vadd.f32 %v1036, 1.0
    %v1038 = vrcp.pop %v1037
    %v1039 = vmul.f32 1.0, %v1038
    %1040 = vrot.lane.b32.xlu0 %v992, 96
    %v1041 = vpop.permute.xlu0 %1040
    %v1043 = vmul.f32 %v1039, %v1041
    %1045 = vrot.lane.b32.xlu0 %v1043, 64
    %v1046 = vpop.permute.xlu0 %1045
    %v1048 = vadd.f32 %v1024, %v1046
    %v1049 = vtanh.pop %v1048
    %v1050 = vsub.f32 1.0, %v1039
    %1052 = vrot.lane.b32.xlu0 %v1049, 96
    %v1053 = vpop.permute.xlu0 %1052
    %v1055 = vmul.f32 %v1050, %v1053
    %v1056 = vmul.f32 %v1039, %v944
    %v1057 = vadd.f32 %v1055, %v1056
    %1059 = vrot.lane.b32.xlu0 %v1023, 96
    %v1060 = vpop.permute.xlu0 %1059
    %1062 = vst.msk [vmem:[#allocation19 + $0x20] sm:$0xff] %vm200, %v1060
    %1064 = vrot.lane.b32.xlu0 %v1057, 96
    %v1065 = vpop.permute.xlu0 %1064
    %1067 = vst.msk [vmem:[#allocation20 + $0x18] sm:$0xff] %vm200, %v1065
    %v1068 = vsel %vm200, %v1060, %v1057
    %v1069 = vpack.c.bf16 %v1068, %v1068
    %v1071 = vsel %vm435, %v1069, 0
    %1073 = vmatprep.subr.bf16.mxu0 %v420
    %1074 = vmatpush1.bf16.msra.mxu0 %v419
    %1075 = vmatprep.subr.bf16.mxu0 %v422
    %1076 = vmatpush1.bf16.msra.mxu0 %v421
    %1077 = vmatprep.subr.bf16.mxu0 %v424
    %1078 = vmatpush1.bf16.msra.mxu0 %v423
    %1079 = vmatprep.subr.bf16.mxu0 %v426
    %1080 = vmatpush1.bf16.msra.mxu0 %v425
    %1081 = vmatprep.subr.bf16.mxu0 0
    %1082 = vmatpush1.bf16.msra.mxu0 0
    %1083 = vmatprep.subr.bf16.mxu0 0
    %1084 = vmatpush1.bf16.msra.mxu0 0
    %1085 = vmatprep.subr.bf16.mxu0 0
    %1086 = vmatpush1.bf16.msra.mxu0 0
    %1087 = vmatprep.subr.bf16.mxu0 0
    %1088 = vmatpush1.bf16.msra.mxu0 0
    %1089 = vmatprep.subr.bf16.mxu0 0
    %1090 = vmatpush1.bf16.msra.mxu0 0
    %1091 = vmatprep.subr.bf16.mxu0 0
    %1092 = vmatpush1.bf16.msra.mxu0 0
    %1093 = vmatprep.subr.bf16.mxu0 0
    %1094 = vmatpush1.bf16.msra.mxu0 0
    %1095 = vmatprep.subr.bf16.mxu0 0
    %1096 = vmatpush1.bf16.msra.mxu0 0
    %1097 = vmatprep.subr.bf16.mxu0 0
    %1098 = vmatpush1.bf16.msra.mxu0 0
    %1099 = vmatprep.subr.bf16.mxu0 0
    %1100 = vmatpush1.bf16.msra.mxu0 0
    %1101 = vmatprep.subr.bf16.mxu0 0
    %1102 = vmatpush1.bf16.msra.mxu0 0
    %1103 = vmatprep.subr.bf16.mxu0 0
    %1104 = vmatpush1.bf16.msra.mxu0 0
    %1105 = vmatprep.mubr.bf16.mxu0 0
    %1106 = vmatmul.mubr.bf16.gmra.mrb[0].mxu0 %v1071
    %v1107 = vpop.f32.mrb[0].mxu0
    %v1108 = vadd.f32 0.0, %v1107
    %v1109 = vpop.f32.mrb[0].mxu0
    %v1110 = vadd.f32 0.0, %v1109
    %v1111 = vpop.f32.mrb[0].mxu0
    %v1112 = vpop.f32.mrb[0].mxu0
    %1113 = vdwg.mxu0
    %v1114 = vadd.f32 %v1108, %v484
    %v1115 = vadd.f32 %v1108, %v493
    %v1116 = vadd.f32 %v1110, %v493
    %v1117 = vld [vmem:[#allocation2 + $0x28] sm:$0xff]
    %v1118 = vadd.f32 %v1117, %v1114
    %v1119 = vxor.u32 %v1118, 2147483648
    %v1120 = vmul.f32 %v1119, 1.442695
    %v1121 = vpow.pop %v1120
    %v1122 = vadd.f32 %v1121, 1.0
    %v1123 = vrcp.pop %v1122
    %v1124 = vmul.f32 1.0, %v1123
    %1126 = vrot.lane.b32.xlu0 %v1114, 64
    %v1127 = vpop.permute.xlu0 %1126
    %v1129 = vmul.f32 %v1124, %v1127
    %1131 = vrot.lane.b32.xlu0 %v1129, 64
    %v1132 = vpop.permute.xlu0 %1131
    %v1134 = vadd.f32 %v1117, %v1132
    %v1135 = vtanh.pop %v1134
    %v1136 = vsub.f32 1.0, %v1124
    %1138 = vrot.lane.b32.xlu0 %v1135, 96
    %v1139 = vpop.permute.xlu0 %1138
    %v1141 = vmul.f32 %v1136, %v1139
    %1143 = vrot.lane.b32.xlu0 %v1068, 32
    %v1144 = vpop.permute.xlu0 %1143
    %v1146 = vmul.f32 %v1124, %v1144
    %v1147 = vadd.f32 %v1141, %v1146
    %v1148 = vld [vmem:[#allocation3 + $0x10] sm:$0xff]
    %1151 = vrot.lane.b32.xlu0 %v1115, 32
    %v1152 = vpop.permute.xlu0 %1151
    %1153 = vrot.lane.b32.xlu0 %v1116, 32
    %v1154 = vpop.permute.xlu0 %1153
    %v1155 = vsel %vm200, %v1152, %v1154
    %v1157 = vadd.f32 %v1148, %v1155
    %v1158 = vxor.u32 %v1157, 2147483648
    %v1159 = vmul.f32 %v1158, 1.442695
    %v1160 = vpow.pop %v1159
    %v1161 = vadd.f32 %v1160, 1.0
    %v1162 = vrcp.pop %v1161
    %v1163 = vmul.f32 1.0, %v1162
    %1164 = vrot.lane.b32.xlu0 %v1116, 96
    %v1165 = vpop.permute.xlu0 %1164
    %v1167 = vmul.f32 %v1163, %v1165
    %1169 = vrot.lane.b32.xlu0 %v1167, 64
    %v1170 = vpop.permute.xlu0 %1169
    %v1172 = vadd.f32 %v1148, %v1170
    %v1173 = vtanh.pop %v1172
    %v1174 = vsub.f32 1.0, %v1163
    %1176 = vrot.lane.b32.xlu0 %v1173, 96
    %v1177 = vpop.permute.xlu0 %1176
    %v1179 = vmul.f32 %v1174, %v1177
    %v1180 = vmul.f32 %v1163, %v1068
    %v1181 = vadd.f32 %v1179, %v1180
    %1183 = vrot.lane.b32.xlu0 %v1147, 96
    %v1184 = vpop.permute.xlu0 %1183
    %1186 = vst.msk [vmem:[#allocation19 + $0x28] sm:$0xff] %vm200, %v1184
    %1188 = vrot.lane.b32.xlu0 %v1181, 96
    %v1189 = vpop.permute.xlu0 %1188
    %1191 = vst.msk [vmem:[#allocation20 + $0x10] sm:$0xff] %vm200, %v1189
    %v1192 = vsel %vm200, %v1184, %v1181
    %v1193 = vpack.c.bf16 %v1192, %v1192
    %v1195 = vsel %vm435, %v1193, 0
    %1197 = vmatprep.subr.bf16.mxu0 %v420
    %1198 = vmatpush1.bf16.msra.mxu0 %v419
    %1199 = vmatprep.subr.bf16.mxu0 %v422
    %1200 = vmatpush1.bf16.msra.mxu0 %v421
    %1201 = vmatprep.subr.bf16.mxu0 %v424
    %1202 = vmatpush1.bf16.msra.mxu0 %v423
    %1203 = vmatprep.subr.bf16.mxu0 %v426
    %1204 = vmatpush1.bf16.msra.mxu0 %v425
    %1205 = vmatprep.subr.bf16.mxu0 0
    %1206 = vmatpush1.bf16.msra.mxu0 0
    %1207 = vmatprep.subr.bf16.mxu0 0
    %1208 = vmatpush1.bf16.msra.mxu0 0
    %1209 = vmatprep.subr.bf16.mxu0 0
    %1210 = vmatpush1.bf16.msra.mxu0 0
    %1211 = vmatprep.subr.bf16.mxu0 0
    %1212 = vmatpush1.bf16.msra.mxu0 0
    %1213 = vmatprep.subr.bf16.mxu0 0
    %1214 = vmatpush1.bf16.msra.mxu0 0
    %1215 = vmatprep.subr.bf16.mxu0 0
    %1216 = vmatpush1.bf16.msra.mxu0 0
    %1217 = vmatprep.subr.bf16.mxu0 0
    %1218 = vmatpush1.bf16.msra.mxu0 0
    %1219 = vmatprep.subr.bf16.mxu0 0
    %1220 = vmatpush1.bf16.msra.mxu0 0
    %1221 = vmatprep.subr.bf16.mxu0 0
    %1222 = vmatpush1.bf16.msra.mxu0 0
    %1223 = vmatprep.subr.bf16.mxu0 0
    %1224 = vmatpush1.bf16.msra.mxu0 0
    %1225 = vmatprep.subr.bf16.mxu0 0
    %1226 = vmatpush1.bf16.msra.mxu0 0
    %1227 = vmatprep.subr.bf16.mxu0 0
    %1228 = vmatpush1.bf16.msra.mxu0 0
    %1229 = vmatprep.mubr.bf16.mxu0 0
    %1230 = vmatmul.mubr.bf16.gmra.mrb[0].mxu0 %v1195
    %v1231 = vpop.f32.mrb[0].mxu0
    %v1232 = vadd.f32 0.0, %v1231
    %v1233 = vpop.f32.mrb[0].mxu0
    %v1234 = vadd.f32 0.0, %v1233
    %v1235 = vpop.f32.mrb[0].mxu0
    %v1236 = vpop.f32.mrb[0].mxu0
    %1237 = vdwg.mxu0
    %v1238 = vadd.f32 %v1232, %v484
    %v1239 = vadd.f32 %v1232, %v493
    %v1240 = vadd.f32 %v1234, %v493
    %v1241 = vld [vmem:[#allocation2 + $0x30] sm:$0xff]
    %v1242 = vadd.f32 %v1241, %v1238
    %v1243 = vxor.u32 %v1242, 2147483648
    %v1244 = vmul.f32 %v1243, 1.442695
    %v1245 = vpow.pop %v1244
    %v1246 = vadd.f32 %v1245, 1.0
    %v1247 = vrcp.pop %v1246
    %v1248 = vmul.f32 1.0, %v1247
    %1250 = vrot.lane.b32.xlu0 %v1238, 64
    %v1251 = vpop.permute.xlu0 %1250
    %v1253 = vmul.f32 %v1248, %v1251
    %1255 = vrot.lane.b32.xlu0 %v1253, 64
    %v1256 = vpop.permute.xlu0 %1255
    %v1258 = vadd.f32 %v1241, %v1256
    %v1259 = vtanh.pop %v1258
    %v1260 = vsub.f32 1.0, %v1248
    %1262 = vrot.lane.b32.xlu0 %v1259, 96
    %v1263 = vpop.permute.xlu0 %1262
    %v1265 = vmul.f32 %v1260, %v1263
    %1267 = vrot.lane.b32.xlu0 %v1192, 32
    %v1268 = vpop.permute.xlu0 %1267
    %v1270 = vmul.f32 %v1248, %v1268
    %v1271 = vadd.f32 %v1265, %v1270
    %v1272 = vld [vmem:[#allocation3 + $0x8] sm:$0xff]
    %1275 = vrot.lane.b32.xlu0 %v1239, 32
    %v1276 = vpop.permute.xlu0 %1275
    %1277 = vrot.lane.b32.xlu0 %v1240, 32
    %v1278 = vpop.permute.xlu0 %1277
    %v1279 = vsel %vm200, %v1276, %v1278
    %v1281 = vadd.f32 %v1272, %v1279
    %v1282 = vxor.u32 %v1281, 2147483648
    %v1283 = vmul.f32 %v1282, 1.442695
    %v1284 = vpow.pop %v1283
    %v1285 = vadd.f32 %v1284, 1.0
    %v1286 = vrcp.pop %v1285
    %v1287 = vmul.f32 1.0, %v1286
    %1288 = vrot.lane.b32.xlu0 %v1240, 96
    %v1289 = vpop.permute.xlu0 %1288
    %v1291 = vmul.f32 %v1287, %v1289
    %1293 = vrot.lane.b32.xlu0 %v1291, 64
    %v1294 = vpop.permute.xlu0 %1293
    %v1296 = vadd.f32 %v1272, %v1294
    %v1297 = vtanh.pop %v1296
    %v1298 = vsub.f32 1.0, %v1287
    %1300 = vrot.lane.b32.xlu0 %v1297, 96
    %v1301 = vpop.permute.xlu0 %1300
    %v1303 = vmul.f32 %v1298, %v1301
    %v1304 = vmul.f32 %v1287, %v1192
    %v1305 = vadd.f32 %v1303, %v1304
    %1307 = vrot.lane.b32.xlu0 %v1271, 96
    %v1308 = vpop.permute.xlu0 %1307
    %1310 = vst.msk [vmem:[#allocation19 + $0x30] sm:$0xff] %vm200, %v1308
    %1312 = vrot.lane.b32.xlu0 %v1305, 96
    %v1313 = vpop.permute.xlu0 %1312
    %1315 = vst.msk [vmem:[#allocation20 + $0x8] sm:$0xff] %vm200, %v1313
    %v1316 = vsel %vm200, %v1308, %v1305
    %v1317 = vpack.c.bf16 %v1316, %v1316
    %v1319 = vsel %vm435, %v1317, 0
    %1321 = vmatprep.subr.bf16.mxu0 %v420
    %1322 = vmatpush1.bf16.msra.mxu0 %v419
    %1323 = vmatprep.subr.bf16.mxu0 %v422
    %1324 = vmatpush1.bf16.msra.mxu0 %v421
    %1325 = vmatprep.subr.bf16.mxu0 %v424
    %1326 = vmatpush1.bf16.msra.mxu0 %v423
    %1327 = vmatprep.subr.bf16.mxu0 %v426
    %1328 = vmatpush1.bf16.msra.mxu0 %v425
    %1329 = vmatprep.subr.bf16.mxu0 0
    %1330 = vmatpush1.bf16.msra.mxu0 0
    %1331 = vmatprep.subr.bf16.mxu0 0
    %1332 = vmatpush1.bf16.msra.mxu0 0
    %1333 = vmatprep.subr.bf16.mxu0 0
    %1334 = vmatpush1.bf16.msra.mxu0 0
    %1335 = vmatprep.subr.bf16.mxu0 0
    %1336 = vmatpush1.bf16.msra.mxu0 0
    %1337 = vmatprep.subr.bf16.mxu0 0
    %1338 = vmatpush1.bf16.msra.mxu0 0
    %1339 = vmatprep.subr.bf16.mxu0 0
    %1340 = vmatpush1.bf16.msra.mxu0 0
    %1341 = vmatprep.subr.bf16.mxu0 0
    %1342 = vmatpush1.bf16.msra.mxu0 0
    %1343 = vmatprep.subr.bf16.mxu0 0
    %1344 = vmatpush1.bf16.msra.mxu0 0
    %1345 = vmatprep.subr.bf16.mxu0 0
    %1346 = vmatpush1.bf16.msra.mxu0 0
    %1347 = vmatprep.subr.bf16.mxu0 0
    %1348 = vmatpush1.bf16.msra.mxu0 0
    %1349 = vmatprep.subr.bf16.mxu0 0
    %1350 = vmatpush1.bf16.msra.mxu0 0
    %1351 = vmatprep.subr.bf16.mxu0 0
    %1352 = vmatpush1.bf16.msra.mxu0 0
    %1353 = vmatprep.mubr.bf16.mxu0 0
    %1354 = vmatmul.mubr.bf16.gmra.mrb[0].mxu0 %v1319
    %v1355 = vpop.f32.mrb[0].mxu0
    %v1356 = vadd.f32 0.0, %v1355
    %v1357 = vpop.f32.mrb[0].mxu0
    %v1358 = vadd.f32 0.0, %v1357
    %v1359 = vpop.f32.mrb[0].mxu0
    %v1360 = vpop.f32.mrb[0].mxu0
    %1361 = vdwg.mxu0
    %v1362 = vadd.f32 %v1356, %v484
    %v1363 = vadd.f32 %v1356, %v493
    %v1364 = vadd.f32 %v1358, %v493
    %v1365 = vld [vmem:[#allocation2 + $0x38] sm:$0xff]
    %v1366 = vadd.f32 %v1365, %v1362
    %v1367 = vxor.u32 %v1366, 2147483648
    %v1368 = vmul.f32 %v1367, 1.442695
    %v1369 = vpow.pop %v1368
    %v1370 = vadd.f32 %v1369, 1.0
    %v1371 = vrcp.pop %v1370
    %v1372 = vmul.f32 1.0, %v1371
    %1374 = vrot.lane.b32.xlu0 %v1362, 64
    %v1375 = vpop.permute.xlu0 %1374
    %v1377 = vmul.f32 %v1372, %v1375
    %1379 = vrot.lane.b32.xlu0 %v1377, 64
    %v1380 = vpop.permute.xlu0 %1379
    %v1382 = vadd.f32 %v1365, %v1380
    %v1383 = vtanh.pop %v1382
    %v1384 = vsub.f32 1.0, %v1372
    %1386 = vrot.lane.b32.xlu0 %v1383, 96
    %v1387 = vpop.permute.xlu0 %1386
    %v1389 = vmul.f32 %v1384, %v1387
    %1391 = vrot.lane.b32.xlu0 %v1316, 32
    %v1392 = vpop.permute.xlu0 %1391
    %v1394 = vmul.f32 %v1372, %v1392
    %v1395 = vadd.f32 %v1389, %v1394
    %v1396 = vld [vmem:[#allocation3] sm:$0xff]
    %1399 = vrot.lane.b32.xlu0 %v1363, 32
    %v1400 = vpop.permute.xlu0 %1399
    %1401 = vrot.lane.b32.xlu0 %v1364, 32
    %v1402 = vpop.permute.xlu0 %1401
    %v1403 = vsel %vm200, %v1400, %v1402
    %v1405 = vadd.f32 %v1396, %v1403
    %v1406 = vxor.u32 %v1405, 2147483648
    %v1407 = vmul.f32 %v1406, 1.442695
    %v1408 = vpow.pop %v1407
    %v1409 = vadd.f32 %v1408, 1.0
    %v1410 = vrcp.pop %v1409
    %v1411 = vmul.f32 1.0, %v1410
    %1412 = vrot.lane.b32.xlu0 %v1364, 96
    %v1413 = vpop.permute.xlu0 %1412
    %v1415 = vmul.f32 %v1411, %v1413
    %1417 = vrot.lane.b32.xlu0 %v1415, 64
    %v1418 = vpop.permute.xlu0 %1417
    %v1420 = vadd.f32 %v1396, %v1418
    %v1421 = vtanh.pop %v1420
    %v1422 = vsub.f32 1.0, %v1411
    %1424 = vrot.lane.b32.xlu0 %v1421, 96
    %v1425 = vpop.permute.xlu0 %1424
    %v1427 = vmul.f32 %v1422, %v1425
    %v1428 = vmul.f32 %v1411, %v1316
    %v1429 = vadd.f32 %v1427, %v1428
    %1431 = vrot.lane.b32.xlu0 %v1395, 96
    %v1432 = vpop.permute.xlu0 %1431
    %1434 = vst.msk [vmem:[#allocation19 + $0x38] sm:$0xff] %vm200, %v1432
    %1436 = vrot.lane.b32.xlu0 %v1429, 96
    %v1437 = vpop.permute.xlu0 %1436
    %1439 = vst.msk [vmem:[#allocation20] sm:$0xff] %vm200, %v1437
    // Predicated region
    $region74: #{vae_forward.8} parent=1 // pred_check
      _
    $region75: #{vae_forward.8} parent=1 // pred_check_branch
      %1441 = sbr.rel (0) target = $region77
    $region76: #{vae_forward.8} parent=1 // pred_region
      %s1443 = ssub.s32 1024, 1024
      %1444 = vsyncadd [#allocation6], %s1443
      %s1445 = sshll.u32 [#allocation19], 4
      %s1446 = int_to_ptr.vmem [resolvable:$true] %s1445
      %1451 = dma.vmem_to_hbm [thread:$0]  %s1446, 1024, %s9, [#allocation6], 128, 128, 8
    $region77: #{vae_forward.8} parent=1 // pred_fallthru
      _
    // Predicated region
    $region78: #{vae_forward.8} parent=1 // pred_check
      _
    $region79: #{vae_forward.8} parent=1 // pred_check_branch
      %1453 = sbr.rel (0) target = $region81
    $region80: #{vae_forward.8} parent=1 // pred_region
      %s1455 = ssub.s32 1024, 1024
      %1456 = vsyncadd [#allocation21], %s1455
      %s1457 = sshll.u32 [#allocation20], 4
      %s1458 = int_to_ptr.vmem [resolvable:$true] %s1457
      %1463 = dma.vmem_to_hbm [thread:$0]  %s1458, 1024, %s10, [#allocation21], 128, 128, 8
    $region81: #{vae_forward.8} parent=1 // pred_fallthru
      _
    // Predicated region
    $region82: #{vae_forward.8} parent=1 // pred_check
      _
    $region83: #{vae_forward.8} parent=1 // pred_check_branch
      %1465 = sbr.rel (0) target = $region85
    $region84: #{vae_forward.8} parent=1 // pred_region
      %1466 = dma.done [#allocation6], 1024
    $region85: #{vae_forward.8} parent=1 // pred_fallthru
      _
    // Predicated region
    $region86: #{vae_forward.8} parent=1 // pred_check
      _
    $region87: #{vae_forward.8} parent=1 // pred_check_branch
      %1468 = sbr.rel (0) target = $region89
    $region88: #{vae_forward.8} parent=1 // pred_region
      %1469 = dma.done [#allocation21], 1024
    $region89: #{vae_forward.8} parent=1 // pred_fallthru
      _
    %1470 = vsyncpa [#allocation5], 1
    %1471 = vsyncpa [#allocation8], 1
    %1472 = vsyncpa [#allocation11], 1
    %1473 = vsyncpa [#allocation14], 1
    %1474 = vsyncpa [#allocation17], 1
    %1475 = vsyncpa [#allocation6], 1
    %1476 = vsyncpa [#allocation21], 1

</llo_original>
